<compile_context>
chip_gen: v6e
topology: v6e:2x2x1
jax: 0.10.0
libtpu: 0.0.40
codegen_flags: <defaults>
</compile_context>

<pallas_src>
import math
import numpy as np
import jax
import jax.numpy as jnp
from jax import lax
from jax.experimental import pallas as pl
from jax.experimental.pallas import tpu as pltpu

_EPS = 1e-5
_INV_SQRT2 = 1.0 / math.sqrt(2.0)
_PADL = 8  # left scratch margin (>= pad, multiple of 8 so the bulk store is aligned)


# ---------------- Hilbert curve permutation (LocED, encoder_mode='hilbert') --
def hilbert_flat_locs_2d(n_bits):
    size = 2 ** n_bits
    flat = np.zeros(size * size, dtype=np.int64)
    for d in range(size * size):
        x = y = 0
        t = d
        s = 1
        while s < size:
            rx = 1 & (t // 2)
            ry = 1 & (t ^ rx)
            if ry == 0:
                if rx == 1:
                    x = s - 1 - x
                    y = s - 1 - y
                x, y = y, x
            x += s * rx
            y += s * ry
            t //= 4
            s *= 2
        # LocED.flat_locs_hilbert: loc_flat = loc[0]*size**0 + loc[1]*size**1
        flat[d] = x + y * size
    return flat


# ---------------- Model structure --------------------------------------------
def build_block_specs(cfg, in_chans):
    wm = cfg["width_multiplier"]
    nb = cfg["num_blocks"]
    specs = []
    in_planes = min(64, int(64 * wm[0]))
    specs.append(dict(cin=in_chans, cout=in_planes, stride=4))
    cur = in_planes
    stage_planes = [int(64 * wm[0]), int(128 * wm[1]), int(256 * wm[2]), int(512 * wm[3])]
    for planes, n in zip(stage_planes, nb):
        strides = [4] + [1] * (n - 1)
        for s in strides:
            specs.append(dict(cin=cur, cout=planes, stride=s))
            cur = planes
    return specs, cur


def init_params(key, specs, c_final, num_classes, K):
    params = {"blocks": []}
    for spec in specs:
        key, *ks = jax.random.split(key, 12)
        cin, cout, stride = spec["cin"], spec["cout"], spec["stride"]
        has_skip = (cin == cout and stride == 1)
        p = dict(
            w=jax.random.normal(ks[0], (cout, cin, K), jnp.float32) / math.sqrt(cin * K),
            b=0.05 * jax.random.normal(ks[1], (cout,), jnp.float32),
            g=1.0 + 0.1 * jax.random.normal(ks[2], (cout,), jnp.float32),
            beta=0.1 * jax.random.normal(ks[3], (cout,), jnp.float32),
            mean=0.1 * jax.random.normal(ks[4], (cout,), jnp.float32),
            var=1.0 + 0.1 * jax.random.uniform(ks[5], (cout,), jnp.float32),
        )
        if has_skip:
            p.update(
                sg=1.0 + 0.1 * jax.random.normal(ks[6], (cout,), jnp.float32),
                sbeta=0.1 * jax.random.normal(ks[7], (cout,), jnp.float32),
                smean=0.1 * jax.random.normal(ks[8], (cout,), jnp.float32),
                svar=1.0 + 0.1 * jax.random.uniform(ks[9], (cout,), jnp.float32),
            )
        params["blocks"].append(p)
    key, k1, k2 = jax.random.split(key, 3)
    params["lin_w"] = jax.random.normal(k1, (num_classes, c_final), jnp.float32) / math.sqrt(c_final)
    params["lin_b"] = 0.05 * jax.random.normal(k2, (num_classes,), jnp.float32)
    return params


# ---------------- RepVGG re-parameterization (trace-time folding) ------------
def fold_block(p, has_skip, K):
    """Fold conv bias + eval BN (+ skip-BN identity) + 1/sqrt(2) into (w, shift).

    Returns w_taps (K, Cin, Cout) and shift (1, Cout) so that the block becomes
        y = relu( sum_k x_tap_k @ w_taps[k] + shift ).
    """
    bn_scale = p["g"] / jnp.sqrt(p["var"] + _EPS)                      # (Cout,)
    w = jnp.transpose(p["w"], (2, 1, 0)) * bn_scale[None, None, :]     # (K, Cin, Cout)
    shift = p["beta"] + bn_scale * (p["b"] - p["mean"])                # (Cout,)
    if has_skip:
        sscale = p["sg"] / jnp.sqrt(p["svar"] + _EPS)
        sshift = p["sbeta"] - sscale * p["smean"]
        cin = w.shape[1]
        # identity branch == a 1x1 "conv" at the center tap (reflect pad keeps
        # the center tap == x[t] for every output position, so this is exact).
        w = w.at[K // 2].add(jnp.eye(cin, dtype=w.dtype) * sscale[None, :])
        shift = shift + sshift
    w = (w * _INV_SQRT2).astype(jnp.float32)
    shift = (shift * _INV_SQRT2).reshape(1, -1).astype(jnp.float32)
    return w, shift


# ---------------- Fused whole-network Pallas kernel ---------------------------
def _make_repvgg_kernel(blocks, K, pad):
    nblk = len(blocks)

    def kernel(*refs):
        x_ref = refs[0]
        out_ref = refs[1 + 2 * nblk]
        bufs = refs[2 + 2 * nblk:]

        a = x_ref[0]                                          # (L0, Cin), channels-last
        for i, blk in enumerate(blocks):
            w_ref = refs[1 + 2 * i]
            s_ref = refs[2 + 2 * i]
            buf = bufs[i]
            L, stride, lout = blk["l_in"], blk["stride"], blk["l_out"]

            # ---- write reflect-padded activation into VMEM scratch ---------
            # buf row p holds padded position m = p - _PADL.
            buf[pl.ds(_PADL, L), :] = a                       # aligned bulk store
            for m in range(1, pad + 1):                       # left reflect: m'=-m -> a[m]
                buf[pl.ds(_PADL - m, 1), :] = a[m:m + 1, :]
            for j in range(pad):                              # right reflect: m'=L+j -> a[L-2-j]
                buf[pl.ds(_PADL + L + j, 1), :] = a[L - 2 - j:L - 1 - j, :]

            # ---- K strided-slice tap loads + accumulated MXU matmuls -------
            acc = None
            for k in range(K):
                start = _PADL - pad + k                       # padded index m = k - pad
                if stride == 1 or lout == 1:
                    idx = pl.ds(start, lout)
                else:
                    idx = pl.ds(start, lout, stride=stride)
                tap = buf[idx, :]                             # (lout, Cin)
                yk = jnp.dot(tap, w_ref[k],
                             preferred_element_type=jnp.float32)   # (lout, Cout)
                acc = yk if acc is None else acc + yk
            a = jnp.maximum(acc + s_ref[...], 0.0)

        # AdaptiveAvgPool1d(1): mean over the (sublane) sequence axis.
        out_ref[0] = jnp.mean(a, axis=0, keepdims=True)

    return kernel


def repvgg_forward_pallas(x, params, specs, cfg, locs_flat):
    B, C, H, W = x.shape
    K, pad = cfg["kernel_size"], cfg["padding"]

    # forward(): permute(0,2,3,1).reshape(B, H*W, C); LocED('hilbert').encode ==
    # gather rows by locs_flat.  Keep activations channels-last throughout.
    xs = jnp.transpose(x, (0, 2, 3, 1)).reshape(B, H * W, C)
    xs = xs[:, locs_flat, :].astype(jnp.float32)              # (B, L0, Cin)

    L = H * W
    args = [xs]
    in_specs = [pl.BlockSpec((1, L, C), lambda b: (b, 0, 0))]
    blocks = []
    scratch_shapes = []
    for spec, p in zip(specs, params["blocks"]):
        has_skip = (spec["cin"] == spec["cout"] and spec["stride"] == 1)
        w, shift = fold_block(p, has_skip, K)
        l_out = (L + 2 * pad - K) // spec["stride"] + 1
        blocks.append(dict(l_in=L, l_out=l_out, stride=spec["stride"]))
        args += [w, shift]
        in_specs += [pl.BlockSpec(w.shape, lambda b: (0, 0, 0)),
                     pl.BlockSpec(shift.shape, lambda b: (0, 0))]
        # per-block reflect-padded activation scratch (rows = margin + L + pad)
        scratch_shapes.append(pltpu.VMEM((_PADL + L + pad, spec["cin"]), jnp.float32))
        L = l_out
    c_final = specs[-1]["cout"]

    feat = pl.pallas_call(
        _make_repvgg_kernel(blocks, K, pad),
        out_shape=jax.ShapeDtypeStruct((B, 1, c_final), jnp.float32),
        grid=(B,),
        in_specs=in_specs,
        out_specs=pl.BlockSpec((1, 1, c_final), lambda b: (b, 0, 0)),
        scratch_shapes=scratch_shapes,
        compiler_params=pltpu.CompilerParams(
            dimension_semantics=("parallel",),
            vmem_limit_bytes=32 * 1024 * 1024),
    )(*args)

    feat = feat.reshape(B, c_final)
    # dropout(p=0.0) is identity; the tiny Linear is cheaper as a plain XLA dot.
    logits = jnp.dot(feat, params["lin_w"].T,
                     precision=lax.Precision.HIGHEST,
                     preferred_element_type=jnp.float32) + params["lin_b"]
    return logits


# ---------------- Pure-JAX reference (mirrors the PyTorch module) -------------
def repvgg_forward_reference(x, params, specs, cfg, locs_flat):
    B, C, H, W = x.shape
    K, pad = cfg["kernel_size"], cfg["padding"]
    xs = jnp.transpose(x, (0, 2, 3, 1)).reshape(B, H * W, C)
    xs = xs[:, locs_flat, :]
    a = jnp.transpose(xs, (0, 2, 1)).astype(jnp.float32)      # (B, Cin, L) like PyTorch
    for spec, p in zip(specs, params["blocks"]):
        stride = spec["stride"]
        _, _, L = a.shape
        ap = jnp.pad(a, ((0, 0), (0, 0), (pad, pad)), mode="reflect")
        l_out = (L + 2 * pad - K) // stride + 1
        cols = [ap[:, :, k: k + stride * (l_out - 1) + 1: stride] for k in range(K)]
        patches = jnp.stack(cols, axis=-1)                    # (B, Cin, Lout, K)
        conv = jnp.einsum("bilk,oik->bol", patches, p["w"],
                          precision=lax.Precision.HIGHEST) + p["b"][None, :, None]
        bn_scale = p["g"] / jnp.sqrt(p["var"] + _EPS)
        y = bn_scale[None, :, None] * (conv - p["mean"][None, :, None]) + p["beta"][None, :, None]
        if spec["cin"] == spec["cout"] and stride == 1:
            ss = p["sg"] / jnp.sqrt(p["svar"] + _EPS)
            y = y + ss[None, :, None] * (a - p["smean"][None, :, None]) + p["sbeta"][None, :, None]
        a = jnp.maximum(y * _INV_SQRT2, 0.0)
    feat = jnp.mean(a, axis=-1)                               # AdaptiveAvgPool1d(1)
    logits = jnp.dot(feat, params["lin_w"].T,
                     precision=lax.Precision.HIGHEST,
                     preferred_element_type=jnp.float32) + params["lin_b"]
    return logits


# ---------------- main --------------------------------------------------------
if __name__ == "__main__":
    cfg = dict(
        num_blocks=[2, 1, 1, 1],
        width_multiplier=[0.25, 0.25, 0.25, 0.25],
        kernel_size=7,
        padding=3,
        encoder_mode="hilbert",
    )
    # Five stride-4 stages need L = H*W >= 4**5, so 32x32 is the smallest valid input.
    img_size = (32,)
    in_chans, num_classes, B = 3, 10, 2

    bit = int(math.log2(img_size[0]))
    locs_flat = jnp.asarray(hilbert_flat_locs_2d(bit), dtype=jnp.int32)

    specs, c_final = build_block_specs(cfg, in_chans)
    params = init_params(jax.random.PRNGKey(0), specs, c_final, num_classes, cfg["kernel_size"])

    x = jax.random.normal(jax.random.PRNGKey(0),
                          (B, in_chans, img_size[0], img_size[0]), jnp.float32)

    fwd = jax.jit(lambda xx, pp: repvgg_forward_pallas(xx, pp, specs, cfg, locs_flat))
    out = fwd(x, params)
    jax.block_until_ready(out)

    ref_fn = jax.jit(lambda xx, pp: repvgg_forward_reference(xx, pp, specs, cfg, locs_flat))
    ref = ref_fn(x, params)
    jax.block_until_ready(ref)

    np.testing.assert_allclose(np.asarray(out), np.asarray(ref), rtol=1e-3, atol=1e-3)
    assert out.shape == (B, num_classes)
    print("KERNEL_OK")
</pallas_src>

<mosaic_0001>
module attributes {stable_mosaic.version = 11 : i64} {
  func.func @kernel(%arg0: i32, %arg1: memref<1x1024x3xf32, #tpu.memory_space<vmem>>, %arg2: memref<7x3x16xf32, #tpu.memory_space<vmem>>, %arg3: memref<1x16xf32, #tpu.memory_space<vmem>>, %arg4: memref<7x16x16xf32, #tpu.memory_space<vmem>>, %arg5: memref<1x16xf32, #tpu.memory_space<vmem>>, %arg6: memref<7x16x16xf32, #tpu.memory_space<vmem>>, %arg7: memref<1x16xf32, #tpu.memory_space<vmem>>, %arg8: memref<7x16x32xf32, #tpu.memory_space<vmem>>, %arg9: memref<1x32xf32, #tpu.memory_space<vmem>>, %arg10: memref<7x32x64xf32, #tpu.memory_space<vmem>>, %arg11: memref<1x64xf32, #tpu.memory_space<vmem>>, %arg12: memref<7x64x128xf32, #tpu.memory_space<vmem>>, %arg13: memref<1x128xf32, #tpu.memory_space<vmem>>, %arg14: memref<1x1x128xf32, #tpu.memory_space<vmem>>, %arg15: memref<1035x3xf32, #tpu.memory_space<vmem>>, %arg16: memref<267x16xf32, #tpu.memory_space<vmem>>, %arg17: memref<75x16xf32, #tpu.memory_space<vmem>>, %arg18: memref<75x16xf32, #tpu.memory_space<vmem>>, %arg19: memref<27x32xf32, #tpu.memory_space<vmem>>, %arg20: memref<15x64xf32, #tpu.memory_space<vmem>>) attributes {dimension_semantics = [#tpu.dimension_semantics<parallel>], iteration_bounds = array<i64: 2>, scalar_prefetch = 0 : i64, scratch_operands = 6 : i64, tpu.core_type = #tpu.core_type<tc>, window_params = [{transform_indices = @transform_0, window_bounds = array<i64: 1, 1024, 3>}, {pipeline_mode = #tpu.pipeline_mode<synchronous>, transform_indices = @transform_1, window_bounds = array<i64: 7, 3, 16>}, {pipeline_mode = #tpu.pipeline_mode<synchronous>, transform_indices = @transform_2, window_bounds = array<i64: 1, 16>}, {pipeline_mode = #tpu.pipeline_mode<synchronous>, transform_indices = @transform_3, window_bounds = array<i64: 7, 16, 16>}, {pipeline_mode = #tpu.pipeline_mode<synchronous>, transform_indices = @transform_4, window_bounds = array<i64: 1, 16>}, {pipeline_mode = #tpu.pipeline_mode<synchronous>, transform_indices = @transform_5, window_bounds = array<i64: 7, 16, 16>}, {pipeline_mode = #tpu.pipeline_mode<synchronous>, transform_indices = @transform_6, window_bounds = array<i64: 1, 16>}, {pipeline_mode = #tpu.pipeline_mode<synchronous>, transform_indices = @transform_7, window_bounds = array<i64: 7, 16, 32>}, {pipeline_mode = #tpu.pipeline_mode<synchronous>, transform_indices = @transform_8, window_bounds = array<i64: 1, 32>}, {pipeline_mode = #tpu.pipeline_mode<synchronous>, transform_indices = @transform_9, window_bounds = array<i64: 7, 32, 64>}, {pipeline_mode = #tpu.pipeline_mode<synchronous>, transform_indices = @transform_10, window_bounds = array<i64: 1, 64>}, {pipeline_mode = #tpu.pipeline_mode<synchronous>, transform_indices = @transform_11, window_bounds = array<i64: 7, 64, 128>}, {pipeline_mode = #tpu.pipeline_mode<synchronous>, transform_indices = @transform_12, window_bounds = array<i64: 1, 128>}, {transform_indices = @transform_13, window_bounds = array<i64: 1, 1, 128>}]} {
    %c0 = arith.constant 0 : index
    %c0_0 = arith.constant 0 : index
    %c0_1 = arith.constant 0 : index
    %0 = vector.load %arg1[%c0, %c0_0, %c0_1] : memref<1x1024x3xf32, #tpu.memory_space<vmem>>, vector<1x1024x3xf32>
    %1 = vector.shape_cast %0 : vector<1x1024x3xf32> to vector<1024x3xf32>
    %c8 = arith.constant 8 : index
    %c0_2 = arith.constant 0 : index
    %2 = vector.load %arg15[%c8, %c0_2] : memref<1035x3xf32, #tpu.memory_space<vmem>>, vector<1024x3xf32>
    tpu.vector_store %arg15[%c8, %c0_2], %1 {strides = array<i32>} : memref<1035x3xf32, #tpu.memory_space<vmem>>, vector<1024x3xf32>,
    %3 = vector.extract_strided_slice %1 {offsets = [1, 0], sizes = [1, 3], strides = [1, 1]} : vector<1024x3xf32> to vector<1x3xf32>
    %c7 = arith.constant 7 : index
    %c0_3 = arith.constant 0 : index
    %4 = vector.load %arg15[%c7, %c0_3] : memref<1035x3xf32, #tpu.memory_space<vmem>>, vector<1x3xf32>
    tpu.vector_store %arg15[%c7, %c0_3], %3 {strides = array<i32>} : memref<1035x3xf32, #tpu.memory_space<vmem>>, vector<1x3xf32>,
    %5 = vector.extract_strided_slice %1 {offsets = [2, 0], sizes = [1, 3], strides = [1, 1]} : vector<1024x3xf32> to vector<1x3xf32>
    %c6 = arith.constant 6 : index
    %c0_4 = arith.constant 0 : index
    %6 = vector.load %arg15[%c6, %c0_4] : memref<1035x3xf32, #tpu.memory_space<vmem>>, vector<1x3xf32>
    tpu.vector_store %arg15[%c6, %c0_4], %5 {strides = array<i32>} : memref<1035x3xf32, #tpu.memory_space<vmem>>, vector<1x3xf32>,
    %7 = vector.extract_strided_slice %1 {offsets = [3, 0], sizes = [1, 3], strides = [1, 1]} : vector<1024x3xf32> to vector<1x3xf32>
    %c5 = arith.constant 5 : index
    %c0_5 = arith.constant 0 : index
    %8 = vector.load %arg15[%c5, %c0_5] : memref<1035x3xf32, #tpu.memory_space<vmem>>, vector<1x3xf32>
    tpu.vector_store %arg15[%c5, %c0_5], %7 {strides = array<i32>} : memref<1035x3xf32, #tpu.memory_space<vmem>>, vector<1x3xf32>,
    %9 = vector.extract_strided_slice %1 {offsets = [1022, 0], sizes = [1, 3], strides = [1, 1]} : vector<1024x3xf32> to vector<1x3xf32>
    %c1032 = arith.constant 1032 : index
    %c0_6 = arith.constant 0 : index
    %10 = vector.load %arg15[%c1032, %c0_6] : memref<1035x3xf32, #tpu.memory_space<vmem>>, vector<1x3xf32>
    tpu.vector_store %arg15[%c1032, %c0_6], %9 {strides = array<i32>} : memref<1035x3xf32, #tpu.memory_space<vmem>>, vector<1x3xf32>,
    %11 = vector.extract_strided_slice %1 {offsets = [1021, 0], sizes = [1, 3], strides = [1, 1]} : vector<1024x3xf32> to vector<1x3xf32>
    %c1033 = arith.constant 1033 : index
    %c0_7 = arith.constant 0 : index
    %12 = vector.load %arg15[%c1033, %c0_7] : memref<1035x3xf32, #tpu.memory_space<vmem>>, vector<1x3xf32>
    tpu.vector_store %arg15[%c1033, %c0_7], %11 {strides = array<i32>} : memref<1035x3xf32, #tpu.memory_space<vmem>>, vector<1x3xf32>,
    %13 = vector.extract_strided_slice %1 {offsets = [1020, 0], sizes = [1, 3], strides = [1, 1]} : vector<1024x3xf32> to vector<1x3xf32>
    %c1034 = arith.constant 1034 : index
    %c0_8 = arith.constant 0 : index
    %14 = vector.load %arg15[%c1034, %c0_8] : memref<1035x3xf32, #tpu.memory_space<vmem>>, vector<1x3xf32>
    tpu.vector_store %arg15[%c1034, %c0_8], %13 {strides = array<i32>} : memref<1035x3xf32, #tpu.memory_space<vmem>>, vector<1x3xf32>,
    %c5_9 = arith.constant 5 : index
    %c0_10 = arith.constant 0 : index
    %15 = tpu.strided_load %arg15[%c5_9, %c0_10] {strides = array<i32: 4, 1>} : memref<1035x3xf32, #tpu.memory_space<vmem>>, vector<256x3xf32>
    %c0_11 = arith.constant 0 : index
    %c0_12 = arith.constant 0 : index
    %c0_13 = arith.constant 0 : index
    %16 = vector.load %arg2[%c0_11, %c0_12, %c0_13] : memref<7x3x16xf32, #tpu.memory_space<vmem>>, vector<1x3x16xf32>
    %17 = vector.shape_cast %16 : vector<1x3x16xf32> to vector<3x16xf32>
    %cst = arith.constant dense<0.000000e+00> : vector<256x16xf32>
    %18 = tpu.matmul %15, %17, %cst {dimension_numbers = #tpu.dot_dimension_numbers<[1], [0], [0], [1], [0, 0, 1, 1], [], []>} : vector<256x3xf32>, vector<3x16xf32>, vector<256x16xf32> -> vector<256x16xf32>
    %c6_14 = arith.constant 6 : index
    %c0_15 = arith.constant 0 : index
    %19 = tpu.strided_load %arg15[%c6_14, %c0_15] {strides = array<i32: 4, 1>} : memref<1035x3xf32, #tpu.memory_space<vmem>>, vector<256x3xf32>
    %c1 = arith.constant 1 : index
    %c0_16 = arith.constant 0 : index
    %c0_17 = arith.constant 0 : index
    %20 = vector.load %arg2[%c1, %c0_16, %c0_17] : memref<7x3x16xf32, #tpu.memory_space<vmem>>, vector<1x3x16xf32>
    %21 = vector.shape_cast %20 : vector<1x3x16xf32> to vector<3x16xf32>
    %cst_18 = arith.constant dense<0.000000e+00> : vector<256x16xf32>
    %22 = tpu.matmul %19, %21, %cst_18 {dimension_numbers = #tpu.dot_dimension_numbers<[1], [0], [0], [1], [0, 0, 1, 1], [], []>} : vector<256x3xf32>, vector<3x16xf32>, vector<256x16xf32> -> vector<256x16xf32>
    %23 = arith.addf %18, %22 : vector<256x16xf32>
    %c7_19 = arith.constant 7 : index
    %c0_20 = arith.constant 0 : index
    %24 = tpu.strided_load %arg15[%c7_19, %c0_20] {strides = array<i32: 4, 1>} : memref<1035x3xf32, #tpu.memory_space<vmem>>, vector<256x3xf32>
    %c2 = arith.constant 2 : index
    %c0_21 = arith.constant 0 : index
    %c0_22 = arith.constant 0 : index
    %25 = vector.load %arg2[%c2, %c0_21, %c0_22] : memref<7x3x16xf32, #tpu.memory_space<vmem>>, vector<1x3x16xf32>
    %26 = vector.shape_cast %25 : vector<1x3x16xf32> to vector<3x16xf32>
    %cst_23 = arith.constant dense<0.000000e+00> : vector<256x16xf32>
    %27 = tpu.matmul %24, %26, %cst_23 {dimension_numbers = #tpu.dot_dimension_numbers<[1], [0], [0], [1], [0, 0, 1, 1], [], []>} : vector<256x3xf32>, vector<3x16xf32>, vector<256x16xf32> -> vector<256x16xf32>
    %28 = arith.addf %23, %27 : vector<256x16xf32>
    %c8_24 = arith.constant 8 : index
    %c0_25 = arith.constant 0 : index
    %29 = tpu.strided_load %arg15[%c8_24, %c0_25] {strides = array<i32: 4, 1>} : memref<1035x3xf32, #tpu.memory_space<vmem>>, vector<256x3xf32>
    %c3 = arith.constant 3 : index
    %c0_26 = arith.constant 0 : index
    %c0_27 = arith.constant 0 : index
    %30 = vector.load %arg2[%c3, %c0_26, %c0_27] : memref<7x3x16xf32, #tpu.memory_space<vmem>>, vector<1x3x16xf32>
    %31 = vector.shape_cast %30 : vector<1x3x16xf32> to vector<3x16xf32>
    %cst_28 = arith.constant dense<0.000000e+00> : vector<256x16xf32>
    %32 = tpu.matmul %29, %31, %cst_28 {dimension_numbers = #tpu.dot_dimension_numbers<[1], [0], [0], [1], [0, 0, 1, 1], [], []>} : vector<256x3xf32>, vector<3x16xf32>, vector<256x16xf32> -> vector<256x16xf32>
    %33 = arith.addf %28, %32 : vector<256x16xf32>
    %c9 = arith.constant 9 : index
    %c0_29 = arith.constant 0 : index
    %34 = tpu.strided_load %arg15[%c9, %c0_29] {strides = array<i32: 4, 1>} : memref<1035x3xf32, #tpu.memory_space<vmem>>, vector<256x3xf32>
    %c4 = arith.constant 4 : index
    %c0_30 = arith.constant 0 : index
    %c0_31 = arith.constant 0 : index
    %35 = vector.load %arg2[%c4, %c0_30, %c0_31] : memref<7x3x16xf32, #tpu.memory_space<vmem>>, vector<1x3x16xf32>
    %36 = vector.shape_cast %35 : vector<1x3x16xf32> to vector<3x16xf32>
    %cst_32 = arith.constant dense<0.000000e+00> : vector<256x16xf32>
    %37 = tpu.matmul %34, %36, %cst_32 {dimension_numbers = #tpu.dot_dimension_numbers<[1], [0], [0], [1], [0, 0, 1, 1], [], []>} : vector<256x3xf32>, vector<3x16xf32>, vector<256x16xf32> -> vector<256x16xf32>
    %38 = arith.addf %33, %37 : vector<256x16xf32>
    %c10 = arith.constant 10 : index
    %c0_33 = arith.constant 0 : index
    %39 = tpu.strided_load %arg15[%c10, %c0_33] {strides = array<i32: 4, 1>} : memref<1035x3xf32, #tpu.memory_space<vmem>>, vector<256x3xf32>
    %c5_34 = arith.constant 5 : index
    %c0_35 = arith.constant 0 : index
    %c0_36 = arith.constant 0 : index
    %40 = vector.load %arg2[%c5_34, %c0_35, %c0_36] : memref<7x3x16xf32, #tpu.memory_space<vmem>>, vector<1x3x16xf32>
    %41 = vector.shape_cast %40 : vector<1x3x16xf32> to vector<3x16xf32>
    %cst_37 = arith.constant dense<0.000000e+00> : vector<256x16xf32>
    %42 = tpu.matmul %39, %41, %cst_37 {dimension_numbers = #tpu.dot_dimension_numbers<[1], [0], [0], [1], [0, 0, 1, 1], [], []>} : vector<256x3xf32>, vector<3x16xf32>, vector<256x16xf32> -> vector<256x16xf32>
    %43 = arith.addf %38, %42 : vector<256x16xf32>
    %c11 = arith.constant 11 : index
    %c0_38 = arith.constant 0 : index
    %44 = tpu.strided_load %arg15[%c11, %c0_38] {strides = array<i32: 4, 1>} : memref<1035x3xf32, #tpu.memory_space<vmem>>, vector<256x3xf32>
    %c6_39 = arith.constant 6 : index
    %c0_40 = arith.constant 0 : index
    %c0_41 = arith.constant 0 : index
    %45 = vector.load %arg2[%c6_39, %c0_40, %c0_41] : memref<7x3x16xf32, #tpu.memory_space<vmem>>, vector<1x3x16xf32>
    %46 = vector.shape_cast %45 : vector<1x3x16xf32> to vector<3x16xf32>
    %cst_42 = arith.constant dense<0.000000e+00> : vector<256x16xf32>
    %47 = tpu.matmul %44, %46, %cst_42 {dimension_numbers = #tpu.dot_dimension_numbers<[1], [0], [0], [1], [0, 0, 1, 1], [], []>} : vector<256x3xf32>, vector<3x16xf32>, vector<256x16xf32> -> vector<256x16xf32>
    %48 = arith.addf %43, %47 : vector<256x16xf32>
    %c0_43 = arith.constant 0 : index
    %c0_44 = arith.constant 0 : index
    %49 = vector.load %arg3[%c0_43, %c0_44] : memref<1x16xf32, #tpu.memory_space<vmem>>, vector<1x16xf32>
    %50 = vector.broadcast %49 : vector<1x16xf32> to vector<256x16xf32>
    %51 = arith.addf %48, %50 : vector<256x16xf32>
    %cst_45 = arith.constant 0.000000e+00 : f32
    %52 = vector.broadcast %cst_45 : f32 to vector<256x16xf32>
    %53 = arith.maximumf %51, %52 : vector<256x16xf32>
    %c8_46 = arith.constant 8 : index
    %c0_47 = arith.constant 0 : index
    %54 = vector.load %arg16[%c8_46, %c0_47] : memref<267x16xf32, #tpu.memory_space<vmem>>, vector<256x16xf32>
    tpu.vector_store %arg16[%c8_46, %c0_47], %53 {strides = array<i32>} : memref<267x16xf32, #tpu.memory_space<vmem>>, vector<256x16xf32>,
    %55 = vector.extract_strided_slice %53 {offsets = [1, 0], sizes = [1, 16], strides = [1, 1]} : vector<256x16xf32> to vector<1x16xf32>
    %c7_48 = arith.constant 7 : index
    %c0_49 = arith.constant 0 : index
    %56 = vector.load %arg16[%c7_48, %c0_49] : memref<267x16xf32, #tpu.memory_space<vmem>>, vector<1x16xf32>
    tpu.vector_store %arg16[%c7_48, %c0_49], %55 {strides = array<i32>} : memref<267x16xf32, #tpu.memory_space<vmem>>, vector<1x16xf32>,
    %57 = vector.extract_strided_slice %53 {offsets = [2, 0], sizes = [1, 16], strides = [1, 1]} : vector<256x16xf32> to vector<1x16xf32>
    %c6_50 = arith.constant 6 : index
    %c0_51 = arith.constant 0 : index
    %58 = vector.load %arg16[%c6_50, %c0_51] : memref<267x16xf32, #tpu.memory_space<vmem>>, vector<1x16xf32>
    tpu.vector_store %arg16[%c6_50, %c0_51], %57 {strides = array<i32>} : memref<267x16xf32, #tpu.memory_space<vmem>>, vector<1x16xf32>,
    %59 = vector.extract_strided_slice %53 {offsets = [3, 0], sizes = [1, 16], strides = [1, 1]} : vector<256x16xf32> to vector<1x16xf32>
    %c5_52 = arith.constant 5 : index
    %c0_53 = arith.constant 0 : index
    %60 = vector.load %arg16[%c5_52, %c0_53] : memref<267x16xf32, #tpu.memory_space<vmem>>, vector<1x16xf32>
    tpu.vector_store %arg16[%c5_52, %c0_53], %59 {strides = array<i32>} : memref<267x16xf32, #tpu.memory_space<vmem>>, vector<1x16xf32>,
    %61 = vector.extract_strided_slice %53 {offsets = [254, 0], sizes = [1, 16], strides = [1, 1]} : vector<256x16xf32> to vector<1x16xf32>
    %c264 = arith.constant 264 : index
    %c0_54 = arith.constant 0 : index
    %62 = vector.load %arg16[%c264, %c0_54] : memref<267x16xf32, #tpu.memory_space<vmem>>, vector<1x16xf32>
    tpu.vector_store %arg16[%c264, %c0_54], %61 {strides = array<i32>} : memref<267x16xf32, #tpu.memory_space<vmem>>, vector<1x16xf32>,
    %63 = vector.extract_strided_slice %53 {offsets = [253, 0], sizes = [1, 16], strides = [1, 1]} : vector<256x16xf32> to vector<1x16xf32>
    %c265 = arith.constant 265 : index
    %c0_55 = arith.constant 0 : index
    %64 = vector.load %arg16[%c265, %c0_55] : memref<267x16xf32, #tpu.memory_space<vmem>>, vector<1x16xf32>
    tpu.vector_store %arg16[%c265, %c0_55], %63 {strides = array<i32>} : memref<267x16xf32, #tpu.memory_space<vmem>>, vector<1x16xf32>,
    %65 = vector.extract_strided_slice %53 {offsets = [252, 0], sizes = [1, 16], strides = [1, 1]} : vector<256x16xf32> to vector<1x16xf32>
    %c266 = arith.constant 266 : index
    %c0_56 = arith.constant 0 : index
    %66 = vector.load %arg16[%c266, %c0_56] : memref<267x16xf32, #tpu.memory_space<vmem>>, vector<1x16xf32>
    tpu.vector_store %arg16[%c266, %c0_56], %65 {strides = array<i32>} : memref<267x16xf32, #tpu.memory_space<vmem>>, vector<1x16xf32>,
    %c5_57 = arith.constant 5 : index
    %c0_58 = arith.constant 0 : index
    %67 = tpu.strided_load %arg16[%c5_57, %c0_58] {strides = array<i32: 4, 1>} : memref<267x16xf32, #tpu.memory_space<vmem>>, vector<64x16xf32>
    %c0_59 = arith.constant 0 : index
    %c0_60 = arith.constant 0 : index
    %c0_61 = arith.constant 0 : index
    %68 = vector.load %arg4[%c0_59, %c0_60, %c0_61] : memref<7x16x16xf32, #tpu.memory_space<vmem>>, vector<1x16x16xf32>
    %69 = vector.shape_cast %68 : vector<1x16x16xf32> to vector<16x16xf32>
    %cst_62 = arith.constant dense<0.000000e+00> : vector<64x16xf32>
    %70 = tpu.matmul %67, %69, %cst_62 {dimension_numbers = #tpu.dot_dimension_numbers<[1], [0], [0], [1], [0, 0, 1, 1], [], []>} : vector<64x16xf32>, vector<16x16xf32>, vector<64x16xf32> -> vector<64x16xf32>
    %c6_63 = arith.constant 6 : index
    %c0_64 = arith.constant 0 : index
    %71 = tpu.strided_load %arg16[%c6_63, %c0_64] {strides = array<i32: 4, 1>} : memref<267x16xf32, #tpu.memory_space<vmem>>, vector<64x16xf32>
    %c1_65 = arith.constant 1 : index
    %c0_66 = arith.constant 0 : index
    %c0_67 = arith.constant 0 : index
    %72 = vector.load %arg4[%c1_65, %c0_66, %c0_67] : memref<7x16x16xf32, #tpu.memory_space<vmem>>, vector<1x16x16xf32>
    %73 = vector.shape_cast %72 : vector<1x16x16xf32> to vector<16x16xf32>
    %cst_68 = arith.constant dense<0.000000e+00> : vector<64x16xf32>
    %74 = tpu.matmul %71, %73, %cst_68 {dimension_numbers = #tpu.dot_dimension_numbers<[1], [0], [0], [1], [0, 0, 1, 1], [], []>} : vector<64x16xf32>, vector<16x16xf32>, vector<64x16xf32> -> vector<64x16xf32>
    %75 = arith.addf %70, %74 : vector<64x16xf32>
    %c7_69 = arith.constant 7 : index
    %c0_70 = arith.constant 0 : index
    %76 = tpu.strided_load %arg16[%c7_69, %c0_70] {strides = array<i32: 4, 1>} : memref<267x16xf32, #tpu.memory_space<vmem>>, vector<64x16xf32>
    %c2_71 = arith.constant 2 : index
    %c0_72 = arith.constant 0 : index
    %c0_73 = arith.constant 0 : index
    %77 = vector.load %arg4[%c2_71, %c0_72, %c0_73] : memref<7x16x16xf32, #tpu.memory_space<vmem>>, vector<1x16x16xf32>
    %78 = vector.shape_cast %77 : vector<1x16x16xf32> to vector<16x16xf32>
    %cst_74 = arith.constant dense<0.000000e+00> : vector<64x16xf32>
    %79 = tpu.matmul %76, %78, %cst_74 {dimension_numbers = #tpu.dot_dimension_numbers<[1], [0], [0], [1], [0, 0, 1, 1], [], []>} : vector<64x16xf32>, vector<16x16xf32>, vector<64x16xf32> -> vector<64x16xf32>
    %80 = arith.addf %75, %79 : vector<64x16xf32>
    %c8_75 = arith.constant 8 : index
    %c0_76 = arith.constant 0 : index
    %81 = tpu.strided_load %arg16[%c8_75, %c0_76] {strides = array<i32: 4, 1>} : memref<267x16xf32, #tpu.memory_space<vmem>>, vector<64x16xf32>
    %c3_77 = arith.constant 3 : index
    %c0_78 = arith.constant 0 : index
    %c0_79 = arith.constant 0 : index
    %82 = vector.load %arg4[%c3_77, %c0_78, %c0_79] : memref<7x16x16xf32, #tpu.memory_space<vmem>>, vector<1x16x16xf32>
    %83 = vector.shape_cast %82 : vector<1x16x16xf32> to vector<16x16xf32>
    %cst_80 = arith.constant dense<0.000000e+00> : vector<64x16xf32>
    %84 = tpu.matmul %81, %83, %cst_80 {dimension_numbers = #tpu.dot_dimension_numbers<[1], [0], [0], [1], [0, 0, 1, 1], [], []>} : vector<64x16xf32>, vector<16x16xf32>, vector<64x16xf32> -> vector<64x16xf32>
    %85 = arith.addf %80, %84 : vector<64x16xf32>
    %c9_81 = arith.constant 9 : index
    %c0_82 = arith.constant 0 : index
    %86 = tpu.strided_load %arg16[%c9_81, %c0_82] {strides = array<i32: 4, 1>} : memref<267x16xf32, #tpu.memory_space<vmem>>, vector<64x16xf32>
    %c4_83 = arith.constant 4 : index
    %c0_84 = arith.constant 0 : index
    %c0_85 = arith.constant 0 : index
    %87 = vector.load %arg4[%c4_83, %c0_84, %c0_85] : memref<7x16x16xf32, #tpu.memory_space<vmem>>, vector<1x16x16xf32>
    %88 = vector.shape_cast %87 : vector<1x16x16xf32> to vector<16x16xf32>
    %cst_86 = arith.constant dense<0.000000e+00> : vector<64x16xf32>
    %89 = tpu.matmul %86, %88, %cst_86 {dimension_numbers = #tpu.dot_dimension_numbers<[1], [0], [0], [1], [0, 0, 1, 1], [], []>} : vector<64x16xf32>, vector<16x16xf32>, vector<64x16xf32> -> vector<64x16xf32>
    %90 = arith.addf %85, %89 : vector<64x16xf32>
    %c10_87 = arith.constant 10 : index
    %c0_88 = arith.constant 0 : index
    %91 = tpu.strided_load %arg16[%c10_87, %c0_88] {strides = array<i32: 4, 1>} : memref<267x16xf32, #tpu.memory_space<vmem>>, vector<64x16xf32>
    %c5_89 = arith.constant 5 : index
    %c0_90 = arith.constant 0 : index
    %c0_91 = arith.constant 0 : index
    %92 = vector.load %arg4[%c5_89, %c0_90, %c0_91] : memref<7x16x16xf32, #tpu.memory_space<vmem>>, vector<1x16x16xf32>
    %93 = vector.shape_cast %92 : vector<1x16x16xf32> to vector<16x16xf32>
    %cst_92 = arith.constant dense<0.000000e+00> : vector<64x16xf32>
    %94 = tpu.matmul %91, %93, %cst_92 {dimension_numbers = #tpu.dot_dimension_numbers<[1], [0], [0], [1], [0, 0, 1, 1], [], []>} : vector<64x16xf32>, vector<16x16xf32>, vector<64x16xf32> -> vector<64x16xf32>
    %95 = arith.addf %90, %94 : vector<64x16xf32>
    %c11_93 = arith.constant 11 : index
    %c0_94 = arith.constant 0 : index
    %96 = tpu.strided_load %arg16[%c11_93, %c0_94] {strides = array<i32: 4, 1>} : memref<267x16xf32, #tpu.memory_space<vmem>>, vector<64x16xf32>
    %c6_95 = arith.constant 6 : index
    %c0_96 = arith.constant 0 : index
    %c0_97 = arith.constant 0 : index
    %97 = vector.load %arg4[%c6_95, %c0_96, %c0_97] : memref<7x16x16xf32, #tpu.memory_space<vmem>>, vector<1x16x16xf32>
    %98 = vector.shape_cast %97 : vector<1x16x16xf32> to vector<16x16xf32>
    %cst_98 = arith.constant dense<0.000000e+00> : vector<64x16xf32>
    %99 = tpu.matmul %96, %98, %cst_98 {dimension_numbers = #tpu.dot_dimension_numbers<[1], [0], [0], [1], [0, 0, 1, 1], [], []>} : vector<64x16xf32>, vector<16x16xf32>, vector<64x16xf32> -> vector<64x16xf32>
    %100 = arith.addf %95, %99 : vector<64x16xf32>
    %c0_99 = arith.constant 0 : index
    %c0_100 = arith.constant 0 : index
    %101 = vector.load %arg5[%c0_99, %c0_100] : memref<1x16xf32, #tpu.memory_space<vmem>>, vector<1x16xf32>
    %102 = vector.broadcast %101 : vector<1x16xf32> to vector<64x16xf32>
    %103 = arith.addf %100, %102 : vector<64x16xf32>
    %cst_101 = arith.constant 0.000000e+00 : f32
    %104 = vector.broadcast %cst_101 : f32 to vector<64x16xf32>
    %105 = arith.maximumf %103, %104 : vector<64x16xf32>
    %c8_102 = arith.constant 8 : index
    %c0_103 = arith.constant 0 : index
    %106 = vector.load %arg17[%c8_102, %c0_103] : memref<75x16xf32, #tpu.memory_space<vmem>>, vector<64x16xf32>
    tpu.vector_store %arg17[%c8_102, %c0_103], %105 {strides = array<i32>} : memref<75x16xf32, #tpu.memory_space<vmem>>, vector<64x16xf32>,
    %107 = vector.extract_strided_slice %105 {offsets = [1, 0], sizes = [1, 16], strides = [1, 1]} : vector<64x16xf32> to vector<1x16xf32>
    %c7_104 = arith.constant 7 : index
    %c0_105 = arith.constant 0 : index
    %108 = vector.load %arg17[%c7_104, %c0_105] : memref<75x16xf32, #tpu.memory_space<vmem>>, vector<1x16xf32>
    tpu.vector_store %arg17[%c7_104, %c0_105], %107 {strides = array<i32>} : memref<75x16xf32, #tpu.memory_space<vmem>>, vector<1x16xf32>,
    %109 = vector.extract_strided_slice %105 {offsets = [2, 0], sizes = [1, 16], strides = [1, 1]} : vector<64x16xf32> to vector<1x16xf32>
    %c6_106 = arith.constant 6 : index
    %c0_107 = arith.constant 0 : index
    %110 = vector.load %arg17[%c6_106, %c0_107] : memref<75x16xf32, #tpu.memory_space<vmem>>, vector<1x16xf32>
    tpu.vector_store %arg17[%c6_106, %c0_107], %109 {strides = array<i32>} : memref<75x16xf32, #tpu.memory_space<vmem>>, vector<1x16xf32>,
    %111 = vector.extract_strided_slice %105 {offsets = [3, 0], sizes = [1, 16], strides = [1, 1]} : vector<64x16xf32> to vector<1x16xf32>
    %c5_108 = arith.constant 5 : index
    %c0_109 = arith.constant 0 : index
    %112 = vector.load %arg17[%c5_108, %c0_109] : memref<75x16xf32, #tpu.memory_space<vmem>>, vector<1x16xf32>
    tpu.vector_store %arg17[%c5_108, %c0_109], %111 {strides = array<i32>} : memref<75x16xf32, #tpu.memory_space<vmem>>, vector<1x16xf32>,
    %113 = vector.extract_strided_slice %105 {offsets = [62, 0], sizes = [1, 16], strides = [1, 1]} : vector<64x16xf32> to vector<1x16xf32>
    %c72 = arith.constant 72 : index
    %c0_110 = arith.constant 0 : index
    %114 = vector.load %arg17[%c72, %c0_110] : memref<75x16xf32, #tpu.memory_space<vmem>>, vector<1x16xf32>
    tpu.vector_store %arg17[%c72, %c0_110], %113 {strides = array<i32>} : memref<75x16xf32, #tpu.memory_space<vmem>>, vector<1x16xf32>,
    %115 = vector.extract_strided_slice %105 {offsets = [61, 0], sizes = [1, 16], strides = [1, 1]} : vector<64x16xf32> to vector<1x16xf32>
    %c73 = arith.constant 73 : index
    %c0_111 = arith.constant 0 : index
    %116 = vector.load %arg17[%c73, %c0_111] : memref<75x16xf32, #tpu.memory_space<vmem>>, vector<1x16xf32>
    tpu.vector_store %arg17[%c73, %c0_111], %115 {strides = array<i32>} : memref<75x16xf32, #tpu.memory_space<vmem>>, vector<1x16xf32>,
    %117 = vector.extract_strided_slice %105 {offsets = [60, 0], sizes = [1, 16], strides = [1, 1]} : vector<64x16xf32> to vector<1x16xf32>
    %c74 = arith.constant 74 : index
    %c0_112 = arith.constant 0 : index
    %118 = vector.load %arg17[%c74, %c0_112] : memref<75x16xf32, #tpu.memory_space<vmem>>, vector<1x16xf32>
    tpu.vector_store %arg17[%c74, %c0_112], %117 {strides = array<i32>} : memref<75x16xf32, #tpu.memory_space<vmem>>, vector<1x16xf32>,
    %c5_113 = arith.constant 5 : index
    %c0_114 = arith.constant 0 : index
    %119 = vector.load %arg17[%c5_113, %c0_114] : memref<75x16xf32, #tpu.memory_space<vmem>>, vector<64x16xf32>
    %c0_115 = arith.constant 0 : index
    %c0_116 = arith.constant 0 : index
    %c0_117 = arith.constant 0 : index
    %120 = vector.load %arg6[%c0_115, %c0_116, %c0_117] : memref<7x16x16xf32, #tpu.memory_space<vmem>>, vector<1x16x16xf32>
    %121 = vector.shape_cast %120 : vector<1x16x16xf32> to vector<16x16xf32>
    %cst_118 = arith.constant dense<0.000000e+00> : vector<64x16xf32>
    %122 = tpu.matmul %119, %121, %cst_118 {dimension_numbers = #tpu.dot_dimension_numbers<[1], [0], [0], [1], [0, 0, 1, 1], [], []>} : vector<64x16xf32>, vector<16x16xf32>, vector<64x16xf32> -> vector<64x16xf32>
    %c6_119 = arith.constant 6 : index
    %c0_120 = arith.constant 0 : index
    %123 = vector.load %arg17[%c6_119, %c0_120] : memref<75x16xf32, #tpu.memory_space<vmem>>, vector<64x16xf32>
    %c1_121 = arith.constant 1 : index
    %c0_122 = arith.constant 0 : index
    %c0_123 = arith.constant 0 : index
    %124 = vector.load %arg6[%c1_121, %c0_122, %c0_123] : memref<7x16x16xf32, #tpu.memory_space<vmem>>, vector<1x16x16xf32>
    %125 = vector.shape_cast %124 : vector<1x16x16xf32> to vector<16x16xf32>
    %cst_124 = arith.constant dense<0.000000e+00> : vector<64x16xf32>
    %126 = tpu.matmul %123, %125, %cst_124 {dimension_numbers = #tpu.dot_dimension_numbers<[1], [0], [0], [1], [0, 0, 1, 1], [], []>} : vector<64x16xf32>, vector<16x16xf32>, vector<64x16xf32> -> vector<64x16xf32>
    %127 = arith.addf %122, %126 : vector<64x16xf32>
    %c7_125 = arith.constant 7 : index
    %c0_126 = arith.constant 0 : index
    %128 = vector.load %arg17[%c7_125, %c0_126] : memref<75x16xf32, #tpu.memory_space<vmem>>, vector<64x16xf32>
    %c2_127 = arith.constant 2 : index
    %c0_128 = arith.constant 0 : index
    %c0_129 = arith.constant 0 : index
    %129 = vector.load %arg6[%c2_127, %c0_128, %c0_129] : memref<7x16x16xf32, #tpu.memory_space<vmem>>, vector<1x16x16xf32>
    %130 = vector.shape_cast %129 : vector<1x16x16xf32> to vector<16x16xf32>
    %cst_130 = arith.constant dense<0.000000e+00> : vector<64x16xf32>
    %131 = tpu.matmul %128, %130, %cst_130 {dimension_numbers = #tpu.dot_dimension_numbers<[1], [0], [0], [1], [0, 0, 1, 1], [], []>} : vector<64x16xf32>, vector<16x16xf32>, vector<64x16xf32> -> vector<64x16xf32>
    %132 = arith.addf %127, %131 : vector<64x16xf32>
    %c8_131 = arith.constant 8 : index
    %c0_132 = arith.constant 0 : index
    %133 = vector.load %arg17[%c8_131, %c0_132] : memref<75x16xf32, #tpu.memory_space<vmem>>, vector<64x16xf32>
    %c3_133 = arith.constant 3 : index
    %c0_134 = arith.constant 0 : index
    %c0_135 = arith.constant 0 : index
    %134 = vector.load %arg6[%c3_133, %c0_134, %c0_135] : memref<7x16x16xf32, #tpu.memory_space<vmem>>, vector<1x16x16xf32>
    %135 = vector.shape_cast %134 : vector<1x16x16xf32> to vector<16x16xf32>
    %cst_136 = arith.constant dense<0.000000e+00> : vector<64x16xf32>
    %136 = tpu.matmul %133, %135, %cst_136 {dimension_numbers = #tpu.dot_dimension_numbers<[1], [0], [0], [1], [0, 0, 1, 1], [], []>} : vector<64x16xf32>, vector<16x16xf32>, vector<64x16xf32> -> vector<64x16xf32>
    %137 = arith.addf %132, %136 : vector<64x16xf32>
    %c9_137 = arith.constant 9 : index
    %c0_138 = arith.constant 0 : index
    %138 = vector.load %arg17[%c9_137, %c0_138] : memref<75x16xf32, #tpu.memory_space<vmem>>, vector<64x16xf32>
    %c4_139 = arith.constant 4 : index
    %c0_140 = arith.constant 0 : index
    %c0_141 = arith.constant 0 : index
    %139 = vector.load %arg6[%c4_139, %c0_140, %c0_141] : memref<7x16x16xf32, #tpu.memory_space<vmem>>, vector<1x16x16xf32>
    %140 = vector.shape_cast %139 : vector<1x16x16xf32> to vector<16x16xf32>
    %cst_142 = arith.constant dense<0.000000e+00> : vector<64x16xf32>
    %141 = tpu.matmul %138, %140, %cst_142 {dimension_numbers = #tpu.dot_dimension_numbers<[1], [0], [0], [1], [0, 0, 1, 1], [], []>} : vector<64x16xf32>, vector<16x16xf32>, vector<64x16xf32> -> vector<64x16xf32>
    %142 = arith.addf %137, %141 : vector<64x16xf32>
    %c10_143 = arith.constant 10 : index
    %c0_144 = arith.constant 0 : index
    %143 = vector.load %arg17[%c10_143, %c0_144] : memref<75x16xf32, #tpu.memory_space<vmem>>, vector<64x16xf32>
    %c5_145 = arith.constant 5 : index
    %c0_146 = arith.constant 0 : index
    %c0_147 = arith.constant 0 : index
    %144 = vector.load %arg6[%c5_145, %c0_146, %c0_147] : memref<7x16x16xf32, #tpu.memory_space<vmem>>, vector<1x16x16xf32>
    %145 = vector.shape_cast %144 : vector<1x16x16xf32> to vector<16x16xf32>
    %cst_148 = arith.constant dense<0.000000e+00> : vector<64x16xf32>
    %146 = tpu.matmul %143, %145, %cst_148 {dimension_numbers = #tpu.dot_dimension_numbers<[1], [0], [0], [1], [0, 0, 1, 1], [], []>} : vector<64x16xf32>, vector<16x16xf32>, vector<64x16xf32> -> vector<64x16xf32>
    %147 = arith.addf %142, %146 : vector<64x16xf32>
    %c11_149 = arith.constant 11 : index
    %c0_150 = arith.constant 0 : index
    %148 = vector.load %arg17[%c11_149, %c0_150] : memref<75x16xf32, #tpu.memory_space<vmem>>, vector<64x16xf32>
    %c6_151 = arith.constant 6 : index
    %c0_152 = arith.constant 0 : index
    %c0_153 = arith.constant 0 : index
    %149 = vector.load %arg6[%c6_151, %c0_152, %c0_153] : memref<7x16x16xf32, #tpu.memory_space<vmem>>, vector<1x16x16xf32>
    %150 = vector.shape_cast %149 : vector<1x16x16xf32> to vector<16x16xf32>
    %cst_154 = arith.constant dense<0.000000e+00> : vector<64x16xf32>
    %151 = tpu.matmul %148, %150, %cst_154 {dimension_numbers = #tpu.dot_dimension_numbers<[1], [0], [0], [1], [0, 0, 1, 1], [], []>} : vector<64x16xf32>, vector<16x16xf32>, vector<64x16xf32> -> vector<64x16xf32>
    %152 = arith.addf %147, %151 : vector<64x16xf32>
    %c0_155 = arith.constant 0 : index
    %c0_156 = arith.constant 0 : index
    %153 = vector.load %arg7[%c0_155, %c0_156] : memref<1x16xf32, #tpu.memory_space<vmem>>, vector<1x16xf32>
    %154 = vector.broadcast %153 : vector<1x16xf32> to vector<64x16xf32>
    %155 = arith.addf %152, %154 : vector<64x16xf32>
    %cst_157 = arith.constant 0.000000e+00 : f32
    %156 = vector.broadcast %cst_157 : f32 to vector<64x16xf32>
    %157 = arith.maximumf %155, %156 : vector<64x16xf32>
    %c8_158 = arith.constant 8 : index
    %c0_159 = arith.constant 0 : index
    %158 = vector.load %arg18[%c8_158, %c0_159] : memref<75x16xf32, #tpu.memory_space<vmem>>, vector<64x16xf32>
    tpu.vector_store %arg18[%c8_158, %c0_159], %157 {strides = array<i32>} : memref<75x16xf32, #tpu.memory_space<vmem>>, vector<64x16xf32>,
    %159 = vector.extract_strided_slice %157 {offsets = [1, 0], sizes = [1, 16], strides = [1, 1]} : vector<64x16xf32> to vector<1x16xf32>
    %c7_160 = arith.constant 7 : index
    %c0_161 = arith.constant 0 : index
    %160 = vector.load %arg18[%c7_160, %c0_161] : memref<75x16xf32, #tpu.memory_space<vmem>>, vector<1x16xf32>
    tpu.vector_store %arg18[%c7_160, %c0_161], %159 {strides = array<i32>} : memref<75x16xf32, #tpu.memory_space<vmem>>, vector<1x16xf32>,
    %161 = vector.extract_strided_slice %157 {offsets = [2, 0], sizes = [1, 16], strides = [1, 1]} : vector<64x16xf32> to vector<1x16xf32>
    %c6_162 = arith.constant 6 : index
    %c0_163 = arith.constant 0 : index
    %162 = vector.load %arg18[%c6_162, %c0_163] : memref<75x16xf32, #tpu.memory_space<vmem>>, vector<1x16xf32>
    tpu.vector_store %arg18[%c6_162, %c0_163], %161 {strides = array<i32>} : memref<75x16xf32, #tpu.memory_space<vmem>>, vector<1x16xf32>,
    %163 = vector.extract_strided_slice %157 {offsets = [3, 0], sizes = [1, 16], strides = [1, 1]} : vector<64x16xf32> to vector<1x16xf32>
    %c5_164 = arith.constant 5 : index
    %c0_165 = arith.constant 0 : index
    %164 = vector.load %arg18[%c5_164, %c0_165] : memref<75x16xf32, #tpu.memory_space<vmem>>, vector<1x16xf32>
    tpu.vector_store %arg18[%c5_164, %c0_165], %163 {strides = array<i32>} : memref<75x16xf32, #tpu.memory_space<vmem>>, vector<1x16xf32>,
    %165 = vector.extract_strided_slice %157 {offsets = [62, 0], sizes = [1, 16], strides = [1, 1]} : vector<64x16xf32> to vector<1x16xf32>
    %c72_166 = arith.constant 72 : index
    %c0_167 = arith.constant 0 : index
    %166 = vector.load %arg18[%c72_166, %c0_167] : memref<75x16xf32, #tpu.memory_space<vmem>>, vector<1x16xf32>
    tpu.vector_store %arg18[%c72_166, %c0_167], %165 {strides = array<i32>} : memref<75x16xf32, #tpu.memory_space<vmem>>, vector<1x16xf32>,
    %167 = vector.extract_strided_slice %157 {offsets = [61, 0], sizes = [1, 16], strides = [1, 1]} : vector<64x16xf32> to vector<1x16xf32>
    %c73_168 = arith.constant 73 : index
    %c0_169 = arith.constant 0 : index
    %168 = vector.load %arg18[%c73_168, %c0_169] : memref<75x16xf32, #tpu.memory_space<vmem>>, vector<1x16xf32>
    tpu.vector_store %arg18[%c73_168, %c0_169], %167 {strides = array<i32>} : memref<75x16xf32, #tpu.memory_space<vmem>>, vector<1x16xf32>,
    %169 = vector.extract_strided_slice %157 {offsets = [60, 0], sizes = [1, 16], strides = [1, 1]} : vector<64x16xf32> to vector<1x16xf32>
    %c74_170 = arith.constant 74 : index
    %c0_171 = arith.constant 0 : index
    %170 = vector.load %arg18[%c74_170, %c0_171] : memref<75x16xf32, #tpu.memory_space<vmem>>, vector<1x16xf32>
    tpu.vector_store %arg18[%c74_170, %c0_171], %169 {strides = array<i32>} : memref<75x16xf32, #tpu.memory_space<vmem>>, vector<1x16xf32>,
    %c5_172 = arith.constant 5 : index
    %c0_173 = arith.constant 0 : index
    %171 = tpu.strided_load %arg18[%c5_172, %c0_173] {strides = array<i32: 4, 1>} : memref<75x16xf32, #tpu.memory_space<vmem>>, vector<16x16xf32>
    %c0_174 = arith.constant 0 : index
    %c0_175 = arith.constant 0 : index
    %c0_176 = arith.constant 0 : index
    %172 = vector.load %arg8[%c0_174, %c0_175, %c0_176] : memref<7x16x32xf32, #tpu.memory_space<vmem>>, vector<1x16x32xf32>
    %173 = vector.shape_cast %172 : vector<1x16x32xf32> to vector<16x32xf32>
    %cst_177 = arith.constant dense<0.000000e+00> : vector<16x32xf32>
    %174 = tpu.matmul %171, %173, %cst_177 {dimension_numbers = #tpu.dot_dimension_numbers<[1], [0], [0], [1], [0, 0, 1, 1], [], []>} : vector<16x16xf32>, vector<16x32xf32>, vector<16x32xf32> -> vector<16x32xf32>
    %c6_178 = arith.constant 6 : index
    %c0_179 = arith.constant 0 : index
    %175 = tpu.strided_load %arg18[%c6_178, %c0_179] {strides = array<i32: 4, 1>} : memref<75x16xf32, #tpu.memory_space<vmem>>, vector<16x16xf32>
    %c1_180 = arith.constant 1 : index
    %c0_181 = arith.constant 0 : index
    %c0_182 = arith.constant 0 : index
    %176 = vector.load %arg8[%c1_180, %c0_181, %c0_182] : memref<7x16x32xf32, #tpu.memory_space<vmem>>, vector<1x16x32xf32>
    %177 = vector.shape_cast %176 : vector<1x16x32xf32> to vector<16x32xf32>
    %cst_183 = arith.constant dense<0.000000e+00> : vector<16x32xf32>
    %178 = tpu.matmul %175, %177, %cst_183 {dimension_numbers = #tpu.dot_dimension_numbers<[1], [0], [0], [1], [0, 0, 1, 1], [], []>} : vector<16x16xf32>, vector<16x32xf32>, vector<16x32xf32> -> vector<16x32xf32>
    %179 = arith.addf %174, %178 : vector<16x32xf32>
    %c7_184 = arith.constant 7 : index
    %c0_185 = arith.constant 0 : index
    %180 = tpu.strided_load %arg18[%c7_184, %c0_185] {strides = array<i32: 4, 1>} : memref<75x16xf32, #tpu.memory_space<vmem>>, vector<16x16xf32>
    %c2_186 = arith.constant 2 : index
    %c0_187 = arith.constant 0 : index
    %c0_188 = arith.constant 0 : index
    %181 = vector.load %arg8[%c2_186, %c0_187, %c0_188] : memref<7x16x32xf32, #tpu.memory_space<vmem>>, vector<1x16x32xf32>
    %182 = vector.shape_cast %181 : vector<1x16x32xf32> to vector<16x32xf32>
    %cst_189 = arith.constant dense<0.000000e+00> : vector<16x32xf32>
    %183 = tpu.matmul %180, %182, %cst_189 {dimension_numbers = #tpu.dot_dimension_numbers<[1], [0], [0], [1], [0, 0, 1, 1], [], []>} : vector<16x16xf32>, vector<16x32xf32>, vector<16x32xf32> -> vector<16x32xf32>
    %184 = arith.addf %179, %183 : vector<16x32xf32>
    %c8_190 = arith.constant 8 : index
    %c0_191 = arith.constant 0 : index
    %185 = tpu.strided_load %arg18[%c8_190, %c0_191] {strides = array<i32: 4, 1>} : memref<75x16xf32, #tpu.memory_space<vmem>>, vector<16x16xf32>
    %c3_192 = arith.constant 3 : index
    %c0_193 = arith.constant 0 : index
    %c0_194 = arith.constant 0 : index
    %186 = vector.load %arg8[%c3_192, %c0_193, %c0_194] : memref<7x16x32xf32, #tpu.memory_space<vmem>>, vector<1x16x32xf32>
    %187 = vector.shape_cast %186 : vector<1x16x32xf32> to vector<16x32xf32>
    %cst_195 = arith.constant dense<0.000000e+00> : vector<16x32xf32>
    %188 = tpu.matmul %185, %187, %cst_195 {dimension_numbers = #tpu.dot_dimension_numbers<[1], [0], [0], [1], [0, 0, 1, 1], [], []>} : vector<16x16xf32>, vector<16x32xf32>, vector<16x32xf32> -> vector<16x32xf32>
    %189 = arith.addf %184, %188 : vector<16x32xf32>
    %c9_196 = arith.constant 9 : index
    %c0_197 = arith.constant 0 : index
    %190 = tpu.strided_load %arg18[%c9_196, %c0_197] {strides = array<i32: 4, 1>} : memref<75x16xf32, #tpu.memory_space<vmem>>, vector<16x16xf32>
    %c4_198 = arith.constant 4 : index
    %c0_199 = arith.constant 0 : index
    %c0_200 = arith.constant 0 : index
    %191 = vector.load %arg8[%c4_198, %c0_199, %c0_200] : memref<7x16x32xf32, #tpu.memory_space<vmem>>, vector<1x16x32xf32>
    %192 = vector.shape_cast %191 : vector<1x16x32xf32> to vector<16x32xf32>
    %cst_201 = arith.constant dense<0.000000e+00> : vector<16x32xf32>
    %193 = tpu.matmul %190, %192, %cst_201 {dimension_numbers = #tpu.dot_dimension_numbers<[1], [0], [0], [1], [0, 0, 1, 1], [], []>} : vector<16x16xf32>, vector<16x32xf32>, vector<16x32xf32> -> vector<16x32xf32>
    %194 = arith.addf %189, %193 : vector<16x32xf32>
    %c10_202 = arith.constant 10 : index
    %c0_203 = arith.constant 0 : index
    %195 = tpu.strided_load %arg18[%c10_202, %c0_203] {strides = array<i32: 4, 1>} : memref<75x16xf32, #tpu.memory_space<vmem>>, vector<16x16xf32>
    %c5_204 = arith.constant 5 : index
    %c0_205 = arith.constant 0 : index
    %c0_206 = arith.constant 0 : index
    %196 = vector.load %arg8[%c5_204, %c0_205, %c0_206] : memref<7x16x32xf32, #tpu.memory_space<vmem>>, vector<1x16x32xf32>
    %197 = vector.shape_cast %196 : vector<1x16x32xf32> to vector<16x32xf32>
    %cst_207 = arith.constant dense<0.000000e+00> : vector<16x32xf32>
    %198 = tpu.matmul %195, %197, %cst_207 {dimension_numbers = #tpu.dot_dimension_numbers<[1], [0], [0], [1], [0, 0, 1, 1], [], []>} : vector<16x16xf32>, vector<16x32xf32>, vector<16x32xf32> -> vector<16x32xf32>
    %199 = arith.addf %194, %198 : vector<16x32xf32>
    %c11_208 = arith.constant 11 : index
    %c0_209 = arith.constant 0 : index
    %200 = tpu.strided_load %arg18[%c11_208, %c0_209] {strides = array<i32: 4, 1>} : memref<75x16xf32, #tpu.memory_space<vmem>>, vector<16x16xf32>
    %c6_210 = arith.constant 6 : index
    %c0_211 = arith.constant 0 : index
    %c0_212 = arith.constant 0 : index
    %201 = vector.load %arg8[%c6_210, %c0_211, %c0_212] : memref<7x16x32xf32, #tpu.memory_space<vmem>>, vector<1x16x32xf32>
    %202 = vector.shape_cast %201 : vector<1x16x32xf32> to vector<16x32xf32>
    %cst_213 = arith.constant dense<0.000000e+00> : vector<16x32xf32>
    %203 = tpu.matmul %200, %202, %cst_213 {dimension_numbers = #tpu.dot_dimension_numbers<[1], [0], [0], [1], [0, 0, 1, 1], [], []>} : vector<16x16xf32>, vector<16x32xf32>, vector<16x32xf32> -> vector<16x32xf32>
    %204 = arith.addf %199, %203 : vector<16x32xf32>
    %c0_214 = arith.constant 0 : index
    %c0_215 = arith.constant 0 : index
    %205 = vector.load %arg9[%c0_214, %c0_215] : memref<1x32xf32, #tpu.memory_space<vmem>>, vector<1x32xf32>
    %206 = vector.broadcast %205 : vector<1x32xf32> to vector<16x32xf32>
    %207 = arith.addf %204, %206 : vector<16x32xf32>
    %cst_216 = arith.constant 0.000000e+00 : f32
    %208 = vector.broadcast %cst_216 : f32 to vector<16x32xf32>
    %209 = arith.maximumf %207, %208 : vector<16x32xf32>
    %c8_217 = arith.constant 8 : index
    %c0_218 = arith.constant 0 : index
    %210 = vector.load %arg19[%c8_217, %c0_218] : memref<27x32xf32, #tpu.memory_space<vmem>>, vector<16x32xf32>
    tpu.vector_store %arg19[%c8_217, %c0_218], %209 {strides = array<i32>} : memref<27x32xf32, #tpu.memory_space<vmem>>, vector<16x32xf32>,
    %211 = vector.extract_strided_slice %209 {offsets = [1, 0], sizes = [1, 32], strides = [1, 1]} : vector<16x32xf32> to vector<1x32xf32>
    %c7_219 = arith.constant 7 : index
    %c0_220 = arith.constant 0 : index
    %212 = vector.load %arg19[%c7_219, %c0_220] : memref<27x32xf32, #tpu.memory_space<vmem>>, vector<1x32xf32>
    tpu.vector_store %arg19[%c7_219, %c0_220], %211 {strides = array<i32>} : memref<27x32xf32, #tpu.memory_space<vmem>>, vector<1x32xf32>,
    %213 = vector.extract_strided_slice %209 {offsets = [2, 0], sizes = [1, 32], strides = [1, 1]} : vector<16x32xf32> to vector<1x32xf32>
    %c6_221 = arith.constant 6 : index
    %c0_222 = arith.constant 0 : index
    %214 = vector.load %arg19[%c6_221, %c0_222] : memref<27x32xf32, #tpu.memory_space<vmem>>, vector<1x32xf32>
    tpu.vector_store %arg19[%c6_221, %c0_222], %213 {strides = array<i32>} : memref<27x32xf32, #tpu.memory_space<vmem>>, vector<1x32xf32>,
    %215 = vector.extract_strided_slice %209 {offsets = [3, 0], sizes = [1, 32], strides = [1, 1]} : vector<16x32xf32> to vector<1x32xf32>
    %c5_223 = arith.constant 5 : index
    %c0_224 = arith.constant 0 : index
    %216 = vector.load %arg19[%c5_223, %c0_224] : memref<27x32xf32, #tpu.memory_space<vmem>>, vector<1x32xf32>
    tpu.vector_store %arg19[%c5_223, %c0_224], %215 {strides = array<i32>} : memref<27x32xf32, #tpu.memory_space<vmem>>, vector<1x32xf32>,
    %217 = vector.extract_strided_slice %209 {offsets = [14, 0], sizes = [1, 32], strides = [1, 1]} : vector<16x32xf32> to vector<1x32xf32>
    %c24 = arith.constant 24 : index
    %c0_225 = arith.constant 0 : index
    %218 = vector.load %arg19[%c24, %c0_225] : memref<27x32xf32, #tpu.memory_space<vmem>>, vector<1x32xf32>
    tpu.vector_store %arg19[%c24, %c0_225], %217 {strides = array<i32>} : memref<27x32xf32, #tpu.memory_space<vmem>>, vector<1x32xf32>,
    %219 = vector.extract_strided_slice %209 {offsets = [13, 0], sizes = [1, 32], strides = [1, 1]} : vector<16x32xf32> to vector<1x32xf32>
    %c25 = arith.constant 25 : index
    %c0_226 = arith.constant 0 : index
    %220 = vector.load %arg19[%c25, %c0_226] : memref<27x32xf32, #tpu.memory_space<vmem>>, vector<1x32xf32>
    tpu.vector_store %arg19[%c25, %c0_226], %219 {strides = array<i32>} : memref<27x32xf32, #tpu.memory_space<vmem>>, vector<1x32xf32>,
    %221 = vector.extract_strided_slice %209 {offsets = [12, 0], sizes = [1, 32], strides = [1, 1]} : vector<16x32xf32> to vector<1x32xf32>
    %c26 = arith.constant 26 : index
    %c0_227 = arith.constant 0 : index
    %222 = vector.load %arg19[%c26, %c0_227] : memref<27x32xf32, #tpu.memory_space<vmem>>, vector<1x32xf32>
    tpu.vector_store %arg19[%c26, %c0_227], %221 {strides = array<i32>} : memref<27x32xf32, #tpu.memory_space<vmem>>, vector<1x32xf32>,
    %c5_228 = arith.constant 5 : index
    %c0_229 = arith.constant 0 : index
    %223 = tpu.strided_load %arg19[%c5_228, %c0_229] {strides = array<i32: 4, 1>} : memref<27x32xf32, #tpu.memory_space<vmem>>, vector<4x32xf32>
    %c0_230 = arith.constant 0 : index
    %c0_231 = arith.constant 0 : index
    %c0_232 = arith.constant 0 : index
    %224 = vector.load %arg10[%c0_230, %c0_231, %c0_232] : memref<7x32x64xf32, #tpu.memory_space<vmem>>, vector<1x32x64xf32>
    %225 = vector.shape_cast %224 : vector<1x32x64xf32> to vector<32x64xf32>
    %cst_233 = arith.constant dense<0.000000e+00> : vector<4x64xf32>
    %226 = tpu.matmul %223, %225, %cst_233 {dimension_numbers = #tpu.dot_dimension_numbers<[1], [0], [0], [1], [0, 0, 1, 1], [], []>} : vector<4x32xf32>, vector<32x64xf32>, vector<4x64xf32> -> vector<4x64xf32>
    %c6_234 = arith.constant 6 : index
    %c0_235 = arith.constant 0 : index
    %227 = tpu.strided_load %arg19[%c6_234, %c0_235] {strides = array<i32: 4, 1>} : memref<27x32xf32, #tpu.memory_space<vmem>>, vector<4x32xf32>
    %c1_236 = arith.constant 1 : index
    %c0_237 = arith.constant 0 : index
    %c0_238 = arith.constant 0 : index
    %228 = vector.load %arg10[%c1_236, %c0_237, %c0_238] : memref<7x32x64xf32, #tpu.memory_space<vmem>>, vector<1x32x64xf32>
    %229 = vector.shape_cast %228 : vector<1x32x64xf32> to vector<32x64xf32>
    %cst_239 = arith.constant dense<0.000000e+00> : vector<4x64xf32>
    %230 = tpu.matmul %227, %229, %cst_239 {dimension_numbers = #tpu.dot_dimension_numbers<[1], [0], [0], [1], [0, 0, 1, 1], [], []>} : vector<4x32xf32>, vector<32x64xf32>, vector<4x64xf32> -> vector<4x64xf32>
    %231 = arith.addf %226, %230 : vector<4x64xf32>
    %c7_240 = arith.constant 7 : index
    %c0_241 = arith.constant 0 : index
    %232 = tpu.strided_load %arg19[%c7_240, %c0_241] {strides = array<i32: 4, 1>} : memref<27x32xf32, #tpu.memory_space<vmem>>, vector<4x32xf32>
    %c2_242 = arith.constant 2 : index
    %c0_243 = arith.constant 0 : index
    %c0_244 = arith.constant 0 : index
    %233 = vector.load %arg10[%c2_242, %c0_243, %c0_244] : memref<7x32x64xf32, #tpu.memory_space<vmem>>, vector<1x32x64xf32>
    %234 = vector.shape_cast %233 : vector<1x32x64xf32> to vector<32x64xf32>
    %cst_245 = arith.constant dense<0.000000e+00> : vector<4x64xf32>
    %235 = tpu.matmul %232, %234, %cst_245 {dimension_numbers = #tpu.dot_dimension_numbers<[1], [0], [0], [1], [0, 0, 1, 1], [], []>} : vector<4x32xf32>, vector<32x64xf32>, vector<4x64xf32> -> vector<4x64xf32>
    %236 = arith.addf %231, %235 : vector<4x64xf32>
    %c8_246 = arith.constant 8 : index
    %c0_247 = arith.constant 0 : index
    %237 = tpu.strided_load %arg19[%c8_246, %c0_247] {strides = array<i32: 4, 1>} : memref<27x32xf32, #tpu.memory_space<vmem>>, vector<4x32xf32>
    %c3_248 = arith.constant 3 : index
    %c0_249 = arith.constant 0 : index
    %c0_250 = arith.constant 0 : index
    %238 = vector.load %arg10[%c3_248, %c0_249, %c0_250] : memref<7x32x64xf32, #tpu.memory_space<vmem>>, vector<1x32x64xf32>
    %239 = vector.shape_cast %238 : vector<1x32x64xf32> to vector<32x64xf32>
    %cst_251 = arith.constant dense<0.000000e+00> : vector<4x64xf32>
    %240 = tpu.matmul %237, %239, %cst_251 {dimension_numbers = #tpu.dot_dimension_numbers<[1], [0], [0], [1], [0, 0, 1, 1], [], []>} : vector<4x32xf32>, vector<32x64xf32>, vector<4x64xf32> -> vector<4x64xf32>
    %241 = arith.addf %236, %240 : vector<4x64xf32>
    %c9_252 = arith.constant 9 : index
    %c0_253 = arith.constant 0 : index
    %242 = tpu.strided_load %arg19[%c9_252, %c0_253] {strides = array<i32: 4, 1>} : memref<27x32xf32, #tpu.memory_space<vmem>>, vector<4x32xf32>
    %c4_254 = arith.constant 4 : index
    %c0_255 = arith.constant 0 : index
    %c0_256 = arith.constant 0 : index
    %243 = vector.load %arg10[%c4_254, %c0_255, %c0_256] : memref<7x32x64xf32, #tpu.memory_space<vmem>>, vector<1x32x64xf32>
    %244 = vector.shape_cast %243 : vector<1x32x64xf32> to vector<32x64xf32>
    %cst_257 = arith.constant dense<0.000000e+00> : vector<4x64xf32>
    %245 = tpu.matmul %242, %244, %cst_257 {dimension_numbers = #tpu.dot_dimension_numbers<[1], [0], [0], [1], [0, 0, 1, 1], [], []>} : vector<4x32xf32>, vector<32x64xf32>, vector<4x64xf32> -> vector<4x64xf32>
    %246 = arith.addf %241, %245 : vector<4x64xf32>
    %c10_258 = arith.constant 10 : index
    %c0_259 = arith.constant 0 : index
    %247 = tpu.strided_load %arg19[%c10_258, %c0_259] {strides = array<i32: 4, 1>} : memref<27x32xf32, #tpu.memory_space<vmem>>, vector<4x32xf32>
    %c5_260 = arith.constant 5 : index
    %c0_261 = arith.constant 0 : index
    %c0_262 = arith.constant 0 : index
    %248 = vector.load %arg10[%c5_260, %c0_261, %c0_262] : memref<7x32x64xf32, #tpu.memory_space<vmem>>, vector<1x32x64xf32>
    %249 = vector.shape_cast %248 : vector<1x32x64xf32> to vector<32x64xf32>
    %cst_263 = arith.constant dense<0.000000e+00> : vector<4x64xf32>
    %250 = tpu.matmul %247, %249, %cst_263 {dimension_numbers = #tpu.dot_dimension_numbers<[1], [0], [0], [1], [0, 0, 1, 1], [], []>} : vector<4x32xf32>, vector<32x64xf32>, vector<4x64xf32> -> vector<4x64xf32>
    %251 = arith.addf %246, %250 : vector<4x64xf32>
    %c11_264 = arith.constant 11 : index
    %c0_265 = arith.constant 0 : index
    %252 = tpu.strided_load %arg19[%c11_264, %c0_265] {strides = array<i32: 4, 1>} : memref<27x32xf32, #tpu.memory_space<vmem>>, vector<4x32xf32>
    %c6_266 = arith.constant 6 : index
    %c0_267 = arith.constant 0 : index
    %c0_268 = arith.constant 0 : index
    %253 = vector.load %arg10[%c6_266, %c0_267, %c0_268] : memref<7x32x64xf32, #tpu.memory_space<vmem>>, vector<1x32x64xf32>
    %254 = vector.shape_cast %253 : vector<1x32x64xf32> to vector<32x64xf32>
    %cst_269 = arith.constant dense<0.000000e+00> : vector<4x64xf32>
    %255 = tpu.matmul %252, %254, %cst_269 {dimension_numbers = #tpu.dot_dimension_numbers<[1], [0], [0], [1], [0, 0, 1, 1], [], []>} : vector<4x32xf32>, vector<32x64xf32>, vector<4x64xf32> -> vector<4x64xf32>
    %256 = arith.addf %251, %255 : vector<4x64xf32>
    %c0_270 = arith.constant 0 : index
    %c0_271 = arith.constant 0 : index
    %257 = vector.load %arg11[%c0_270, %c0_271] : memref<1x64xf32, #tpu.memory_space<vmem>>, vector<1x64xf32>
    %258 = vector.broadcast %257 : vector<1x64xf32> to vector<4x64xf32>
    %259 = arith.addf %256, %258 : vector<4x64xf32>
    %cst_272 = arith.constant 0.000000e+00 : f32
    %260 = vector.broadcast %cst_272 : f32 to vector<4x64xf32>
    %261 = arith.maximumf %259, %260 : vector<4x64xf32>
    %c8_273 = arith.constant 8 : index
    %c0_274 = arith.constant 0 : index
    %262 = vector.load %arg20[%c8_273, %c0_274] : memref<15x64xf32, #tpu.memory_space<vmem>>, vector<4x64xf32>
    tpu.vector_store %arg20[%c8_273, %c0_274], %261 {strides = array<i32>} : memref<15x64xf32, #tpu.memory_space<vmem>>, vector<4x64xf32>,
    %263 = vector.extract_strided_slice %261 {offsets = [1, 0], sizes = [1, 64], strides = [1, 1]} : vector<4x64xf32> to vector<1x64xf32>
    %c7_275 = arith.constant 7 : index
    %c0_276 = arith.constant 0 : index
    %264 = vector.load %arg20[%c7_275, %c0_276] : memref<15x64xf32, #tpu.memory_space<vmem>>, vector<1x64xf32>
    tpu.vector_store %arg20[%c7_275, %c0_276], %263 {strides = array<i32>} : memref<15x64xf32, #tpu.memory_space<vmem>>, vector<1x64xf32>,
    %265 = vector.extract_strided_slice %261 {offsets = [2, 0], sizes = [1, 64], strides = [1, 1]} : vector<4x64xf32> to vector<1x64xf32>
    %c6_277 = arith.constant 6 : index
    %c0_278 = arith.constant 0 : index
    %266 = vector.load %arg20[%c6_277, %c0_278] : memref<15x64xf32, #tpu.memory_space<vmem>>, vector<1x64xf32>
    tpu.vector_store %arg20[%c6_277, %c0_278], %265 {strides = array<i32>} : memref<15x64xf32, #tpu.memory_space<vmem>>, vector<1x64xf32>,
    %267 = vector.extract_strided_slice %261 {offsets = [3, 0], sizes = [1, 64], strides = [1, 1]} : vector<4x64xf32> to vector<1x64xf32>
    %c5_279 = arith.constant 5 : index
    %c0_280 = arith.constant 0 : index
    %268 = vector.load %arg20[%c5_279, %c0_280] : memref<15x64xf32, #tpu.memory_space<vmem>>, vector<1x64xf32>
    tpu.vector_store %arg20[%c5_279, %c0_280], %267 {strides = array<i32>} : memref<15x64xf32, #tpu.memory_space<vmem>>, vector<1x64xf32>,
    %269 = vector.extract_strided_slice %261 {offsets = [2, 0], sizes = [1, 64], strides = [1, 1]} : vector<4x64xf32> to vector<1x64xf32>
    %c12 = arith.constant 12 : index
    %c0_281 = arith.constant 0 : index
    %270 = vector.load %arg20[%c12, %c0_281] : memref<15x64xf32, #tpu.memory_space<vmem>>, vector<1x64xf32>
    tpu.vector_store %arg20[%c12, %c0_281], %269 {strides = array<i32>} : memref<15x64xf32, #tpu.memory_space<vmem>>, vector<1x64xf32>,
    %271 = vector.extract_strided_slice %261 {offsets = [1, 0], sizes = [1, 64], strides = [1, 1]} : vector<4x64xf32> to vector<1x64xf32>
    %c13 = arith.constant 13 : index
    %c0_282 = arith.constant 0 : index
    %272 = vector.load %arg20[%c13, %c0_282] : memref<15x64xf32, #tpu.memory_space<vmem>>, vector<1x64xf32>
    tpu.vector_store %arg20[%c13, %c0_282], %271 {strides = array<i32>} : memref<15x64xf32, #tpu.memory_space<vmem>>, vector<1x64xf32>,
    %273 = vector.extract_strided_slice %261 {offsets = [0, 0], sizes = [1, 64], strides = [1, 1]} : vector<4x64xf32> to vector<1x64xf32>
    %c14 = arith.constant 14 : index
    %c0_283 = arith.constant 0 : index
    %274 = vector.load %arg20[%c14, %c0_283] : memref<15x64xf32, #tpu.memory_space<vmem>>, vector<1x64xf32>
    tpu.vector_store %arg20[%c14, %c0_283], %273 {strides = array<i32>} : memref<15x64xf32, #tpu.memory_space<vmem>>, vector<1x64xf32>,
    %c5_284 = arith.constant 5 : index
    %c0_285 = arith.constant 0 : index
    %275 = vector.load %arg20[%c5_284, %c0_285] : memref<15x64xf32, #tpu.memory_space<vmem>>, vector<1x64xf32>
    %c0_286 = arith.constant 0 : index
    %c0_287 = arith.constant 0 : index
    %c0_288 = arith.constant 0 : index
    %276 = vector.load %arg12[%c0_286, %c0_287, %c0_288] : memref<7x64x128xf32, #tpu.memory_space<vmem>>, vector<1x64x128xf32>
    %277 = vector.shape_cast %276 : vector<1x64x128xf32> to vector<64x128xf32>
    %cst_289 = arith.constant dense<0.000000e+00> : vector<1x128xf32>
    %278 = tpu.matmul %275, %277, %cst_289 {dimension_numbers = #tpu.dot_dimension_numbers<[1], [0], [0], [1], [0, 0, 1, 1], [], []>} : vector<1x64xf32>, vector<64x128xf32>, vector<1x128xf32> -> vector<1x128xf32>
    %c6_290 = arith.constant 6 : index
    %c0_291 = arith.constant 0 : index
    %279 = vector.load %arg20[%c6_290, %c0_291] : memref<15x64xf32, #tpu.memory_space<vmem>>, vector<1x64xf32>
    %c1_292 = arith.constant 1 : index
    %c0_293 = arith.constant 0 : index
    %c0_294 = arith.constant 0 : index
    %280 = vector.load %arg12[%c1_292, %c0_293, %c0_294] : memref<7x64x128xf32, #tpu.memory_space<vmem>>, vector<1x64x128xf32>
    %281 = vector.shape_cast %280 : vector<1x64x128xf32> to vector<64x128xf32>
    %cst_295 = arith.constant dense<0.000000e+00> : vector<1x128xf32>
    %282 = tpu.matmul %279, %281, %cst_295 {dimension_numbers = #tpu.dot_dimension_numbers<[1], [0], [0], [1], [0, 0, 1, 1], [], []>} : vector<1x64xf32>, vector<64x128xf32>, vector<1x128xf32> -> vector<1x128xf32>
    %283 = arith.addf %278, %282 : vector<1x128xf32>
    %c7_296 = arith.constant 7 : index
    %c0_297 = arith.constant 0 : index
    %284 = vector.load %arg20[%c7_296, %c0_297] : memref<15x64xf32, #tpu.memory_space<vmem>>, vector<1x64xf32>
    %c2_298 = arith.constant 2 : index
    %c0_299 = arith.constant 0 : index
    %c0_300 = arith.constant 0 : index
    %285 = vector.load %arg12[%c2_298, %c0_299, %c0_300] : memref<7x64x128xf32, #tpu.memory_space<vmem>>, vector<1x64x128xf32>
    %286 = vector.shape_cast %285 : vector<1x64x128xf32> to vector<64x128xf32>
    %cst_301 = arith.constant dense<0.000000e+00> : vector<1x128xf32>
    %287 = tpu.matmul %284, %286, %cst_301 {dimension_numbers = #tpu.dot_dimension_numbers<[1], [0], [0], [1], [0, 0, 1, 1], [], []>} : vector<1x64xf32>, vector<64x128xf32>, vector<1x128xf32> -> vector<1x128xf32>
    %288 = arith.addf %283, %287 : vector<1x128xf32>
    %c8_302 = arith.constant 8 : index
    %c0_303 = arith.constant 0 : index
    %289 = vector.load %arg20[%c8_302, %c0_303] : memref<15x64xf32, #tpu.memory_space<vmem>>, vector<1x64xf32>
    %c3_304 = arith.constant 3 : index
    %c0_305 = arith.constant 0 : index
    %c0_306 = arith.constant 0 : index
    %290 = vector.load %arg12[%c3_304, %c0_305, %c0_306] : memref<7x64x128xf32, #tpu.memory_space<vmem>>, vector<1x64x128xf32>
    %291 = vector.shape_cast %290 : vector<1x64x128xf32> to vector<64x128xf32>
    %cst_307 = arith.constant dense<0.000000e+00> : vector<1x128xf32>
    %292 = tpu.matmul %289, %291, %cst_307 {dimension_numbers = #tpu.dot_dimension_numbers<[1], [0], [0], [1], [0, 0, 1, 1], [], []>} : vector<1x64xf32>, vector<64x128xf32>, vector<1x128xf32> -> vector<1x128xf32>
    %293 = arith.addf %288, %292 : vector<1x128xf32>
    %c9_308 = arith.constant 9 : index
    %c0_309 = arith.constant 0 : index
    %294 = vector.load %arg20[%c9_308, %c0_309] : memref<15x64xf32, #tpu.memory_space<vmem>>, vector<1x64xf32>
    %c4_310 = arith.constant 4 : index
    %c0_311 = arith.constant 0 : index
    %c0_312 = arith.constant 0 : index
    %295 = vector.load %arg12[%c4_310, %c0_311, %c0_312] : memref<7x64x128xf32, #tpu.memory_space<vmem>>, vector<1x64x128xf32>
    %296 = vector.shape_cast %295 : vector<1x64x128xf32> to vector<64x128xf32>
    %cst_313 = arith.constant dense<0.000000e+00> : vector<1x128xf32>
    %297 = tpu.matmul %294, %296, %cst_313 {dimension_numbers = #tpu.dot_dimension_numbers<[1], [0], [0], [1], [0, 0, 1, 1], [], []>} : vector<1x64xf32>, vector<64x128xf32>, vector<1x128xf32> -> vector<1x128xf32>
    %298 = arith.addf %293, %297 : vector<1x128xf32>
    %c10_314 = arith.constant 10 : index
    %c0_315 = arith.constant 0 : index
    %299 = vector.load %arg20[%c10_314, %c0_315] : memref<15x64xf32, #tpu.memory_space<vmem>>, vector<1x64xf32>
    %c5_316 = arith.constant 5 : index
    %c0_317 = arith.constant 0 : index
    %c0_318 = arith.constant 0 : index
    %300 = vector.load %arg12[%c5_316, %c0_317, %c0_318] : memref<7x64x128xf32, #tpu.memory_space<vmem>>, vector<1x64x128xf32>
    %301 = vector.shape_cast %300 : vector<1x64x128xf32> to vector<64x128xf32>
    %cst_319 = arith.constant dense<0.000000e+00> : vector<1x128xf32>
    %302 = tpu.matmul %299, %301, %cst_319 {dimension_numbers = #tpu.dot_dimension_numbers<[1], [0], [0], [1], [0, 0, 1, 1], [], []>} : vector<1x64xf32>, vector<64x128xf32>, vector<1x128xf32> -> vector<1x128xf32>
    %303 = arith.addf %298, %302 : vector<1x128xf32>
    %c11_320 = arith.constant 11 : index
    %c0_321 = arith.constant 0 : index
    %304 = vector.load %arg20[%c11_320, %c0_321] : memref<15x64xf32, #tpu.memory_space<vmem>>, vector<1x64xf32>
    %c6_322 = arith.constant 6 : index
    %c0_323 = arith.constant 0 : index
    %c0_324 = arith.constant 0 : index
    %305 = vector.load %arg12[%c6_322, %c0_323, %c0_324] : memref<7x64x128xf32, #tpu.memory_space<vmem>>, vector<1x64x128xf32>
    %306 = vector.shape_cast %305 : vector<1x64x128xf32> to vector<64x128xf32>
    %cst_325 = arith.constant dense<0.000000e+00> : vector<1x128xf32>
    %307 = tpu.matmul %304, %306, %cst_325 {dimension_numbers = #tpu.dot_dimension_numbers<[1], [0], [0], [1], [0, 0, 1, 1], [], []>} : vector<1x64xf32>, vector<64x128xf32>, vector<1x128xf32> -> vector<1x128xf32>
    %308 = arith.addf %303, %307 : vector<1x128xf32>
    %c0_326 = arith.constant 0 : index
    %c0_327 = arith.constant 0 : index
    %309 = vector.load %arg13[%c0_326, %c0_327] : memref<1x128xf32, #tpu.memory_space<vmem>>, vector<1x128xf32>
    %310 = arith.addf %308, %309 : vector<1x128xf32>
    %cst_328 = arith.constant 0.000000e+00 : f32
    %311 = vector.broadcast %cst_328 : f32 to vector<1x128xf32>
    %312 = arith.maximumf %310, %311 : vector<1x128xf32>
    %cst_329 = arith.constant dense<0.000000e+00> : vector<128xf32>
    %313 = vector.multi_reduction <add>, %312, %cst_329 [0] : vector<1x128xf32> to vector<128xf32>
    %314 = vector.shape_cast %313 : vector<128xf32> to vector<1x128xf32>
    %cst_330 = arith.constant 1.000000e+00 : f32
    %315 = vector.broadcast %cst_330 : f32 to vector<1x128xf32>
    %316 = arith.divf %314, %315 : vector<1x128xf32>
    %c0_331 = arith.constant 0 : index
    %c0_332 = arith.constant 0 : index
    %c0_333 = arith.constant 0 : index
    %317 = vector.load %arg14[%c0_331, %c0_332, %c0_333] : memref<1x1x128xf32, #tpu.memory_space<vmem>>, vector<1x1x128xf32>
    %318 = vector.shape_cast %317 : vector<1x1x128xf32> to vector<1x128xf32>
    %319 = vector.shape_cast %316 : vector<1x128xf32> to vector<1x1x128xf32>
    tpu.vector_store %arg14[%c0_331, %c0_332, %c0_333], %319 {strides = array<i32>} : memref<1x1x128xf32, #tpu.memory_space<vmem>>, vector<1x1x128xf32>,
    return
  }
  func.func @transform_0(%arg0: i32) -> (i32, i32, i32) {
    %c0_i32 = arith.constant 0 : i32
    %c0_i32_0 = arith.constant 0 : i32
    %c0_i32_1 = arith.constant 0 : i32
    return %arg0, %c0_i32, %c0_i32_0 : i32, i32, i32
  }
  func.func @transform_1(%arg0: i32) -> (i32, i32, i32) {
    %c0_i32 = arith.constant 0 : i32
    %c0_i32_0 = arith.constant 0 : i32
    %c0_i32_1 = arith.constant 0 : i32
    %c0_i32_2 = arith.constant 0 : i32
    return %c0_i32, %c0_i32_0, %c0_i32_1 : i32, i32, i32
  }
  func.func @transform_2(%arg0: i32) -> (i32, i32) {
    %c0_i32 = arith.constant 0 : i32
    %c0_i32_0 = arith.constant 0 : i32
    %c0_i32_1 = arith.constant 0 : i32
    return %c0_i32, %c0_i32_0 : i32, i32
  }
  func.func @transform_3(%arg0: i32) -> (i32, i32, i32) {
    %c0_i32 = arith.constant 0 : i32
    %c0_i32_0 = arith.constant 0 : i32
    %c0_i32_1 = arith.constant 0 : i32
    %c0_i32_2 = arith.constant 0 : i32
    return %c0_i32, %c0_i32_0, %c0_i32_1 : i32, i32, i32
  }
  func.func @transform_4(%arg0: i32) -> (i32, i32) {
    %c0_i32 = arith.constant 0 : i32
    %c0_i32_0 = arith.constant 0 : i32
    %c0_i32_1 = arith.constant 0 : i32
    return %c0_i32, %c0_i32_0 : i32, i32
  }
  func.func @transform_5(%arg0: i32) -> (i32, i32, i32) {
    %c0_i32 = arith.constant 0 : i32
    %c0_i32_0 = arith.constant 0 : i32
    %c0_i32_1 = arith.constant 0 : i32
    %c0_i32_2 = arith.constant 0 : i32
    return %c0_i32, %c0_i32_0, %c0_i32_1 : i32, i32, i32
  }
  func.func @transform_6(%arg0: i32) -> (i32, i32) {
    %c0_i32 = arith.constant 0 : i32
    %c0_i32_0 = arith.constant 0 : i32
    %c0_i32_1 = arith.constant 0 : i32
    return %c0_i32, %c0_i32_0 : i32, i32
  }
  func.func @transform_7(%arg0: i32) -> (i32, i32, i32) {
    %c0_i32 = arith.constant 0 : i32
    %c0_i32_0 = arith.constant 0 : i32
    %c0_i32_1 = arith.constant 0 : i32
    %c0_i32_2 = arith.constant 0 : i32
    return %c0_i32, %c0_i32_0, %c0_i32_1 : i32, i32, i32
  }
  func.func @transform_8(%arg0: i32) -> (i32, i32) {
    %c0_i32 = arith.constant 0 : i32
    %c0_i32_0 = arith.constant 0 : i32
    %c0_i32_1 = arith.constant 0 : i32
    return %c0_i32, %c0_i32_0 : i32, i32
  }
  func.func @transform_9(%arg0: i32) -> (i32, i32, i32) {
    %c0_i32 = arith.constant 0 : i32
    %c0_i32_0 = arith.constant 0 : i32
    %c0_i32_1 = arith.constant 0 : i32
    %c0_i32_2 = arith.constant 0 : i32
    return %c0_i32, %c0_i32_0, %c0_i32_1 : i32, i32, i32
  }
  func.func @transform_10(%arg0: i32) -> (i32, i32) {
    %c0_i32 = arith.constant 0 : i32
    %c0_i32_0 = arith.constant 0 : i32
    %c0_i32_1 = arith.constant 0 : i32
    return %c0_i32, %c0_i32_0 : i32, i32
  }
  func.func @transform_11(%arg0: i32) -> (i32, i32, i32) {
    %c0_i32 = arith.constant 0 : i32
    %c0_i32_0 = arith.constant 0 : i32
    %c0_i32_1 = arith.constant 0 : i32
    %c0_i32_2 = arith.constant 0 : i32
    return %c0_i32, %c0_i32_0, %c0_i32_1 : i32, i32, i32
  }
  func.func @transform_12(%arg0: i32) -> (i32, i32) {
    %c0_i32 = arith.constant 0 : i32
    %c0_i32_0 = arith.constant 0 : i32
    %c0_i32_1 = arith.constant 0 : i32
    return %c0_i32, %c0_i32_0 : i32, i32
  }
  func.func @transform_13(%arg0: i32) -> (i32, i32, i32) {
    %c0_i32 = arith.constant 0 : i32
    %c0_i32_0 = arith.constant 0 : i32
    %c0_i32_1 = arith.constant 0 : i32
    return %arg0, %c0_i32, %c0_i32_0 : i32, i32, i32
  }
}

</mosaic_0001>

<llo_original>
// kernel: _lambda_.1
$region0: #{_lambda_.1}
  #allocation0 [shape = 'u32[]', space=smem, size = 0x4, offset = 0x4, fixed_abs, tag = 'smem constant byte address 0x4 - core index']
  #allocation1 [shape = 'u32[144,128]{1,0:T(1,128)}', space=vmem, size = 0x12000, scoped, tag = 'internal scratch']
  #allocation2 [shape = 'f32[1035,3]{1,0:T(8,128)}', space=vmem, size = 0x82000, scoped, tag = 'scratch operand']
  #allocation3 [shape = 'f32[267,16]{1,0:T(8,128)}', space=vmem, size = 0x22000, scoped, tag = 'scratch operand']
  #allocation4 [shape = 'f32[75,16]{1,0:T(8,128)}', space=vmem, size = 0xa000, scoped, tag = 'scratch operand']
  #allocation5 [shape = 'f32[75,16]{1,0:T(8,128)}', space=vmem, size = 0xa000, scoped, tag = 'scratch operand']
  #allocation6 [shape = 'f32[27,32]{1,0:T(8,128)}', space=vmem, size = 0x4000, scoped, tag = 'scratch operand']
  #allocation7 [shape = 'f32[15,64]{1,0:T(8,128)}', space=vmem, size = 0x2000, scoped, tag = 'scratch operand']
  %s0 = inlined_call_operand.vmem [shape: f32[2,1024,3], index: 0, kind: input, shape index: {}]
  %s1 = inlined_call_operand.vmem [shape: f32[7,3,16], index: 1, kind: input, shape index: {}]
  %s2 = inlined_call_operand.vmem [shape: f32[1,16], index: 2, kind: input, shape index: {}]
  %s3 = inlined_call_operand.vmem [shape: f32[7,16,16], index: 3, kind: input, shape index: {}]
  %s4 = inlined_call_operand.vmem [shape: f32[1,16], index: 4, kind: input, shape index: {}]
  %s5 = inlined_call_operand.vmem [shape: f32[7,16,16], index: 5, kind: input, shape index: {}]
  %s6 = inlined_call_operand.vmem [shape: f32[1,16], index: 6, kind: input, shape index: {}]
  %s7 = inlined_call_operand.vmem [shape: f32[7,16,32], index: 7, kind: input, shape index: {}]
  %s8 = inlined_call_operand.vmem [shape: f32[1,32], index: 8, kind: input, shape index: {}]
  %s9 = inlined_call_operand.vmem [shape: f32[7,32,64], index: 9, kind: input, shape index: {}]
  %s10 = inlined_call_operand.vmem [shape: f32[1,64], index: 10, kind: input, shape index: {}]
  %s11 = inlined_call_operand.vmem [shape: f32[7,64,128], index: 11, kind: input, shape index: {}]
  %s12 = inlined_call_operand.vmem [shape: f32[1,128], index: 12, kind: input, shape index: {}]
  %s13 = inlined_call_operand.vmem [shape: f32[2,1,128], index: 13, kind: output, shape index: {}]
  %s14 = sld [smem:[#allocation0]]
  $region85: #{_lambda_.1} parent=0
    _
  %s16 = ssub.s32 1, %s14
  %s17 = scalar_select 0, %s16, %s14
  loop: start=0, step=1, limit=4
  $region2: #{_lambda_.1} parent=0 // loop_pre_header
    _
  $region3: #{_lambda_.1} parent=0 // loop_header
    %s19 = sphi 0, %s23
    %p20 = scmp.ge.s32.totalorder %s19, 4
    %s29 = sphi 0, %s31
    %s32 = sphi 0, %s29
    %s33 = sphi 0, %s32
    %s49 = sphi 0, %s33
    %s53 = sphi 0, %s53
    %s55 = sphi 0, %s53
    %s56 = sphi 0, %s55
    %s70 = sphi 0, %s56
    %s74 = sphi 0, %s74
    %s76 = sphi 0, %s74
    %s77 = sphi 0, %s76
    %s91 = sphi 0, %s77
    %s95 = sphi 0, %s95
    %s97 = sphi 0, %s95
    %s98 = sphi 0, %s97
    %s112 = sphi 0, %s98
    %s116 = sphi 0, %s116
    %s118 = sphi 0, %s116
    %s119 = sphi 0, %s118
    %s133 = sphi 0, %s119
    %s137 = sphi 0, %s137
    %s139 = sphi 0, %s137
    %s140 = sphi 0, %s139
    %s154 = sphi 0, %s140
    %s158 = sphi 0, %s158
    %s160 = sphi 0, %s158
    %s161 = sphi 0, %s160
    %s175 = sphi 0, %s161
    %s179 = sphi 0, %s179
    %s181 = sphi 0, %s179
    %s182 = sphi 0, %s181
    %s196 = sphi 0, %s182
    %s200 = sphi 0, %s200
    %s202 = sphi 0, %s200
    %s203 = sphi 0, %s202
    %s217 = sphi 0, %s203
    %s221 = sphi 0, %s221
    %s223 = sphi 0, %s221
    %s224 = sphi 0, %s223
    %s238 = sphi 0, %s224
    %s242 = sphi 0, %s242
    %s244 = sphi 0, %s242
    %s245 = sphi 0, %s244
    %s259 = sphi 0, %s245
    %s263 = sphi 0, %s263
    %s265 = sphi 0, %s263
    %s266 = sphi 0, %s265
    %s280 = sphi 0, %s266
    %s284 = sphi 0, %s284
    %s286 = sphi 0, %s284
    %s287 = sphi 0, %s286
    %s301 = sphi 0, %s287
    %s307 = sphi 0, %s309
    %s310 = sphi 0, %s307
    %s311 = sphi 0, %s310
    %s327 = sphi 0, %s311
  $region4: #{_lambda_.1} parent=0 // loop_header_branch
    %22 = sbr.rel (%p20) target = $region8
  $region5: #{_lambda_.1} parent=0 // loop_body
    %s24 = ssub.s32 %s19, 1
    %s25 = ssub.s32 %s19, 2
    %s26 = sadd.s32 %s19, 1
    %s27 = ssub.s32 %s19, %s26
    %p28 = scmp.eq.s32.totalorder %s27, 0
    %s30 = sadd.s32 %s29, 1
    %s31 = scalar_select %p28, %s29, %s30
    %p34 = pneg %p28
    %p35 = scmp.eq.s32.totalorder %s19, 1
    %p36 = por %p34, %p35
    %p37 = scmp.ne.s32.totalorder %s29, %s32
    %p38 = scmp.eq.s32.totalorder %s19, 0
    %p39 = por %p37, %p38
    %p40 = scmp.ne.s32.totalorder %s29, %s32
    %p41 = scmp.eq.s32.totalorder %s24, 1
    %p42 = por %p40, %p41
    %p43 = scmp.ne.s32.totalorder %s32, %s33
    %p44 = scmp.eq.s32.totalorder %s24, 0
    %p45 = por %p43, %p44
    %p46 = scmp.ne.s32.totalorder %s32, %s33
    %p47 = scmp.eq.s32.totalorder %s25, 1
    %p48 = por %p46, %p47
    %p50 = scmp.ne.s32.totalorder %s33, %s49
    %p51 = scmp.eq.s32.totalorder %s25, 0
    %p52 = por %p50, %p51
    %s54 = sadd.s32 %s53, 1
    %p57 = scmp.eq.s32.totalorder %s19, 1
    %p58 = scmp.ne.s32.totalorder %s53, %s55
    %p59 = scmp.eq.s32.totalorder %s19, 0
    %p60 = por %p58, %p59
    %p61 = scmp.ne.s32.totalorder %s53, %s55
    %p62 = scmp.eq.s32.totalorder %s24, 1
    %p63 = por %p61, %p62
    %p64 = scmp.ne.s32.totalorder %s55, %s56
    %p65 = scmp.eq.s32.totalorder %s24, 0
    %p66 = por %p64, %p65
    %p67 = scmp.ne.s32.totalorder %s55, %s56
    %p68 = scmp.eq.s32.totalorder %s25, 1
    %p69 = por %p67, %p68
    %p71 = scmp.ne.s32.totalorder %s56, %s70
    %p72 = scmp.eq.s32.totalorder %s25, 0
    %p73 = por %p71, %p72
    %s75 = sadd.s32 %s74, 1
    %p78 = scmp.eq.s32.totalorder %s19, 1
    %p79 = scmp.ne.s32.totalorder %s74, %s76
    %p80 = scmp.eq.s32.totalorder %s19, 0
    %p81 = por %p79, %p80
    %p82 = scmp.ne.s32.totalorder %s74, %s76
    %p83 = scmp.eq.s32.totalorder %s24, 1
    %p84 = por %p82, %p83
    %p85 = scmp.ne.s32.totalorder %s76, %s77
    %p86 = scmp.eq.s32.totalorder %s24, 0
    %p87 = por %p85, %p86
    %p88 = scmp.ne.s32.totalorder %s76, %s77
    %p89 = scmp.eq.s32.totalorder %s25, 1
    %p90 = por %p88, %p89
    %p92 = scmp.ne.s32.totalorder %s77, %s91
    %p93 = scmp.eq.s32.totalorder %s25, 0
    %p94 = por %p92, %p93
    %s96 = sadd.s32 %s95, 1
    %p99 = scmp.eq.s32.totalorder %s19, 1
    %p100 = scmp.ne.s32.totalorder %s95, %s97
    %p101 = scmp.eq.s32.totalorder %s19, 0
    %p102 = por %p100, %p101
    %p103 = scmp.ne.s32.totalorder %s95, %s97
    %p104 = scmp.eq.s32.totalorder %s24, 1
    %p105 = por %p103, %p104
    %p106 = scmp.ne.s32.totalorder %s97, %s98
    %p107 = scmp.eq.s32.totalorder %s24, 0
    %p108 = por %p106, %p107
    %p109 = scmp.ne.s32.totalorder %s97, %s98
    %p110 = scmp.eq.s32.totalorder %s25, 1
    %p111 = por %p109, %p110
    %p113 = scmp.ne.s32.totalorder %s98, %s112
    %p114 = scmp.eq.s32.totalorder %s25, 0
    %p115 = por %p113, %p114
    %s117 = sadd.s32 %s116, 1
    %p120 = scmp.eq.s32.totalorder %s19, 1
    %p121 = scmp.ne.s32.totalorder %s116, %s118
    %p122 = scmp.eq.s32.totalorder %s19, 0
    %p123 = por %p121, %p122
    %p124 = scmp.ne.s32.totalorder %s116, %s118
    %p125 = scmp.eq.s32.totalorder %s24, 1
    %p126 = por %p124, %p125
    %p127 = scmp.ne.s32.totalorder %s118, %s119
    %p128 = scmp.eq.s32.totalorder %s24, 0
    %p129 = por %p127, %p128
    %p130 = scmp.ne.s32.totalorder %s118, %s119
    %p131 = scmp.eq.s32.totalorder %s25, 1
    %p132 = por %p130, %p131
    %p134 = scmp.ne.s32.totalorder %s119, %s133
    %p135 = scmp.eq.s32.totalorder %s25, 0
    %p136 = por %p134, %p135
    %s138 = sadd.s32 %s137, 1
    %p141 = scmp.eq.s32.totalorder %s19, 1
    %p142 = scmp.ne.s32.totalorder %s137, %s139
    %p143 = scmp.eq.s32.totalorder %s19, 0
    %p144 = por %p142, %p143
    %p145 = scmp.ne.s32.totalorder %s137, %s139
    %p146 = scmp.eq.s32.totalorder %s24, 1
    %p147 = por %p145, %p146
    %p148 = scmp.ne.s32.totalorder %s139, %s140
    %p149 = scmp.eq.s32.totalorder %s24, 0
    %p150 = por %p148, %p149
    %p151 = scmp.ne.s32.totalorder %s139, %s140
    %p152 = scmp.eq.s32.totalorder %s25, 1
    %p153 = por %p151, %p152
    %p155 = scmp.ne.s32.totalorder %s140, %s154
    %p156 = scmp.eq.s32.totalorder %s25, 0
    %p157 = por %p155, %p156
    %s159 = sadd.s32 %s158, 1
    %p162 = scmp.eq.s32.totalorder %s19, 1
    %p163 = scmp.ne.s32.totalorder %s158, %s160
    %p164 = scmp.eq.s32.totalorder %s19, 0
    %p165 = por %p163, %p164
    %p166 = scmp.ne.s32.totalorder %s158, %s160
    %p167 = scmp.eq.s32.totalorder %s24, 1
    %p168 = por %p166, %p167
    %p169 = scmp.ne.s32.totalorder %s160, %s161
    %p170 = scmp.eq.s32.totalorder %s24, 0
    %p171 = por %p169, %p170
    %p172 = scmp.ne.s32.totalorder %s160, %s161
    %p173 = scmp.eq.s32.totalorder %s25, 1
    %p174 = por %p172, %p173
    %p176 = scmp.ne.s32.totalorder %s161, %s175
    %p177 = scmp.eq.s32.totalorder %s25, 0
    %p178 = por %p176, %p177
    %s180 = sadd.s32 %s179, 1
    %p183 = scmp.eq.s32.totalorder %s19, 1
    %p184 = scmp.ne.s32.totalorder %s179, %s181
    %p185 = scmp.eq.s32.totalorder %s19, 0
    %p186 = por %p184, %p185
    %p187 = scmp.ne.s32.totalorder %s179, %s181
    %p188 = scmp.eq.s32.totalorder %s24, 1
    %p189 = por %p187, %p188
    %p190 = scmp.ne.s32.totalorder %s181, %s182
    %p191 = scmp.eq.s32.totalorder %s24, 0
    %p192 = por %p190, %p191
    %p193 = scmp.ne.s32.totalorder %s181, %s182
    %p194 = scmp.eq.s32.totalorder %s25, 1
    %p195 = por %p193, %p194
    %p197 = scmp.ne.s32.totalorder %s182, %s196
    %p198 = scmp.eq.s32.totalorder %s25, 0
    %p199 = por %p197, %p198
    %s201 = sadd.s32 %s200, 1
    %p204 = scmp.eq.s32.totalorder %s19, 1
    %p205 = scmp.ne.s32.totalorder %s200, %s202
    %p206 = scmp.eq.s32.totalorder %s19, 0
    %p207 = por %p205, %p206
    %p208 = scmp.ne.s32.totalorder %s200, %s202
    %p209 = scmp.eq.s32.totalorder %s24, 1
    %p210 = por %p208, %p209
    %p211 = scmp.ne.s32.totalorder %s202, %s203
    %p212 = scmp.eq.s32.totalorder %s24, 0
    %p213 = por %p211, %p212
    %p214 = scmp.ne.s32.totalorder %s202, %s203
    %p215 = scmp.eq.s32.totalorder %s25, 1
    %p216 = por %p214, %p215
    %p218 = scmp.ne.s32.totalorder %s203, %s217
    %p219 = scmp.eq.s32.totalorder %s25, 0
    %p220 = por %p218, %p219
    %s222 = sadd.s32 %s221, 1
    %p225 = scmp.eq.s32.totalorder %s19, 1
    %p226 = scmp.ne.s32.totalorder %s221, %s223
    %p227 = scmp.eq.s32.totalorder %s19, 0
    %p228 = por %p226, %p227
    %p229 = scmp.ne.s32.totalorder %s221, %s223
    %p230 = scmp.eq.s32.totalorder %s24, 1
    %p231 = por %p229, %p230
    %p232 = scmp.ne.s32.totalorder %s223, %s224
    %p233 = scmp.eq.s32.totalorder %s24, 0
    %p234 = por %p232, %p233
    %p235 = scmp.ne.s32.totalorder %s223, %s224
    %p236 = scmp.eq.s32.totalorder %s25, 1
    %p237 = por %p235, %p236
    %p239 = scmp.ne.s32.totalorder %s224, %s238
    %p240 = scmp.eq.s32.totalorder %s25, 0
    %p241 = por %p239, %p240
    %s243 = sadd.s32 %s242, 1
    %p246 = scmp.eq.s32.totalorder %s19, 1
    %p247 = scmp.ne.s32.totalorder %s242, %s244
    %p248 = scmp.eq.s32.totalorder %s19, 0
    %p249 = por %p247, %p248
    %p250 = scmp.ne.s32.totalorder %s242, %s244
    %p251 = scmp.eq.s32.totalorder %s24, 1
    %p252 = por %p250, %p251
    %p253 = scmp.ne.s32.totalorder %s244, %s245
    %p254 = scmp.eq.s32.totalorder %s24, 0
    %p255 = por %p253, %p254
    %p256 = scmp.ne.s32.totalorder %s244, %s245
    %p257 = scmp.eq.s32.totalorder %s25, 1
    %p258 = por %p256, %p257
    %p260 = scmp.ne.s32.totalorder %s245, %s259
    %p261 = scmp.eq.s32.totalorder %s25, 0
    %p262 = por %p260, %p261
    %s264 = sadd.s32 %s263, 1
    %p267 = scmp.eq.s32.totalorder %s19, 1
    %p268 = scmp.ne.s32.totalorder %s263, %s265
    %p269 = scmp.eq.s32.totalorder %s19, 0
    %p270 = por %p268, %p269
    %p271 = scmp.ne.s32.totalorder %s263, %s265
    %p272 = scmp.eq.s32.totalorder %s24, 1
    %p273 = por %p271, %p272
    %p274 = scmp.ne.s32.totalorder %s265, %s266
    %p275 = scmp.eq.s32.totalorder %s24, 0
    %p276 = por %p274, %p275
    %p277 = scmp.ne.s32.totalorder %s265, %s266
    %p278 = scmp.eq.s32.totalorder %s25, 1
    %p279 = por %p277, %p278
    %p281 = scmp.ne.s32.totalorder %s266, %s280
    %p282 = scmp.eq.s32.totalorder %s25, 0
    %p283 = por %p281, %p282
    %s285 = sadd.s32 %s284, 1
    %p288 = scmp.eq.s32.totalorder %s19, 1
    %p289 = scmp.ne.s32.totalorder %s284, %s286
    %p290 = scmp.eq.s32.totalorder %s19, 0
    %p291 = por %p289, %p290
    %p292 = scmp.ne.s32.totalorder %s284, %s286
    %p293 = scmp.eq.s32.totalorder %s24, 1
    %p294 = por %p292, %p293
    %p295 = scmp.ne.s32.totalorder %s286, %s287
    %p296 = scmp.eq.s32.totalorder %s24, 0
    %p297 = por %p295, %p296
    %p298 = scmp.ne.s32.totalorder %s286, %s287
    %p299 = scmp.eq.s32.totalorder %s25, 1
    %p300 = por %p298, %p299
    %p302 = scmp.ne.s32.totalorder %s287, %s301
    %p303 = scmp.eq.s32.totalorder %s25, 0
    %p304 = por %p302, %p303
    %s305 = ssub.s32 %s19, %s26
    %p306 = scmp.eq.s32.totalorder %s305, 0
    %s308 = sadd.s32 %s307, 1
    %s309 = scalar_select %p306, %s307, %s308
    %p312 = pneg %p306
    %p313 = scmp.eq.s32.totalorder %s19, 1
    %p314 = por %p312, %p313
    %p315 = scmp.ne.s32.totalorder %s307, %s310
    %p316 = scmp.eq.s32.totalorder %s19, 0
    %p317 = por %p315, %p316
    %p318 = scmp.ne.s32.totalorder %s307, %s310
    %p319 = scmp.eq.s32.totalorder %s24, 1
    %p320 = por %p318, %p319
    %p321 = scmp.ne.s32.totalorder %s310, %s311
    %p322 = scmp.eq.s32.totalorder %s24, 0
    %p323 = por %p321, %p322
    %p324 = scmp.ne.s32.totalorder %s310, %s311
    %p325 = scmp.eq.s32.totalorder %s25, 1
    %p326 = por %p324, %p325
    %p328 = scmp.ne.s32.totalorder %s311, %s327
    %p329 = scmp.eq.s32.totalorder %s25, 0
    %p330 = por %p328, %p329
    %p331 = scmp.le.s32.totalorder 1, %s19
    %p332 = scmp.lt.s32.totalorder %s19, 3
    %p333 = pnand %p331, %p332
    %p334 = pneg %p333
    // Predicated region
    $region9: #{_lambda_.1} parent=5 // pred_check
      _
    $region10: #{_lambda_.1} parent=5 // pred_check_branch
      %336 = sbr.rel (%p333) target = $region12
    $region11: #{_lambda_.1} parent=5 // pred_region
      %s337 = ssub.s32 %s19, 1
      // Predicated region
      $region13: #{_lambda_.1} parent=11 // pred_check
        %p338 = pneg %p66
      $region14: #{_lambda_.1} parent=11 // pred_check_branch
        %340 = sbr.rel (%p338) target = $region16
      $region15: #{_lambda_.1} parent=11 // pred_region
        _
      $region16: #{_lambda_.1} parent=11 // pred_fallthru
        _
      // Predicated region
      $region17: #{_lambda_.1} parent=11 // pred_check
        %p341 = pneg %p87
      $region18: #{_lambda_.1} parent=11 // pred_check_branch
        %343 = sbr.rel (%p341) target = $region20
      $region19: #{_lambda_.1} parent=11 // pred_region
        _
      $region20: #{_lambda_.1} parent=11 // pred_fallthru
        _
      // Predicated region
      $region21: #{_lambda_.1} parent=11 // pred_check
        %p344 = pneg %p108
      $region22: #{_lambda_.1} parent=11 // pred_check_branch
        %346 = sbr.rel (%p344) target = $region24
      $region23: #{_lambda_.1} parent=11 // pred_region
        _
      $region24: #{_lambda_.1} parent=11 // pred_fallthru
        _
      // Predicated region
      $region25: #{_lambda_.1} parent=11 // pred_check
        %p347 = pneg %p129
      $region26: #{_lambda_.1} parent=11 // pred_check_branch
        %349 = sbr.rel (%p347) target = $region28
      $region27: #{_lambda_.1} parent=11 // pred_region
        _
      $region28: #{_lambda_.1} parent=11 // pred_fallthru
        _
      // Predicated region
      $region29: #{_lambda_.1} parent=11 // pred_check
        %p350 = pneg %p150
      $region30: #{_lambda_.1} parent=11 // pred_check_branch
        %352 = sbr.rel (%p350) target = $region32
      $region31: #{_lambda_.1} parent=11 // pred_region
        _
      $region32: #{_lambda_.1} parent=11 // pred_fallthru
        _
      // Predicated region
      $region33: #{_lambda_.1} parent=11 // pred_check
        %p353 = pneg %p171
      $region34: #{_lambda_.1} parent=11 // pred_check_branch
        %355 = sbr.rel (%p353) target = $region36
      $region35: #{_lambda_.1} parent=11 // pred_region
        _
      $region36: #{_lambda_.1} parent=11 // pred_fallthru
        _
      // Predicated region
      $region37: #{_lambda_.1} parent=11 // pred_check
        %p356 = pneg %p192
      $region38: #{_lambda_.1} parent=11 // pred_check_branch
        %358 = sbr.rel (%p356) target = $region40
      $region39: #{_lambda_.1} parent=11 // pred_region
        _
      $region40: #{_lambda_.1} parent=11 // pred_fallthru
        _
      // Predicated region
      $region41: #{_lambda_.1} parent=11 // pred_check
        %p359 = pneg %p213
      $region42: #{_lambda_.1} parent=11 // pred_check_branch
        %361 = sbr.rel (%p359) target = $region44
      $region43: #{_lambda_.1} parent=11 // pred_region
        _
      $region44: #{_lambda_.1} parent=11 // pred_fallthru
        _
      // Predicated region
      $region45: #{_lambda_.1} parent=11 // pred_check
        %p362 = pneg %p234
      $region46: #{_lambda_.1} parent=11 // pred_check_branch
        %364 = sbr.rel (%p362) target = $region48
      $region47: #{_lambda_.1} parent=11 // pred_region
        _
      $region48: #{_lambda_.1} parent=11 // pred_fallthru
        _
      // Predicated region
      $region49: #{_lambda_.1} parent=11 // pred_check
        %p365 = pneg %p255
      $region50: #{_lambda_.1} parent=11 // pred_check_branch
        %367 = sbr.rel (%p365) target = $region52
      $region51: #{_lambda_.1} parent=11 // pred_region
        _
      $region52: #{_lambda_.1} parent=11 // pred_fallthru
        _
      // Predicated region
      $region53: #{_lambda_.1} parent=11 // pred_check
        %p368 = pneg %p276
      $region54: #{_lambda_.1} parent=11 // pred_check_branch
        %370 = sbr.rel (%p368) target = $region56
      $region55: #{_lambda_.1} parent=11 // pred_region
        _
      $region56: #{_lambda_.1} parent=11 // pred_fallthru
        _
      // Predicated region
      $region57: #{_lambda_.1} parent=11 // pred_check
        %p371 = pneg %p297
      $region58: #{_lambda_.1} parent=11 // pred_check_branch
        %373 = sbr.rel (%p371) target = $region60
      $region59: #{_lambda_.1} parent=11 // pred_region
        _
      $region60: #{_lambda_.1} parent=11 // pred_fallthru
        _
    $region12: #{_lambda_.1} parent=5 // pred_fallthru
      _
    %p374 = scmp.lt.s32.totalorder %s19, 2
    // Predicated region
    $region61: #{_lambda_.1} parent=5 // pred_check
      %p375 = pneg %p374
    $region62: #{_lambda_.1} parent=5 // pred_check_branch
      %377 = sbr.rel (%p375) target = $region64
    $region63: #{_lambda_.1} parent=5 // pred_region
      // Predicated region
      $region65: #{_lambda_.1} parent=63 // pred_check
        %p378 = pneg %p39
      $region66: #{_lambda_.1} parent=63 // pred_check_branch
        %380 = sbr.rel (%p378) target = $region68
      $region67: #{_lambda_.1} parent=63 // pred_region
        %p381 = scmp.lt.s32.totalorder %s19, 1
        %s382 = scalar_select %p381, %s19, 1
        %s383 = smul.addr %s382, 128
        %s384 = smul.addr %s383, 8
        %s385 = scalar_lea.vmem %s0, %s384
      $region68: #{_lambda_.1} parent=63 // pred_fallthru
        _
    $region64: #{_lambda_.1} parent=5 // pred_fallthru
      _
    %p386 = scmp.le.s32.totalorder 1, %s19
    %p387 = scmp.lt.s32.totalorder %s19, 3
    %p388 = pnand %p386, %p387
    %p389 = pneg %p388
    // Predicated region
    $region69: #{_lambda_.1} parent=5 // pred_check
      _
    $region70: #{_lambda_.1} parent=5 // pred_check_branch
      %391 = sbr.rel (%p388) target = $region72
    $region71: #{_lambda_.1} parent=5 // pred_region
      %s392 = ssub.s32 %s19, 1
      %p393 = scmp.lt.s32.totalorder %s24, 1
      %s394 = scalar_select %p393, %s24, 1
      %s395 = smul.addr %s394, 128
      %s396 = smul.addr %s395, 8
      %s397 = scalar_lea.vmem %s0, %s396
      %p398 = pneg %p45
      %p399 = pneg %p42
      %p400 = pneg %p66
      %p401 = pneg %p63
      %p402 = pneg %p87
      %p403 = pneg %p84
      %p404 = pneg %p108
      %p405 = pneg %p105
      %p406 = pneg %p129
      %p407 = pneg %p126
      %p408 = pneg %p150
      %p409 = pneg %p147
      %p410 = pneg %p171
      %p411 = pneg %p168
      %p412 = pneg %p192
      %p413 = pneg %p189
      %p414 = pneg %p213
      %p415 = pneg %p210
      %p416 = pneg %p234
      %p417 = pneg %p231
      %p418 = pneg %p255
      %p419 = pneg %p252
      %p420 = pneg %p276
      %p421 = pneg %p273
      %p422 = pneg %p297
      %p423 = pneg %p294
      %p424 = pneg %p323
      %p425 = pneg %p320
      %p426 = scmp.lt.s32.totalorder %s24, 1
      %s427 = scalar_select %p426, %s24, 1
      %s428 = scalar_lea.vmem %s13, %s427
      %p429 = scmp.lt.s32.totalorder %s24, 1
      %s430 = scalar_select %p429, %s24, 1
      %s431 = smul.addr %s430, 128
      %s432 = smul.addr %s431, 8
      %s433 = scalar_lea.vmem %s0, %s432
      %p434 = scmp.lt.s32.totalorder %s24, 1
      %s435 = scalar_select %p434, %s24, 1
      %s436 = scalar_lea.vmem %s13, %s435
      %v437 = vld [vmem:[%s433] sm:$0xff]
      %v438 = vld [vmem:[%s433 + $0x8] sm:$0xff]
      %v439 = vld [vmem:[%s433 + $0x10] sm:$0xff]
      %v440 = vld [vmem:[%s433 + $0x18] sm:$0xff]
      %v441 = vld [vmem:[%s433 + $0x20] sm:$0xff]
      %v442 = vld [vmem:[%s433 + $0x28] sm:$0xff]
      %v443 = vld [vmem:[%s433 + $0x30] sm:$0xff]
      %v444 = vld [vmem:[%s433 + $0x38] sm:$0xff]
      %v445 = vld [vmem:[%s433 + $0x40] sm:$0xff]
      %v446 = vld [vmem:[%s433 + $0x48] sm:$0xff]
      %v447 = vld [vmem:[%s433 + $0x50] sm:$0xff]
      %v448 = vld [vmem:[%s433 + $0x58] sm:$0xff]
      %v449 = vld [vmem:[%s433 + $0x60] sm:$0xff]
      %v450 = vld [vmem:[%s433 + $0x68] sm:$0xff]
      %v451 = vld [vmem:[%s433 + $0x70] sm:$0xff]
      %v452 = vld [vmem:[%s433 + $0x78] sm:$0xff]
      %v453 = vld [vmem:[%s433 + $0x80] sm:$0xff]
      %v454 = vld [vmem:[%s433 + $0x88] sm:$0xff]
      %v455 = vld [vmem:[%s433 + $0x90] sm:$0xff]
      %v456 = vld [vmem:[%s433 + $0x98] sm:$0xff]
      %v457 = vld [vmem:[%s433 + $0xa0] sm:$0xff]
      %v458 = vld [vmem:[%s433 + $0xa8] sm:$0xff]
      %v459 = vld [vmem:[%s433 + $0xb0] sm:$0xff]
      %v460 = vld [vmem:[%s433 + $0xb8] sm:$0xff]
      %v461 = vld [vmem:[%s433 + $0xc0] sm:$0xff]
      %v462 = vld [vmem:[%s433 + $0xc8] sm:$0xff]
      %v463 = vld [vmem:[%s433 + $0xd0] sm:$0xff]
      %v464 = vld [vmem:[%s433 + $0xd8] sm:$0xff]
      %v465 = vld [vmem:[%s433 + $0xe0] sm:$0xff]
      %v466 = vld [vmem:[%s433 + $0xe8] sm:$0xff]
      %v467 = vld [vmem:[%s433 + $0xf0] sm:$0xff]
      %v468 = vld [vmem:[%s433 + $0xf8] sm:$0xff]
      %v469 = vld [vmem:[%s433 + $0x100] sm:$0xff]
      %v470 = vld [vmem:[%s433 + $0x108] sm:$0xff]
      %v471 = vld [vmem:[%s433 + $0x110] sm:$0xff]
      %v472 = vld [vmem:[%s433 + $0x118] sm:$0xff]
      %v473 = vld [vmem:[%s433 + $0x120] sm:$0xff]
      %v474 = vld [vmem:[%s433 + $0x128] sm:$0xff]
      %v475 = vld [vmem:[%s433 + $0x130] sm:$0xff]
      %v476 = vld [vmem:[%s433 + $0x138] sm:$0xff]
      %v477 = vld [vmem:[%s433 + $0x140] sm:$0xff]
      %v478 = vld [vmem:[%s433 + $0x148] sm:$0xff]
      %v479 = vld [vmem:[%s433 + $0x150] sm:$0xff]
      %v480 = vld [vmem:[%s433 + $0x158] sm:$0xff]
      %v481 = vld [vmem:[%s433 + $0x160] sm:$0xff]
      %v482 = vld [vmem:[%s433 + $0x168] sm:$0xff]
      %v483 = vld [vmem:[%s433 + $0x170] sm:$0xff]
      %v484 = vld [vmem:[%s433 + $0x178] sm:$0xff]
      %v485 = vld [vmem:[%s433 + $0x180] sm:$0xff]
      %v486 = vld [vmem:[%s433 + $0x188] sm:$0xff]
      %v487 = vld [vmem:[%s433 + $0x190] sm:$0xff]
      %v488 = vld [vmem:[%s433 + $0x198] sm:$0xff]
      %v489 = vld [vmem:[%s433 + $0x1a0] sm:$0xff]
      %v490 = vld [vmem:[%s433 + $0x1a8] sm:$0xff]
      %v491 = vld [vmem:[%s433 + $0x1b0] sm:$0xff]
      %v492 = vld [vmem:[%s433 + $0x1b8] sm:$0xff]
      %v493 = vld [vmem:[%s433 + $0x1c0] sm:$0xff]
      %v494 = vld [vmem:[%s433 + $0x1c8] sm:$0xff]
      %v495 = vld [vmem:[%s433 + $0x1d0] sm:$0xff]
      %v496 = vld [vmem:[%s433 + $0x1d8] sm:$0xff]
      %v497 = vld [vmem:[%s433 + $0x1e0] sm:$0xff]
      %v498 = vld [vmem:[%s433 + $0x1e8] sm:$0xff]
      %v499 = vld [vmem:[%s433 + $0x1f0] sm:$0xff]
      %v500 = vld [vmem:[%s433 + $0x1f8] sm:$0xff]
      %v501 = vld [vmem:[%s433 + $0x200] sm:$0xff]
      %v502 = vld [vmem:[%s433 + $0x208] sm:$0xff]
      %v503 = vld [vmem:[%s433 + $0x210] sm:$0xff]
      %v504 = vld [vmem:[%s433 + $0x218] sm:$0xff]
      %v505 = vld [vmem:[%s433 + $0x220] sm:$0xff]
      %v506 = vld [vmem:[%s433 + $0x228] sm:$0xff]
      %v507 = vld [vmem:[%s433 + $0x230] sm:$0xff]
      %v508 = vld [vmem:[%s433 + $0x238] sm:$0xff]
      %v509 = vld [vmem:[%s433 + $0x240] sm:$0xff]
      %v510 = vld [vmem:[%s433 + $0x248] sm:$0xff]
      %v511 = vld [vmem:[%s433 + $0x250] sm:$0xff]
      %v512 = vld [vmem:[%s433 + $0x258] sm:$0xff]
      %v513 = vld [vmem:[%s433 + $0x260] sm:$0xff]
      %v514 = vld [vmem:[%s433 + $0x268] sm:$0xff]
      %v515 = vld [vmem:[%s433 + $0x270] sm:$0xff]
      %v516 = vld [vmem:[%s433 + $0x278] sm:$0xff]
      %v517 = vld [vmem:[%s433 + $0x280] sm:$0xff]
      %v518 = vld [vmem:[%s433 + $0x288] sm:$0xff]
      %v519 = vld [vmem:[%s433 + $0x290] sm:$0xff]
      %v520 = vld [vmem:[%s433 + $0x298] sm:$0xff]
      %v521 = vld [vmem:[%s433 + $0x2a0] sm:$0xff]
      %v522 = vld [vmem:[%s433 + $0x2a8] sm:$0xff]
      %v523 = vld [vmem:[%s433 + $0x2b0] sm:$0xff]
      %v524 = vld [vmem:[%s433 + $0x2b8] sm:$0xff]
      %v525 = vld [vmem:[%s433 + $0x2c0] sm:$0xff]
      %v526 = vld [vmem:[%s433 + $0x2c8] sm:$0xff]
      %v527 = vld [vmem:[%s433 + $0x2d0] sm:$0xff]
      %v528 = vld [vmem:[%s433 + $0x2d8] sm:$0xff]
      %v529 = vld [vmem:[%s433 + $0x2e0] sm:$0xff]
      %v530 = vld [vmem:[%s433 + $0x2e8] sm:$0xff]
      %v531 = vld [vmem:[%s433 + $0x2f0] sm:$0xff]
      %v532 = vld [vmem:[%s433 + $0x2f8] sm:$0xff]
      %v533 = vld [vmem:[%s433 + $0x300] sm:$0xff]
      %v534 = vld [vmem:[%s433 + $0x308] sm:$0xff]
      %v535 = vld [vmem:[%s433 + $0x310] sm:$0xff]
      %v536 = vld [vmem:[%s433 + $0x318] sm:$0xff]
      %v537 = vld [vmem:[%s433 + $0x320] sm:$0xff]
      %v538 = vld [vmem:[%s433 + $0x328] sm:$0xff]
      %v539 = vld [vmem:[%s433 + $0x330] sm:$0xff]
      %v540 = vld [vmem:[%s433 + $0x338] sm:$0xff]
      %v541 = vld [vmem:[%s433 + $0x340] sm:$0xff]
      %v542 = vld [vmem:[%s433 + $0x348] sm:$0xff]
      %v543 = vld [vmem:[%s433 + $0x350] sm:$0xff]
      %v544 = vld [vmem:[%s433 + $0x358] sm:$0xff]
      %v545 = vld [vmem:[%s433 + $0x360] sm:$0xff]
      %v546 = vld [vmem:[%s433 + $0x368] sm:$0xff]
      %v547 = vld [vmem:[%s433 + $0x370] sm:$0xff]
      %v548 = vld [vmem:[%s433 + $0x378] sm:$0xff]
      %v549 = vld [vmem:[%s433 + $0x380] sm:$0xff]
      %v550 = vld [vmem:[%s433 + $0x388] sm:$0xff]
      %v551 = vld [vmem:[%s433 + $0x390] sm:$0xff]
      %v552 = vld [vmem:[%s433 + $0x398] sm:$0xff]
      %v553 = vld [vmem:[%s433 + $0x3a0] sm:$0xff]
      %v554 = vld [vmem:[%s433 + $0x3a8] sm:$0xff]
      %v555 = vld [vmem:[%s433 + $0x3b0] sm:$0xff]
      %v556 = vld [vmem:[%s433 + $0x3b8] sm:$0xff]
      %v557 = vld [vmem:[%s433 + $0x3c0] sm:$0xff]
      %v558 = vld [vmem:[%s433 + $0x3c8] sm:$0xff]
      %v559 = vld [vmem:[%s433 + $0x3d0] sm:$0xff]
      %v560 = vld [vmem:[%s433 + $0x3d8] sm:$0xff]
      %v561 = vld [vmem:[%s433 + $0x3e0] sm:$0xff]
      %v562 = vld [vmem:[%s433 + $0x3e8] sm:$0xff]
      %v563 = vld [vmem:[%s433 + $0x3f0] sm:$0xff]
      %v564 = vld [vmem:[%s433 + $0x3f8] sm:$0xff]
      %vm565 = vcmask 23552
      %566 = vst.msk [vmem:[#allocation2 + $0x8] sm:$0xff] %vm565, %v437
      %567 = vst.msk [vmem:[#allocation2 + $0x10] sm:$0xff] %vm565, %v438
      %568 = vst.msk [vmem:[#allocation2 + $0x18] sm:$0xff] %vm565, %v439
      %569 = vst.msk [vmem:[#allocation2 + $0x20] sm:$0xff] %vm565, %v440
      %570 = vst.msk [vmem:[#allocation2 + $0x28] sm:$0xff] %vm565, %v441
      %571 = vst.msk [vmem:[#allocation2 + $0x30] sm:$0xff] %vm565, %v442
      %572 = vst.msk [vmem:[#allocation2 + $0x38] sm:$0xff] %vm565, %v443
      %573 = vst.msk [vmem:[#allocation2 + $0x40] sm:$0xff] %vm565, %v444
      %574 = vst.msk [vmem:[#allocation2 + $0x48] sm:$0xff] %vm565, %v445
      %575 = vst.msk [vmem:[#allocation2 + $0x50] sm:$0xff] %vm565, %v446
      %576 = vst.msk [vmem:[#allocation2 + $0x58] sm:$0xff] %vm565, %v447
      %577 = vst.msk [vmem:[#allocation2 + $0x60] sm:$0xff] %vm565, %v448
      %578 = vst.msk [vmem:[#allocation2 + $0x68] sm:$0xff] %vm565, %v449
      %579 = vst.msk [vmem:[#allocation2 + $0x70] sm:$0xff] %vm565, %v450
      %580 = vst.msk [vmem:[#allocation2 + $0x78] sm:$0xff] %vm565, %v451
      %581 = vst.msk [vmem:[#allocation2 + $0x80] sm:$0xff] %vm565, %v452
      %582 = vst.msk [vmem:[#allocation2 + $0x88] sm:$0xff] %vm565, %v453
      %583 = vst.msk [vmem:[#allocation2 + $0x90] sm:$0xff] %vm565, %v454
      %584 = vst.msk [vmem:[#allocation2 + $0x98] sm:$0xff] %vm565, %v455
      %585 = vst.msk [vmem:[#allocation2 + $0xa0] sm:$0xff] %vm565, %v456
      %586 = vst.msk [vmem:[#allocation2 + $0xa8] sm:$0xff] %vm565, %v457
      %587 = vst.msk [vmem:[#allocation2 + $0xb0] sm:$0xff] %vm565, %v458
      %588 = vst.msk [vmem:[#allocation2 + $0xb8] sm:$0xff] %vm565, %v459
      %589 = vst.msk [vmem:[#allocation2 + $0xc0] sm:$0xff] %vm565, %v460
      %590 = vst.msk [vmem:[#allocation2 + $0xc8] sm:$0xff] %vm565, %v461
      %591 = vst.msk [vmem:[#allocation2 + $0xd0] sm:$0xff] %vm565, %v462
      %592 = vst.msk [vmem:[#allocation2 + $0xd8] sm:$0xff] %vm565, %v463
      %593 = vst.msk [vmem:[#allocation2 + $0xe0] sm:$0xff] %vm565, %v464
      %594 = vst.msk [vmem:[#allocation2 + $0xe8] sm:$0xff] %vm565, %v465
      %595 = vst.msk [vmem:[#allocation2 + $0xf0] sm:$0xff] %vm565, %v466
      %596 = vst.msk [vmem:[#allocation2 + $0xf8] sm:$0xff] %vm565, %v467
      %597 = vst.msk [vmem:[#allocation2 + $0x100] sm:$0xff] %vm565, %v468
      %598 = vst.msk [vmem:[#allocation2 + $0x108] sm:$0xff] %vm565, %v469
      %599 = vst.msk [vmem:[#allocation2 + $0x110] sm:$0xff] %vm565, %v470
      %600 = vst.msk [vmem:[#allocation2 + $0x118] sm:$0xff] %vm565, %v471
      %601 = vst.msk [vmem:[#allocation2 + $0x120] sm:$0xff] %vm565, %v472
      %602 = vst.msk [vmem:[#allocation2 + $0x128] sm:$0xff] %vm565, %v473
      %603 = vst.msk [vmem:[#allocation2 + $0x130] sm:$0xff] %vm565, %v474
      %604 = vst.msk [vmem:[#allocation2 + $0x138] sm:$0xff] %vm565, %v475
      %605 = vst.msk [vmem:[#allocation2 + $0x140] sm:$0xff] %vm565, %v476
      %606 = vst.msk [vmem:[#allocation2 + $0x148] sm:$0xff] %vm565, %v477
      %607 = vst.msk [vmem:[#allocation2 + $0x150] sm:$0xff] %vm565, %v478
      %608 = vst.msk [vmem:[#allocation2 + $0x158] sm:$0xff] %vm565, %v479
      %609 = vst.msk [vmem:[#allocation2 + $0x160] sm:$0xff] %vm565, %v480
      %610 = vst.msk [vmem:[#allocation2 + $0x168] sm:$0xff] %vm565, %v481
      %611 = vst.msk [vmem:[#allocation2 + $0x170] sm:$0xff] %vm565, %v482
      %612 = vst.msk [vmem:[#allocation2 + $0x178] sm:$0xff] %vm565, %v483
      %613 = vst.msk [vmem:[#allocation2 + $0x180] sm:$0xff] %vm565, %v484
      %614 = vst.msk [vmem:[#allocation2 + $0x188] sm:$0xff] %vm565, %v485
      %615 = vst.msk [vmem:[#allocation2 + $0x190] sm:$0xff] %vm565, %v486
      %616 = vst.msk [vmem:[#allocation2 + $0x198] sm:$0xff] %vm565, %v487
      %617 = vst.msk [vmem:[#allocation2 + $0x1a0] sm:$0xff] %vm565, %v488
      %618 = vst.msk [vmem:[#allocation2 + $0x1a8] sm:$0xff] %vm565, %v489
      %619 = vst.msk [vmem:[#allocation2 + $0x1b0] sm:$0xff] %vm565, %v490
      %620 = vst.msk [vmem:[#allocation2 + $0x1b8] sm:$0xff] %vm565, %v491
      %621 = vst.msk [vmem:[#allocation2 + $0x1c0] sm:$0xff] %vm565, %v492
      %622 = vst.msk [vmem:[#allocation2 + $0x1c8] sm:$0xff] %vm565, %v493
      %623 = vst.msk [vmem:[#allocation2 + $0x1d0] sm:$0xff] %vm565, %v494
      %624 = vst.msk [vmem:[#allocation2 + $0x1d8] sm:$0xff] %vm565, %v495
      %625 = vst.msk [vmem:[#allocation2 + $0x1e0] sm:$0xff] %vm565, %v496
      %626 = vst.msk [vmem:[#allocation2 + $0x1e8] sm:$0xff] %vm565, %v497
      %627 = vst.msk [vmem:[#allocation2 + $0x1f0] sm:$0xff] %vm565, %v498
      %628 = vst.msk [vmem:[#allocation2 + $0x1f8] sm:$0xff] %vm565, %v499
      %629 = vst.msk [vmem:[#allocation2 + $0x200] sm:$0xff] %vm565, %v500
      %630 = vst.msk [vmem:[#allocation2 + $0x208] sm:$0xff] %vm565, %v501
      %631 = vst.msk [vmem:[#allocation2 + $0x210] sm:$0xff] %vm565, %v502
      %632 = vst.msk [vmem:[#allocation2 + $0x218] sm:$0xff] %vm565, %v503
      %633 = vst.msk [vmem:[#allocation2 + $0x220] sm:$0xff] %vm565, %v504
      %634 = vst.msk [vmem:[#allocation2 + $0x228] sm:$0xff] %vm565, %v505
      %635 = vst.msk [vmem:[#allocation2 + $0x230] sm:$0xff] %vm565, %v506
      %636 = vst.msk [vmem:[#allocation2 + $0x238] sm:$0xff] %vm565, %v507
      %637 = vst.msk [vmem:[#allocation2 + $0x240] sm:$0xff] %vm565, %v508
      %638 = vst.msk [vmem:[#allocation2 + $0x248] sm:$0xff] %vm565, %v509
      %639 = vst.msk [vmem:[#allocation2 + $0x250] sm:$0xff] %vm565, %v510
      %640 = vst.msk [vmem:[#allocation2 + $0x258] sm:$0xff] %vm565, %v511
      %641 = vst.msk [vmem:[#allocation2 + $0x260] sm:$0xff] %vm565, %v512
      %642 = vst.msk [vmem:[#allocation2 + $0x268] sm:$0xff] %vm565, %v513
      %643 = vst.msk [vmem:[#allocation2 + $0x270] sm:$0xff] %vm565, %v514
      %644 = vst.msk [vmem:[#allocation2 + $0x278] sm:$0xff] %vm565, %v515
      %645 = vst.msk [vmem:[#allocation2 + $0x280] sm:$0xff] %vm565, %v516
      %646 = vst.msk [vmem:[#allocation2 + $0x288] sm:$0xff] %vm565, %v517
      %647 = vst.msk [vmem:[#allocation2 + $0x290] sm:$0xff] %vm565, %v518
      %648 = vst.msk [vmem:[#allocation2 + $0x298] sm:$0xff] %vm565, %v519
      %649 = vst.msk [vmem:[#allocation2 + $0x2a0] sm:$0xff] %vm565, %v520
      %650 = vst.msk [vmem:[#allocation2 + $0x2a8] sm:$0xff] %vm565, %v521
      %651 = vst.msk [vmem:[#allocation2 + $0x2b0] sm:$0xff] %vm565, %v522
      %652 = vst.msk [vmem:[#allocation2 + $0x2b8] sm:$0xff] %vm565, %v523
      %653 = vst.msk [vmem:[#allocation2 + $0x2c0] sm:$0xff] %vm565, %v524
      %654 = vst.msk [vmem:[#allocation2 + $0x2c8] sm:$0xff] %vm565, %v525
      %655 = vst.msk [vmem:[#allocation2 + $0x2d0] sm:$0xff] %vm565, %v526
      %656 = vst.msk [vmem:[#allocation2 + $0x2d8] sm:$0xff] %vm565, %v527
      %657 = vst.msk [vmem:[#allocation2 + $0x2e0] sm:$0xff] %vm565, %v528
      %658 = vst.msk [vmem:[#allocation2 + $0x2e8] sm:$0xff] %vm565, %v529
      %659 = vst.msk [vmem:[#allocation2 + $0x2f0] sm:$0xff] %vm565, %v530
      %660 = vst.msk [vmem:[#allocation2 + $0x2f8] sm:$0xff] %vm565, %v531
      %661 = vst.msk [vmem:[#allocation2 + $0x300] sm:$0xff] %vm565, %v532
      %662 = vst.msk [vmem:[#allocation2 + $0x308] sm:$0xff] %vm565, %v533
      %663 = vst.msk [vmem:[#allocation2 + $0x310] sm:$0xff] %vm565, %v534
      %664 = vst.msk [vmem:[#allocation2 + $0x318] sm:$0xff] %vm565, %v535
      %665 = vst.msk [vmem:[#allocation2 + $0x320] sm:$0xff] %vm565, %v536
      %666 = vst.msk [vmem:[#allocation2 + $0x328] sm:$0xff] %vm565, %v537
      %667 = vst.msk [vmem:[#allocation2 + $0x330] sm:$0xff] %vm565, %v538
      %668 = vst.msk [vmem:[#allocation2 + $0x338] sm:$0xff] %vm565, %v539
      %669 = vst.msk [vmem:[#allocation2 + $0x340] sm:$0xff] %vm565, %v540
      %670 = vst.msk [vmem:[#allocation2 + $0x348] sm:$0xff] %vm565, %v541
      %671 = vst.msk [vmem:[#allocation2 + $0x350] sm:$0xff] %vm565, %v542
      %672 = vst.msk [vmem:[#allocation2 + $0x358] sm:$0xff] %vm565, %v543
      %673 = vst.msk [vmem:[#allocation2 + $0x360] sm:$0xff] %vm565, %v544
      %674 = vst.msk [vmem:[#allocation2 + $0x368] sm:$0xff] %vm565, %v545
      %675 = vst.msk [vmem:[#allocation2 + $0x370] sm:$0xff] %vm565, %v546
      %676 = vst.msk [vmem:[#allocation2 + $0x378] sm:$0xff] %vm565, %v547
      %677 = vst.msk [vmem:[#allocation2 + $0x380] sm:$0xff] %vm565, %v548
      %678 = vst.msk [vmem:[#allocation2 + $0x388] sm:$0xff] %vm565, %v549
      %679 = vst.msk [vmem:[#allocation2 + $0x390] sm:$0xff] %vm565, %v550
      %680 = vst.msk [vmem:[#allocation2 + $0x398] sm:$0xff] %vm565, %v551
      %681 = vst.msk [vmem:[#allocation2 + $0x3a0] sm:$0xff] %vm565, %v552
      %682 = vst.msk [vmem:[#allocation2 + $0x3a8] sm:$0xff] %vm565, %v553
      %683 = vst.msk [vmem:[#allocation2 + $0x3b0] sm:$0xff] %vm565, %v554
      %684 = vst.msk [vmem:[#allocation2 + $0x3b8] sm:$0xff] %vm565, %v555
      %685 = vst.msk [vmem:[#allocation2 + $0x3c0] sm:$0xff] %vm565, %v556
      %686 = vst.msk [vmem:[#allocation2 + $0x3c8] sm:$0xff] %vm565, %v557
      %687 = vst.msk [vmem:[#allocation2 + $0x3d0] sm:$0xff] %vm565, %v558
      %688 = vst.msk [vmem:[#allocation2 + $0x3d8] sm:$0xff] %vm565, %v559
      %689 = vst.msk [vmem:[#allocation2 + $0x3e0] sm:$0xff] %vm565, %v560
      %690 = vst.msk [vmem:[#allocation2 + $0x3e8] sm:$0xff] %vm565, %v561
      %691 = vst.msk [vmem:[#allocation2 + $0x3f0] sm:$0xff] %vm565, %v562
      %692 = vst.msk [vmem:[#allocation2 + $0x3f8] sm:$0xff] %vm565, %v563
      %693 = vst.msk [vmem:[#allocation2 + $0x400] sm:$0xff] %vm565, %v564
      %vm694 = vcmask 17409
      %695 = vst.msk [vmem:[#allocation2 + $0x6] sm:$0x2] %vm694, %v437
      %vm696 = vcmask 18434
      %697 = vst.msk [vmem:[#allocation2 + $0x4] sm:$0x4] %vm696, %v437
      %vm698 = vcmask 19459
      %699 = vst.msk [vmem:[#allocation2 + $0x2] sm:$0x8] %vm698, %v437
      %vm700 = vcmask 22534
      %701 = vst.msk [vmem:[#allocation2 + $0x402] sm:$0x40] %vm700, %v564
      %vm702 = vcmask 21509
      %703 = vst.msk [vmem:[#allocation2 + $0x404] sm:$0x20] %vm702, %v564
      %vm704 = vcmask 20484
      %705 = vst.msk [vmem:[#allocation2 + $0x406] sm:$0x10] %vm704, %v564
      %s706 = scalar_lea.vmem [#allocation2], 5
      %v707 = vld [vmem:[%s706] ss:$4 sm:$0xff]
      %s708 = scalar_lea.vmem [#allocation2], 37
      %v709 = vld [vmem:[%s708] ss:$4 sm:$0xff]
      %s710 = scalar_lea.vmem [#allocation2], 69
      %v711 = vld [vmem:[%s710] ss:$4 sm:$0xff]
      %s712 = scalar_lea.vmem [#allocation2], 101
      %v713 = vld [vmem:[%s712] ss:$4 sm:$0xff]
      %s714 = scalar_lea.vmem [#allocation2], 133
      %v715 = vld [vmem:[%s714] ss:$4 sm:$0xff]
      %s716 = scalar_lea.vmem [#allocation2], 165
      %v717 = vld [vmem:[%s716] ss:$4 sm:$0xff]
      %s718 = scalar_lea.vmem [#allocation2], 197
      %v719 = vld [vmem:[%s718] ss:$4 sm:$0xff]
      %s720 = scalar_lea.vmem [#allocation2], 229
      %v721 = vld [vmem:[%s720] ss:$4 sm:$0xff]
      %s722 = scalar_lea.vmem [#allocation2], 261
      %v723 = vld [vmem:[%s722] ss:$4 sm:$0xff]
      %s724 = scalar_lea.vmem [#allocation2], 293
      %v725 = vld [vmem:[%s724] ss:$4 sm:$0xff]
      %s726 = scalar_lea.vmem [#allocation2], 325
      %v727 = vld [vmem:[%s726] ss:$4 sm:$0xff]
      %s728 = scalar_lea.vmem [#allocation2], 357
      %v729 = vld [vmem:[%s728] ss:$4 sm:$0xff]
      %s730 = scalar_lea.vmem [#allocation2], 389
      %v731 = vld [vmem:[%s730] ss:$4 sm:$0xff]
      %s732 = scalar_lea.vmem [#allocation2], 421
      %v733 = vld [vmem:[%s732] ss:$4 sm:$0xff]
      %s734 = scalar_lea.vmem [#allocation2], 453
      %v735 = vld [vmem:[%s734] ss:$4 sm:$0xff]
      %s736 = scalar_lea.vmem [#allocation2], 485
      %v737 = vld [vmem:[%s736] ss:$4 sm:$0xff]
      %s738 = scalar_lea.vmem [#allocation2], 517
      %v739 = vld [vmem:[%s738] ss:$4 sm:$0xff]
      %s740 = scalar_lea.vmem [#allocation2], 549
      %v741 = vld [vmem:[%s740] ss:$4 sm:$0xff]
      %s742 = scalar_lea.vmem [#allocation2], 581
      %v743 = vld [vmem:[%s742] ss:$4 sm:$0xff]
      %s744 = scalar_lea.vmem [#allocation2], 613
      %v745 = vld [vmem:[%s744] ss:$4 sm:$0xff]
      %s746 = scalar_lea.vmem [#allocation2], 645
      %v747 = vld [vmem:[%s746] ss:$4 sm:$0xff]
      %s748 = scalar_lea.vmem [#allocation2], 677
      %v749 = vld [vmem:[%s748] ss:$4 sm:$0xff]
      %s750 = scalar_lea.vmem [#allocation2], 709
      %v751 = vld [vmem:[%s750] ss:$4 sm:$0xff]
      %s752 = scalar_lea.vmem [#allocation2], 741
      %v753 = vld [vmem:[%s752] ss:$4 sm:$0xff]
      %s754 = scalar_lea.vmem [#allocation2], 773
      %v755 = vld [vmem:[%s754] ss:$4 sm:$0xff]
      %s756 = scalar_lea.vmem [#allocation2], 805
      %v757 = vld [vmem:[%s756] ss:$4 sm:$0xff]
      %s758 = scalar_lea.vmem [#allocation2], 837
      %v759 = vld [vmem:[%s758] ss:$4 sm:$0xff]
      %s760 = scalar_lea.vmem [#allocation2], 869
      %v761 = vld [vmem:[%s760] ss:$4 sm:$0xff]
      %s762 = scalar_lea.vmem [#allocation2], 901
      %v763 = vld [vmem:[%s762] ss:$4 sm:$0xff]
      %s764 = scalar_lea.vmem [#allocation2], 933
      %v765 = vld [vmem:[%s764] ss:$4 sm:$0xff]
      %s766 = scalar_lea.vmem [#allocation2], 965
      %v767 = vld [vmem:[%s766] ss:$4 sm:$0xff]
      %s768 = scalar_lea.vmem [#allocation2], 997
      %v769 = vld [vmem:[%s768] ss:$4 sm:$0xff]
      %v770 = vld [vmem:[%s1] sm:$0x7]
      %s771 = scalar_lea.vmem [#allocation2], 6
      %v772 = vld [vmem:[%s771] ss:$4 sm:$0xff]
      %s773 = scalar_lea.vmem [#allocation2], 38
      %v774 = vld [vmem:[%s773] ss:$4 sm:$0xff]
      %s775 = scalar_lea.vmem [#allocation2], 70
      %v776 = vld [vmem:[%s775] ss:$4 sm:$0xff]
      %s777 = scalar_lea.vmem [#allocation2], 102
      %v778 = vld [vmem:[%s777] ss:$4 sm:$0xff]
      %s779 = scalar_lea.vmem [#allocation2], 134
      %v780 = vld [vmem:[%s779] ss:$4 sm:$0xff]
      %s781 = scalar_lea.vmem [#allocation2], 166
      %v782 = vld [vmem:[%s781] ss:$4 sm:$0xff]
      %s783 = scalar_lea.vmem [#allocation2], 198
      %v784 = vld [vmem:[%s783] ss:$4 sm:$0xff]
      %s785 = scalar_lea.vmem [#allocation2], 230
      %v786 = vld [vmem:[%s785] ss:$4 sm:$0xff]
      %s787 = scalar_lea.vmem [#allocation2], 262
      %v788 = vld [vmem:[%s787] ss:$4 sm:$0xff]
      %s789 = scalar_lea.vmem [#allocation2], 294
      %v790 = vld [vmem:[%s789] ss:$4 sm:$0xff]
      %s791 = scalar_lea.vmem [#allocation2], 326
      %v792 = vld [vmem:[%s791] ss:$4 sm:$0xff]
      %s793 = scalar_lea.vmem [#allocation2], 358
      %v794 = vld [vmem:[%s793] ss:$4 sm:$0xff]
      %s795 = scalar_lea.vmem [#allocation2], 390
      %v796 = vld [vmem:[%s795] ss:$4 sm:$0xff]
      %s797 = scalar_lea.vmem [#allocation2], 422
      %v798 = vld [vmem:[%s797] ss:$4 sm:$0xff]
      %s799 = scalar_lea.vmem [#allocation2], 454
      %v800 = vld [vmem:[%s799] ss:$4 sm:$0xff]
      %s801 = scalar_lea.vmem [#allocation2], 486
      %v802 = vld [vmem:[%s801] ss:$4 sm:$0xff]
      %s803 = scalar_lea.vmem [#allocation2], 518
      %v804 = vld [vmem:[%s803] ss:$4 sm:$0xff]
      %s805 = scalar_lea.vmem [#allocation2], 550
      %v806 = vld [vmem:[%s805] ss:$4 sm:$0xff]
      %s807 = scalar_lea.vmem [#allocation2], 582
      %v808 = vld [vmem:[%s807] ss:$4 sm:$0xff]
      %s809 = scalar_lea.vmem [#allocation2], 614
      %v810 = vld [vmem:[%s809] ss:$4 sm:$0xff]
      %s811 = scalar_lea.vmem [#allocation2], 646
      %v812 = vld [vmem:[%s811] ss:$4 sm:$0xff]
      %s813 = scalar_lea.vmem [#allocation2], 678
      %v814 = vld [vmem:[%s813] ss:$4 sm:$0xff]
      %s815 = scalar_lea.vmem [#allocation2], 710
      %v816 = vld [vmem:[%s815] ss:$4 sm:$0xff]
      %s817 = scalar_lea.vmem [#allocation2], 742
      %v818 = vld [vmem:[%s817] ss:$4 sm:$0xff]
      %s819 = scalar_lea.vmem [#allocation2], 774
      %v820 = vld [vmem:[%s819] ss:$4 sm:$0xff]
      %s821 = scalar_lea.vmem [#allocation2], 806
      %v822 = vld [vmem:[%s821] ss:$4 sm:$0xff]
      %s823 = scalar_lea.vmem [#allocation2], 838
      %v824 = vld [vmem:[%s823] ss:$4 sm:$0xff]
      %s825 = scalar_lea.vmem [#allocation2], 870
      %v826 = vld [vmem:[%s825] ss:$4 sm:$0xff]
      %s827 = scalar_lea.vmem [#allocation2], 902
      %v828 = vld [vmem:[%s827] ss:$4 sm:$0xff]
      %s829 = scalar_lea.vmem [#allocation2], 934
      %v830 = vld [vmem:[%s829] ss:$4 sm:$0xff]
      %s831 = scalar_lea.vmem [#allocation2], 966
      %v832 = vld [vmem:[%s831] ss:$4 sm:$0xff]
      %s833 = scalar_lea.vmem [#allocation2], 998
      %v834 = vld [vmem:[%s833] ss:$4 sm:$0xff]
      %s835 = scalar_lea.vmem %s1, 4
      %v836 = vld [vmem:[%s835] sm:$0x7]
      %v838 = vsel %vm565, %v772, 0
      %v841 = vsel %vm565, %v774, 0
      %v844 = vsel %vm565, %v776, 0
      %v847 = vsel %vm565, %v778, 0
      %v850 = vsel %vm565, %v780, 0
      %v853 = vsel %vm565, %v782, 0
      %v856 = vsel %vm565, %v784, 0
      %v859 = vsel %vm565, %v786, 0
      %v862 = vsel %vm565, %v788, 0
      %v865 = vsel %vm565, %v790, 0
      %v868 = vsel %vm565, %v792, 0
      %v871 = vsel %vm565, %v794, 0
      %v874 = vsel %vm565, %v796, 0
      %v877 = vsel %vm565, %v798, 0
      %v880 = vsel %vm565, %v800, 0
      %v883 = vsel %vm565, %v802, 0
      %v886 = vsel %vm565, %v804, 0
      %v889 = vsel %vm565, %v806, 0
      %v892 = vsel %vm565, %v808, 0
      %v895 = vsel %vm565, %v810, 0
      %v898 = vsel %vm565, %v812, 0
      %v901 = vsel %vm565, %v814, 0
      %v904 = vsel %vm565, %v816, 0
      %v907 = vsel %vm565, %v818, 0
      %v910 = vsel %vm565, %v820, 0
      %v913 = vsel %vm565, %v822, 0
      %v916 = vsel %vm565, %v824, 0
      %v919 = vsel %vm565, %v826, 0
      %v922 = vsel %vm565, %v828, 0
      %v925 = vsel %vm565, %v830, 0
      %v928 = vsel %vm565, %v832, 0
      %v931 = vsel %vm565, %v834, 0
      %vm933 = vcmask 1042432
      %v935 = vsel %vm933, %v836, 0
      %937 = vmatprep.subr.mxu0 0.0
      %938 = vmatpush1.msra.mxu0 0.0
      %939 = vmatprep.subr.mxu0 0.0
      %940 = vmatpush1.msra.mxu0 0.0
      %941 = vmatprep.subr.mxu0 0.0
      %942 = vmatpush1.msra.mxu0 0.0
      %943 = vmatprep.subr.mxu0 0.0
      %944 = vmatpush1.msra.mxu0 0.0
      %945 = vmatprep.subr.mxu0 0.0
      %946 = vmatpush1.msra.mxu0 0.0
      %947 = vmatprep.subr.mxu0 0.0
      %948 = vmatpush1.msra.mxu0 0.0
      %949 = vmatprep.subr.mxu0 0.0
      %950 = vmatpush1.msra.mxu0 0.0
      %951 = vmatprep.subr.mxu0 0.0
      %952 = vmatpush1.msra.mxu0 0.0
      %953 = vmatprep.subr.mxu0 0.0
      %954 = vmatpush1.msra.mxu0 0.0
      %955 = vmatprep.subr.mxu0 0.0
      %956 = vmatpush1.msra.mxu0 0.0
      %957 = vmatprep.subr.mxu0 0.0
      %958 = vmatpush1.msra.mxu0 0.0
      %959 = vmatprep.subr.mxu0 0.0
      %960 = vmatpush1.msra.mxu0 0.0
      %961 = vmatprep.subr.mxu0 0.0
      %962 = vmatpush1.msra.mxu0 0.0
      %963 = vmatprep.subr.mxu0 0.0
      %964 = vmatpush1.msra.mxu0 0.0
      %965 = vmatprep.subr.mxu0 0.0
      %966 = vmatpush1.msra.mxu0 0.0
      %967 = vmatprep.subr.mxu0 0.0
      %968 = vmatpush1.msra.mxu0 %v935
      %969 = vmatprep.subr.mxu0 0.0
      %970 = vmatpush2.msra.mxu0 0.0
      %971 = vmatprep.subr.mxu0 0.0
      %972 = vmatpush2.msra.mxu0 0.0
      %973 = vmatprep.subr.mxu0 0.0
      %974 = vmatpush2.msra.mxu0 0.0
      %975 = vmatprep.subr.mxu0 0.0
      %976 = vmatpush2.msra.mxu0 0.0
      %977 = vmatprep.subr.mxu0 0.0
      %978 = vmatpush2.msra.mxu0 0.0
      %979 = vmatprep.subr.mxu0 0.0
      %980 = vmatpush2.msra.mxu0 0.0
      %981 = vmatprep.subr.mxu0 0.0
      %982 = vmatpush2.msra.mxu0 0.0
      %983 = vmatprep.subr.mxu0 0.0
      %984 = vmatpush2.msra.mxu0 0.0
      %985 = vmatprep.subr.mxu0 0.0
      %986 = vmatpush2.msra.mxu0 0.0
      %987 = vmatprep.subr.mxu0 0.0
      %988 = vmatpush2.msra.mxu0 0.0
      %989 = vmatprep.subr.mxu0 0.0
      %990 = vmatpush2.msra.mxu0 0.0
      %991 = vmatprep.subr.mxu0 0.0
      %992 = vmatpush2.msra.mxu0 0.0
      %993 = vmatprep.subr.mxu0 0.0
      %994 = vmatpush2.msra.mxu0 0.0
      %995 = vmatprep.subr.mxu0 0.0
      %996 = vmatpush2.msra.mxu0 0.0
      %997 = vmatprep.subr.mxu0 0.0
      %998 = vmatpush2.msra.mxu0 0.0
      %999 = vmatprep.subr.mxu0 0.0
      %1000 = vmatpush2.msra.mxu0 0.0
      %1001 = vmatprep.mubr.f32.mxu0 0.0
      %1002 = vmatmul.mubr.f32.gmra.mxu0 %v838
      %v1003 = vpop.f32.mrf.mxu0
      %v1004 = vadd.f32 0.0, %v1003
      %v1005 = vpop.f32.mrf.mxu0
      %1006 = vmatprep.mubr.f32.mxu0 0.0
      %1007 = vmatmul.mubr.f32.gmra.mxu0 %v841
      %v1008 = vpop.f32.mrf.mxu0
      %v1009 = vadd.f32 0.0, %v1008
      %v1010 = vpop.f32.mrf.mxu0
      %1011 = vmatprep.mubr.f32.mxu0 0.0
      %1012 = vmatmul.mubr.f32.gmra.mxu0 %v844
      %v1013 = vpop.f32.mrf.mxu0
      %v1014 = vadd.f32 0.0, %v1013
      %v1015 = vpop.f32.mrf.mxu0
      %1016 = vmatprep.mubr.f32.mxu0 0.0
      %1017 = vmatmul.mubr.f32.gmra.mxu0 %v847
      %v1018 = vpop.f32.mrf.mxu0
      %v1019 = vadd.f32 0.0, %v1018
      %v1020 = vpop.f32.mrf.mxu0
      %1021 = vmatprep.mubr.f32.mxu0 0.0
      %1022 = vmatmul.mubr.f32.gmra.mxu0 %v850
      %v1023 = vpop.f32.mrf.mxu0
      %v1024 = vadd.f32 0.0, %v1023
      %v1025 = vpop.f32.mrf.mxu0
      %1026 = vmatprep.mubr.f32.mxu0 0.0
      %1027 = vmatmul.mubr.f32.gmra.mxu0 %v853
      %v1028 = vpop.f32.mrf.mxu0
      %v1029 = vadd.f32 0.0, %v1028
      %v1030 = vpop.f32.mrf.mxu0
      %1031 = vmatprep.mubr.f32.mxu0 0.0
      %1032 = vmatmul.mubr.f32.gmra.mxu0 %v856
      %v1033 = vpop.f32.mrf.mxu0
      %v1034 = vadd.f32 0.0, %v1033
      %v1035 = vpop.f32.mrf.mxu0
      %1036 = vmatprep.mubr.f32.mxu0 0.0
      %1037 = vmatmul.mubr.f32.gmra.mxu0 %v859
      %v1038 = vpop.f32.mrf.mxu0
      %v1039 = vadd.f32 0.0, %v1038
      %v1040 = vpop.f32.mrf.mxu0
      %1041 = vmatprep.mubr.f32.mxu0 0.0
      %1042 = vmatmul.mubr.f32.gmra.mxu0 %v862
      %v1043 = vpop.f32.mrf.mxu0
      %v1044 = vadd.f32 0.0, %v1043
      %v1045 = vpop.f32.mrf.mxu0
      %1046 = vmatprep.mubr.f32.mxu0 0.0
      %1047 = vmatmul.mubr.f32.gmra.mxu0 %v865
      %v1048 = vpop.f32.mrf.mxu0
      %v1049 = vadd.f32 0.0, %v1048
      %v1050 = vpop.f32.mrf.mxu0
      %1051 = vmatprep.mubr.f32.mxu0 0.0
      %1052 = vmatmul.mubr.f32.gmra.mxu0 %v868
      %v1053 = vpop.f32.mrf.mxu0
      %v1054 = vadd.f32 0.0, %v1053
      %v1055 = vpop.f32.mrf.mxu0
      %1056 = vmatprep.mubr.f32.mxu0 0.0
      %1057 = vmatmul.mubr.f32.gmra.mxu0 %v871
      %v1058 = vpop.f32.mrf.mxu0
      %v1059 = vadd.f32 0.0, %v1058
      %v1060 = vpop.f32.mrf.mxu0
      %1061 = vmatprep.mubr.f32.mxu0 0.0
      %1062 = vmatmul.mubr.f32.gmra.mxu0 %v874
      %v1063 = vpop.f32.mrf.mxu0
      %v1064 = vadd.f32 0.0, %v1063
      %v1065 = vpop.f32.mrf.mxu0
      %1066 = vmatprep.mubr.f32.mxu0 0.0
      %1067 = vmatmul.mubr.f32.gmra.mxu0 %v877
      %v1068 = vpop.f32.mrf.mxu0
      %v1069 = vadd.f32 0.0, %v1068
      %v1070 = vpop.f32.mrf.mxu0
      %1071 = vmatprep.mubr.f32.mxu0 0.0
      %1072 = vmatmul.mubr.f32.gmra.mxu0 %v880
      %v1073 = vpop.f32.mrf.mxu0
      %v1074 = vadd.f32 0.0, %v1073
      %v1075 = vpop.f32.mrf.mxu0
      %1076 = vmatprep.mubr.f32.mxu0 0.0
      %1077 = vmatmul.mubr.f32.gmra.mxu0 %v883
      %v1078 = vpop.f32.mrf.mxu0
      %v1079 = vadd.f32 0.0, %v1078
      %v1080 = vpop.f32.mrf.mxu0
      %1081 = vmatprep.mubr.f32.mxu0 0.0
      %1082 = vmatmul.mubr.f32.gmra.mxu0 %v886
      %v1083 = vpop.f32.mrf.mxu0
      %v1084 = vadd.f32 0.0, %v1083
      %v1085 = vpop.f32.mrf.mxu0
      %1086 = vmatprep.mubr.f32.mxu0 0.0
      %1087 = vmatmul.mubr.f32.gmra.mxu0 %v889
      %v1088 = vpop.f32.mrf.mxu0
      %v1089 = vadd.f32 0.0, %v1088
      %v1090 = vpop.f32.mrf.mxu0
      %1091 = vmatprep.mubr.f32.mxu0 0.0
      %1092 = vmatmul.mubr.f32.gmra.mxu0 %v892
      %v1093 = vpop.f32.mrf.mxu0
      %v1094 = vadd.f32 0.0, %v1093
      %v1095 = vpop.f32.mrf.mxu0
      %1096 = vmatprep.mubr.f32.mxu0 0.0
      %1097 = vmatmul.mubr.f32.gmra.mxu0 %v895
      %v1098 = vpop.f32.mrf.mxu0
      %v1099 = vadd.f32 0.0, %v1098
      %v1100 = vpop.f32.mrf.mxu0
      %1101 = vmatprep.mubr.f32.mxu0 0.0
      %1102 = vmatmul.mubr.f32.gmra.mxu0 %v898
      %v1103 = vpop.f32.mrf.mxu0
      %v1104 = vadd.f32 0.0, %v1103
      %v1105 = vpop.f32.mrf.mxu0
      %1106 = vmatprep.mubr.f32.mxu0 0.0
      %1107 = vmatmul.mubr.f32.gmra.mxu0 %v901
      %v1108 = vpop.f32.mrf.mxu0
      %v1109 = vadd.f32 0.0, %v1108
      %v1110 = vpop.f32.mrf.mxu0
      %1111 = vmatprep.mubr.f32.mxu0 0.0
      %1112 = vmatmul.mubr.f32.gmra.mxu0 %v904
      %v1113 = vpop.f32.mrf.mxu0
      %v1114 = vadd.f32 0.0, %v1113
      %v1115 = vpop.f32.mrf.mxu0
      %1116 = vmatprep.mubr.f32.mxu0 0.0
      %1117 = vmatmul.mubr.f32.gmra.mxu0 %v907
      %v1118 = vpop.f32.mrf.mxu0
      %v1119 = vadd.f32 0.0, %v1118
      %v1120 = vpop.f32.mrf.mxu0
      %1121 = vmatprep.mubr.f32.mxu0 0.0
      %1122 = vmatmul.mubr.f32.gmra.mxu0 %v910
      %v1123 = vpop.f32.mrf.mxu0
      %v1124 = vadd.f32 0.0, %v1123
      %v1125 = vpop.f32.mrf.mxu0
      %1126 = vmatprep.mubr.f32.mxu0 0.0
      %1127 = vmatmul.mubr.f32.gmra.mxu0 %v913
      %v1128 = vpop.f32.mrf.mxu0
      %v1129 = vadd.f32 0.0, %v1128
      %v1130 = vpop.f32.mrf.mxu0
      %1131 = vmatprep.mubr.f32.mxu0 0.0
      %1132 = vmatmul.mubr.f32.gmra.mxu0 %v916
      %v1133 = vpop.f32.mrf.mxu0
      %v1134 = vadd.f32 0.0, %v1133
      %v1135 = vpop.f32.mrf.mxu0
      %1136 = vmatprep.mubr.f32.mxu0 0.0
      %1137 = vmatmul.mubr.f32.gmra.mxu0 %v919
      %v1138 = vpop.f32.mrf.mxu0
      %v1139 = vadd.f32 0.0, %v1138
      %v1140 = vpop.f32.mrf.mxu0
      %1141 = vmatprep.mubr.f32.mxu0 0.0
      %1142 = vmatmul.mubr.f32.gmra.mxu0 %v922
      %v1143 = vpop.f32.mrf.mxu0
      %v1144 = vadd.f32 0.0, %v1143
      %v1145 = vpop.f32.mrf.mxu0
      %1146 = vmatprep.mubr.f32.mxu0 0.0
      %1147 = vmatmul.mubr.f32.gmra.mxu0 %v925
      %v1148 = vpop.f32.mrf.mxu0
      %v1149 = vadd.f32 0.0, %v1148
      %v1150 = vpop.f32.mrf.mxu0
      %1151 = vmatprep.mubr.f32.mxu0 0.0
      %1152 = vmatmul.mubr.f32.gmra.mxu0 %v928
      %v1153 = vpop.f32.mrf.mxu0
      %v1154 = vadd.f32 0.0, %v1153
      %v1155 = vpop.f32.mrf.mxu0
      %1156 = vmatprep.mubr.f32.mxu0 0.0
      %1157 = vmatmul.mubr.f32.gmra.mxu0 %v931
      %v1158 = vpop.f32.mrf.mxu0
      %v1159 = vadd.f32 0.0, %v1158
      %v1160 = vpop.f32.mrf.mxu0
      %1161 = vdwg.mxu0
      %v1163 = vsel %vm565, %v707, 0
      %v1166 = vsel %vm565, %v709, 0
      %v1169 = vsel %vm565, %v711, 0
      %v1172 = vsel %vm565, %v713, 0
      %v1175 = vsel %vm565, %v715, 0
      %v1178 = vsel %vm565, %v717, 0
      %v1181 = vsel %vm565, %v719, 0
      %v1184 = vsel %vm565, %v721, 0
      %v1187 = vsel %vm565, %v723, 0
      %v1190 = vsel %vm565, %v725, 0
      %v1193 = vsel %vm565, %v727, 0
      %v1196 = vsel %vm565, %v729, 0
      %v1199 = vsel %vm565, %v731, 0
      %v1202 = vsel %vm565, %v733, 0
      %v1205 = vsel %vm565, %v735, 0
      %v1208 = vsel %vm565, %v737, 0
      %v1211 = vsel %vm565, %v739, 0
      %v1214 = vsel %vm565, %v741, 0
      %v1217 = vsel %vm565, %v743, 0
      %v1220 = vsel %vm565, %v745, 0
      %v1223 = vsel %vm565, %v747, 0
      %v1226 = vsel %vm565, %v749, 0
      %v1229 = vsel %vm565, %v751, 0
      %v1232 = vsel %vm565, %v753, 0
      %v1235 = vsel %vm565, %v755, 0
      %v1238 = vsel %vm565, %v757, 0
      %v1241 = vsel %vm565, %v759, 0
      %v1244 = vsel %vm565, %v761, 0
      %v1247 = vsel %vm565, %v763, 0
      %v1250 = vsel %vm565, %v765, 0
      %v1253 = vsel %vm565, %v767, 0
      %v1256 = vsel %vm565, %v769, 0
      %v1259 = vsel %vm933, %v770, 0
      %1261 = vmatprep.subr.mxu0 0.0
      %1262 = vmatpush1.msra.mxu0 0.0
      %1263 = vmatprep.subr.mxu0 0.0
      %1264 = vmatpush1.msra.mxu0 0.0
      %1265 = vmatprep.subr.mxu0 0.0
      %1266 = vmatpush1.msra.mxu0 0.0
      %1267 = vmatprep.subr.mxu0 0.0
      %1268 = vmatpush1.msra.mxu0 0.0
      %1269 = vmatprep.subr.mxu0 0.0
      %1270 = vmatpush1.msra.mxu0 0.0
      %1271 = vmatprep.subr.mxu0 0.0
      %1272 = vmatpush1.msra.mxu0 0.0
      %1273 = vmatprep.subr.mxu0 0.0
      %1274 = vmatpush1.msra.mxu0 0.0
      %1275 = vmatprep.subr.mxu0 0.0
      %1276 = vmatpush1.msra.mxu0 0.0
      %1277 = vmatprep.subr.mxu0 0.0
      %1278 = vmatpush1.msra.mxu0 0.0
      %1279 = vmatprep.subr.mxu0 0.0
      %1280 = vmatpush1.msra.mxu0 0.0
      %1281 = vmatprep.subr.mxu0 0.0
      %1282 = vmatpush1.msra.mxu0 0.0
      %1283 = vmatprep.subr.mxu0 0.0
      %1284 = vmatpush1.msra.mxu0 0.0
      %1285 = vmatprep.subr.mxu0 0.0
      %1286 = vmatpush1.msra.mxu0 0.0
      %1287 = vmatprep.subr.mxu0 0.0
      %1288 = vmatpush1.msra.mxu0 0.0
      %1289 = vmatprep.subr.mxu0 0.0
      %1290 = vmatpush1.msra.mxu0 0.0
      %1291 = vmatprep.subr.mxu0 0.0
      %1292 = vmatpush1.msra.mxu0 %v1259
      %1293 = vmatprep.subr.mxu0 0.0
      %1294 = vmatpush2.msra.mxu0 0.0
      %1295 = vmatprep.subr.mxu0 0.0
      %1296 = vmatpush2.msra.mxu0 0.0
      %1297 = vmatprep.subr.mxu0 0.0
      %1298 = vmatpush2.msra.mxu0 0.0
      %1299 = vmatprep.subr.mxu0 0.0
      %1300 = vmatpush2.msra.mxu0 0.0
      %1301 = vmatprep.subr.mxu0 0.0
      %1302 = vmatpush2.msra.mxu0 0.0
      %1303 = vmatprep.subr.mxu0 0.0
      %1304 = vmatpush2.msra.mxu0 0.0
      %1305 = vmatprep.subr.mxu0 0.0
      %1306 = vmatpush2.msra.mxu0 0.0
      %1307 = vmatprep.subr.mxu0 0.0
      %1308 = vmatpush2.msra.mxu0 0.0
      %1309 = vmatprep.subr.mxu0 0.0
      %1310 = vmatpush2.msra.mxu0 0.0
      %1311 = vmatprep.subr.mxu0 0.0
      %1312 = vmatpush2.msra.mxu0 0.0
      %1313 = vmatprep.subr.mxu0 0.0
      %1314 = vmatpush2.msra.mxu0 0.0
      %1315 = vmatprep.subr.mxu0 0.0
      %1316 = vmatpush2.msra.mxu0 0.0
      %1317 = vmatprep.subr.mxu0 0.0
      %1318 = vmatpush2.msra.mxu0 0.0
      %1319 = vmatprep.subr.mxu0 0.0
      %1320 = vmatpush2.msra.mxu0 0.0
      %1321 = vmatprep.subr.mxu0 0.0
      %1322 = vmatpush2.msra.mxu0 0.0
      %1323 = vmatprep.subr.mxu0 0.0
      %1324 = vmatpush2.msra.mxu0 0.0
      %1325 = vmatprep.mubr.f32.mxu0 0.0
      %1326 = vmatmul.mubr.f32.gmra.mxu0 %v1163
      %v1327 = vpop.f32.mrf.mxu0
      %v1328 = vadd.f32 %v1004, %v1327
      %v1329 = vpop.f32.mrf.mxu0
      %1330 = vmatprep.mubr.f32.mxu0 0.0
      %1331 = vmatmul.mubr.f32.gmra.mxu0 %v1166
      %v1332 = vpop.f32.mrf.mxu0
      %v1333 = vadd.f32 %v1009, %v1332
      %v1334 = vpop.f32.mrf.mxu0
      %1335 = vmatprep.mubr.f32.mxu0 0.0
      %1336 = vmatmul.mubr.f32.gmra.mxu0 %v1169
      %v1337 = vpop.f32.mrf.mxu0
      %v1338 = vadd.f32 %v1014, %v1337
      %v1339 = vpop.f32.mrf.mxu0
      %1340 = vmatprep.mubr.f32.mxu0 0.0
      %1341 = vmatmul.mubr.f32.gmra.mxu0 %v1172
      %v1342 = vpop.f32.mrf.mxu0
      %v1343 = vadd.f32 %v1019, %v1342
      %v1344 = vpop.f32.mrf.mxu0
      %1345 = vmatprep.mubr.f32.mxu0 0.0
      %1346 = vmatmul.mubr.f32.gmra.mxu0 %v1175
      %v1347 = vpop.f32.mrf.mxu0
      %v1348 = vadd.f32 %v1024, %v1347
      %v1349 = vpop.f32.mrf.mxu0
      %1350 = vmatprep.mubr.f32.mxu0 0.0
      %1351 = vmatmul.mubr.f32.gmra.mxu0 %v1178
      %v1352 = vpop.f32.mrf.mxu0
      %v1353 = vadd.f32 %v1029, %v1352
      %v1354 = vpop.f32.mrf.mxu0
      %1355 = vmatprep.mubr.f32.mxu0 0.0
      %1356 = vmatmul.mubr.f32.gmra.mxu0 %v1181
      %v1357 = vpop.f32.mrf.mxu0
      %v1358 = vadd.f32 %v1034, %v1357
      %v1359 = vpop.f32.mrf.mxu0
      %1360 = vmatprep.mubr.f32.mxu0 0.0
      %1361 = vmatmul.mubr.f32.gmra.mxu0 %v1184
      %v1362 = vpop.f32.mrf.mxu0
      %v1363 = vadd.f32 %v1039, %v1362
      %v1364 = vpop.f32.mrf.mxu0
      %1365 = vmatprep.mubr.f32.mxu0 0.0
      %1366 = vmatmul.mubr.f32.gmra.mxu0 %v1187
      %v1367 = vpop.f32.mrf.mxu0
      %v1368 = vadd.f32 %v1044, %v1367
      %v1369 = vpop.f32.mrf.mxu0
      %1370 = vmatprep.mubr.f32.mxu0 0.0
      %1371 = vmatmul.mubr.f32.gmra.mxu0 %v1190
      %v1372 = vpop.f32.mrf.mxu0
      %v1373 = vadd.f32 %v1049, %v1372
      %v1374 = vpop.f32.mrf.mxu0
      %1375 = vmatprep.mubr.f32.mxu0 0.0
      %1376 = vmatmul.mubr.f32.gmra.mxu0 %v1193
      %v1377 = vpop.f32.mrf.mxu0
      %v1378 = vadd.f32 %v1054, %v1377
      %v1379 = vpop.f32.mrf.mxu0
      %1380 = vmatprep.mubr.f32.mxu0 0.0
      %1381 = vmatmul.mubr.f32.gmra.mxu0 %v1196
      %v1382 = vpop.f32.mrf.mxu0
      %v1383 = vadd.f32 %v1059, %v1382
      %v1384 = vpop.f32.mrf.mxu0
      %1385 = vmatprep.mubr.f32.mxu0 0.0
      %1386 = vmatmul.mubr.f32.gmra.mxu0 %v1199
      %v1387 = vpop.f32.mrf.mxu0
      %v1388 = vadd.f32 %v1064, %v1387
      %v1389 = vpop.f32.mrf.mxu0
      %1390 = vmatprep.mubr.f32.mxu0 0.0
      %1391 = vmatmul.mubr.f32.gmra.mxu0 %v1202
      %v1392 = vpop.f32.mrf.mxu0
      %v1393 = vadd.f32 %v1069, %v1392
      %v1394 = vpop.f32.mrf.mxu0
      %1395 = vmatprep.mubr.f32.mxu0 0.0
      %1396 = vmatmul.mubr.f32.gmra.mxu0 %v1205
      %v1397 = vpop.f32.mrf.mxu0
      %v1398 = vadd.f32 %v1074, %v1397
      %v1399 = vpop.f32.mrf.mxu0
      %1400 = vmatprep.mubr.f32.mxu0 0.0
      %1401 = vmatmul.mubr.f32.gmra.mxu0 %v1208
      %v1402 = vpop.f32.mrf.mxu0
      %v1403 = vadd.f32 %v1079, %v1402
      %v1404 = vpop.f32.mrf.mxu0
      %1405 = vmatprep.mubr.f32.mxu0 0.0
      %1406 = vmatmul.mubr.f32.gmra.mxu0 %v1211
      %v1407 = vpop.f32.mrf.mxu0
      %v1408 = vadd.f32 %v1084, %v1407
      %v1409 = vpop.f32.mrf.mxu0
      %1410 = vmatprep.mubr.f32.mxu0 0.0
      %1411 = vmatmul.mubr.f32.gmra.mxu0 %v1214
      %v1412 = vpop.f32.mrf.mxu0
      %v1413 = vadd.f32 %v1089, %v1412
      %v1414 = vpop.f32.mrf.mxu0
      %1415 = vmatprep.mubr.f32.mxu0 0.0
      %1416 = vmatmul.mubr.f32.gmra.mxu0 %v1217
      %v1417 = vpop.f32.mrf.mxu0
      %v1418 = vadd.f32 %v1094, %v1417
      %v1419 = vpop.f32.mrf.mxu0
      %1420 = vmatprep.mubr.f32.mxu0 0.0
      %1421 = vmatmul.mubr.f32.gmra.mxu0 %v1220
      %v1422 = vpop.f32.mrf.mxu0
      %v1423 = vadd.f32 %v1099, %v1422
      %v1424 = vpop.f32.mrf.mxu0
      %1425 = vmatprep.mubr.f32.mxu0 0.0
      %1426 = vmatmul.mubr.f32.gmra.mxu0 %v1223
      %v1427 = vpop.f32.mrf.mxu0
      %v1428 = vadd.f32 %v1104, %v1427
      %v1429 = vpop.f32.mrf.mxu0
      %1430 = vmatprep.mubr.f32.mxu0 0.0
      %1431 = vmatmul.mubr.f32.gmra.mxu0 %v1226
      %v1432 = vpop.f32.mrf.mxu0
      %v1433 = vadd.f32 %v1109, %v1432
      %v1434 = vpop.f32.mrf.mxu0
      %1435 = vmatprep.mubr.f32.mxu0 0.0
      %1436 = vmatmul.mubr.f32.gmra.mxu0 %v1229
      %v1437 = vpop.f32.mrf.mxu0
      %v1438 = vadd.f32 %v1114, %v1437
      %v1439 = vpop.f32.mrf.mxu0
      %1440 = vmatprep.mubr.f32.mxu0 0.0
      %1441 = vmatmul.mubr.f32.gmra.mxu0 %v1232
      %v1442 = vpop.f32.mrf.mxu0
      %v1443 = vadd.f32 %v1119, %v1442
      %v1444 = vpop.f32.mrf.mxu0
      %1445 = vmatprep.mubr.f32.mxu0 0.0
      %1446 = vmatmul.mubr.f32.gmra.mxu0 %v1235
      %v1447 = vpop.f32.mrf.mxu0
      %v1448 = vadd.f32 %v1124, %v1447
      %v1449 = vpop.f32.mrf.mxu0
      %1450 = vmatprep.mubr.f32.mxu0 0.0
      %1451 = vmatmul.mubr.f32.gmra.mxu0 %v1238
      %v1452 = vpop.f32.mrf.mxu0
      %v1453 = vadd.f32 %v1129, %v1452
      %v1454 = vpop.f32.mrf.mxu0
      %1455 = vmatprep.mubr.f32.mxu0 0.0
      %1456 = vmatmul.mubr.f32.gmra.mxu0 %v1241
      %v1457 = vpop.f32.mrf.mxu0
      %v1458 = vadd.f32 %v1134, %v1457
      %v1459 = vpop.f32.mrf.mxu0
      %1460 = vmatprep.mubr.f32.mxu0 0.0
      %1461 = vmatmul.mubr.f32.gmra.mxu0 %v1244
      %v1462 = vpop.f32.mrf.mxu0
      %v1463 = vadd.f32 %v1139, %v1462
      %v1464 = vpop.f32.mrf.mxu0
      %1465 = vmatprep.mubr.f32.mxu0 0.0
      %1466 = vmatmul.mubr.f32.gmra.mxu0 %v1247
      %v1467 = vpop.f32.mrf.mxu0
      %v1468 = vadd.f32 %v1144, %v1467
      %v1469 = vpop.f32.mrf.mxu0
      %1470 = vmatprep.mubr.f32.mxu0 0.0
      %1471 = vmatmul.mubr.f32.gmra.mxu0 %v1250
      %v1472 = vpop.f32.mrf.mxu0
      %v1473 = vadd.f32 %v1149, %v1472
      %v1474 = vpop.f32.mrf.mxu0
      %1475 = vmatprep.mubr.f32.mxu0 0.0
      %1476 = vmatmul.mubr.f32.gmra.mxu0 %v1253
      %v1477 = vpop.f32.mrf.mxu0
      %v1478 = vadd.f32 %v1154, %v1477
      %v1479 = vpop.f32.mrf.mxu0
      %1480 = vmatprep.mubr.f32.mxu0 0.0
      %1481 = vmatmul.mubr.f32.gmra.mxu0 %v1256
      %v1482 = vpop.f32.mrf.mxu0
      %v1483 = vadd.f32 %v1159, %v1482
      %v1484 = vpop.f32.mrf.mxu0
      %1485 = vdwg.mxu0
      %s1486 = scalar_lea.vmem [#allocation2], 7
      %v1487 = vld [vmem:[%s1486] ss:$4 sm:$0xff]
      %s1488 = scalar_lea.vmem [#allocation2], 39
      %v1489 = vld [vmem:[%s1488] ss:$4 sm:$0xff]
      %s1490 = scalar_lea.vmem [#allocation2], 71
      %v1491 = vld [vmem:[%s1490] ss:$4 sm:$0xff]
      %s1492 = scalar_lea.vmem [#allocation2], 103
      %v1493 = vld [vmem:[%s1492] ss:$4 sm:$0xff]
      %s1494 = scalar_lea.vmem [#allocation2], 135
      %v1495 = vld [vmem:[%s1494] ss:$4 sm:$0xff]
      %s1496 = scalar_lea.vmem [#allocation2], 167
      %v1497 = vld [vmem:[%s1496] ss:$4 sm:$0xff]
      %s1498 = scalar_lea.vmem [#allocation2], 199
      %v1499 = vld [vmem:[%s1498] ss:$4 sm:$0xff]
      %s1500 = scalar_lea.vmem [#allocation2], 231
      %v1501 = vld [vmem:[%s1500] ss:$4 sm:$0xff]
      %s1502 = scalar_lea.vmem [#allocation2], 263
      %v1503 = vld [vmem:[%s1502] ss:$4 sm:$0xff]
      %s1504 = scalar_lea.vmem [#allocation2], 295
      %v1505 = vld [vmem:[%s1504] ss:$4 sm:$0xff]
      %s1506 = scalar_lea.vmem [#allocation2], 327
      %v1507 = vld [vmem:[%s1506] ss:$4 sm:$0xff]
      %s1508 = scalar_lea.vmem [#allocation2], 359
      %v1509 = vld [vmem:[%s1508] ss:$4 sm:$0xff]
      %s1510 = scalar_lea.vmem [#allocation2], 391
      %v1511 = vld [vmem:[%s1510] ss:$4 sm:$0xff]
      %s1512 = scalar_lea.vmem [#allocation2], 423
      %v1513 = vld [vmem:[%s1512] ss:$4 sm:$0xff]
      %s1514 = scalar_lea.vmem [#allocation2], 455
      %v1515 = vld [vmem:[%s1514] ss:$4 sm:$0xff]
      %s1516 = scalar_lea.vmem [#allocation2], 487
      %v1517 = vld [vmem:[%s1516] ss:$4 sm:$0xff]
      %s1518 = scalar_lea.vmem [#allocation2], 519
      %v1519 = vld [vmem:[%s1518] ss:$4 sm:$0xff]
      %s1520 = scalar_lea.vmem [#allocation2], 551
      %v1521 = vld [vmem:[%s1520] ss:$4 sm:$0xff]
      %s1522 = scalar_lea.vmem [#allocation2], 583
      %v1523 = vld [vmem:[%s1522] ss:$4 sm:$0xff]
      %s1524 = scalar_lea.vmem [#allocation2], 615
      %v1525 = vld [vmem:[%s1524] ss:$4 sm:$0xff]
      %s1526 = scalar_lea.vmem [#allocation2], 647
      %v1527 = vld [vmem:[%s1526] ss:$4 sm:$0xff]
      %s1528 = scalar_lea.vmem [#allocation2], 679
      %v1529 = vld [vmem:[%s1528] ss:$4 sm:$0xff]
      %s1530 = scalar_lea.vmem [#allocation2], 711
      %v1531 = vld [vmem:[%s1530] ss:$4 sm:$0xff]
      %s1532 = scalar_lea.vmem [#allocation2], 743
      %v1533 = vld [vmem:[%s1532] ss:$4 sm:$0xff]
      %s1534 = scalar_lea.vmem [#allocation2], 775
      %v1535 = vld [vmem:[%s1534] ss:$4 sm:$0xff]
      %s1536 = scalar_lea.vmem [#allocation2], 807
      %v1537 = vld [vmem:[%s1536] ss:$4 sm:$0xff]
      %s1538 = scalar_lea.vmem [#allocation2], 839
      %v1539 = vld [vmem:[%s1538] ss:$4 sm:$0xff]
      %s1540 = scalar_lea.vmem [#allocation2], 871
      %v1541 = vld [vmem:[%s1540] ss:$4 sm:$0xff]
      %s1542 = scalar_lea.vmem [#allocation2], 903
      %v1543 = vld [vmem:[%s1542] ss:$4 sm:$0xff]
      %s1544 = scalar_lea.vmem [#allocation2], 935
      %v1545 = vld [vmem:[%s1544] ss:$4 sm:$0xff]
      %s1546 = scalar_lea.vmem [#allocation2], 967
      %v1547 = vld [vmem:[%s1546] ss:$4 sm:$0xff]
      %s1548 = scalar_lea.vmem [#allocation2], 999
      %v1549 = vld [vmem:[%s1548] ss:$4 sm:$0xff]
      %s1550 = scalar_lea.vmem %s1, 8
      %v1551 = vld [vmem:[%s1550] sm:$0x7]
      %v1553 = vsel %vm565, %v1487, 0
      %v1556 = vsel %vm565, %v1489, 0
      %v1559 = vsel %vm565, %v1491, 0
      %v1562 = vsel %vm565, %v1493, 0
      %v1565 = vsel %vm565, %v1495, 0
      %v1568 = vsel %vm565, %v1497, 0
      %v1571 = vsel %vm565, %v1499, 0
      %v1574 = vsel %vm565, %v1501, 0
      %v1577 = vsel %vm565, %v1503, 0
      %v1580 = vsel %vm565, %v1505, 0
      %v1583 = vsel %vm565, %v1507, 0
      %v1586 = vsel %vm565, %v1509, 0
      %v1589 = vsel %vm565, %v1511, 0
      %v1592 = vsel %vm565, %v1513, 0
      %v1595 = vsel %vm565, %v1515, 0
      %v1598 = vsel %vm565, %v1517, 0
      %v1601 = vsel %vm565, %v1519, 0
      %v1604 = vsel %vm565, %v1521, 0
      %v1607 = vsel %vm565, %v1523, 0
      %v1610 = vsel %vm565, %v1525, 0
      %v1613 = vsel %vm565, %v1527, 0
      %v1616 = vsel %vm565, %v1529, 0
      %v1619 = vsel %vm565, %v1531, 0
      %v1622 = vsel %vm565, %v1533, 0
      %v1625 = vsel %vm565, %v1535, 0
      %v1628 = vsel %vm565, %v1537, 0
      %v1631 = vsel %vm565, %v1539, 0
      %v1634 = vsel %vm565, %v1541, 0
      %v1637 = vsel %vm565, %v1543, 0
      %v1640 = vsel %vm565, %v1545, 0
      %v1643 = vsel %vm565, %v1547, 0
      %v1646 = vsel %vm565, %v1549, 0
      %v1649 = vsel %vm933, %v1551, 0
      %1651 = vmatprep.subr.mxu0 0.0
      %1652 = vmatpush1.msra.mxu0 0.0
      %1653 = vmatprep.subr.mxu0 0.0
      %1654 = vmatpush1.msra.mxu0 0.0
      %1655 = vmatprep.subr.mxu0 0.0
      %1656 = vmatpush1.msra.mxu0 0.0
      %1657 = vmatprep.subr.mxu0 0.0
      %1658 = vmatpush1.msra.mxu0 0.0
      %1659 = vmatprep.subr.mxu0 0.0
      %1660 = vmatpush1.msra.mxu0 0.0
      %1661 = vmatprep.subr.mxu0 0.0
      %1662 = vmatpush1.msra.mxu0 0.0
      %1663 = vmatprep.subr.mxu0 0.0
      %1664 = vmatpush1.msra.mxu0 0.0
      %1665 = vmatprep.subr.mxu0 0.0
      %1666 = vmatpush1.msra.mxu0 0.0
      %1667 = vmatprep.subr.mxu0 0.0
      %1668 = vmatpush1.msra.mxu0 0.0
      %1669 = vmatprep.subr.mxu0 0.0
      %1670 = vmatpush1.msra.mxu0 0.0
      %1671 = vmatprep.subr.mxu0 0.0
      %1672 = vmatpush1.msra.mxu0 0.0
      %1673 = vmatprep.subr.mxu0 0.0
      %1674 = vmatpush1.msra.mxu0 0.0
      %1675 = vmatprep.subr.mxu0 0.0
      %1676 = vmatpush1.msra.mxu0 0.0
      %1677 = vmatprep.subr.mxu0 0.0
      %1678 = vmatpush1.msra.mxu0 0.0
      %1679 = vmatprep.subr.mxu0 0.0
      %1680 = vmatpush1.msra.mxu0 0.0
      %1681 = vmatprep.subr.mxu0 0.0
      %1682 = vmatpush1.msra.mxu0 %v1649
      %1683 = vmatprep.subr.mxu0 0.0
      %1684 = vmatpush2.msra.mxu0 0.0
      %1685 = vmatprep.subr.mxu0 0.0
      %1686 = vmatpush2.msra.mxu0 0.0
      %1687 = vmatprep.subr.mxu0 0.0
      %1688 = vmatpush2.msra.mxu0 0.0
      %1689 = vmatprep.subr.mxu0 0.0
      %1690 = vmatpush2.msra.mxu0 0.0
      %1691 = vmatprep.subr.mxu0 0.0
      %1692 = vmatpush2.msra.mxu0 0.0
      %1693 = vmatprep.subr.mxu0 0.0
      %1694 = vmatpush2.msra.mxu0 0.0
      %1695 = vmatprep.subr.mxu0 0.0
      %1696 = vmatpush2.msra.mxu0 0.0
      %1697 = vmatprep.subr.mxu0 0.0
      %1698 = vmatpush2.msra.mxu0 0.0
      %1699 = vmatprep.subr.mxu0 0.0
      %1700 = vmatpush2.msra.mxu0 0.0
      %1701 = vmatprep.subr.mxu0 0.0
      %1702 = vmatpush2.msra.mxu0 0.0
      %1703 = vmatprep.subr.mxu0 0.0
      %1704 = vmatpush2.msra.mxu0 0.0
      %1705 = vmatprep.subr.mxu0 0.0
      %1706 = vmatpush2.msra.mxu0 0.0
      %1707 = vmatprep.subr.mxu0 0.0
      %1708 = vmatpush2.msra.mxu0 0.0
      %1709 = vmatprep.subr.mxu0 0.0
      %1710 = vmatpush2.msra.mxu0 0.0
      %1711 = vmatprep.subr.mxu0 0.0
      %1712 = vmatpush2.msra.mxu0 0.0
      %1713 = vmatprep.subr.mxu0 0.0
      %1714 = vmatpush2.msra.mxu0 0.0
      %1715 = vmatprep.mubr.f32.mxu0 0.0
      %1716 = vmatmul.mubr.f32.gmra.mxu0 %v1553
      %v1717 = vpop.f32.mrf.mxu0
      %v1718 = vadd.f32 0.0, %v1717
      %v1719 = vpop.f32.mrf.mxu0
      %1720 = vmatprep.mubr.f32.mxu0 0.0
      %1721 = vmatmul.mubr.f32.gmra.mxu0 %v1556
      %v1722 = vpop.f32.mrf.mxu0
      %v1723 = vadd.f32 0.0, %v1722
      %v1724 = vpop.f32.mrf.mxu0
      %1725 = vmatprep.mubr.f32.mxu0 0.0
      %1726 = vmatmul.mubr.f32.gmra.mxu0 %v1559
      %v1727 = vpop.f32.mrf.mxu0
      %v1728 = vadd.f32 0.0, %v1727
      %v1729 = vpop.f32.mrf.mxu0
      %1730 = vmatprep.mubr.f32.mxu0 0.0
      %1731 = vmatmul.mubr.f32.gmra.mxu0 %v1562
      %v1732 = vpop.f32.mrf.mxu0
      %v1733 = vadd.f32 0.0, %v1732
      %v1734 = vpop.f32.mrf.mxu0
      %1735 = vmatprep.mubr.f32.mxu0 0.0
      %1736 = vmatmul.mubr.f32.gmra.mxu0 %v1565
      %v1737 = vpop.f32.mrf.mxu0
      %v1738 = vadd.f32 0.0, %v1737
      %v1739 = vpop.f32.mrf.mxu0
      %1740 = vmatprep.mubr.f32.mxu0 0.0
      %1741 = vmatmul.mubr.f32.gmra.mxu0 %v1568
      %v1742 = vpop.f32.mrf.mxu0
      %v1743 = vadd.f32 0.0, %v1742
      %v1744 = vpop.f32.mrf.mxu0
      %1745 = vmatprep.mubr.f32.mxu0 0.0
      %1746 = vmatmul.mubr.f32.gmra.mxu0 %v1571
      %v1747 = vpop.f32.mrf.mxu0
      %v1748 = vadd.f32 0.0, %v1747
      %v1749 = vpop.f32.mrf.mxu0
      %1750 = vmatprep.mubr.f32.mxu0 0.0
      %1751 = vmatmul.mubr.f32.gmra.mxu0 %v1574
      %v1752 = vpop.f32.mrf.mxu0
      %v1753 = vadd.f32 0.0, %v1752
      %v1754 = vpop.f32.mrf.mxu0
      %1755 = vmatprep.mubr.f32.mxu0 0.0
      %1756 = vmatmul.mubr.f32.gmra.mxu0 %v1577
      %v1757 = vpop.f32.mrf.mxu0
      %v1758 = vadd.f32 0.0, %v1757
      %v1759 = vpop.f32.mrf.mxu0
      %1760 = vmatprep.mubr.f32.mxu0 0.0
      %1761 = vmatmul.mubr.f32.gmra.mxu0 %v1580
      %v1762 = vpop.f32.mrf.mxu0
      %v1763 = vadd.f32 0.0, %v1762
      %v1764 = vpop.f32.mrf.mxu0
      %1765 = vmatprep.mubr.f32.mxu0 0.0
      %1766 = vmatmul.mubr.f32.gmra.mxu0 %v1583
      %v1767 = vpop.f32.mrf.mxu0
      %v1768 = vadd.f32 0.0, %v1767
      %v1769 = vpop.f32.mrf.mxu0
      %1770 = vmatprep.mubr.f32.mxu0 0.0
      %1771 = vmatmul.mubr.f32.gmra.mxu0 %v1586
      %v1772 = vpop.f32.mrf.mxu0
      %v1773 = vadd.f32 0.0, %v1772
      %v1774 = vpop.f32.mrf.mxu0
      %1775 = vmatprep.mubr.f32.mxu0 0.0
      %1776 = vmatmul.mubr.f32.gmra.mxu0 %v1589
      %v1777 = vpop.f32.mrf.mxu0
      %v1778 = vadd.f32 0.0, %v1777
      %v1779 = vpop.f32.mrf.mxu0
      %1780 = vmatprep.mubr.f32.mxu0 0.0
      %1781 = vmatmul.mubr.f32.gmra.mxu0 %v1592
      %v1782 = vpop.f32.mrf.mxu0
      %v1783 = vadd.f32 0.0, %v1782
      %v1784 = vpop.f32.mrf.mxu0
      %1785 = vmatprep.mubr.f32.mxu0 0.0
      %1786 = vmatmul.mubr.f32.gmra.mxu0 %v1595
      %v1787 = vpop.f32.mrf.mxu0
      %v1788 = vadd.f32 0.0, %v1787
      %v1789 = vpop.f32.mrf.mxu0
      %1790 = vmatprep.mubr.f32.mxu0 0.0
      %1791 = vmatmul.mubr.f32.gmra.mxu0 %v1598
      %v1792 = vpop.f32.mrf.mxu0
      %v1793 = vadd.f32 0.0, %v1792
      %v1794 = vpop.f32.mrf.mxu0
      %1795 = vmatprep.mubr.f32.mxu0 0.0
      %1796 = vmatmul.mubr.f32.gmra.mxu0 %v1601
      %v1797 = vpop.f32.mrf.mxu0
      %v1798 = vadd.f32 0.0, %v1797
      %v1799 = vpop.f32.mrf.mxu0
      %1800 = vmatprep.mubr.f32.mxu0 0.0
      %1801 = vmatmul.mubr.f32.gmra.mxu0 %v1604
      %v1802 = vpop.f32.mrf.mxu0
      %v1803 = vadd.f32 0.0, %v1802
      %v1804 = vpop.f32.mrf.mxu0
      %1805 = vmatprep.mubr.f32.mxu0 0.0
      %1806 = vmatmul.mubr.f32.gmra.mxu0 %v1607
      %v1807 = vpop.f32.mrf.mxu0
      %v1808 = vadd.f32 0.0, %v1807
      %v1809 = vpop.f32.mrf.mxu0
      %1810 = vmatprep.mubr.f32.mxu0 0.0
      %1811 = vmatmul.mubr.f32.gmra.mxu0 %v1610
      %v1812 = vpop.f32.mrf.mxu0
      %v1813 = vadd.f32 0.0, %v1812
      %v1814 = vpop.f32.mrf.mxu0
      %1815 = vmatprep.mubr.f32.mxu0 0.0
      %1816 = vmatmul.mubr.f32.gmra.mxu0 %v1613
      %v1817 = vpop.f32.mrf.mxu0
      %v1818 = vadd.f32 0.0, %v1817
      %v1819 = vpop.f32.mrf.mxu0
      %1820 = vmatprep.mubr.f32.mxu0 0.0
      %1821 = vmatmul.mubr.f32.gmra.mxu0 %v1616
      %v1822 = vpop.f32.mrf.mxu0
      %v1823 = vadd.f32 0.0, %v1822
      %v1824 = vpop.f32.mrf.mxu0
      %1825 = vmatprep.mubr.f32.mxu0 0.0
      %1826 = vmatmul.mubr.f32.gmra.mxu0 %v1619
      %v1827 = vpop.f32.mrf.mxu0
      %v1828 = vadd.f32 0.0, %v1827
      %v1829 = vpop.f32.mrf.mxu0
      %1830 = vmatprep.mubr.f32.mxu0 0.0
      %1831 = vmatmul.mubr.f32.gmra.mxu0 %v1622
      %v1832 = vpop.f32.mrf.mxu0
      %v1833 = vadd.f32 0.0, %v1832
      %v1834 = vpop.f32.mrf.mxu0
      %1835 = vmatprep.mubr.f32.mxu0 0.0
      %1836 = vmatmul.mubr.f32.gmra.mxu0 %v1625
      %v1837 = vpop.f32.mrf.mxu0
      %v1838 = vadd.f32 0.0, %v1837
      %v1839 = vpop.f32.mrf.mxu0
      %1840 = vmatprep.mubr.f32.mxu0 0.0
      %1841 = vmatmul.mubr.f32.gmra.mxu0 %v1628
      %v1842 = vpop.f32.mrf.mxu0
      %v1843 = vadd.f32 0.0, %v1842
      %v1844 = vpop.f32.mrf.mxu0
      %1845 = vmatprep.mubr.f32.mxu0 0.0
      %1846 = vmatmul.mubr.f32.gmra.mxu0 %v1631
      %v1847 = vpop.f32.mrf.mxu0
      %v1848 = vadd.f32 0.0, %v1847
      %v1849 = vpop.f32.mrf.mxu0
      %1850 = vmatprep.mubr.f32.mxu0 0.0
      %1851 = vmatmul.mubr.f32.gmra.mxu0 %v1634
      %v1852 = vpop.f32.mrf.mxu0
      %v1853 = vadd.f32 0.0, %v1852
      %v1854 = vpop.f32.mrf.mxu0
      %1855 = vmatprep.mubr.f32.mxu0 0.0
      %1856 = vmatmul.mubr.f32.gmra.mxu0 %v1637
      %v1857 = vpop.f32.mrf.mxu0
      %v1858 = vadd.f32 0.0, %v1857
      %v1859 = vpop.f32.mrf.mxu0
      %1860 = vmatprep.mubr.f32.mxu0 0.0
      %1861 = vmatmul.mubr.f32.gmra.mxu0 %v1640
      %v1862 = vpop.f32.mrf.mxu0
      %v1863 = vadd.f32 0.0, %v1862
      %v1864 = vpop.f32.mrf.mxu0
      %1865 = vmatprep.mubr.f32.mxu0 0.0
      %1866 = vmatmul.mubr.f32.gmra.mxu0 %v1643
      %v1867 = vpop.f32.mrf.mxu0
      %v1868 = vadd.f32 0.0, %v1867
      %v1869 = vpop.f32.mrf.mxu0
      %1870 = vmatprep.mubr.f32.mxu0 0.0
      %1871 = vmatmul.mubr.f32.gmra.mxu0 %v1646
      %v1872 = vpop.f32.mrf.mxu0
      %v1873 = vadd.f32 0.0, %v1872
      %v1874 = vpop.f32.mrf.mxu0
      %1875 = vdwg.mxu0
      %v1876 = vadd.f32 %v1328, %v1718
      %v1877 = vadd.f32 %v1333, %v1723
      %v1878 = vadd.f32 %v1338, %v1728
      %v1879 = vadd.f32 %v1343, %v1733
      %v1880 = vadd.f32 %v1348, %v1738
      %v1881 = vadd.f32 %v1353, %v1743
      %v1882 = vadd.f32 %v1358, %v1748
      %v1883 = vadd.f32 %v1363, %v1753
      %v1884 = vadd.f32 %v1368, %v1758
      %v1885 = vadd.f32 %v1373, %v1763
      %v1886 = vadd.f32 %v1378, %v1768
      %v1887 = vadd.f32 %v1383, %v1773
      %v1888 = vadd.f32 %v1388, %v1778
      %v1889 = vadd.f32 %v1393, %v1783
      %v1890 = vadd.f32 %v1398, %v1788
      %v1891 = vadd.f32 %v1403, %v1793
      %v1892 = vadd.f32 %v1408, %v1798
      %v1893 = vadd.f32 %v1413, %v1803
      %v1894 = vadd.f32 %v1418, %v1808
      %v1895 = vadd.f32 %v1423, %v1813
      %v1896 = vadd.f32 %v1428, %v1818
      %v1897 = vadd.f32 %v1433, %v1823
      %v1898 = vadd.f32 %v1438, %v1828
      %v1899 = vadd.f32 %v1443, %v1833
      %v1900 = vadd.f32 %v1448, %v1838
      %v1901 = vadd.f32 %v1453, %v1843
      %v1902 = vadd.f32 %v1458, %v1848
      %v1903 = vadd.f32 %v1463, %v1853
      %v1904 = vadd.f32 %v1468, %v1858
      %v1905 = vadd.f32 %v1473, %v1863
      %v1906 = vadd.f32 %v1478, %v1868
      %v1907 = vadd.f32 %v1483, %v1873
      %s1908 = scalar_lea.vmem [#allocation2], 8
      %v1909 = vld [vmem:[%s1908] ss:$4 sm:$0xff]
      %s1910 = scalar_lea.vmem [#allocation2], 40
      %v1911 = vld [vmem:[%s1910] ss:$4 sm:$0xff]
      %s1912 = scalar_lea.vmem [#allocation2], 72
      %v1913 = vld [vmem:[%s1912] ss:$4 sm:$0xff]
      %s1914 = scalar_lea.vmem [#allocation2], 104
      %v1915 = vld [vmem:[%s1914] ss:$4 sm:$0xff]
      %s1916 = scalar_lea.vmem [#allocation2], 136
      %v1917 = vld [vmem:[%s1916] ss:$4 sm:$0xff]
      %s1918 = scalar_lea.vmem [#allocation2], 168
      %v1919 = vld [vmem:[%s1918] ss:$4 sm:$0xff]
      %s1920 = scalar_lea.vmem [#allocation2], 200
      %v1921 = vld [vmem:[%s1920] ss:$4 sm:$0xff]
      %s1922 = scalar_lea.vmem [#allocation2], 232
      %v1923 = vld [vmem:[%s1922] ss:$4 sm:$0xff]
      %s1924 = scalar_lea.vmem [#allocation2], 264
      %v1925 = vld [vmem:[%s1924] ss:$4 sm:$0xff]
      %s1926 = scalar_lea.vmem [#allocation2], 296
      %v1927 = vld [vmem:[%s1926] ss:$4 sm:$0xff]
      %s1928 = scalar_lea.vmem [#allocation2], 328
      %v1929 = vld [vmem:[%s1928] ss:$4 sm:$0xff]
      %s1930 = scalar_lea.vmem [#allocation2], 360
      %v1931 = vld [vmem:[%s1930] ss:$4 sm:$0xff]
      %s1932 = scalar_lea.vmem [#allocation2], 392
      %v1933 = vld [vmem:[%s1932] ss:$4 sm:$0xff]
      %s1934 = scalar_lea.vmem [#allocation2], 424
      %v1935 = vld [vmem:[%s1934] ss:$4 sm:$0xff]
      %s1936 = scalar_lea.vmem [#allocation2], 456
      %v1937 = vld [vmem:[%s1936] ss:$4 sm:$0xff]
      %s1938 = scalar_lea.vmem [#allocation2], 488
      %v1939 = vld [vmem:[%s1938] ss:$4 sm:$0xff]
      %s1940 = scalar_lea.vmem [#allocation2], 520
      %v1941 = vld [vmem:[%s1940] ss:$4 sm:$0xff]
      %s1942 = scalar_lea.vmem [#allocation2], 552
      %v1943 = vld [vmem:[%s1942] ss:$4 sm:$0xff]
      %s1944 = scalar_lea.vmem [#allocation2], 584
      %v1945 = vld [vmem:[%s1944] ss:$4 sm:$0xff]
      %s1946 = scalar_lea.vmem [#allocation2], 616
      %v1947 = vld [vmem:[%s1946] ss:$4 sm:$0xff]
      %s1948 = scalar_lea.vmem [#allocation2], 648
      %v1949 = vld [vmem:[%s1948] ss:$4 sm:$0xff]
      %s1950 = scalar_lea.vmem [#allocation2], 680
      %v1951 = vld [vmem:[%s1950] ss:$4 sm:$0xff]
      %s1952 = scalar_lea.vmem [#allocation2], 712
      %v1953 = vld [vmem:[%s1952] ss:$4 sm:$0xff]
      %s1954 = scalar_lea.vmem [#allocation2], 744
      %v1955 = vld [vmem:[%s1954] ss:$4 sm:$0xff]
      %s1956 = scalar_lea.vmem [#allocation2], 776
      %v1957 = vld [vmem:[%s1956] ss:$4 sm:$0xff]
      %s1958 = scalar_lea.vmem [#allocation2], 808
      %v1959 = vld [vmem:[%s1958] ss:$4 sm:$0xff]
      %s1960 = scalar_lea.vmem [#allocation2], 840
      %v1961 = vld [vmem:[%s1960] ss:$4 sm:$0xff]
      %s1962 = scalar_lea.vmem [#allocation2], 872
      %v1963 = vld [vmem:[%s1962] ss:$4 sm:$0xff]
      %s1964 = scalar_lea.vmem [#allocation2], 904
      %v1965 = vld [vmem:[%s1964] ss:$4 sm:$0xff]
      %s1966 = scalar_lea.vmem [#allocation2], 936
      %v1967 = vld [vmem:[%s1966] ss:$4 sm:$0xff]
      %s1968 = scalar_lea.vmem [#allocation2], 968
      %v1969 = vld [vmem:[%s1968] ss:$4 sm:$0xff]
      %s1970 = scalar_lea.vmem [#allocation2], 1000
      %v1971 = vld [vmem:[%s1970] ss:$4 sm:$0xff]
      %s1972 = scalar_lea.vmem %s1, 12
      %v1973 = vld [vmem:[%s1972] sm:$0x7]
      %v1975 = vsel %vm565, %v1909, 0
      %v1978 = vsel %vm565, %v1911, 0
      %v1981 = vsel %vm565, %v1913, 0
      %v1984 = vsel %vm565, %v1915, 0
      %v1987 = vsel %vm565, %v1917, 0
      %v1990 = vsel %vm565, %v1919, 0
      %v1993 = vsel %vm565, %v1921, 0
      %v1996 = vsel %vm565, %v1923, 0
      %v1999 = vsel %vm565, %v1925, 0
      %v2002 = vsel %vm565, %v1927, 0
      %v2005 = vsel %vm565, %v1929, 0
      %v2008 = vsel %vm565, %v1931, 0
      %v2011 = vsel %vm565, %v1933, 0
      %v2014 = vsel %vm565, %v1935, 0
      %v2017 = vsel %vm565, %v1937, 0
      %v2020 = vsel %vm565, %v1939, 0
      %v2023 = vsel %vm565, %v1941, 0
      %v2026 = vsel %vm565, %v1943, 0
      %v2029 = vsel %vm565, %v1945, 0
      %v2032 = vsel %vm565, %v1947, 0
      %v2035 = vsel %vm565, %v1949, 0
      %v2038 = vsel %vm565, %v1951, 0
      %v2041 = vsel %vm565, %v1953, 0
      %v2044 = vsel %vm565, %v1955, 0
      %v2047 = vsel %vm565, %v1957, 0
      %v2050 = vsel %vm565, %v1959, 0
      %v2053 = vsel %vm565, %v1961, 0
      %v2056 = vsel %vm565, %v1963, 0
      %v2059 = vsel %vm565, %v1965, 0
      %v2062 = vsel %vm565, %v1967, 0
      %v2065 = vsel %vm565, %v1969, 0
      %v2068 = vsel %vm565, %v1971, 0
      %v2071 = vsel %vm933, %v1973, 0
      %2073 = vmatprep.subr.mxu0 0.0
      %2074 = vmatpush1.msra.mxu0 0.0
      %2075 = vmatprep.subr.mxu0 0.0
      %2076 = vmatpush1.msra.mxu0 0.0
      %2077 = vmatprep.subr.mxu0 0.0
      %2078 = vmatpush1.msra.mxu0 0.0
      %2079 = vmatprep.subr.mxu0 0.0
      %2080 = vmatpush1.msra.mxu0 0.0
      %2081 = vmatprep.subr.mxu0 0.0
      %2082 = vmatpush1.msra.mxu0 0.0
      %2083 = vmatprep.subr.mxu0 0.0
      %2084 = vmatpush1.msra.mxu0 0.0
      %2085 = vmatprep.subr.mxu0 0.0
      %2086 = vmatpush1.msra.mxu0 0.0
      %2087 = vmatprep.subr.mxu0 0.0
      %2088 = vmatpush1.msra.mxu0 0.0
      %2089 = vmatprep.subr.mxu0 0.0
      %2090 = vmatpush1.msra.mxu0 0.0
      %2091 = vmatprep.subr.mxu0 0.0
      %2092 = vmatpush1.msra.mxu0 0.0
      %2093 = vmatprep.subr.mxu0 0.0
      %2094 = vmatpush1.msra.mxu0 0.0
      %2095 = vmatprep.subr.mxu0 0.0
      %2096 = vmatpush1.msra.mxu0 0.0
      %2097 = vmatprep.subr.mxu0 0.0
      %2098 = vmatpush1.msra.mxu0 0.0
      %2099 = vmatprep.subr.mxu0 0.0
      %2100 = vmatpush1.msra.mxu0 0.0
      %2101 = vmatprep.subr.mxu0 0.0
      %2102 = vmatpush1.msra.mxu0 0.0
      %2103 = vmatprep.subr.mxu0 0.0
      %2104 = vmatpush1.msra.mxu0 %v2071
      %2105 = vmatprep.subr.mxu0 0.0
      %2106 = vmatpush2.msra.mxu0 0.0
      %2107 = vmatprep.subr.mxu0 0.0
      %2108 = vmatpush2.msra.mxu0 0.0
      %2109 = vmatprep.subr.mxu0 0.0
      %2110 = vmatpush2.msra.mxu0 0.0
      %2111 = vmatprep.subr.mxu0 0.0
      %2112 = vmatpush2.msra.mxu0 0.0
      %2113 = vmatprep.subr.mxu0 0.0
      %2114 = vmatpush2.msra.mxu0 0.0
      %2115 = vmatprep.subr.mxu0 0.0
      %2116 = vmatpush2.msra.mxu0 0.0
      %2117 = vmatprep.subr.mxu0 0.0
      %2118 = vmatpush2.msra.mxu0 0.0
      %2119 = vmatprep.subr.mxu0 0.0
      %2120 = vmatpush2.msra.mxu0 0.0
      %2121 = vmatprep.subr.mxu0 0.0
      %2122 = vmatpush2.msra.mxu0 0.0
      %2123 = vmatprep.subr.mxu0 0.0
      %2124 = vmatpush2.msra.mxu0 0.0
      %2125 = vmatprep.subr.mxu0 0.0
      %2126 = vmatpush2.msra.mxu0 0.0
      %2127 = vmatprep.subr.mxu0 0.0
      %2128 = vmatpush2.msra.mxu0 0.0
      %2129 = vmatprep.subr.mxu0 0.0
      %2130 = vmatpush2.msra.mxu0 0.0
      %2131 = vmatprep.subr.mxu0 0.0
      %2132 = vmatpush2.msra.mxu0 0.0
      %2133 = vmatprep.subr.mxu0 0.0
      %2134 = vmatpush2.msra.mxu0 0.0
      %2135 = vmatprep.subr.mxu0 0.0
      %2136 = vmatpush2.msra.mxu0 0.0
      %2137 = vmatprep.mubr.f32.mxu0 0.0
      %2138 = vmatmul.mubr.f32.gmra.mxu0 %v1975
      %v2139 = vpop.f32.mrf.mxu0
      %v2140 = vadd.f32 0.0, %v2139
      %v2141 = vpop.f32.mrf.mxu0
      %2142 = vmatprep.mubr.f32.mxu0 0.0
      %2143 = vmatmul.mubr.f32.gmra.mxu0 %v1978
      %v2144 = vpop.f32.mrf.mxu0
      %v2145 = vadd.f32 0.0, %v2144
      %v2146 = vpop.f32.mrf.mxu0
      %2147 = vmatprep.mubr.f32.mxu0 0.0
      %2148 = vmatmul.mubr.f32.gmra.mxu0 %v1981
      %v2149 = vpop.f32.mrf.mxu0
      %v2150 = vadd.f32 0.0, %v2149
      %v2151 = vpop.f32.mrf.mxu0
      %2152 = vmatprep.mubr.f32.mxu0 0.0
      %2153 = vmatmul.mubr.f32.gmra.mxu0 %v1984
      %v2154 = vpop.f32.mrf.mxu0
      %v2155 = vadd.f32 0.0, %v2154
      %v2156 = vpop.f32.mrf.mxu0
      %2157 = vmatprep.mubr.f32.mxu0 0.0
      %2158 = vmatmul.mubr.f32.gmra.mxu0 %v1987
      %v2159 = vpop.f32.mrf.mxu0
      %v2160 = vadd.f32 0.0, %v2159
      %v2161 = vpop.f32.mrf.mxu0
      %2162 = vmatprep.mubr.f32.mxu0 0.0
      %2163 = vmatmul.mubr.f32.gmra.mxu0 %v1990
      %v2164 = vpop.f32.mrf.mxu0
      %v2165 = vadd.f32 0.0, %v2164
      %v2166 = vpop.f32.mrf.mxu0
      %2167 = vmatprep.mubr.f32.mxu0 0.0
      %2168 = vmatmul.mubr.f32.gmra.mxu0 %v1993
      %v2169 = vpop.f32.mrf.mxu0
      %v2170 = vadd.f32 0.0, %v2169
      %v2171 = vpop.f32.mrf.mxu0
      %2172 = vmatprep.mubr.f32.mxu0 0.0
      %2173 = vmatmul.mubr.f32.gmra.mxu0 %v1996
      %v2174 = vpop.f32.mrf.mxu0
      %v2175 = vadd.f32 0.0, %v2174
      %v2176 = vpop.f32.mrf.mxu0
      %2177 = vmatprep.mubr.f32.mxu0 0.0
      %2178 = vmatmul.mubr.f32.gmra.mxu0 %v1999
      %v2179 = vpop.f32.mrf.mxu0
      %v2180 = vadd.f32 0.0, %v2179
      %v2181 = vpop.f32.mrf.mxu0
      %2182 = vmatprep.mubr.f32.mxu0 0.0
      %2183 = vmatmul.mubr.f32.gmra.mxu0 %v2002
      %v2184 = vpop.f32.mrf.mxu0
      %v2185 = vadd.f32 0.0, %v2184
      %v2186 = vpop.f32.mrf.mxu0
      %2187 = vmatprep.mubr.f32.mxu0 0.0
      %2188 = vmatmul.mubr.f32.gmra.mxu0 %v2005
      %v2189 = vpop.f32.mrf.mxu0
      %v2190 = vadd.f32 0.0, %v2189
      %v2191 = vpop.f32.mrf.mxu0
      %2192 = vmatprep.mubr.f32.mxu0 0.0
      %2193 = vmatmul.mubr.f32.gmra.mxu0 %v2008
      %v2194 = vpop.f32.mrf.mxu0
      %v2195 = vadd.f32 0.0, %v2194
      %v2196 = vpop.f32.mrf.mxu0
      %2197 = vmatprep.mubr.f32.mxu0 0.0
      %2198 = vmatmul.mubr.f32.gmra.mxu0 %v2011
      %v2199 = vpop.f32.mrf.mxu0
      %v2200 = vadd.f32 0.0, %v2199
      %v2201 = vpop.f32.mrf.mxu0
      %2202 = vmatprep.mubr.f32.mxu0 0.0
      %2203 = vmatmul.mubr.f32.gmra.mxu0 %v2014
      %v2204 = vpop.f32.mrf.mxu0
      %v2205 = vadd.f32 0.0, %v2204
      %v2206 = vpop.f32.mrf.mxu0
      %2207 = vmatprep.mubr.f32.mxu0 0.0
      %2208 = vmatmul.mubr.f32.gmra.mxu0 %v2017
      %v2209 = vpop.f32.mrf.mxu0
      %v2210 = vadd.f32 0.0, %v2209
      %v2211 = vpop.f32.mrf.mxu0
      %2212 = vmatprep.mubr.f32.mxu0 0.0
      %2213 = vmatmul.mubr.f32.gmra.mxu0 %v2020
      %v2214 = vpop.f32.mrf.mxu0
      %v2215 = vadd.f32 0.0, %v2214
      %v2216 = vpop.f32.mrf.mxu0
      %2217 = vmatprep.mubr.f32.mxu0 0.0
      %2218 = vmatmul.mubr.f32.gmra.mxu0 %v2023
      %v2219 = vpop.f32.mrf.mxu0
      %v2220 = vadd.f32 0.0, %v2219
      %v2221 = vpop.f32.mrf.mxu0
      %2222 = vmatprep.mubr.f32.mxu0 0.0
      %2223 = vmatmul.mubr.f32.gmra.mxu0 %v2026
      %v2224 = vpop.f32.mrf.mxu0
      %v2225 = vadd.f32 0.0, %v2224
      %v2226 = vpop.f32.mrf.mxu0
      %2227 = vmatprep.mubr.f32.mxu0 0.0
      %2228 = vmatmul.mubr.f32.gmra.mxu0 %v2029
      %v2229 = vpop.f32.mrf.mxu0
      %v2230 = vadd.f32 0.0, %v2229
      %v2231 = vpop.f32.mrf.mxu0
      %2232 = vmatprep.mubr.f32.mxu0 0.0
      %2233 = vmatmul.mubr.f32.gmra.mxu0 %v2032
      %v2234 = vpop.f32.mrf.mxu0
      %v2235 = vadd.f32 0.0, %v2234
      %v2236 = vpop.f32.mrf.mxu0
      %2237 = vmatprep.mubr.f32.mxu0 0.0
      %2238 = vmatmul.mubr.f32.gmra.mxu0 %v2035
      %v2239 = vpop.f32.mrf.mxu0
      %v2240 = vadd.f32 0.0, %v2239
      %v2241 = vpop.f32.mrf.mxu0
      %2242 = vmatprep.mubr.f32.mxu0 0.0
      %2243 = vmatmul.mubr.f32.gmra.mxu0 %v2038
      %v2244 = vpop.f32.mrf.mxu0
      %v2245 = vadd.f32 0.0, %v2244
      %v2246 = vpop.f32.mrf.mxu0
      %2247 = vmatprep.mubr.f32.mxu0 0.0
      %2248 = vmatmul.mubr.f32.gmra.mxu0 %v2041
      %v2249 = vpop.f32.mrf.mxu0
      %v2250 = vadd.f32 0.0, %v2249
      %v2251 = vpop.f32.mrf.mxu0
      %2252 = vmatprep.mubr.f32.mxu0 0.0
      %2253 = vmatmul.mubr.f32.gmra.mxu0 %v2044
      %v2254 = vpop.f32.mrf.mxu0
      %v2255 = vadd.f32 0.0, %v2254
      %v2256 = vpop.f32.mrf.mxu0
      %2257 = vmatprep.mubr.f32.mxu0 0.0
      %2258 = vmatmul.mubr.f32.gmra.mxu0 %v2047
      %v2259 = vpop.f32.mrf.mxu0
      %v2260 = vadd.f32 0.0, %v2259
      %v2261 = vpop.f32.mrf.mxu0
      %2262 = vmatprep.mubr.f32.mxu0 0.0
      %2263 = vmatmul.mubr.f32.gmra.mxu0 %v2050
      %v2264 = vpop.f32.mrf.mxu0
      %v2265 = vadd.f32 0.0, %v2264
      %v2266 = vpop.f32.mrf.mxu0
      %2267 = vmatprep.mubr.f32.mxu0 0.0
      %2268 = vmatmul.mubr.f32.gmra.mxu0 %v2053
      %v2269 = vpop.f32.mrf.mxu0
      %v2270 = vadd.f32 0.0, %v2269
      %v2271 = vpop.f32.mrf.mxu0
      %2272 = vmatprep.mubr.f32.mxu0 0.0
      %2273 = vmatmul.mubr.f32.gmra.mxu0 %v2056
      %v2274 = vpop.f32.mrf.mxu0
      %v2275 = vadd.f32 0.0, %v2274
      %v2276 = vpop.f32.mrf.mxu0
      %2277 = vmatprep.mubr.f32.mxu0 0.0
      %2278 = vmatmul.mubr.f32.gmra.mxu0 %v2059
      %v2279 = vpop.f32.mrf.mxu0
      %v2280 = vadd.f32 0.0, %v2279
      %v2281 = vpop.f32.mrf.mxu0
      %2282 = vmatprep.mubr.f32.mxu0 0.0
      %2283 = vmatmul.mubr.f32.gmra.mxu0 %v2062
      %v2284 = vpop.f32.mrf.mxu0
      %v2285 = vadd.f32 0.0, %v2284
      %v2286 = vpop.f32.mrf.mxu0
      %2287 = vmatprep.mubr.f32.mxu0 0.0
      %2288 = vmatmul.mubr.f32.gmra.mxu0 %v2065
      %v2289 = vpop.f32.mrf.mxu0
      %v2290 = vadd.f32 0.0, %v2289
      %v2291 = vpop.f32.mrf.mxu0
      %2292 = vmatprep.mubr.f32.mxu0 0.0
      %2293 = vmatmul.mubr.f32.gmra.mxu0 %v2068
      %v2294 = vpop.f32.mrf.mxu0
      %v2295 = vadd.f32 0.0, %v2294
      %v2296 = vpop.f32.mrf.mxu0
      %2297 = vdwg.mxu0
      %v2298 = vadd.f32 %v1876, %v2140
      %v2299 = vadd.f32 %v1877, %v2145
      %v2300 = vadd.f32 %v1878, %v2150
      %v2301 = vadd.f32 %v1879, %v2155
      %v2302 = vadd.f32 %v1880, %v2160
      %v2303 = vadd.f32 %v1881, %v2165
      %v2304 = vadd.f32 %v1882, %v2170
      %v2305 = vadd.f32 %v1883, %v2175
      %v2306 = vadd.f32 %v1884, %v2180
      %v2307 = vadd.f32 %v1885, %v2185
      %v2308 = vadd.f32 %v1886, %v2190
      %v2309 = vadd.f32 %v1887, %v2195
      %v2310 = vadd.f32 %v1888, %v2200
      %v2311 = vadd.f32 %v1889, %v2205
      %v2312 = vadd.f32 %v1890, %v2210
      %v2313 = vadd.f32 %v1891, %v2215
      %v2314 = vadd.f32 %v1892, %v2220
      %v2315 = vadd.f32 %v1893, %v2225
      %v2316 = vadd.f32 %v1894, %v2230
      %v2317 = vadd.f32 %v1895, %v2235
      %v2318 = vadd.f32 %v1896, %v2240
      %v2319 = vadd.f32 %v1897, %v2245
      %v2320 = vadd.f32 %v1898, %v2250
      %v2321 = vadd.f32 %v1899, %v2255
      %v2322 = vadd.f32 %v1900, %v2260
      %v2323 = vadd.f32 %v1901, %v2265
      %v2324 = vadd.f32 %v1902, %v2270
      %v2325 = vadd.f32 %v1903, %v2275
      %v2326 = vadd.f32 %v1904, %v2280
      %v2327 = vadd.f32 %v1905, %v2285
      %v2328 = vadd.f32 %v1906, %v2290
      %v2329 = vadd.f32 %v1907, %v2295
      %s2330 = scalar_lea.vmem [#allocation2], 9
      %v2331 = vld [vmem:[%s2330] ss:$4 sm:$0xff]
      %s2332 = scalar_lea.vmem [#allocation2], 41
      %v2333 = vld [vmem:[%s2332] ss:$4 sm:$0xff]
      %s2334 = scalar_lea.vmem [#allocation2], 73
      %v2335 = vld [vmem:[%s2334] ss:$4 sm:$0xff]
      %s2336 = scalar_lea.vmem [#allocation2], 105
      %v2337 = vld [vmem:[%s2336] ss:$4 sm:$0xff]
      %s2338 = scalar_lea.vmem [#allocation2], 137
      %v2339 = vld [vmem:[%s2338] ss:$4 sm:$0xff]
      %s2340 = scalar_lea.vmem [#allocation2], 169
      %v2341 = vld [vmem:[%s2340] ss:$4 sm:$0xff]
      %s2342 = scalar_lea.vmem [#allocation2], 201
      %v2343 = vld [vmem:[%s2342] ss:$4 sm:$0xff]
      %s2344 = scalar_lea.vmem [#allocation2], 233
      %v2345 = vld [vmem:[%s2344] ss:$4 sm:$0xff]
      %s2346 = scalar_lea.vmem [#allocation2], 265
      %v2347 = vld [vmem:[%s2346] ss:$4 sm:$0xff]
      %s2348 = scalar_lea.vmem [#allocation2], 297
      %v2349 = vld [vmem:[%s2348] ss:$4 sm:$0xff]
      %s2350 = scalar_lea.vmem [#allocation2], 329
      %v2351 = vld [vmem:[%s2350] ss:$4 sm:$0xff]
      %s2352 = scalar_lea.vmem [#allocation2], 361
      %v2353 = vld [vmem:[%s2352] ss:$4 sm:$0xff]
      %s2354 = scalar_lea.vmem [#allocation2], 393
      %v2355 = vld [vmem:[%s2354] ss:$4 sm:$0xff]
      %s2356 = scalar_lea.vmem [#allocation2], 425
      %v2357 = vld [vmem:[%s2356] ss:$4 sm:$0xff]
      %s2358 = scalar_lea.vmem [#allocation2], 457
      %v2359 = vld [vmem:[%s2358] ss:$4 sm:$0xff]
      %s2360 = scalar_lea.vmem [#allocation2], 489
      %v2361 = vld [vmem:[%s2360] ss:$4 sm:$0xff]
      %s2362 = scalar_lea.vmem [#allocation2], 521
      %v2363 = vld [vmem:[%s2362] ss:$4 sm:$0xff]
      %s2364 = scalar_lea.vmem [#allocation2], 553
      %v2365 = vld [vmem:[%s2364] ss:$4 sm:$0xff]
      %s2366 = scalar_lea.vmem [#allocation2], 585
      %v2367 = vld [vmem:[%s2366] ss:$4 sm:$0xff]
      %s2368 = scalar_lea.vmem [#allocation2], 617
      %v2369 = vld [vmem:[%s2368] ss:$4 sm:$0xff]
      %s2370 = scalar_lea.vmem [#allocation2], 649
      %v2371 = vld [vmem:[%s2370] ss:$4 sm:$0xff]
      %s2372 = scalar_lea.vmem [#allocation2], 681
      %v2373 = vld [vmem:[%s2372] ss:$4 sm:$0xff]
      %s2374 = scalar_lea.vmem [#allocation2], 713
      %v2375 = vld [vmem:[%s2374] ss:$4 sm:$0xff]
      %s2376 = scalar_lea.vmem [#allocation2], 745
      %v2377 = vld [vmem:[%s2376] ss:$4 sm:$0xff]
      %s2378 = scalar_lea.vmem [#allocation2], 777
      %v2379 = vld [vmem:[%s2378] ss:$4 sm:$0xff]
      %s2380 = scalar_lea.vmem [#allocation2], 809
      %v2381 = vld [vmem:[%s2380] ss:$4 sm:$0xff]
      %s2382 = scalar_lea.vmem [#allocation2], 841
      %v2383 = vld [vmem:[%s2382] ss:$4 sm:$0xff]
      %s2384 = scalar_lea.vmem [#allocation2], 873
      %v2385 = vld [vmem:[%s2384] ss:$4 sm:$0xff]
      %s2386 = scalar_lea.vmem [#allocation2], 905
      %v2387 = vld [vmem:[%s2386] ss:$4 sm:$0xff]
      %s2388 = scalar_lea.vmem [#allocation2], 937
      %v2389 = vld [vmem:[%s2388] ss:$4 sm:$0xff]
      %s2390 = scalar_lea.vmem [#allocation2], 969
      %v2391 = vld [vmem:[%s2390] ss:$4 sm:$0xff]
      %s2392 = scalar_lea.vmem [#allocation2], 1001
      %v2393 = vld [vmem:[%s2392] ss:$4 sm:$0xff]
      %s2394 = scalar_lea.vmem %s1, 16
      %v2395 = vld [vmem:[%s2394] sm:$0x7]
      %v2397 = vsel %vm565, %v2331, 0
      %v2400 = vsel %vm565, %v2333, 0
      %v2403 = vsel %vm565, %v2335, 0
      %v2406 = vsel %vm565, %v2337, 0
      %v2409 = vsel %vm565, %v2339, 0
      %v2412 = vsel %vm565, %v2341, 0
      %v2415 = vsel %vm565, %v2343, 0
      %v2418 = vsel %vm565, %v2345, 0
      %v2421 = vsel %vm565, %v2347, 0
      %v2424 = vsel %vm565, %v2349, 0
      %v2427 = vsel %vm565, %v2351, 0
      %v2430 = vsel %vm565, %v2353, 0
      %v2433 = vsel %vm565, %v2355, 0
      %v2436 = vsel %vm565, %v2357, 0
      %v2439 = vsel %vm565, %v2359, 0
      %v2442 = vsel %vm565, %v2361, 0
      %v2445 = vsel %vm565, %v2363, 0
      %v2448 = vsel %vm565, %v2365, 0
      %v2451 = vsel %vm565, %v2367, 0
      %v2454 = vsel %vm565, %v2369, 0
      %v2457 = vsel %vm565, %v2371, 0
      %v2460 = vsel %vm565, %v2373, 0
      %v2463 = vsel %vm565, %v2375, 0
      %v2466 = vsel %vm565, %v2377, 0
      %v2469 = vsel %vm565, %v2379, 0
      %v2472 = vsel %vm565, %v2381, 0
      %v2475 = vsel %vm565, %v2383, 0
      %v2478 = vsel %vm565, %v2385, 0
      %v2481 = vsel %vm565, %v2387, 0
      %v2484 = vsel %vm565, %v2389, 0
      %v2487 = vsel %vm565, %v2391, 0
      %v2490 = vsel %vm565, %v2393, 0
      %v2493 = vsel %vm933, %v2395, 0
      %2495 = vmatprep.subr.mxu0 0.0
      %2496 = vmatpush1.msra.mxu0 0.0
      %2497 = vmatprep.subr.mxu0 0.0
      %2498 = vmatpush1.msra.mxu0 0.0
      %2499 = vmatprep.subr.mxu0 0.0
      %2500 = vmatpush1.msra.mxu0 0.0
      %2501 = vmatprep.subr.mxu0 0.0
      %2502 = vmatpush1.msra.mxu0 0.0
      %2503 = vmatprep.subr.mxu0 0.0
      %2504 = vmatpush1.msra.mxu0 0.0
      %2505 = vmatprep.subr.mxu0 0.0
      %2506 = vmatpush1.msra.mxu0 0.0
      %2507 = vmatprep.subr.mxu0 0.0
      %2508 = vmatpush1.msra.mxu0 0.0
      %2509 = vmatprep.subr.mxu0 0.0
      %2510 = vmatpush1.msra.mxu0 0.0
      %2511 = vmatprep.subr.mxu0 0.0
      %2512 = vmatpush1.msra.mxu0 0.0
      %2513 = vmatprep.subr.mxu0 0.0
      %2514 = vmatpush1.msra.mxu0 0.0
      %2515 = vmatprep.subr.mxu0 0.0
      %2516 = vmatpush1.msra.mxu0 0.0
      %2517 = vmatprep.subr.mxu0 0.0
      %2518 = vmatpush1.msra.mxu0 0.0
      %2519 = vmatprep.subr.mxu0 0.0
      %2520 = vmatpush1.msra.mxu0 0.0
      %2521 = vmatprep.subr.mxu0 0.0
      %2522 = vmatpush1.msra.mxu0 0.0
      %2523 = vmatprep.subr.mxu0 0.0
      %2524 = vmatpush1.msra.mxu0 0.0
      %2525 = vmatprep.subr.mxu0 0.0
      %2526 = vmatpush1.msra.mxu0 %v2493
      %2527 = vmatprep.subr.mxu0 0.0
      %2528 = vmatpush2.msra.mxu0 0.0
      %2529 = vmatprep.subr.mxu0 0.0
      %2530 = vmatpush2.msra.mxu0 0.0
      %2531 = vmatprep.subr.mxu0 0.0
      %2532 = vmatpush2.msra.mxu0 0.0
      %2533 = vmatprep.subr.mxu0 0.0
      %2534 = vmatpush2.msra.mxu0 0.0
      %2535 = vmatprep.subr.mxu0 0.0
      %2536 = vmatpush2.msra.mxu0 0.0
      %2537 = vmatprep.subr.mxu0 0.0
      %2538 = vmatpush2.msra.mxu0 0.0
      %2539 = vmatprep.subr.mxu0 0.0
      %2540 = vmatpush2.msra.mxu0 0.0
      %2541 = vmatprep.subr.mxu0 0.0
      %2542 = vmatpush2.msra.mxu0 0.0
      %2543 = vmatprep.subr.mxu0 0.0
      %2544 = vmatpush2.msra.mxu0 0.0
      %2545 = vmatprep.subr.mxu0 0.0
      %2546 = vmatpush2.msra.mxu0 0.0
      %2547 = vmatprep.subr.mxu0 0.0
      %2548 = vmatpush2.msra.mxu0 0.0
      %2549 = vmatprep.subr.mxu0 0.0
      %2550 = vmatpush2.msra.mxu0 0.0
      %2551 = vmatprep.subr.mxu0 0.0
      %2552 = vmatpush2.msra.mxu0 0.0
      %2553 = vmatprep.subr.mxu0 0.0
      %2554 = vmatpush2.msra.mxu0 0.0
      %2555 = vmatprep.subr.mxu0 0.0
      %2556 = vmatpush2.msra.mxu0 0.0
      %2557 = vmatprep.subr.mxu0 0.0
      %2558 = vmatpush2.msra.mxu0 0.0
      %2559 = vmatprep.mubr.f32.mxu0 0.0
      %2560 = vmatmul.mubr.f32.gmra.mxu0 %v2397
      %v2561 = vpop.f32.mrf.mxu0
      %v2562 = vadd.f32 0.0, %v2561
      %v2563 = vpop.f32.mrf.mxu0
      %2564 = vmatprep.mubr.f32.mxu0 0.0
      %2565 = vmatmul.mubr.f32.gmra.mxu0 %v2400
      %v2566 = vpop.f32.mrf.mxu0
      %v2567 = vadd.f32 0.0, %v2566
      %v2568 = vpop.f32.mrf.mxu0
      %2569 = vmatprep.mubr.f32.mxu0 0.0
      %2570 = vmatmul.mubr.f32.gmra.mxu0 %v2403
      %v2571 = vpop.f32.mrf.mxu0
      %v2572 = vadd.f32 0.0, %v2571
      %v2573 = vpop.f32.mrf.mxu0
      %2574 = vmatprep.mubr.f32.mxu0 0.0
      %2575 = vmatmul.mubr.f32.gmra.mxu0 %v2406
      %v2576 = vpop.f32.mrf.mxu0
      %v2577 = vadd.f32 0.0, %v2576
      %v2578 = vpop.f32.mrf.mxu0
      %2579 = vmatprep.mubr.f32.mxu0 0.0
      %2580 = vmatmul.mubr.f32.gmra.mxu0 %v2409
      %v2581 = vpop.f32.mrf.mxu0
      %v2582 = vadd.f32 0.0, %v2581
      %v2583 = vpop.f32.mrf.mxu0
      %2584 = vmatprep.mubr.f32.mxu0 0.0
      %2585 = vmatmul.mubr.f32.gmra.mxu0 %v2412
      %v2586 = vpop.f32.mrf.mxu0
      %v2587 = vadd.f32 0.0, %v2586
      %v2588 = vpop.f32.mrf.mxu0
      %2589 = vmatprep.mubr.f32.mxu0 0.0
      %2590 = vmatmul.mubr.f32.gmra.mxu0 %v2415
      %v2591 = vpop.f32.mrf.mxu0
      %v2592 = vadd.f32 0.0, %v2591
      %v2593 = vpop.f32.mrf.mxu0
      %2594 = vmatprep.mubr.f32.mxu0 0.0
      %2595 = vmatmul.mubr.f32.gmra.mxu0 %v2418
      %v2596 = vpop.f32.mrf.mxu0
      %v2597 = vadd.f32 0.0, %v2596
      %v2598 = vpop.f32.mrf.mxu0
      %2599 = vmatprep.mubr.f32.mxu0 0.0
      %2600 = vmatmul.mubr.f32.gmra.mxu0 %v2421
      %v2601 = vpop.f32.mrf.mxu0
      %v2602 = vadd.f32 0.0, %v2601
      %v2603 = vpop.f32.mrf.mxu0
      %2604 = vmatprep.mubr.f32.mxu0 0.0
      %2605 = vmatmul.mubr.f32.gmra.mxu0 %v2424
      %v2606 = vpop.f32.mrf.mxu0
      %v2607 = vadd.f32 0.0, %v2606
      %v2608 = vpop.f32.mrf.mxu0
      %2609 = vmatprep.mubr.f32.mxu0 0.0
      %2610 = vmatmul.mubr.f32.gmra.mxu0 %v2427
      %v2611 = vpop.f32.mrf.mxu0
      %v2612 = vadd.f32 0.0, %v2611
      %v2613 = vpop.f32.mrf.mxu0
      %2614 = vmatprep.mubr.f32.mxu0 0.0
      %2615 = vmatmul.mubr.f32.gmra.mxu0 %v2430
      %v2616 = vpop.f32.mrf.mxu0
      %v2617 = vadd.f32 0.0, %v2616
      %v2618 = vpop.f32.mrf.mxu0
      %2619 = vmatprep.mubr.f32.mxu0 0.0
      %2620 = vmatmul.mubr.f32.gmra.mxu0 %v2433
      %v2621 = vpop.f32.mrf.mxu0
      %v2622 = vadd.f32 0.0, %v2621
      %v2623 = vpop.f32.mrf.mxu0
      %2624 = vmatprep.mubr.f32.mxu0 0.0
      %2625 = vmatmul.mubr.f32.gmra.mxu0 %v2436
      %v2626 = vpop.f32.mrf.mxu0
      %v2627 = vadd.f32 0.0, %v2626
      %v2628 = vpop.f32.mrf.mxu0
      %2629 = vmatprep.mubr.f32.mxu0 0.0
      %2630 = vmatmul.mubr.f32.gmra.mxu0 %v2439
      %v2631 = vpop.f32.mrf.mxu0
      %v2632 = vadd.f32 0.0, %v2631
      %v2633 = vpop.f32.mrf.mxu0
      %2634 = vmatprep.mubr.f32.mxu0 0.0
      %2635 = vmatmul.mubr.f32.gmra.mxu0 %v2442
      %v2636 = vpop.f32.mrf.mxu0
      %v2637 = vadd.f32 0.0, %v2636
      %v2638 = vpop.f32.mrf.mxu0
      %2639 = vmatprep.mubr.f32.mxu0 0.0
      %2640 = vmatmul.mubr.f32.gmra.mxu0 %v2445
      %v2641 = vpop.f32.mrf.mxu0
      %v2642 = vadd.f32 0.0, %v2641
      %v2643 = vpop.f32.mrf.mxu0
      %2644 = vmatprep.mubr.f32.mxu0 0.0
      %2645 = vmatmul.mubr.f32.gmra.mxu0 %v2448
      %v2646 = vpop.f32.mrf.mxu0
      %v2647 = vadd.f32 0.0, %v2646
      %v2648 = vpop.f32.mrf.mxu0
      %2649 = vmatprep.mubr.f32.mxu0 0.0
      %2650 = vmatmul.mubr.f32.gmra.mxu0 %v2451
      %v2651 = vpop.f32.mrf.mxu0
      %v2652 = vadd.f32 0.0, %v2651
      %v2653 = vpop.f32.mrf.mxu0
      %2654 = vmatprep.mubr.f32.mxu0 0.0
      %2655 = vmatmul.mubr.f32.gmra.mxu0 %v2454
      %v2656 = vpop.f32.mrf.mxu0
      %v2657 = vadd.f32 0.0, %v2656
      %v2658 = vpop.f32.mrf.mxu0
      %2659 = vmatprep.mubr.f32.mxu0 0.0
      %2660 = vmatmul.mubr.f32.gmra.mxu0 %v2457
      %v2661 = vpop.f32.mrf.mxu0
      %v2662 = vadd.f32 0.0, %v2661
      %v2663 = vpop.f32.mrf.mxu0
      %2664 = vmatprep.mubr.f32.mxu0 0.0
      %2665 = vmatmul.mubr.f32.gmra.mxu0 %v2460
      %v2666 = vpop.f32.mrf.mxu0
      %v2667 = vadd.f32 0.0, %v2666
      %v2668 = vpop.f32.mrf.mxu0
      %2669 = vmatprep.mubr.f32.mxu0 0.0
      %2670 = vmatmul.mubr.f32.gmra.mxu0 %v2463
      %v2671 = vpop.f32.mrf.mxu0
      %v2672 = vadd.f32 0.0, %v2671
      %v2673 = vpop.f32.mrf.mxu0
      %2674 = vmatprep.mubr.f32.mxu0 0.0
      %2675 = vmatmul.mubr.f32.gmra.mxu0 %v2466
      %v2676 = vpop.f32.mrf.mxu0
      %v2677 = vadd.f32 0.0, %v2676
      %v2678 = vpop.f32.mrf.mxu0
      %2679 = vmatprep.mubr.f32.mxu0 0.0
      %2680 = vmatmul.mubr.f32.gmra.mxu0 %v2469
      %v2681 = vpop.f32.mrf.mxu0
      %v2682 = vadd.f32 0.0, %v2681
      %v2683 = vpop.f32.mrf.mxu0
      %2684 = vmatprep.mubr.f32.mxu0 0.0
      %2685 = vmatmul.mubr.f32.gmra.mxu0 %v2472
      %v2686 = vpop.f32.mrf.mxu0
      %v2687 = vadd.f32 0.0, %v2686
      %v2688 = vpop.f32.mrf.mxu0
      %2689 = vmatprep.mubr.f32.mxu0 0.0
      %2690 = vmatmul.mubr.f32.gmra.mxu0 %v2475
      %v2691 = vpop.f32.mrf.mxu0
      %v2692 = vadd.f32 0.0, %v2691
      %v2693 = vpop.f32.mrf.mxu0
      %2694 = vmatprep.mubr.f32.mxu0 0.0
      %2695 = vmatmul.mubr.f32.gmra.mxu0 %v2478
      %v2696 = vpop.f32.mrf.mxu0
      %v2697 = vadd.f32 0.0, %v2696
      %v2698 = vpop.f32.mrf.mxu0
      %2699 = vmatprep.mubr.f32.mxu0 0.0
      %2700 = vmatmul.mubr.f32.gmra.mxu0 %v2481
      %v2701 = vpop.f32.mrf.mxu0
      %v2702 = vadd.f32 0.0, %v2701
      %v2703 = vpop.f32.mrf.mxu0
      %2704 = vmatprep.mubr.f32.mxu0 0.0
      %2705 = vmatmul.mubr.f32.gmra.mxu0 %v2484
      %v2706 = vpop.f32.mrf.mxu0
      %v2707 = vadd.f32 0.0, %v2706
      %v2708 = vpop.f32.mrf.mxu0
      %2709 = vmatprep.mubr.f32.mxu0 0.0
      %2710 = vmatmul.mubr.f32.gmra.mxu0 %v2487
      %v2711 = vpop.f32.mrf.mxu0
      %v2712 = vadd.f32 0.0, %v2711
      %v2713 = vpop.f32.mrf.mxu0
      %2714 = vmatprep.mubr.f32.mxu0 0.0
      %2715 = vmatmul.mubr.f32.gmra.mxu0 %v2490
      %v2716 = vpop.f32.mrf.mxu0
      %v2717 = vadd.f32 0.0, %v2716
      %v2718 = vpop.f32.mrf.mxu0
      %2719 = vdwg.mxu0
      %v2720 = vadd.f32 %v2298, %v2562
      %v2721 = vadd.f32 %v2299, %v2567
      %v2722 = vadd.f32 %v2300, %v2572
      %v2723 = vadd.f32 %v2301, %v2577
      %v2724 = vadd.f32 %v2302, %v2582
      %v2725 = vadd.f32 %v2303, %v2587
      %v2726 = vadd.f32 %v2304, %v2592
      %v2727 = vadd.f32 %v2305, %v2597
      %v2728 = vadd.f32 %v2306, %v2602
      %v2729 = vadd.f32 %v2307, %v2607
      %v2730 = vadd.f32 %v2308, %v2612
      %v2731 = vadd.f32 %v2309, %v2617
      %v2732 = vadd.f32 %v2310, %v2622
      %v2733 = vadd.f32 %v2311, %v2627
      %v2734 = vadd.f32 %v2312, %v2632
      %v2735 = vadd.f32 %v2313, %v2637
      %v2736 = vadd.f32 %v2314, %v2642
      %v2737 = vadd.f32 %v2315, %v2647
      %v2738 = vadd.f32 %v2316, %v2652
      %v2739 = vadd.f32 %v2317, %v2657
      %v2740 = vadd.f32 %v2318, %v2662
      %v2741 = vadd.f32 %v2319, %v2667
      %v2742 = vadd.f32 %v2320, %v2672
      %v2743 = vadd.f32 %v2321, %v2677
      %v2744 = vadd.f32 %v2322, %v2682
      %v2745 = vadd.f32 %v2323, %v2687
      %v2746 = vadd.f32 %v2324, %v2692
      %v2747 = vadd.f32 %v2325, %v2697
      %v2748 = vadd.f32 %v2326, %v2702
      %v2749 = vadd.f32 %v2327, %v2707
      %v2750 = vadd.f32 %v2328, %v2712
      %v2751 = vadd.f32 %v2329, %v2717
      %s2752 = scalar_lea.vmem [#allocation2], 10
      %v2753 = vld [vmem:[%s2752] ss:$4 sm:$0xff]
      %s2754 = scalar_lea.vmem [#allocation2], 42
      %v2755 = vld [vmem:[%s2754] ss:$4 sm:$0xff]
      %s2756 = scalar_lea.vmem [#allocation2], 74
      %v2757 = vld [vmem:[%s2756] ss:$4 sm:$0xff]
      %s2758 = scalar_lea.vmem [#allocation2], 106
      %v2759 = vld [vmem:[%s2758] ss:$4 sm:$0xff]
      %s2760 = scalar_lea.vmem [#allocation2], 138
      %v2761 = vld [vmem:[%s2760] ss:$4 sm:$0xff]
      %s2762 = scalar_lea.vmem [#allocation2], 170
      %v2763 = vld [vmem:[%s2762] ss:$4 sm:$0xff]
      %s2764 = scalar_lea.vmem [#allocation2], 202
      %v2765 = vld [vmem:[%s2764] ss:$4 sm:$0xff]
      %s2766 = scalar_lea.vmem [#allocation2], 234
      %v2767 = vld [vmem:[%s2766] ss:$4 sm:$0xff]
      %s2768 = scalar_lea.vmem [#allocation2], 266
      %v2769 = vld [vmem:[%s2768] ss:$4 sm:$0xff]
      %s2770 = scalar_lea.vmem [#allocation2], 298
      %v2771 = vld [vmem:[%s2770] ss:$4 sm:$0xff]
      %s2772 = scalar_lea.vmem [#allocation2], 330
      %v2773 = vld [vmem:[%s2772] ss:$4 sm:$0xff]
      %s2774 = scalar_lea.vmem [#allocation2], 362
      %v2775 = vld [vmem:[%s2774] ss:$4 sm:$0xff]
      %s2776 = scalar_lea.vmem [#allocation2], 394
      %v2777 = vld [vmem:[%s2776] ss:$4 sm:$0xff]
      %s2778 = scalar_lea.vmem [#allocation2], 426
      %v2779 = vld [vmem:[%s2778] ss:$4 sm:$0xff]
      %s2780 = scalar_lea.vmem [#allocation2], 458
      %v2781 = vld [vmem:[%s2780] ss:$4 sm:$0xff]
      %s2782 = scalar_lea.vmem [#allocation2], 490
      %v2783 = vld [vmem:[%s2782] ss:$4 sm:$0xff]
      %s2784 = scalar_lea.vmem [#allocation2], 522
      %v2785 = vld [vmem:[%s2784] ss:$4 sm:$0xff]
      %s2786 = scalar_lea.vmem [#allocation2], 554
      %v2787 = vld [vmem:[%s2786] ss:$4 sm:$0xff]
      %s2788 = scalar_lea.vmem [#allocation2], 586
      %v2789 = vld [vmem:[%s2788] ss:$4 sm:$0xff]
      %s2790 = scalar_lea.vmem [#allocation2], 618
      %v2791 = vld [vmem:[%s2790] ss:$4 sm:$0xff]
      %s2792 = scalar_lea.vmem [#allocation2], 650
      %v2793 = vld [vmem:[%s2792] ss:$4 sm:$0xff]
      %s2794 = scalar_lea.vmem [#allocation2], 682
      %v2795 = vld [vmem:[%s2794] ss:$4 sm:$0xff]
      %s2796 = scalar_lea.vmem [#allocation2], 714
      %v2797 = vld [vmem:[%s2796] ss:$4 sm:$0xff]
      %s2798 = scalar_lea.vmem [#allocation2], 746
      %v2799 = vld [vmem:[%s2798] ss:$4 sm:$0xff]
      %s2800 = scalar_lea.vmem [#allocation2], 778
      %v2801 = vld [vmem:[%s2800] ss:$4 sm:$0xff]
      %s2802 = scalar_lea.vmem [#allocation2], 810
      %v2803 = vld [vmem:[%s2802] ss:$4 sm:$0xff]
      %s2804 = scalar_lea.vmem [#allocation2], 842
      %v2805 = vld [vmem:[%s2804] ss:$4 sm:$0xff]
      %s2806 = scalar_lea.vmem [#allocation2], 874
      %v2807 = vld [vmem:[%s2806] ss:$4 sm:$0xff]
      %s2808 = scalar_lea.vmem [#allocation2], 906
      %v2809 = vld [vmem:[%s2808] ss:$4 sm:$0xff]
      %s2810 = scalar_lea.vmem [#allocation2], 938
      %v2811 = vld [vmem:[%s2810] ss:$4 sm:$0xff]
      %s2812 = scalar_lea.vmem [#allocation2], 970
      %v2813 = vld [vmem:[%s2812] ss:$4 sm:$0xff]
      %s2814 = scalar_lea.vmem [#allocation2], 1002
      %v2815 = vld [vmem:[%s2814] ss:$4 sm:$0xff]
      %s2816 = scalar_lea.vmem %s1, 20
      %v2817 = vld [vmem:[%s2816] sm:$0x7]
      %v2819 = vsel %vm565, %v2753, 0
      %v2822 = vsel %vm565, %v2755, 0
      %v2825 = vsel %vm565, %v2757, 0
      %v2828 = vsel %vm565, %v2759, 0
      %v2831 = vsel %vm565, %v2761, 0
      %v2834 = vsel %vm565, %v2763, 0
      %v2837 = vsel %vm565, %v2765, 0
      %v2840 = vsel %vm565, %v2767, 0
      %v2843 = vsel %vm565, %v2769, 0
      %v2846 = vsel %vm565, %v2771, 0
      %v2849 = vsel %vm565, %v2773, 0
      %v2852 = vsel %vm565, %v2775, 0
      %v2855 = vsel %vm565, %v2777, 0
      %v2858 = vsel %vm565, %v2779, 0
      %v2861 = vsel %vm565, %v2781, 0
      %v2864 = vsel %vm565, %v2783, 0
      %v2867 = vsel %vm565, %v2785, 0
      %v2870 = vsel %vm565, %v2787, 0
      %v2873 = vsel %vm565, %v2789, 0
      %v2876 = vsel %vm565, %v2791, 0
      %v2879 = vsel %vm565, %v2793, 0
      %v2882 = vsel %vm565, %v2795, 0
      %v2885 = vsel %vm565, %v2797, 0
      %v2888 = vsel %vm565, %v2799, 0
      %v2891 = vsel %vm565, %v2801, 0
      %v2894 = vsel %vm565, %v2803, 0
      %v2897 = vsel %vm565, %v2805, 0
      %v2900 = vsel %vm565, %v2807, 0
      %v2903 = vsel %vm565, %v2809, 0
      %v2906 = vsel %vm565, %v2811, 0
      %v2909 = vsel %vm565, %v2813, 0
      %v2912 = vsel %vm565, %v2815, 0
      %v2915 = vsel %vm933, %v2817, 0
      %2917 = vmatprep.subr.mxu0 0.0
      %2918 = vmatpush1.msra.mxu0 0.0
      %2919 = vmatprep.subr.mxu0 0.0
      %2920 = vmatpush1.msra.mxu0 0.0
      %2921 = vmatprep.subr.mxu0 0.0
      %2922 = vmatpush1.msra.mxu0 0.0
      %2923 = vmatprep.subr.mxu0 0.0
      %2924 = vmatpush1.msra.mxu0 0.0
      %2925 = vmatprep.subr.mxu0 0.0
      %2926 = vmatpush1.msra.mxu0 0.0
      %2927 = vmatprep.subr.mxu0 0.0
      %2928 = vmatpush1.msra.mxu0 0.0
      %2929 = vmatprep.subr.mxu0 0.0
      %2930 = vmatpush1.msra.mxu0 0.0
      %2931 = vmatprep.subr.mxu0 0.0
      %2932 = vmatpush1.msra.mxu0 0.0
      %2933 = vmatprep.subr.mxu0 0.0
      %2934 = vmatpush1.msra.mxu0 0.0
      %2935 = vmatprep.subr.mxu0 0.0
      %2936 = vmatpush1.msra.mxu0 0.0
      %2937 = vmatprep.subr.mxu0 0.0
      %2938 = vmatpush1.msra.mxu0 0.0
      %2939 = vmatprep.subr.mxu0 0.0
      %2940 = vmatpush1.msra.mxu0 0.0
      %2941 = vmatprep.subr.mxu0 0.0
      %2942 = vmatpush1.msra.mxu0 0.0
      %2943 = vmatprep.subr.mxu0 0.0
      %2944 = vmatpush1.msra.mxu0 0.0
      %2945 = vmatprep.subr.mxu0 0.0
      %2946 = vmatpush1.msra.mxu0 0.0
      %2947 = vmatprep.subr.mxu0 0.0
      %2948 = vmatpush1.msra.mxu0 %v2915
      %2949 = vmatprep.subr.mxu0 0.0
      %2950 = vmatpush2.msra.mxu0 0.0
      %2951 = vmatprep.subr.mxu0 0.0
      %2952 = vmatpush2.msra.mxu0 0.0
      %2953 = vmatprep.subr.mxu0 0.0
      %2954 = vmatpush2.msra.mxu0 0.0
      %2955 = vmatprep.subr.mxu0 0.0
      %2956 = vmatpush2.msra.mxu0 0.0
      %2957 = vmatprep.subr.mxu0 0.0
      %2958 = vmatpush2.msra.mxu0 0.0
      %2959 = vmatprep.subr.mxu0 0.0
      %2960 = vmatpush2.msra.mxu0 0.0
      %2961 = vmatprep.subr.mxu0 0.0
      %2962 = vmatpush2.msra.mxu0 0.0
      %2963 = vmatprep.subr.mxu0 0.0
      %2964 = vmatpush2.msra.mxu0 0.0
      %2965 = vmatprep.subr.mxu0 0.0
      %2966 = vmatpush2.msra.mxu0 0.0
      %2967 = vmatprep.subr.mxu0 0.0
      %2968 = vmatpush2.msra.mxu0 0.0
      %2969 = vmatprep.subr.mxu0 0.0
      %2970 = vmatpush2.msra.mxu0 0.0
      %2971 = vmatprep.subr.mxu0 0.0
      %2972 = vmatpush2.msra.mxu0 0.0
      %2973 = vmatprep.subr.mxu0 0.0
      %2974 = vmatpush2.msra.mxu0 0.0
      %2975 = vmatprep.subr.mxu0 0.0
      %2976 = vmatpush2.msra.mxu0 0.0
      %2977 = vmatprep.subr.mxu0 0.0
      %2978 = vmatpush2.msra.mxu0 0.0
      %2979 = vmatprep.subr.mxu0 0.0
      %2980 = vmatpush2.msra.mxu0 0.0
      %2981 = vmatprep.mubr.f32.mxu0 0.0
      %2982 = vmatmul.mubr.f32.gmra.mxu0 %v2819
      %v2983 = vpop.f32.mrf.mxu0
      %v2984 = vadd.f32 0.0, %v2983
      %v2985 = vpop.f32.mrf.mxu0
      %2986 = vmatprep.mubr.f32.mxu0 0.0
      %2987 = vmatmul.mubr.f32.gmra.mxu0 %v2822
      %v2988 = vpop.f32.mrf.mxu0
      %v2989 = vadd.f32 0.0, %v2988
      %v2990 = vpop.f32.mrf.mxu0
      %2991 = vmatprep.mubr.f32.mxu0 0.0
      %2992 = vmatmul.mubr.f32.gmra.mxu0 %v2825
      %v2993 = vpop.f32.mrf.mxu0
      %v2994 = vadd.f32 0.0, %v2993
      %v2995 = vpop.f32.mrf.mxu0
      %2996 = vmatprep.mubr.f32.mxu0 0.0
      %2997 = vmatmul.mubr.f32.gmra.mxu0 %v2828
      %v2998 = vpop.f32.mrf.mxu0
      %v2999 = vadd.f32 0.0, %v2998
      %v3000 = vpop.f32.mrf.mxu0
      %3001 = vmatprep.mubr.f32.mxu0 0.0
      %3002 = vmatmul.mubr.f32.gmra.mxu0 %v2831
      %v3003 = vpop.f32.mrf.mxu0
      %v3004 = vadd.f32 0.0, %v3003
      %v3005 = vpop.f32.mrf.mxu0
      %3006 = vmatprep.mubr.f32.mxu0 0.0
      %3007 = vmatmul.mubr.f32.gmra.mxu0 %v2834
      %v3008 = vpop.f32.mrf.mxu0
      %v3009 = vadd.f32 0.0, %v3008
      %v3010 = vpop.f32.mrf.mxu0
      %3011 = vmatprep.mubr.f32.mxu0 0.0
      %3012 = vmatmul.mubr.f32.gmra.mxu0 %v2837
      %v3013 = vpop.f32.mrf.mxu0
      %v3014 = vadd.f32 0.0, %v3013
      %v3015 = vpop.f32.mrf.mxu0
      %3016 = vmatprep.mubr.f32.mxu0 0.0
      %3017 = vmatmul.mubr.f32.gmra.mxu0 %v2840
      %v3018 = vpop.f32.mrf.mxu0
      %v3019 = vadd.f32 0.0, %v3018
      %v3020 = vpop.f32.mrf.mxu0
      %3021 = vmatprep.mubr.f32.mxu0 0.0
      %3022 = vmatmul.mubr.f32.gmra.mxu0 %v2843
      %v3023 = vpop.f32.mrf.mxu0
      %v3024 = vadd.f32 0.0, %v3023
      %v3025 = vpop.f32.mrf.mxu0
      %3026 = vmatprep.mubr.f32.mxu0 0.0
      %3027 = vmatmul.mubr.f32.gmra.mxu0 %v2846
      %v3028 = vpop.f32.mrf.mxu0
      %v3029 = vadd.f32 0.0, %v3028
      %v3030 = vpop.f32.mrf.mxu0
      %3031 = vmatprep.mubr.f32.mxu0 0.0
      %3032 = vmatmul.mubr.f32.gmra.mxu0 %v2849
      %v3033 = vpop.f32.mrf.mxu0
      %v3034 = vadd.f32 0.0, %v3033
      %v3035 = vpop.f32.mrf.mxu0
      %3036 = vmatprep.mubr.f32.mxu0 0.0
      %3037 = vmatmul.mubr.f32.gmra.mxu0 %v2852
      %v3038 = vpop.f32.mrf.mxu0
      %v3039 = vadd.f32 0.0, %v3038
      %v3040 = vpop.f32.mrf.mxu0
      %3041 = vmatprep.mubr.f32.mxu0 0.0
      %3042 = vmatmul.mubr.f32.gmra.mxu0 %v2855
      %v3043 = vpop.f32.mrf.mxu0
      %v3044 = vadd.f32 0.0, %v3043
      %v3045 = vpop.f32.mrf.mxu0
      %3046 = vmatprep.mubr.f32.mxu0 0.0
      %3047 = vmatmul.mubr.f32.gmra.mxu0 %v2858
      %v3048 = vpop.f32.mrf.mxu0
      %v3049 = vadd.f32 0.0, %v3048
      %v3050 = vpop.f32.mrf.mxu0
      %3051 = vmatprep.mubr.f32.mxu0 0.0
      %3052 = vmatmul.mubr.f32.gmra.mxu0 %v2861
      %v3053 = vpop.f32.mrf.mxu0
      %v3054 = vadd.f32 0.0, %v3053
      %v3055 = vpop.f32.mrf.mxu0
      %3056 = vmatprep.mubr.f32.mxu0 0.0
      %3057 = vmatmul.mubr.f32.gmra.mxu0 %v2864
      %v3058 = vpop.f32.mrf.mxu0
      %v3059 = vadd.f32 0.0, %v3058
      %v3060 = vpop.f32.mrf.mxu0
      %3061 = vmatprep.mubr.f32.mxu0 0.0
      %3062 = vmatmul.mubr.f32.gmra.mxu0 %v2867
      %v3063 = vpop.f32.mrf.mxu0
      %v3064 = vadd.f32 0.0, %v3063
      %v3065 = vpop.f32.mrf.mxu0
      %3066 = vmatprep.mubr.f32.mxu0 0.0
      %3067 = vmatmul.mubr.f32.gmra.mxu0 %v2870
      %v3068 = vpop.f32.mrf.mxu0
      %v3069 = vadd.f32 0.0, %v3068
      %v3070 = vpop.f32.mrf.mxu0
      %3071 = vmatprep.mubr.f32.mxu0 0.0
      %3072 = vmatmul.mubr.f32.gmra.mxu0 %v2873
      %v3073 = vpop.f32.mrf.mxu0
      %v3074 = vadd.f32 0.0, %v3073
      %v3075 = vpop.f32.mrf.mxu0
      %3076 = vmatprep.mubr.f32.mxu0 0.0
      %3077 = vmatmul.mubr.f32.gmra.mxu0 %v2876
      %v3078 = vpop.f32.mrf.mxu0
      %v3079 = vadd.f32 0.0, %v3078
      %v3080 = vpop.f32.mrf.mxu0
      %3081 = vmatprep.mubr.f32.mxu0 0.0
      %3082 = vmatmul.mubr.f32.gmra.mxu0 %v2879
      %v3083 = vpop.f32.mrf.mxu0
      %v3084 = vadd.f32 0.0, %v3083
      %v3085 = vpop.f32.mrf.mxu0
      %3086 = vmatprep.mubr.f32.mxu0 0.0
      %3087 = vmatmul.mubr.f32.gmra.mxu0 %v2882
      %v3088 = vpop.f32.mrf.mxu0
      %v3089 = vadd.f32 0.0, %v3088
      %v3090 = vpop.f32.mrf.mxu0
      %3091 = vmatprep.mubr.f32.mxu0 0.0
      %3092 = vmatmul.mubr.f32.gmra.mxu0 %v2885
      %v3093 = vpop.f32.mrf.mxu0
      %v3094 = vadd.f32 0.0, %v3093
      %v3095 = vpop.f32.mrf.mxu0
      %3096 = vmatprep.mubr.f32.mxu0 0.0
      %3097 = vmatmul.mubr.f32.gmra.mxu0 %v2888
      %v3098 = vpop.f32.mrf.mxu0
      %v3099 = vadd.f32 0.0, %v3098
      %v3100 = vpop.f32.mrf.mxu0
      %3101 = vmatprep.mubr.f32.mxu0 0.0
      %3102 = vmatmul.mubr.f32.gmra.mxu0 %v2891
      %v3103 = vpop.f32.mrf.mxu0
      %v3104 = vadd.f32 0.0, %v3103
      %v3105 = vpop.f32.mrf.mxu0
      %3106 = vmatprep.mubr.f32.mxu0 0.0
      %3107 = vmatmul.mubr.f32.gmra.mxu0 %v2894
      %v3108 = vpop.f32.mrf.mxu0
      %v3109 = vadd.f32 0.0, %v3108
      %v3110 = vpop.f32.mrf.mxu0
      %3111 = vmatprep.mubr.f32.mxu0 0.0
      %3112 = vmatmul.mubr.f32.gmra.mxu0 %v2897
      %v3113 = vpop.f32.mrf.mxu0
      %v3114 = vadd.f32 0.0, %v3113
      %v3115 = vpop.f32.mrf.mxu0
      %3116 = vmatprep.mubr.f32.mxu0 0.0
      %3117 = vmatmul.mubr.f32.gmra.mxu0 %v2900
      %v3118 = vpop.f32.mrf.mxu0
      %v3119 = vadd.f32 0.0, %v3118
      %v3120 = vpop.f32.mrf.mxu0
      %3121 = vmatprep.mubr.f32.mxu0 0.0
      %3122 = vmatmul.mubr.f32.gmra.mxu0 %v2903
      %v3123 = vpop.f32.mrf.mxu0
      %v3124 = vadd.f32 0.0, %v3123
      %v3125 = vpop.f32.mrf.mxu0
      %3126 = vmatprep.mubr.f32.mxu0 0.0
      %3127 = vmatmul.mubr.f32.gmra.mxu0 %v2906
      %v3128 = vpop.f32.mrf.mxu0
      %v3129 = vadd.f32 0.0, %v3128
      %v3130 = vpop.f32.mrf.mxu0
      %3131 = vmatprep.mubr.f32.mxu0 0.0
      %3132 = vmatmul.mubr.f32.gmra.mxu0 %v2909
      %v3133 = vpop.f32.mrf.mxu0
      %v3134 = vadd.f32 0.0, %v3133
      %v3135 = vpop.f32.mrf.mxu0
      %3136 = vmatprep.mubr.f32.mxu0 0.0
      %3137 = vmatmul.mubr.f32.gmra.mxu0 %v2912
      %v3138 = vpop.f32.mrf.mxu0
      %v3139 = vadd.f32 0.0, %v3138
      %v3140 = vpop.f32.mrf.mxu0
      %3141 = vdwg.mxu0
      %v3142 = vadd.f32 %v2720, %v2984
      %v3143 = vadd.f32 %v2721, %v2989
      %v3144 = vadd.f32 %v2722, %v2994
      %v3145 = vadd.f32 %v2723, %v2999
      %v3146 = vadd.f32 %v2724, %v3004
      %v3147 = vadd.f32 %v2725, %v3009
      %v3148 = vadd.f32 %v2726, %v3014
      %v3149 = vadd.f32 %v2727, %v3019
      %v3150 = vadd.f32 %v2728, %v3024
      %v3151 = vadd.f32 %v2729, %v3029
      %v3152 = vadd.f32 %v2730, %v3034
      %v3153 = vadd.f32 %v2731, %v3039
      %v3154 = vadd.f32 %v2732, %v3044
      %v3155 = vadd.f32 %v2733, %v3049
      %v3156 = vadd.f32 %v2734, %v3054
      %v3157 = vadd.f32 %v2735, %v3059
      %v3158 = vadd.f32 %v2736, %v3064
      %v3159 = vadd.f32 %v2737, %v3069
      %v3160 = vadd.f32 %v2738, %v3074
      %v3161 = vadd.f32 %v2739, %v3079
      %v3162 = vadd.f32 %v2740, %v3084
      %v3163 = vadd.f32 %v2741, %v3089
      %v3164 = vadd.f32 %v2742, %v3094
      %v3165 = vadd.f32 %v2743, %v3099
      %v3166 = vadd.f32 %v2744, %v3104
      %v3167 = vadd.f32 %v2745, %v3109
      %v3168 = vadd.f32 %v2746, %v3114
      %v3169 = vadd.f32 %v2747, %v3119
      %v3170 = vadd.f32 %v2748, %v3124
      %v3171 = vadd.f32 %v2749, %v3129
      %v3172 = vadd.f32 %v2750, %v3134
      %v3173 = vadd.f32 %v2751, %v3139
      %s3174 = scalar_lea.vmem [#allocation2], 11
      %v3175 = vld [vmem:[%s3174] ss:$4 sm:$0xff]
      %s3176 = scalar_lea.vmem [#allocation2], 43
      %v3177 = vld [vmem:[%s3176] ss:$4 sm:$0xff]
      %s3178 = scalar_lea.vmem [#allocation2], 75
      %v3179 = vld [vmem:[%s3178] ss:$4 sm:$0xff]
      %s3180 = scalar_lea.vmem [#allocation2], 107
      %v3181 = vld [vmem:[%s3180] ss:$4 sm:$0xff]
      %s3182 = scalar_lea.vmem [#allocation2], 139
      %v3183 = vld [vmem:[%s3182] ss:$4 sm:$0xff]
      %s3184 = scalar_lea.vmem [#allocation2], 171
      %v3185 = vld [vmem:[%s3184] ss:$4 sm:$0xff]
      %s3186 = scalar_lea.vmem [#allocation2], 203
      %v3187 = vld [vmem:[%s3186] ss:$4 sm:$0xff]
      %s3188 = scalar_lea.vmem [#allocation2], 235
      %v3189 = vld [vmem:[%s3188] ss:$4 sm:$0xff]
      %s3190 = scalar_lea.vmem [#allocation2], 267
      %v3191 = vld [vmem:[%s3190] ss:$4 sm:$0xff]
      %s3192 = scalar_lea.vmem [#allocation2], 299
      %v3193 = vld [vmem:[%s3192] ss:$4 sm:$0xff]
      %s3194 = scalar_lea.vmem [#allocation2], 331
      %v3195 = vld [vmem:[%s3194] ss:$4 sm:$0xff]
      %s3196 = scalar_lea.vmem [#allocation2], 363
      %v3197 = vld [vmem:[%s3196] ss:$4 sm:$0xff]
      %s3198 = scalar_lea.vmem [#allocation2], 395
      %v3199 = vld [vmem:[%s3198] ss:$4 sm:$0xff]
      %s3200 = scalar_lea.vmem [#allocation2], 427
      %v3201 = vld [vmem:[%s3200] ss:$4 sm:$0xff]
      %s3202 = scalar_lea.vmem [#allocation2], 459
      %v3203 = vld [vmem:[%s3202] ss:$4 sm:$0xff]
      %s3204 = scalar_lea.vmem [#allocation2], 491
      %v3205 = vld [vmem:[%s3204] ss:$4 sm:$0xff]
      %s3206 = scalar_lea.vmem [#allocation2], 523
      %v3207 = vld [vmem:[%s3206] ss:$4 sm:$0xff]
      %s3208 = scalar_lea.vmem [#allocation2], 555
      %v3209 = vld [vmem:[%s3208] ss:$4 sm:$0xff]
      %s3210 = scalar_lea.vmem [#allocation2], 587
      %v3211 = vld [vmem:[%s3210] ss:$4 sm:$0xff]
      %s3212 = scalar_lea.vmem [#allocation2], 619
      %v3213 = vld [vmem:[%s3212] ss:$4 sm:$0xff]
      %s3214 = scalar_lea.vmem [#allocation2], 651
      %v3215 = vld [vmem:[%s3214] ss:$4 sm:$0xff]
      %s3216 = scalar_lea.vmem [#allocation2], 683
      %v3217 = vld [vmem:[%s3216] ss:$4 sm:$0xff]
      %s3218 = scalar_lea.vmem [#allocation2], 715
      %v3219 = vld [vmem:[%s3218] ss:$4 sm:$0xff]
      %s3220 = scalar_lea.vmem [#allocation2], 747
      %v3221 = vld [vmem:[%s3220] ss:$4 sm:$0xff]
      %s3222 = scalar_lea.vmem [#allocation2], 779
      %v3223 = vld [vmem:[%s3222] ss:$4 sm:$0xff]
      %s3224 = scalar_lea.vmem [#allocation2], 811
      %v3225 = vld [vmem:[%s3224] ss:$4 sm:$0xff]
      %s3226 = scalar_lea.vmem [#allocation2], 843
      %v3227 = vld [vmem:[%s3226] ss:$4 sm:$0xff]
      %s3228 = scalar_lea.vmem [#allocation2], 875
      %v3229 = vld [vmem:[%s3228] ss:$4 sm:$0xff]
      %s3230 = scalar_lea.vmem [#allocation2], 907
      %v3231 = vld [vmem:[%s3230] ss:$4 sm:$0xff]
      %s3232 = scalar_lea.vmem [#allocation2], 939
      %v3233 = vld [vmem:[%s3232] ss:$4 sm:$0xff]
      %s3234 = scalar_lea.vmem [#allocation2], 971
      %v3235 = vld [vmem:[%s3234] ss:$4 sm:$0xff]
      %s3236 = scalar_lea.vmem [#allocation2], 1003
      %v3237 = vld [vmem:[%s3236] ss:$4 sm:$0xff]
      %s3238 = scalar_lea.vmem %s1, 24
      %v3239 = vld [vmem:[%s3238] sm:$0x7]
      %v3241 = vsel %vm565, %v3175, 0
      %v3244 = vsel %vm565, %v3177, 0
      %v3247 = vsel %vm565, %v3179, 0
      %v3250 = vsel %vm565, %v3181, 0
      %v3253 = vsel %vm565, %v3183, 0
      %v3256 = vsel %vm565, %v3185, 0
      %v3259 = vsel %vm565, %v3187, 0
      %v3262 = vsel %vm565, %v3189, 0
      %v3265 = vsel %vm565, %v3191, 0
      %v3268 = vsel %vm565, %v3193, 0
      %v3271 = vsel %vm565, %v3195, 0
      %v3274 = vsel %vm565, %v3197, 0
      %v3277 = vsel %vm565, %v3199, 0
      %v3280 = vsel %vm565, %v3201, 0
      %v3283 = vsel %vm565, %v3203, 0
      %v3286 = vsel %vm565, %v3205, 0
      %v3289 = vsel %vm565, %v3207, 0
      %v3292 = vsel %vm565, %v3209, 0
      %v3295 = vsel %vm565, %v3211, 0
      %v3298 = vsel %vm565, %v3213, 0
      %v3301 = vsel %vm565, %v3215, 0
      %v3304 = vsel %vm565, %v3217, 0
      %v3307 = vsel %vm565, %v3219, 0
      %v3310 = vsel %vm565, %v3221, 0
      %v3313 = vsel %vm565, %v3223, 0
      %v3316 = vsel %vm565, %v3225, 0
      %v3319 = vsel %vm565, %v3227, 0
      %v3322 = vsel %vm565, %v3229, 0
      %v3325 = vsel %vm565, %v3231, 0
      %v3328 = vsel %vm565, %v3233, 0
      %v3331 = vsel %vm565, %v3235, 0
      %v3334 = vsel %vm565, %v3237, 0
      %v3337 = vsel %vm933, %v3239, 0
      %3339 = vmatprep.subr.mxu0 0.0
      %3340 = vmatpush1.msra.mxu0 0.0
      %3341 = vmatprep.subr.mxu0 0.0
      %3342 = vmatpush1.msra.mxu0 0.0
      %3343 = vmatprep.subr.mxu0 0.0
      %3344 = vmatpush1.msra.mxu0 0.0
      %3345 = vmatprep.subr.mxu0 0.0
      %3346 = vmatpush1.msra.mxu0 0.0
      %3347 = vmatprep.subr.mxu0 0.0
      %3348 = vmatpush1.msra.mxu0 0.0
      %3349 = vmatprep.subr.mxu0 0.0
      %3350 = vmatpush1.msra.mxu0 0.0
      %3351 = vmatprep.subr.mxu0 0.0
      %3352 = vmatpush1.msra.mxu0 0.0
      %3353 = vmatprep.subr.mxu0 0.0
      %3354 = vmatpush1.msra.mxu0 0.0
      %3355 = vmatprep.subr.mxu0 0.0
      %3356 = vmatpush1.msra.mxu0 0.0
      %3357 = vmatprep.subr.mxu0 0.0
      %3358 = vmatpush1.msra.mxu0 0.0
      %3359 = vmatprep.subr.mxu0 0.0
      %3360 = vmatpush1.msra.mxu0 0.0
      %3361 = vmatprep.subr.mxu0 0.0
      %3362 = vmatpush1.msra.mxu0 0.0
      %3363 = vmatprep.subr.mxu0 0.0
      %3364 = vmatpush1.msra.mxu0 0.0
      %3365 = vmatprep.subr.mxu0 0.0
      %3366 = vmatpush1.msra.mxu0 0.0
      %3367 = vmatprep.subr.mxu0 0.0
      %3368 = vmatpush1.msra.mxu0 0.0
      %3369 = vmatprep.subr.mxu0 0.0
      %3370 = vmatpush1.msra.mxu0 %v3337
      %3371 = vmatprep.subr.mxu0 0.0
      %3372 = vmatpush2.msra.mxu0 0.0
      %3373 = vmatprep.subr.mxu0 0.0
      %3374 = vmatpush2.msra.mxu0 0.0
      %3375 = vmatprep.subr.mxu0 0.0
      %3376 = vmatpush2.msra.mxu0 0.0
      %3377 = vmatprep.subr.mxu0 0.0
      %3378 = vmatpush2.msra.mxu0 0.0
      %3379 = vmatprep.subr.mxu0 0.0
      %3380 = vmatpush2.msra.mxu0 0.0
      %3381 = vmatprep.subr.mxu0 0.0
      %3382 = vmatpush2.msra.mxu0 0.0
      %3383 = vmatprep.subr.mxu0 0.0
      %3384 = vmatpush2.msra.mxu0 0.0
      %3385 = vmatprep.subr.mxu0 0.0
      %3386 = vmatpush2.msra.mxu0 0.0
      %3387 = vmatprep.subr.mxu0 0.0
      %3388 = vmatpush2.msra.mxu0 0.0
      %3389 = vmatprep.subr.mxu0 0.0
      %3390 = vmatpush2.msra.mxu0 0.0
      %3391 = vmatprep.subr.mxu0 0.0
      %3392 = vmatpush2.msra.mxu0 0.0
      %3393 = vmatprep.subr.mxu0 0.0
      %3394 = vmatpush2.msra.mxu0 0.0
      %3395 = vmatprep.subr.mxu0 0.0
      %3396 = vmatpush2.msra.mxu0 0.0
      %3397 = vmatprep.subr.mxu0 0.0
      %3398 = vmatpush2.msra.mxu0 0.0
      %3399 = vmatprep.subr.mxu0 0.0
      %3400 = vmatpush2.msra.mxu0 0.0
      %3401 = vmatprep.subr.mxu0 0.0
      %3402 = vmatpush2.msra.mxu0 0.0
      %3403 = vmatprep.mubr.f32.mxu0 0.0
      %3404 = vmatmul.mubr.f32.gmra.mxu0 %v3241
      %v3405 = vpop.f32.mrf.mxu0
      %v3406 = vadd.f32 0.0, %v3405
      %v3407 = vpop.f32.mrf.mxu0
      %3408 = vmatprep.mubr.f32.mxu0 0.0
      %3409 = vmatmul.mubr.f32.gmra.mxu0 %v3244
      %v3410 = vpop.f32.mrf.mxu0
      %v3411 = vadd.f32 0.0, %v3410
      %v3412 = vpop.f32.mrf.mxu0
      %3413 = vmatprep.mubr.f32.mxu0 0.0
      %3414 = vmatmul.mubr.f32.gmra.mxu0 %v3247
      %v3415 = vpop.f32.mrf.mxu0
      %v3416 = vadd.f32 0.0, %v3415
      %v3417 = vpop.f32.mrf.mxu0
      %3418 = vmatprep.mubr.f32.mxu0 0.0
      %3419 = vmatmul.mubr.f32.gmra.mxu0 %v3250
      %v3420 = vpop.f32.mrf.mxu0
      %v3421 = vadd.f32 0.0, %v3420
      %v3422 = vpop.f32.mrf.mxu0
      %3423 = vmatprep.mubr.f32.mxu0 0.0
      %3424 = vmatmul.mubr.f32.gmra.mxu0 %v3253
      %v3425 = vpop.f32.mrf.mxu0
      %v3426 = vadd.f32 0.0, %v3425
      %v3427 = vpop.f32.mrf.mxu0
      %3428 = vmatprep.mubr.f32.mxu0 0.0
      %3429 = vmatmul.mubr.f32.gmra.mxu0 %v3256
      %v3430 = vpop.f32.mrf.mxu0
      %v3431 = vadd.f32 0.0, %v3430
      %v3432 = vpop.f32.mrf.mxu0
      %3433 = vmatprep.mubr.f32.mxu0 0.0
      %3434 = vmatmul.mubr.f32.gmra.mxu0 %v3259
      %v3435 = vpop.f32.mrf.mxu0
      %v3436 = vadd.f32 0.0, %v3435
      %v3437 = vpop.f32.mrf.mxu0
      %3438 = vmatprep.mubr.f32.mxu0 0.0
      %3439 = vmatmul.mubr.f32.gmra.mxu0 %v3262
      %v3440 = vpop.f32.mrf.mxu0
      %v3441 = vadd.f32 0.0, %v3440
      %v3442 = vpop.f32.mrf.mxu0
      %3443 = vmatprep.mubr.f32.mxu0 0.0
      %3444 = vmatmul.mubr.f32.gmra.mxu0 %v3265
      %v3445 = vpop.f32.mrf.mxu0
      %v3446 = vadd.f32 0.0, %v3445
      %v3447 = vpop.f32.mrf.mxu0
      %3448 = vmatprep.mubr.f32.mxu0 0.0
      %3449 = vmatmul.mubr.f32.gmra.mxu0 %v3268
      %v3450 = vpop.f32.mrf.mxu0
      %v3451 = vadd.f32 0.0, %v3450
      %v3452 = vpop.f32.mrf.mxu0
      %3453 = vmatprep.mubr.f32.mxu0 0.0
      %3454 = vmatmul.mubr.f32.gmra.mxu0 %v3271
      %v3455 = vpop.f32.mrf.mxu0
      %v3456 = vadd.f32 0.0, %v3455
      %v3457 = vpop.f32.mrf.mxu0
      %3458 = vmatprep.mubr.f32.mxu0 0.0
      %3459 = vmatmul.mubr.f32.gmra.mxu0 %v3274
      %v3460 = vpop.f32.mrf.mxu0
      %v3461 = vadd.f32 0.0, %v3460
      %v3462 = vpop.f32.mrf.mxu0
      %3463 = vmatprep.mubr.f32.mxu0 0.0
      %3464 = vmatmul.mubr.f32.gmra.mxu0 %v3277
      %v3465 = vpop.f32.mrf.mxu0
      %v3466 = vadd.f32 0.0, %v3465
      %v3467 = vpop.f32.mrf.mxu0
      %3468 = vmatprep.mubr.f32.mxu0 0.0
      %3469 = vmatmul.mubr.f32.gmra.mxu0 %v3280
      %v3470 = vpop.f32.mrf.mxu0
      %v3471 = vadd.f32 0.0, %v3470
      %v3472 = vpop.f32.mrf.mxu0
      %3473 = vmatprep.mubr.f32.mxu0 0.0
      %3474 = vmatmul.mubr.f32.gmra.mxu0 %v3283
      %v3475 = vpop.f32.mrf.mxu0
      %v3476 = vadd.f32 0.0, %v3475
      %v3477 = vpop.f32.mrf.mxu0
      %3478 = vmatprep.mubr.f32.mxu0 0.0
      %3479 = vmatmul.mubr.f32.gmra.mxu0 %v3286
      %v3480 = vpop.f32.mrf.mxu0
      %v3481 = vadd.f32 0.0, %v3480
      %v3482 = vpop.f32.mrf.mxu0
      %3483 = vmatprep.mubr.f32.mxu0 0.0
      %3484 = vmatmul.mubr.f32.gmra.mxu0 %v3289
      %v3485 = vpop.f32.mrf.mxu0
      %v3486 = vadd.f32 0.0, %v3485
      %v3487 = vpop.f32.mrf.mxu0
      %3488 = vmatprep.mubr.f32.mxu0 0.0
      %3489 = vmatmul.mubr.f32.gmra.mxu0 %v3292
      %v3490 = vpop.f32.mrf.mxu0
      %v3491 = vadd.f32 0.0, %v3490
      %v3492 = vpop.f32.mrf.mxu0
      %3493 = vmatprep.mubr.f32.mxu0 0.0
      %3494 = vmatmul.mubr.f32.gmra.mxu0 %v3295
      %v3495 = vpop.f32.mrf.mxu0
      %v3496 = vadd.f32 0.0, %v3495
      %v3497 = vpop.f32.mrf.mxu0
      %3498 = vmatprep.mubr.f32.mxu0 0.0
      %3499 = vmatmul.mubr.f32.gmra.mxu0 %v3298
      %v3500 = vpop.f32.mrf.mxu0
      %v3501 = vadd.f32 0.0, %v3500
      %v3502 = vpop.f32.mrf.mxu0
      %3503 = vmatprep.mubr.f32.mxu0 0.0
      %3504 = vmatmul.mubr.f32.gmra.mxu0 %v3301
      %v3505 = vpop.f32.mrf.mxu0
      %v3506 = vadd.f32 0.0, %v3505
      %v3507 = vpop.f32.mrf.mxu0
      %3508 = vmatprep.mubr.f32.mxu0 0.0
      %3509 = vmatmul.mubr.f32.gmra.mxu0 %v3304
      %v3510 = vpop.f32.mrf.mxu0
      %v3511 = vadd.f32 0.0, %v3510
      %v3512 = vpop.f32.mrf.mxu0
      %3513 = vmatprep.mubr.f32.mxu0 0.0
      %3514 = vmatmul.mubr.f32.gmra.mxu0 %v3307
      %v3515 = vpop.f32.mrf.mxu0
      %v3516 = vadd.f32 0.0, %v3515
      %v3517 = vpop.f32.mrf.mxu0
      %3518 = vmatprep.mubr.f32.mxu0 0.0
      %3519 = vmatmul.mubr.f32.gmra.mxu0 %v3310
      %v3520 = vpop.f32.mrf.mxu0
      %v3521 = vadd.f32 0.0, %v3520
      %v3522 = vpop.f32.mrf.mxu0
      %3523 = vmatprep.mubr.f32.mxu0 0.0
      %3524 = vmatmul.mubr.f32.gmra.mxu0 %v3313
      %v3525 = vpop.f32.mrf.mxu0
      %v3526 = vadd.f32 0.0, %v3525
      %v3527 = vpop.f32.mrf.mxu0
      %3528 = vmatprep.mubr.f32.mxu0 0.0
      %3529 = vmatmul.mubr.f32.gmra.mxu0 %v3316
      %v3530 = vpop.f32.mrf.mxu0
      %v3531 = vadd.f32 0.0, %v3530
      %v3532 = vpop.f32.mrf.mxu0
      %3533 = vmatprep.mubr.f32.mxu0 0.0
      %3534 = vmatmul.mubr.f32.gmra.mxu0 %v3319
      %v3535 = vpop.f32.mrf.mxu0
      %v3536 = vadd.f32 0.0, %v3535
      %v3537 = vpop.f32.mrf.mxu0
      %3538 = vmatprep.mubr.f32.mxu0 0.0
      %3539 = vmatmul.mubr.f32.gmra.mxu0 %v3322
      %v3540 = vpop.f32.mrf.mxu0
      %v3541 = vadd.f32 0.0, %v3540
      %v3542 = vpop.f32.mrf.mxu0
      %3543 = vmatprep.mubr.f32.mxu0 0.0
      %3544 = vmatmul.mubr.f32.gmra.mxu0 %v3325
      %v3545 = vpop.f32.mrf.mxu0
      %v3546 = vadd.f32 0.0, %v3545
      %v3547 = vpop.f32.mrf.mxu0
      %3548 = vmatprep.mubr.f32.mxu0 0.0
      %3549 = vmatmul.mubr.f32.gmra.mxu0 %v3328
      %v3550 = vpop.f32.mrf.mxu0
      %v3551 = vadd.f32 0.0, %v3550
      %v3552 = vpop.f32.mrf.mxu0
      %3553 = vmatprep.mubr.f32.mxu0 0.0
      %3554 = vmatmul.mubr.f32.gmra.mxu0 %v3331
      %v3555 = vpop.f32.mrf.mxu0
      %v3556 = vadd.f32 0.0, %v3555
      %v3557 = vpop.f32.mrf.mxu0
      %3558 = vmatprep.mubr.f32.mxu0 0.0
      %3559 = vmatmul.mubr.f32.gmra.mxu0 %v3334
      %v3560 = vpop.f32.mrf.mxu0
      %v3561 = vadd.f32 0.0, %v3560
      %v3562 = vpop.f32.mrf.mxu0
      %3563 = vdwg.mxu0
      %v3564 = vadd.f32 %v3142, %v3406
      %v3565 = vadd.f32 %v3143, %v3411
      %v3566 = vadd.f32 %v3144, %v3416
      %v3567 = vadd.f32 %v3145, %v3421
      %v3568 = vadd.f32 %v3146, %v3426
      %v3569 = vadd.f32 %v3147, %v3431
      %v3570 = vadd.f32 %v3148, %v3436
      %v3571 = vadd.f32 %v3149, %v3441
      %v3572 = vadd.f32 %v3150, %v3446
      %v3573 = vadd.f32 %v3151, %v3451
      %v3574 = vadd.f32 %v3152, %v3456
      %v3575 = vadd.f32 %v3153, %v3461
      %v3576 = vadd.f32 %v3154, %v3466
      %v3577 = vadd.f32 %v3155, %v3471
      %v3578 = vadd.f32 %v3156, %v3476
      %v3579 = vadd.f32 %v3157, %v3481
      %v3580 = vadd.f32 %v3158, %v3486
      %v3581 = vadd.f32 %v3159, %v3491
      %v3582 = vadd.f32 %v3160, %v3496
      %v3583 = vadd.f32 %v3161, %v3501
      %v3584 = vadd.f32 %v3162, %v3506
      %v3585 = vadd.f32 %v3163, %v3511
      %v3586 = vadd.f32 %v3164, %v3516
      %v3587 = vadd.f32 %v3165, %v3521
      %v3588 = vadd.f32 %v3166, %v3526
      %v3589 = vadd.f32 %v3167, %v3531
      %v3590 = vadd.f32 %v3168, %v3536
      %v3591 = vadd.f32 %v3169, %v3541
      %v3592 = vadd.f32 %v3170, %v3546
      %v3593 = vadd.f32 %v3171, %v3551
      %v3594 = vadd.f32 %v3172, %v3556
      %v3595 = vadd.f32 %v3173, %v3561
      %v3596 = vld [vmem:[%s2] sm:$0x1]
      %v3598 = vlaneseq
      %v3599 = vshrl.u32 %v3598, 7
      %v3600 = vsub.s32 0, %v3599
      %v3601 = vrot.slane %v3596, %v3600
      %v3603 = vadd.f32 %v3564, %v3601
      %v3604 = vadd.f32 %v3565, %v3601
      %v3605 = vadd.f32 %v3566, %v3601
      %v3606 = vadd.f32 %v3567, %v3601
      %v3607 = vadd.f32 %v3568, %v3601
      %v3608 = vadd.f32 %v3569, %v3601
      %v3609 = vadd.f32 %v3570, %v3601
      %v3610 = vadd.f32 %v3571, %v3601
      %v3611 = vadd.f32 %v3572, %v3601
      %v3612 = vadd.f32 %v3573, %v3601
      %v3613 = vadd.f32 %v3574, %v3601
      %v3614 = vadd.f32 %v3575, %v3601
      %v3615 = vadd.f32 %v3576, %v3601
      %v3616 = vadd.f32 %v3577, %v3601
      %v3617 = vadd.f32 %v3578, %v3601
      %v3618 = vadd.f32 %v3579, %v3601
      %v3619 = vadd.f32 %v3580, %v3601
      %v3620 = vadd.f32 %v3581, %v3601
      %v3621 = vadd.f32 %v3582, %v3601
      %v3622 = vadd.f32 %v3583, %v3601
      %v3623 = vadd.f32 %v3584, %v3601
      %v3624 = vadd.f32 %v3585, %v3601
      %v3625 = vadd.f32 %v3586, %v3601
      %v3626 = vadd.f32 %v3587, %v3601
      %v3627 = vadd.f32 %v3588, %v3601
      %v3628 = vadd.f32 %v3589, %v3601
      %v3629 = vadd.f32 %v3590, %v3601
      %v3630 = vadd.f32 %v3591, %v3601
      %v3631 = vadd.f32 %v3592, %v3601
      %v3632 = vadd.f32 %v3593, %v3601
      %v3633 = vadd.f32 %v3594, %v3601
      %v3634 = vadd.f32 %v3595, %v3601
      %v3635 = vmax.f32 %v3603, 0.0
      %v3636 = vmax.f32 %v3604, 0.0
      %v3637 = vmax.f32 %v3605, 0.0
      %v3638 = vmax.f32 %v3606, 0.0
      %v3639 = vmax.f32 %v3607, 0.0
      %v3640 = vmax.f32 %v3608, 0.0
      %v3641 = vmax.f32 %v3609, 0.0
      %v3642 = vmax.f32 %v3610, 0.0
      %v3643 = vmax.f32 %v3611, 0.0
      %v3644 = vmax.f32 %v3612, 0.0
      %v3645 = vmax.f32 %v3613, 0.0
      %v3646 = vmax.f32 %v3614, 0.0
      %v3647 = vmax.f32 %v3615, 0.0
      %v3648 = vmax.f32 %v3616, 0.0
      %v3649 = vmax.f32 %v3617, 0.0
      %v3650 = vmax.f32 %v3618, 0.0
      %v3651 = vmax.f32 %v3619, 0.0
      %v3652 = vmax.f32 %v3620, 0.0
      %v3653 = vmax.f32 %v3621, 0.0
      %v3654 = vmax.f32 %v3622, 0.0
      %v3655 = vmax.f32 %v3623, 0.0
      %v3656 = vmax.f32 %v3624, 0.0
      %v3657 = vmax.f32 %v3625, 0.0
      %v3658 = vmax.f32 %v3626, 0.0
      %v3659 = vmax.f32 %v3627, 0.0
      %v3660 = vmax.f32 %v3628, 0.0
      %v3661 = vmax.f32 %v3629, 0.0
      %v3662 = vmax.f32 %v3630, 0.0
      %v3663 = vmax.f32 %v3631, 0.0
      %v3664 = vmax.f32 %v3632, 0.0
      %v3665 = vmax.f32 %v3633, 0.0
      %v3666 = vmax.f32 %v3634, 0.0
      %vm3667 = vcmask 130048
      %3668 = vst.msk [vmem:[#allocation3 + $0x8] sm:$0xff] %vm3667, %v3635
      %3669 = vst.msk [vmem:[#allocation3 + $0x10] sm:$0xff] %vm3667, %v3636
      %3670 = vst.msk [vmem:[#allocation3 + $0x18] sm:$0xff] %vm3667, %v3637
      %3671 = vst.msk [vmem:[#allocation3 + $0x20] sm:$0xff] %vm3667, %v3638
      %3672 = vst.msk [vmem:[#allocation3 + $0x28] sm:$0xff] %vm3667, %v3639
      %3673 = vst.msk [vmem:[#allocation3 + $0x30] sm:$0xff] %vm3667, %v3640
      %3674 = vst.msk [vmem:[#allocation3 + $0x38] sm:$0xff] %vm3667, %v3641
      %3675 = vst.msk [vmem:[#allocation3 + $0x40] sm:$0xff] %vm3667, %v3642
      %3676 = vst.msk [vmem:[#allocation3 + $0x48] sm:$0xff] %vm3667, %v3643
      %3677 = vst.msk [vmem:[#allocation3 + $0x50] sm:$0xff] %vm3667, %v3644
      %3678 = vst.msk [vmem:[#allocation3 + $0x58] sm:$0xff] %vm3667, %v3645
      %3679 = vst.msk [vmem:[#allocation3 + $0x60] sm:$0xff] %vm3667, %v3646
      %3680 = vst.msk [vmem:[#allocation3 + $0x68] sm:$0xff] %vm3667, %v3647
      %3681 = vst.msk [vmem:[#allocation3 + $0x70] sm:$0xff] %vm3667, %v3648
      %3682 = vst.msk [vmem:[#allocation3 + $0x78] sm:$0xff] %vm3667, %v3649
      %3683 = vst.msk [vmem:[#allocation3 + $0x80] sm:$0xff] %vm3667, %v3650
      %3684 = vst.msk [vmem:[#allocation3 + $0x88] sm:$0xff] %vm3667, %v3651
      %3685 = vst.msk [vmem:[#allocation3 + $0x90] sm:$0xff] %vm3667, %v3652
      %3686 = vst.msk [vmem:[#allocation3 + $0x98] sm:$0xff] %vm3667, %v3653
      %3687 = vst.msk [vmem:[#allocation3 + $0xa0] sm:$0xff] %vm3667, %v3654
      %3688 = vst.msk [vmem:[#allocation3 + $0xa8] sm:$0xff] %vm3667, %v3655
      %3689 = vst.msk [vmem:[#allocation3 + $0xb0] sm:$0xff] %vm3667, %v3656
      %3690 = vst.msk [vmem:[#allocation3 + $0xb8] sm:$0xff] %vm3667, %v3657
      %3691 = vst.msk [vmem:[#allocation3 + $0xc0] sm:$0xff] %vm3667, %v3658
      %3692 = vst.msk [vmem:[#allocation3 + $0xc8] sm:$0xff] %vm3667, %v3659
      %3693 = vst.msk [vmem:[#allocation3 + $0xd0] sm:$0xff] %vm3667, %v3660
      %3694 = vst.msk [vmem:[#allocation3 + $0xd8] sm:$0xff] %vm3667, %v3661
      %3695 = vst.msk [vmem:[#allocation3 + $0xe0] sm:$0xff] %vm3667, %v3662
      %3696 = vst.msk [vmem:[#allocation3 + $0xe8] sm:$0xff] %vm3667, %v3663
      %3697 = vst.msk [vmem:[#allocation3 + $0xf0] sm:$0xff] %vm3667, %v3664
      %3698 = vst.msk [vmem:[#allocation3 + $0xf8] sm:$0xff] %vm3667, %v3665
      %3699 = vst.msk [vmem:[#allocation3 + $0x100] sm:$0xff] %vm3667, %v3666
      %vm3700 = vcmask 123905
      %3701 = vst.msk [vmem:[#allocation3 + $0x6] sm:$0x2] %vm3700, %v3635
      %vm3702 = vcmask 124930
      %3703 = vst.msk [vmem:[#allocation3 + $0x4] sm:$0x4] %vm3702, %v3635
      %vm3704 = vcmask 125955
      %3705 = vst.msk [vmem:[#allocation3 + $0x2] sm:$0x8] %vm3704, %v3635
      %vm3706 = vcmask 129030
      %3707 = vst.msk [vmem:[#allocation3 + $0x102] sm:$0x40] %vm3706, %v3666
      %vm3708 = vcmask 128005
      %3709 = vst.msk [vmem:[#allocation3 + $0x104] sm:$0x20] %vm3708, %v3666
      %vm3710 = vcmask 126980
      %3711 = vst.msk [vmem:[#allocation3 + $0x106] sm:$0x10] %vm3710, %v3666
      %s3712 = scalar_lea.vmem [#allocation3], 5
      %v3713 = vld [vmem:[%s3712] ss:$4 sm:$0xff]
      %s3714 = scalar_lea.vmem [#allocation3], 37
      %v3715 = vld [vmem:[%s3714] ss:$4 sm:$0xff]
      %s3716 = scalar_lea.vmem [#allocation3], 69
      %v3717 = vld [vmem:[%s3716] ss:$4 sm:$0xff]
      %s3718 = scalar_lea.vmem [#allocation3], 101
      %v3719 = vld [vmem:[%s3718] ss:$4 sm:$0xff]
      %s3720 = scalar_lea.vmem [#allocation3], 133
      %v3721 = vld [vmem:[%s3720] ss:$4 sm:$0xff]
      %s3722 = scalar_lea.vmem [#allocation3], 165
      %v3723 = vld [vmem:[%s3722] ss:$4 sm:$0xff]
      %s3724 = scalar_lea.vmem [#allocation3], 197
      %v3725 = vld [vmem:[%s3724] ss:$4 sm:$0xff]
      %s3726 = scalar_lea.vmem [#allocation3], 229
      %v3727 = vld [vmem:[%s3726] ss:$4 sm:$0xff]
      %v3728 = vld [vmem:[%s3] sm:$0xff]
      %v3729 = vld [vmem:[%s3 + $0x8] sm:$0xff]
      %s3730 = scalar_lea.vmem [#allocation3], 6
      %v3731 = vld [vmem:[%s3730] ss:$4 sm:$0xff]
      %s3732 = scalar_lea.vmem [#allocation3], 38
      %v3733 = vld [vmem:[%s3732] ss:$4 sm:$0xff]
      %s3734 = scalar_lea.vmem [#allocation3], 70
      %v3735 = vld [vmem:[%s3734] ss:$4 sm:$0xff]
      %s3736 = scalar_lea.vmem [#allocation3], 102
      %v3737 = vld [vmem:[%s3736] ss:$4 sm:$0xff]
      %s3738 = scalar_lea.vmem [#allocation3], 134
      %v3739 = vld [vmem:[%s3738] ss:$4 sm:$0xff]
      %s3740 = scalar_lea.vmem [#allocation3], 166
      %v3741 = vld [vmem:[%s3740] ss:$4 sm:$0xff]
      %s3742 = scalar_lea.vmem [#allocation3], 198
      %v3743 = vld [vmem:[%s3742] ss:$4 sm:$0xff]
      %s3744 = scalar_lea.vmem [#allocation3], 230
      %v3745 = vld [vmem:[%s3744] ss:$4 sm:$0xff]
      %s3746 = scalar_lea.vmem %s3, 16
      %v3747 = vld [vmem:[%s3746] sm:$0xff]
      %v3748 = vld [vmem:[%s3746 + $0x8] sm:$0xff]
      %v3750 = vsel %vm3667, %v3731, 0
      %v3753 = vsel %vm3667, %v3733, 0
      %v3756 = vsel %vm3667, %v3735, 0
      %v3759 = vsel %vm3667, %v3737, 0
      %v3762 = vsel %vm3667, %v3739, 0
      %v3765 = vsel %vm3667, %v3741, 0
      %v3768 = vsel %vm3667, %v3743, 0
      %v3771 = vsel %vm3667, %v3745, 0
      %3773 = vmatprep.subr.mxu0 0.0
      %3774 = vmatpush1.msra.mxu0 0.0
      %3775 = vmatprep.subr.mxu0 0.0
      %3776 = vmatpush1.msra.mxu0 0.0
      %3777 = vmatprep.subr.mxu0 0.0
      %3778 = vmatpush1.msra.mxu0 0.0
      %3779 = vmatprep.subr.mxu0 0.0
      %3780 = vmatpush1.msra.mxu0 0.0
      %3781 = vmatprep.subr.mxu0 0.0
      %3782 = vmatpush1.msra.mxu0 0.0
      %3783 = vmatprep.subr.mxu0 0.0
      %3784 = vmatpush1.msra.mxu0 0.0
      %3785 = vmatprep.subr.mxu0 0.0
      %3786 = vmatpush1.msra.mxu0 0.0
      %3787 = vmatprep.subr.mxu0 0.0
      %3788 = vmatpush1.msra.mxu0 0.0
      %3789 = vmatprep.subr.mxu0 0.0
      %3790 = vmatpush1.msra.mxu0 0.0
      %3791 = vmatprep.subr.mxu0 0.0
      %3792 = vmatpush1.msra.mxu0 0.0
      %3793 = vmatprep.subr.mxu0 0.0
      %3794 = vmatpush1.msra.mxu0 0.0
      %3795 = vmatprep.subr.mxu0 0.0
      %3796 = vmatpush1.msra.mxu0 0.0
      %3797 = vmatprep.subr.mxu0 0.0
      %3798 = vmatpush1.msra.mxu0 0.0
      %3799 = vmatprep.subr.mxu0 0.0
      %3800 = vmatpush1.msra.mxu0 0.0
      %3801 = vmatprep.subr.mxu0 0.0
      %3802 = vmatpush1.msra.mxu0 %v3748
      %3803 = vmatprep.subr.mxu0 0.0
      %3804 = vmatpush1.msra.mxu0 %v3747
      %3805 = vmatprep.subr.mxu0 0.0
      %3806 = vmatpush2.msra.mxu0 0.0
      %3807 = vmatprep.subr.mxu0 0.0
      %3808 = vmatpush2.msra.mxu0 0.0
      %3809 = vmatprep.subr.mxu0 0.0
      %3810 = vmatpush2.msra.mxu0 0.0
      %3811 = vmatprep.subr.mxu0 0.0
      %3812 = vmatpush2.msra.mxu0 0.0
      %3813 = vmatprep.subr.mxu0 0.0
      %3814 = vmatpush2.msra.mxu0 0.0
      %3815 = vmatprep.subr.mxu0 0.0
      %3816 = vmatpush2.msra.mxu0 0.0
      %3817 = vmatprep.subr.mxu0 0.0
      %3818 = vmatpush2.msra.mxu0 0.0
      %3819 = vmatprep.subr.mxu0 0.0
      %3820 = vmatpush2.msra.mxu0 0.0
      %3821 = vmatprep.subr.mxu0 0.0
      %3822 = vmatpush2.msra.mxu0 0.0
      %3823 = vmatprep.subr.mxu0 0.0
      %3824 = vmatpush2.msra.mxu0 0.0
      %3825 = vmatprep.subr.mxu0 0.0
      %3826 = vmatpush2.msra.mxu0 0.0
      %3827 = vmatprep.subr.mxu0 0.0
      %3828 = vmatpush2.msra.mxu0 0.0
      %3829 = vmatprep.subr.mxu0 0.0
      %3830 = vmatpush2.msra.mxu0 0.0
      %3831 = vmatprep.subr.mxu0 0.0
      %3832 = vmatpush2.msra.mxu0 0.0
      %3833 = vmatprep.subr.mxu0 0.0
      %3834 = vmatpush2.msra.mxu0 0.0
      %3835 = vmatprep.subr.mxu0 0.0
      %3836 = vmatpush2.msra.mxu0 0.0
      %3837 = vmatprep.mubr.f32.mxu0 0.0
      %3838 = vmatmul.mubr.f32.gmra.mxu0 %v3750
      %v3839 = vpop.f32.mrf.mxu0
      %v3840 = vadd.f32 0.0, %v3839
      %v3841 = vpop.f32.mrf.mxu0
      %3842 = vmatprep.mubr.f32.mxu0 0.0
      %3843 = vmatmul.mubr.f32.gmra.mxu0 %v3753
      %v3844 = vpop.f32.mrf.mxu0
      %v3845 = vadd.f32 0.0, %v3844
      %v3846 = vpop.f32.mrf.mxu0
      %3847 = vmatprep.mubr.f32.mxu0 0.0
      %3848 = vmatmul.mubr.f32.gmra.mxu0 %v3756
      %v3849 = vpop.f32.mrf.mxu0
      %v3850 = vadd.f32 0.0, %v3849
      %v3851 = vpop.f32.mrf.mxu0
      %3852 = vmatprep.mubr.f32.mxu0 0.0
      %3853 = vmatmul.mubr.f32.gmra.mxu0 %v3759
      %v3854 = vpop.f32.mrf.mxu0
      %v3855 = vadd.f32 0.0, %v3854
      %v3856 = vpop.f32.mrf.mxu0
      %3857 = vmatprep.mubr.f32.mxu0 0.0
      %3858 = vmatmul.mubr.f32.gmra.mxu0 %v3762
      %v3859 = vpop.f32.mrf.mxu0
      %v3860 = vadd.f32 0.0, %v3859
      %v3861 = vpop.f32.mrf.mxu0
      %3862 = vmatprep.mubr.f32.mxu0 0.0
      %3863 = vmatmul.mubr.f32.gmra.mxu0 %v3765
      %v3864 = vpop.f32.mrf.mxu0
      %v3865 = vadd.f32 0.0, %v3864
      %v3866 = vpop.f32.mrf.mxu0
      %3867 = vmatprep.mubr.f32.mxu0 0.0
      %3868 = vmatmul.mubr.f32.gmra.mxu0 %v3768
      %v3869 = vpop.f32.mrf.mxu0
      %v3870 = vadd.f32 0.0, %v3869
      %v3871 = vpop.f32.mrf.mxu0
      %3872 = vmatprep.mubr.f32.mxu0 0.0
      %3873 = vmatmul.mubr.f32.gmra.mxu0 %v3771
      %v3874 = vpop.f32.mrf.mxu0
      %v3875 = vadd.f32 0.0, %v3874
      %v3876 = vpop.f32.mrf.mxu0
      %3877 = vdwg.mxu0
      %v3879 = vsel %vm3667, %v3713, 0
      %v3882 = vsel %vm3667, %v3715, 0
      %v3885 = vsel %vm3667, %v3717, 0
      %v3888 = vsel %vm3667, %v3719, 0
      %v3891 = vsel %vm3667, %v3721, 0
      %v3894 = vsel %vm3667, %v3723, 0
      %v3897 = vsel %vm3667, %v3725, 0
      %v3900 = vsel %vm3667, %v3727, 0
      %3902 = vmatprep.subr.mxu0 0.0
      %3903 = vmatpush1.msra.mxu0 0.0
      %3904 = vmatprep.subr.mxu0 0.0
      %3905 = vmatpush1.msra.mxu0 0.0
      %3906 = vmatprep.subr.mxu0 0.0
      %3907 = vmatpush1.msra.mxu0 0.0
      %3908 = vmatprep.subr.mxu0 0.0
      %3909 = vmatpush1.msra.mxu0 0.0
      %3910 = vmatprep.subr.mxu0 0.0
      %3911 = vmatpush1.msra.mxu0 0.0
      %3912 = vmatprep.subr.mxu0 0.0
      %3913 = vmatpush1.msra.mxu0 0.0
      %3914 = vmatprep.subr.mxu0 0.0
      %3915 = vmatpush1.msra.mxu0 0.0
      %3916 = vmatprep.subr.mxu0 0.0
      %3917 = vmatpush1.msra.mxu0 0.0
      %3918 = vmatprep.subr.mxu0 0.0
      %3919 = vmatpush1.msra.mxu0 0.0
      %3920 = vmatprep.subr.mxu0 0.0
      %3921 = vmatpush1.msra.mxu0 0.0
      %3922 = vmatprep.subr.mxu0 0.0
      %3923 = vmatpush1.msra.mxu0 0.0
      %3924 = vmatprep.subr.mxu0 0.0
      %3925 = vmatpush1.msra.mxu0 0.0
      %3926 = vmatprep.subr.mxu0 0.0
      %3927 = vmatpush1.msra.mxu0 0.0
      %3928 = vmatprep.subr.mxu0 0.0
      %3929 = vmatpush1.msra.mxu0 0.0
      %3930 = vmatprep.subr.mxu0 0.0
      %3931 = vmatpush1.msra.mxu0 %v3729
      %3932 = vmatprep.subr.mxu0 0.0
      %3933 = vmatpush1.msra.mxu0 %v3728
      %3934 = vmatprep.subr.mxu0 0.0
      %3935 = vmatpush2.msra.mxu0 0.0
      %3936 = vmatprep.subr.mxu0 0.0
      %3937 = vmatpush2.msra.mxu0 0.0
      %3938 = vmatprep.subr.mxu0 0.0
      %3939 = vmatpush2.msra.mxu0 0.0
      %3940 = vmatprep.subr.mxu0 0.0
      %3941 = vmatpush2.msra.mxu0 0.0
      %3942 = vmatprep.subr.mxu0 0.0
      %3943 = vmatpush2.msra.mxu0 0.0
      %3944 = vmatprep.subr.mxu0 0.0
      %3945 = vmatpush2.msra.mxu0 0.0
      %3946 = vmatprep.subr.mxu0 0.0
      %3947 = vmatpush2.msra.mxu0 0.0
      %3948 = vmatprep.subr.mxu0 0.0
      %3949 = vmatpush2.msra.mxu0 0.0
      %3950 = vmatprep.subr.mxu0 0.0
      %3951 = vmatpush2.msra.mxu0 0.0
      %3952 = vmatprep.subr.mxu0 0.0
      %3953 = vmatpush2.msra.mxu0 0.0
      %3954 = vmatprep.subr.mxu0 0.0
      %3955 = vmatpush2.msra.mxu0 0.0
      %3956 = vmatprep.subr.mxu0 0.0
      %3957 = vmatpush2.msra.mxu0 0.0
      %3958 = vmatprep.subr.mxu0 0.0
      %3959 = vmatpush2.msra.mxu0 0.0
      %3960 = vmatprep.subr.mxu0 0.0
      %3961 = vmatpush2.msra.mxu0 0.0
      %3962 = vmatprep.subr.mxu0 0.0
      %3963 = vmatpush2.msra.mxu0 0.0
      %3964 = vmatprep.subr.mxu0 0.0
      %3965 = vmatpush2.msra.mxu0 0.0
      %3966 = vmatprep.mubr.f32.mxu0 0.0
      %3967 = vmatmul.mubr.f32.gmra.mxu0 %v3879
      %v3968 = vpop.f32.mrf.mxu0
      %v3969 = vadd.f32 %v3840, %v3968
      %v3970 = vpop.f32.mrf.mxu0
      %3971 = vmatprep.mubr.f32.mxu0 0.0
      %3972 = vmatmul.mubr.f32.gmra.mxu0 %v3882
      %v3973 = vpop.f32.mrf.mxu0
      %v3974 = vadd.f32 %v3845, %v3973
      %v3975 = vpop.f32.mrf.mxu0
      %3976 = vmatprep.mubr.f32.mxu0 0.0
      %3977 = vmatmul.mubr.f32.gmra.mxu0 %v3885
      %v3978 = vpop.f32.mrf.mxu0
      %v3979 = vadd.f32 %v3850, %v3978
      %v3980 = vpop.f32.mrf.mxu0
      %3981 = vmatprep.mubr.f32.mxu0 0.0
      %3982 = vmatmul.mubr.f32.gmra.mxu0 %v3888
      %v3983 = vpop.f32.mrf.mxu0
      %v3984 = vadd.f32 %v3855, %v3983
      %v3985 = vpop.f32.mrf.mxu0
      %3986 = vmatprep.mubr.f32.mxu0 0.0
      %3987 = vmatmul.mubr.f32.gmra.mxu0 %v3891
      %v3988 = vpop.f32.mrf.mxu0
      %v3989 = vadd.f32 %v3860, %v3988
      %v3990 = vpop.f32.mrf.mxu0
      %3991 = vmatprep.mubr.f32.mxu0 0.0
      %3992 = vmatmul.mubr.f32.gmra.mxu0 %v3894
      %v3993 = vpop.f32.mrf.mxu0
      %v3994 = vadd.f32 %v3865, %v3993
      %v3995 = vpop.f32.mrf.mxu0
      %3996 = vmatprep.mubr.f32.mxu0 0.0
      %3997 = vmatmul.mubr.f32.gmra.mxu0 %v3897
      %v3998 = vpop.f32.mrf.mxu0
      %v3999 = vadd.f32 %v3870, %v3998
      %v4000 = vpop.f32.mrf.mxu0
      %4001 = vmatprep.mubr.f32.mxu0 0.0
      %4002 = vmatmul.mubr.f32.gmra.mxu0 %v3900
      %v4003 = vpop.f32.mrf.mxu0
      %v4004 = vadd.f32 %v3875, %v4003
      %v4005 = vpop.f32.mrf.mxu0
      %4006 = vdwg.mxu0
      %s4007 = scalar_lea.vmem [#allocation3], 7
      %v4008 = vld [vmem:[%s4007] ss:$4 sm:$0xff]
      %s4009 = scalar_lea.vmem [#allocation3], 39
      %v4010 = vld [vmem:[%s4009] ss:$4 sm:$0xff]
      %s4011 = scalar_lea.vmem [#allocation3], 71
      %v4012 = vld [vmem:[%s4011] ss:$4 sm:$0xff]
      %s4013 = scalar_lea.vmem [#allocation3], 103
      %v4014 = vld [vmem:[%s4013] ss:$4 sm:$0xff]
      %s4015 = scalar_lea.vmem [#allocation3], 135
      %v4016 = vld [vmem:[%s4015] ss:$4 sm:$0xff]
      %s4017 = scalar_lea.vmem [#allocation3], 167
      %v4018 = vld [vmem:[%s4017] ss:$4 sm:$0xff]
      %s4019 = scalar_lea.vmem [#allocation3], 199
      %v4020 = vld [vmem:[%s4019] ss:$4 sm:$0xff]
      %s4021 = scalar_lea.vmem [#allocation3], 231
      %v4022 = vld [vmem:[%s4021] ss:$4 sm:$0xff]
      %s4023 = scalar_lea.vmem %s3, 32
      %v4024 = vld [vmem:[%s4023] sm:$0xff]
      %v4025 = vld [vmem:[%s4023 + $0x8] sm:$0xff]
      %v4027 = vsel %vm3667, %v4008, 0
      %v4030 = vsel %vm3667, %v4010, 0
      %v4033 = vsel %vm3667, %v4012, 0
      %v4036 = vsel %vm3667, %v4014, 0
      %v4039 = vsel %vm3667, %v4016, 0
      %v4042 = vsel %vm3667, %v4018, 0
      %v4045 = vsel %vm3667, %v4020, 0
      %v4048 = vsel %vm3667, %v4022, 0
      %4050 = vmatprep.subr.mxu0 0.0
      %4051 = vmatpush1.msra.mxu0 0.0
      %4052 = vmatprep.subr.mxu0 0.0
      %4053 = vmatpush1.msra.mxu0 0.0
      %4054 = vmatprep.subr.mxu0 0.0
      %4055 = vmatpush1.msra.mxu0 0.0
      %4056 = vmatprep.subr.mxu0 0.0
      %4057 = vmatpush1.msra.mxu0 0.0
      %4058 = vmatprep.subr.mxu0 0.0
      %4059 = vmatpush1.msra.mxu0 0.0
      %4060 = vmatprep.subr.mxu0 0.0
      %4061 = vmatpush1.msra.mxu0 0.0
      %4062 = vmatprep.subr.mxu0 0.0
      %4063 = vmatpush1.msra.mxu0 0.0
      %4064 = vmatprep.subr.mxu0 0.0
      %4065 = vmatpush1.msra.mxu0 0.0
      %4066 = vmatprep.subr.mxu0 0.0
      %4067 = vmatpush1.msra.mxu0 0.0
      %4068 = vmatprep.subr.mxu0 0.0
      %4069 = vmatpush1.msra.mxu0 0.0
      %4070 = vmatprep.subr.mxu0 0.0
      %4071 = vmatpush1.msra.mxu0 0.0
      %4072 = vmatprep.subr.mxu0 0.0
      %4073 = vmatpush1.msra.mxu0 0.0
      %4074 = vmatprep.subr.mxu0 0.0
      %4075 = vmatpush1.msra.mxu0 0.0
      %4076 = vmatprep.subr.mxu0 0.0
      %4077 = vmatpush1.msra.mxu0 0.0
      %4078 = vmatprep.subr.mxu0 0.0
      %4079 = vmatpush1.msra.mxu0 %v4025
      %4080 = vmatprep.subr.mxu0 0.0
      %4081 = vmatpush1.msra.mxu0 %v4024
      %4082 = vmatprep.subr.mxu0 0.0
      %4083 = vmatpush2.msra.mxu0 0.0
      %4084 = vmatprep.subr.mxu0 0.0
      %4085 = vmatpush2.msra.mxu0 0.0
      %4086 = vmatprep.subr.mxu0 0.0
      %4087 = vmatpush2.msra.mxu0 0.0
      %4088 = vmatprep.subr.mxu0 0.0
      %4089 = vmatpush2.msra.mxu0 0.0
      %4090 = vmatprep.subr.mxu0 0.0
      %4091 = vmatpush2.msra.mxu0 0.0
      %4092 = vmatprep.subr.mxu0 0.0
      %4093 = vmatpush2.msra.mxu0 0.0
      %4094 = vmatprep.subr.mxu0 0.0
      %4095 = vmatpush2.msra.mxu0 0.0
      %4096 = vmatprep.subr.mxu0 0.0
      %4097 = vmatpush2.msra.mxu0 0.0
      %4098 = vmatprep.subr.mxu0 0.0
      %4099 = vmatpush2.msra.mxu0 0.0
      %4100 = vmatprep.subr.mxu0 0.0
      %4101 = vmatpush2.msra.mxu0 0.0
      %4102 = vmatprep.subr.mxu0 0.0
      %4103 = vmatpush2.msra.mxu0 0.0
      %4104 = vmatprep.subr.mxu0 0.0
      %4105 = vmatpush2.msra.mxu0 0.0
      %4106 = vmatprep.subr.mxu0 0.0
      %4107 = vmatpush2.msra.mxu0 0.0
      %4108 = vmatprep.subr.mxu0 0.0
      %4109 = vmatpush2.msra.mxu0 0.0
      %4110 = vmatprep.subr.mxu0 0.0
      %4111 = vmatpush2.msra.mxu0 0.0
      %4112 = vmatprep.subr.mxu0 0.0
      %4113 = vmatpush2.msra.mxu0 0.0
      %4114 = vmatprep.mubr.f32.mxu0 0.0
      %4115 = vmatmul.mubr.f32.gmra.mxu0 %v4027
      %v4116 = vpop.f32.mrf.mxu0
      %v4117 = vadd.f32 0.0, %v4116
      %v4118 = vpop.f32.mrf.mxu0
      %4119 = vmatprep.mubr.f32.mxu0 0.0
      %4120 = vmatmul.mubr.f32.gmra.mxu0 %v4030
      %v4121 = vpop.f32.mrf.mxu0
      %v4122 = vadd.f32 0.0, %v4121
      %v4123 = vpop.f32.mrf.mxu0
      %4124 = vmatprep.mubr.f32.mxu0 0.0
      %4125 = vmatmul.mubr.f32.gmra.mxu0 %v4033
      %v4126 = vpop.f32.mrf.mxu0
      %v4127 = vadd.f32 0.0, %v4126
      %v4128 = vpop.f32.mrf.mxu0
      %4129 = vmatprep.mubr.f32.mxu0 0.0
      %4130 = vmatmul.mubr.f32.gmra.mxu0 %v4036
      %v4131 = vpop.f32.mrf.mxu0
      %v4132 = vadd.f32 0.0, %v4131
      %v4133 = vpop.f32.mrf.mxu0
      %4134 = vmatprep.mubr.f32.mxu0 0.0
      %4135 = vmatmul.mubr.f32.gmra.mxu0 %v4039
      %v4136 = vpop.f32.mrf.mxu0
      %v4137 = vadd.f32 0.0, %v4136
      %v4138 = vpop.f32.mrf.mxu0
      %4139 = vmatprep.mubr.f32.mxu0 0.0
      %4140 = vmatmul.mubr.f32.gmra.mxu0 %v4042
      %v4141 = vpop.f32.mrf.mxu0
      %v4142 = vadd.f32 0.0, %v4141
      %v4143 = vpop.f32.mrf.mxu0
      %4144 = vmatprep.mubr.f32.mxu0 0.0
      %4145 = vmatmul.mubr.f32.gmra.mxu0 %v4045
      %v4146 = vpop.f32.mrf.mxu0
      %v4147 = vadd.f32 0.0, %v4146
      %v4148 = vpop.f32.mrf.mxu0
      %4149 = vmatprep.mubr.f32.mxu0 0.0
      %4150 = vmatmul.mubr.f32.gmra.mxu0 %v4048
      %v4151 = vpop.f32.mrf.mxu0
      %v4152 = vadd.f32 0.0, %v4151
      %v4153 = vpop.f32.mrf.mxu0
      %4154 = vdwg.mxu0
      %v4155 = vadd.f32 %v3969, %v4117
      %v4156 = vadd.f32 %v3974, %v4122
      %v4157 = vadd.f32 %v3979, %v4127
      %v4158 = vadd.f32 %v3984, %v4132
      %v4159 = vadd.f32 %v3989, %v4137
      %v4160 = vadd.f32 %v3994, %v4142
      %v4161 = vadd.f32 %v3999, %v4147
      %v4162 = vadd.f32 %v4004, %v4152
      %s4163 = scalar_lea.vmem [#allocation3], 8
      %v4164 = vld [vmem:[%s4163] ss:$4 sm:$0xff]
      %s4165 = scalar_lea.vmem [#allocation3], 40
      %v4166 = vld [vmem:[%s4165] ss:$4 sm:$0xff]
      %s4167 = scalar_lea.vmem [#allocation3], 72
      %v4168 = vld [vmem:[%s4167] ss:$4 sm:$0xff]
      %s4169 = scalar_lea.vmem [#allocation3], 104
      %v4170 = vld [vmem:[%s4169] ss:$4 sm:$0xff]
      %s4171 = scalar_lea.vmem [#allocation3], 136
      %v4172 = vld [vmem:[%s4171] ss:$4 sm:$0xff]
      %s4173 = scalar_lea.vmem [#allocation3], 168
      %v4174 = vld [vmem:[%s4173] ss:$4 sm:$0xff]
      %s4175 = scalar_lea.vmem [#allocation3], 200
      %v4176 = vld [vmem:[%s4175] ss:$4 sm:$0xff]
      %s4177 = scalar_lea.vmem [#allocation3], 232
      %v4178 = vld [vmem:[%s4177] ss:$4 sm:$0xff]
      %s4179 = scalar_lea.vmem %s3, 48
      %v4180 = vld [vmem:[%s4179] sm:$0xff]
      %v4181 = vld [vmem:[%s4179 + $0x8] sm:$0xff]
      %v4183 = vsel %vm3667, %v4164, 0
      %v4186 = vsel %vm3667, %v4166, 0
      %v4189 = vsel %vm3667, %v4168, 0
      %v4192 = vsel %vm3667, %v4170, 0
      %v4195 = vsel %vm3667, %v4172, 0
      %v4198 = vsel %vm3667, %v4174, 0
      %v4201 = vsel %vm3667, %v4176, 0
      %v4204 = vsel %vm3667, %v4178, 0
      %4206 = vmatprep.subr.mxu0 0.0
      %4207 = vmatpush1.msra.mxu0 0.0
      %4208 = vmatprep.subr.mxu0 0.0
      %4209 = vmatpush1.msra.mxu0 0.0
      %4210 = vmatprep.subr.mxu0 0.0
      %4211 = vmatpush1.msra.mxu0 0.0
      %4212 = vmatprep.subr.mxu0 0.0
      %4213 = vmatpush1.msra.mxu0 0.0
      %4214 = vmatprep.subr.mxu0 0.0
      %4215 = vmatpush1.msra.mxu0 0.0
      %4216 = vmatprep.subr.mxu0 0.0
      %4217 = vmatpush1.msra.mxu0 0.0
      %4218 = vmatprep.subr.mxu0 0.0
      %4219 = vmatpush1.msra.mxu0 0.0
      %4220 = vmatprep.subr.mxu0 0.0
      %4221 = vmatpush1.msra.mxu0 0.0
      %4222 = vmatprep.subr.mxu0 0.0
      %4223 = vmatpush1.msra.mxu0 0.0
      %4224 = vmatprep.subr.mxu0 0.0
      %4225 = vmatpush1.msra.mxu0 0.0
      %4226 = vmatprep.subr.mxu0 0.0
      %4227 = vmatpush1.msra.mxu0 0.0
      %4228 = vmatprep.subr.mxu0 0.0
      %4229 = vmatpush1.msra.mxu0 0.0
      %4230 = vmatprep.subr.mxu0 0.0
      %4231 = vmatpush1.msra.mxu0 0.0
      %4232 = vmatprep.subr.mxu0 0.0
      %4233 = vmatpush1.msra.mxu0 0.0
      %4234 = vmatprep.subr.mxu0 0.0
      %4235 = vmatpush1.msra.mxu0 %v4181
      %4236 = vmatprep.subr.mxu0 0.0
      %4237 = vmatpush1.msra.mxu0 %v4180
      %4238 = vmatprep.subr.mxu0 0.0
      %4239 = vmatpush2.msra.mxu0 0.0
      %4240 = vmatprep.subr.mxu0 0.0
      %4241 = vmatpush2.msra.mxu0 0.0
      %4242 = vmatprep.subr.mxu0 0.0
      %4243 = vmatpush2.msra.mxu0 0.0
      %4244 = vmatprep.subr.mxu0 0.0
      %4245 = vmatpush2.msra.mxu0 0.0
      %4246 = vmatprep.subr.mxu0 0.0
      %4247 = vmatpush2.msra.mxu0 0.0
      %4248 = vmatprep.subr.mxu0 0.0
      %4249 = vmatpush2.msra.mxu0 0.0
      %4250 = vmatprep.subr.mxu0 0.0
      %4251 = vmatpush2.msra.mxu0 0.0
      %4252 = vmatprep.subr.mxu0 0.0
      %4253 = vmatpush2.msra.mxu0 0.0
      %4254 = vmatprep.subr.mxu0 0.0
      %4255 = vmatpush2.msra.mxu0 0.0
      %4256 = vmatprep.subr.mxu0 0.0
      %4257 = vmatpush2.msra.mxu0 0.0
      %4258 = vmatprep.subr.mxu0 0.0
      %4259 = vmatpush2.msra.mxu0 0.0
      %4260 = vmatprep.subr.mxu0 0.0
      %4261 = vmatpush2.msra.mxu0 0.0
      %4262 = vmatprep.subr.mxu0 0.0
      %4263 = vmatpush2.msra.mxu0 0.0
      %4264 = vmatprep.subr.mxu0 0.0
      %4265 = vmatpush2.msra.mxu0 0.0
      %4266 = vmatprep.subr.mxu0 0.0
      %4267 = vmatpush2.msra.mxu0 0.0
      %4268 = vmatprep.subr.mxu0 0.0
      %4269 = vmatpush2.msra.mxu0 0.0
      %4270 = vmatprep.mubr.f32.mxu0 0.0
      %4271 = vmatmul.mubr.f32.gmra.mxu0 %v4183
      %v4272 = vpop.f32.mrf.mxu0
      %v4273 = vadd.f32 0.0, %v4272
      %v4274 = vpop.f32.mrf.mxu0
      %4275 = vmatprep.mubr.f32.mxu0 0.0
      %4276 = vmatmul.mubr.f32.gmra.mxu0 %v4186
      %v4277 = vpop.f32.mrf.mxu0
      %v4278 = vadd.f32 0.0, %v4277
      %v4279 = vpop.f32.mrf.mxu0
      %4280 = vmatprep.mubr.f32.mxu0 0.0
      %4281 = vmatmul.mubr.f32.gmra.mxu0 %v4189
      %v4282 = vpop.f32.mrf.mxu0
      %v4283 = vadd.f32 0.0, %v4282
      %v4284 = vpop.f32.mrf.mxu0
      %4285 = vmatprep.mubr.f32.mxu0 0.0
      %4286 = vmatmul.mubr.f32.gmra.mxu0 %v4192
      %v4287 = vpop.f32.mrf.mxu0
      %v4288 = vadd.f32 0.0, %v4287
      %v4289 = vpop.f32.mrf.mxu0
      %4290 = vmatprep.mubr.f32.mxu0 0.0
      %4291 = vmatmul.mubr.f32.gmra.mxu0 %v4195
      %v4292 = vpop.f32.mrf.mxu0
      %v4293 = vadd.f32 0.0, %v4292
      %v4294 = vpop.f32.mrf.mxu0
      %4295 = vmatprep.mubr.f32.mxu0 0.0
      %4296 = vmatmul.mubr.f32.gmra.mxu0 %v4198
      %v4297 = vpop.f32.mrf.mxu0
      %v4298 = vadd.f32 0.0, %v4297
      %v4299 = vpop.f32.mrf.mxu0
      %4300 = vmatprep.mubr.f32.mxu0 0.0
      %4301 = vmatmul.mubr.f32.gmra.mxu0 %v4201
      %v4302 = vpop.f32.mrf.mxu0
      %v4303 = vadd.f32 0.0, %v4302
      %v4304 = vpop.f32.mrf.mxu0
      %4305 = vmatprep.mubr.f32.mxu0 0.0
      %4306 = vmatmul.mubr.f32.gmra.mxu0 %v4204
      %v4307 = vpop.f32.mrf.mxu0
      %v4308 = vadd.f32 0.0, %v4307
      %v4309 = vpop.f32.mrf.mxu0
      %4310 = vdwg.mxu0
      %v4311 = vadd.f32 %v4155, %v4273
      %v4312 = vadd.f32 %v4156, %v4278
      %v4313 = vadd.f32 %v4157, %v4283
      %v4314 = vadd.f32 %v4158, %v4288
      %v4315 = vadd.f32 %v4159, %v4293
      %v4316 = vadd.f32 %v4160, %v4298
      %v4317 = vadd.f32 %v4161, %v4303
      %v4318 = vadd.f32 %v4162, %v4308
      %s4319 = scalar_lea.vmem [#allocation3], 9
      %v4320 = vld [vmem:[%s4319] ss:$4 sm:$0xff]
      %s4321 = scalar_lea.vmem [#allocation3], 41
      %v4322 = vld [vmem:[%s4321] ss:$4 sm:$0xff]
      %s4323 = scalar_lea.vmem [#allocation3], 73
      %v4324 = vld [vmem:[%s4323] ss:$4 sm:$0xff]
      %s4325 = scalar_lea.vmem [#allocation3], 105
      %v4326 = vld [vmem:[%s4325] ss:$4 sm:$0xff]
      %s4327 = scalar_lea.vmem [#allocation3], 137
      %v4328 = vld [vmem:[%s4327] ss:$4 sm:$0xff]
      %s4329 = scalar_lea.vmem [#allocation3], 169
      %v4330 = vld [vmem:[%s4329] ss:$4 sm:$0xff]
      %s4331 = scalar_lea.vmem [#allocation3], 201
      %v4332 = vld [vmem:[%s4331] ss:$4 sm:$0xff]
      %s4333 = scalar_lea.vmem [#allocation3], 233
      %v4334 = vld [vmem:[%s4333] ss:$4 sm:$0xff]
      %s4335 = scalar_lea.vmem %s3, 64
      %v4336 = vld [vmem:[%s4335] sm:$0xff]
      %v4337 = vld [vmem:[%s4335 + $0x8] sm:$0xff]
      %v4339 = vsel %vm3667, %v4320, 0
      %v4342 = vsel %vm3667, %v4322, 0
      %v4345 = vsel %vm3667, %v4324, 0
      %v4348 = vsel %vm3667, %v4326, 0
      %v4351 = vsel %vm3667, %v4328, 0
      %v4354 = vsel %vm3667, %v4330, 0
      %v4357 = vsel %vm3667, %v4332, 0
      %v4360 = vsel %vm3667, %v4334, 0
      %4362 = vmatprep.subr.mxu0 0.0
      %4363 = vmatpush1.msra.mxu0 0.0
      %4364 = vmatprep.subr.mxu0 0.0
      %4365 = vmatpush1.msra.mxu0 0.0
      %4366 = vmatprep.subr.mxu0 0.0
      %4367 = vmatpush1.msra.mxu0 0.0
      %4368 = vmatprep.subr.mxu0 0.0
      %4369 = vmatpush1.msra.mxu0 0.0
      %4370 = vmatprep.subr.mxu0 0.0
      %4371 = vmatpush1.msra.mxu0 0.0
      %4372 = vmatprep.subr.mxu0 0.0
      %4373 = vmatpush1.msra.mxu0 0.0
      %4374 = vmatprep.subr.mxu0 0.0
      %4375 = vmatpush1.msra.mxu0 0.0
      %4376 = vmatprep.subr.mxu0 0.0
      %4377 = vmatpush1.msra.mxu0 0.0
      %4378 = vmatprep.subr.mxu0 0.0
      %4379 = vmatpush1.msra.mxu0 0.0
      %4380 = vmatprep.subr.mxu0 0.0
      %4381 = vmatpush1.msra.mxu0 0.0
      %4382 = vmatprep.subr.mxu0 0.0
      %4383 = vmatpush1.msra.mxu0 0.0
      %4384 = vmatprep.subr.mxu0 0.0
      %4385 = vmatpush1.msra.mxu0 0.0
      %4386 = vmatprep.subr.mxu0 0.0
      %4387 = vmatpush1.msra.mxu0 0.0
      %4388 = vmatprep.subr.mxu0 0.0
      %4389 = vmatpush1.msra.mxu0 0.0
      %4390 = vmatprep.subr.mxu0 0.0
      %4391 = vmatpush1.msra.mxu0 %v4337
      %4392 = vmatprep.subr.mxu0 0.0
      %4393 = vmatpush1.msra.mxu0 %v4336
      %4394 = vmatprep.subr.mxu0 0.0
      %4395 = vmatpush2.msra.mxu0 0.0
      %4396 = vmatprep.subr.mxu0 0.0
      %4397 = vmatpush2.msra.mxu0 0.0
      %4398 = vmatprep.subr.mxu0 0.0
      %4399 = vmatpush2.msra.mxu0 0.0
      %4400 = vmatprep.subr.mxu0 0.0
      %4401 = vmatpush2.msra.mxu0 0.0
      %4402 = vmatprep.subr.mxu0 0.0
      %4403 = vmatpush2.msra.mxu0 0.0
      %4404 = vmatprep.subr.mxu0 0.0
      %4405 = vmatpush2.msra.mxu0 0.0
      %4406 = vmatprep.subr.mxu0 0.0
      %4407 = vmatpush2.msra.mxu0 0.0
      %4408 = vmatprep.subr.mxu0 0.0
      %4409 = vmatpush2.msra.mxu0 0.0
      %4410 = vmatprep.subr.mxu0 0.0
      %4411 = vmatpush2.msra.mxu0 0.0
      %4412 = vmatprep.subr.mxu0 0.0
      %4413 = vmatpush2.msra.mxu0 0.0
      %4414 = vmatprep.subr.mxu0 0.0
      %4415 = vmatpush2.msra.mxu0 0.0
      %4416 = vmatprep.subr.mxu0 0.0
      %4417 = vmatpush2.msra.mxu0 0.0
      %4418 = vmatprep.subr.mxu0 0.0
      %4419 = vmatpush2.msra.mxu0 0.0
      %4420 = vmatprep.subr.mxu0 0.0
      %4421 = vmatpush2.msra.mxu0 0.0
      %4422 = vmatprep.subr.mxu0 0.0
      %4423 = vmatpush2.msra.mxu0 0.0
      %4424 = vmatprep.subr.mxu0 0.0
      %4425 = vmatpush2.msra.mxu0 0.0
      %4426 = vmatprep.mubr.f32.mxu0 0.0
      %4427 = vmatmul.mubr.f32.gmra.mxu0 %v4339
      %v4428 = vpop.f32.mrf.mxu0
      %v4429 = vadd.f32 0.0, %v4428
      %v4430 = vpop.f32.mrf.mxu0
      %4431 = vmatprep.mubr.f32.mxu0 0.0
      %4432 = vmatmul.mubr.f32.gmra.mxu0 %v4342
      %v4433 = vpop.f32.mrf.mxu0
      %v4434 = vadd.f32 0.0, %v4433
      %v4435 = vpop.f32.mrf.mxu0
      %4436 = vmatprep.mubr.f32.mxu0 0.0
      %4437 = vmatmul.mubr.f32.gmra.mxu0 %v4345
      %v4438 = vpop.f32.mrf.mxu0
      %v4439 = vadd.f32 0.0, %v4438
      %v4440 = vpop.f32.mrf.mxu0
      %4441 = vmatprep.mubr.f32.mxu0 0.0
      %4442 = vmatmul.mubr.f32.gmra.mxu0 %v4348
      %v4443 = vpop.f32.mrf.mxu0
      %v4444 = vadd.f32 0.0, %v4443
      %v4445 = vpop.f32.mrf.mxu0
      %4446 = vmatprep.mubr.f32.mxu0 0.0
      %4447 = vmatmul.mubr.f32.gmra.mxu0 %v4351
      %v4448 = vpop.f32.mrf.mxu0
      %v4449 = vadd.f32 0.0, %v4448
      %v4450 = vpop.f32.mrf.mxu0
      %4451 = vmatprep.mubr.f32.mxu0 0.0
      %4452 = vmatmul.mubr.f32.gmra.mxu0 %v4354
      %v4453 = vpop.f32.mrf.mxu0
      %v4454 = vadd.f32 0.0, %v4453
      %v4455 = vpop.f32.mrf.mxu0
      %4456 = vmatprep.mubr.f32.mxu0 0.0
      %4457 = vmatmul.mubr.f32.gmra.mxu0 %v4357
      %v4458 = vpop.f32.mrf.mxu0
      %v4459 = vadd.f32 0.0, %v4458
      %v4460 = vpop.f32.mrf.mxu0
      %4461 = vmatprep.mubr.f32.mxu0 0.0
      %4462 = vmatmul.mubr.f32.gmra.mxu0 %v4360
      %v4463 = vpop.f32.mrf.mxu0
      %v4464 = vadd.f32 0.0, %v4463
      %v4465 = vpop.f32.mrf.mxu0
      %4466 = vdwg.mxu0
      %v4467 = vadd.f32 %v4311, %v4429
      %v4468 = vadd.f32 %v4312, %v4434
      %v4469 = vadd.f32 %v4313, %v4439
      %v4470 = vadd.f32 %v4314, %v4444
      %v4471 = vadd.f32 %v4315, %v4449
      %v4472 = vadd.f32 %v4316, %v4454
      %v4473 = vadd.f32 %v4317, %v4459
      %v4474 = vadd.f32 %v4318, %v4464
      %s4475 = scalar_lea.vmem [#allocation3], 10
      %v4476 = vld [vmem:[%s4475] ss:$4 sm:$0xff]
      %s4477 = scalar_lea.vmem [#allocation3], 42
      %v4478 = vld [vmem:[%s4477] ss:$4 sm:$0xff]
      %s4479 = scalar_lea.vmem [#allocation3], 74
      %v4480 = vld [vmem:[%s4479] ss:$4 sm:$0xff]
      %s4481 = scalar_lea.vmem [#allocation3], 106
      %v4482 = vld [vmem:[%s4481] ss:$4 sm:$0xff]
      %s4483 = scalar_lea.vmem [#allocation3], 138
      %v4484 = vld [vmem:[%s4483] ss:$4 sm:$0xff]
      %s4485 = scalar_lea.vmem [#allocation3], 170
      %v4486 = vld [vmem:[%s4485] ss:$4 sm:$0xff]
      %s4487 = scalar_lea.vmem [#allocation3], 202
      %v4488 = vld [vmem:[%s4487] ss:$4 sm:$0xff]
      %s4489 = scalar_lea.vmem [#allocation3], 234
      %v4490 = vld [vmem:[%s4489] ss:$4 sm:$0xff]
      %s4491 = scalar_lea.vmem %s3, 80
      %v4492 = vld [vmem:[%s4491] sm:$0xff]
      %v4493 = vld [vmem:[%s4491 + $0x8] sm:$0xff]
      %v4495 = vsel %vm3667, %v4476, 0
      %v4498 = vsel %vm3667, %v4478, 0
      %v4501 = vsel %vm3667, %v4480, 0
      %v4504 = vsel %vm3667, %v4482, 0
      %v4507 = vsel %vm3667, %v4484, 0
      %v4510 = vsel %vm3667, %v4486, 0
      %v4513 = vsel %vm3667, %v4488, 0
      %v4516 = vsel %vm3667, %v4490, 0
      %4518 = vmatprep.subr.mxu0 0.0
      %4519 = vmatpush1.msra.mxu0 0.0
      %4520 = vmatprep.subr.mxu0 0.0
      %4521 = vmatpush1.msra.mxu0 0.0
      %4522 = vmatprep.subr.mxu0 0.0
      %4523 = vmatpush1.msra.mxu0 0.0
      %4524 = vmatprep.subr.mxu0 0.0
      %4525 = vmatpush1.msra.mxu0 0.0
      %4526 = vmatprep.subr.mxu0 0.0
      %4527 = vmatpush1.msra.mxu0 0.0
      %4528 = vmatprep.subr.mxu0 0.0
      %4529 = vmatpush1.msra.mxu0 0.0
      %4530 = vmatprep.subr.mxu0 0.0
      %4531 = vmatpush1.msra.mxu0 0.0
      %4532 = vmatprep.subr.mxu0 0.0
      %4533 = vmatpush1.msra.mxu0 0.0
      %4534 = vmatprep.subr.mxu0 0.0
      %4535 = vmatpush1.msra.mxu0 0.0
      %4536 = vmatprep.subr.mxu0 0.0
      %4537 = vmatpush1.msra.mxu0 0.0
      %4538 = vmatprep.subr.mxu0 0.0
      %4539 = vmatpush1.msra.mxu0 0.0
      %4540 = vmatprep.subr.mxu0 0.0
      %4541 = vmatpush1.msra.mxu0 0.0
      %4542 = vmatprep.subr.mxu0 0.0
      %4543 = vmatpush1.msra.mxu0 0.0
      %4544 = vmatprep.subr.mxu0 0.0
      %4545 = vmatpush1.msra.mxu0 0.0
      %4546 = vmatprep.subr.mxu0 0.0
      %4547 = vmatpush1.msra.mxu0 %v4493
      %4548 = vmatprep.subr.mxu0 0.0
      %4549 = vmatpush1.msra.mxu0 %v4492
      %4550 = vmatprep.subr.mxu0 0.0
      %4551 = vmatpush2.msra.mxu0 0.0
      %4552 = vmatprep.subr.mxu0 0.0
      %4553 = vmatpush2.msra.mxu0 0.0
      %4554 = vmatprep.subr.mxu0 0.0
      %4555 = vmatpush2.msra.mxu0 0.0
      %4556 = vmatprep.subr.mxu0 0.0
      %4557 = vmatpush2.msra.mxu0 0.0
      %4558 = vmatprep.subr.mxu0 0.0
      %4559 = vmatpush2.msra.mxu0 0.0
      %4560 = vmatprep.subr.mxu0 0.0
      %4561 = vmatpush2.msra.mxu0 0.0
      %4562 = vmatprep.subr.mxu0 0.0
      %4563 = vmatpush2.msra.mxu0 0.0
      %4564 = vmatprep.subr.mxu0 0.0
      %4565 = vmatpush2.msra.mxu0 0.0
      %4566 = vmatprep.subr.mxu0 0.0
      %4567 = vmatpush2.msra.mxu0 0.0
      %4568 = vmatprep.subr.mxu0 0.0
      %4569 = vmatpush2.msra.mxu0 0.0
      %4570 = vmatprep.subr.mxu0 0.0
      %4571 = vmatpush2.msra.mxu0 0.0
      %4572 = vmatprep.subr.mxu0 0.0
      %4573 = vmatpush2.msra.mxu0 0.0
      %4574 = vmatprep.subr.mxu0 0.0
      %4575 = vmatpush2.msra.mxu0 0.0
      %4576 = vmatprep.subr.mxu0 0.0
      %4577 = vmatpush2.msra.mxu0 0.0
      %4578 = vmatprep.subr.mxu0 0.0
      %4579 = vmatpush2.msra.mxu0 0.0
      %4580 = vmatprep.subr.mxu0 0.0
      %4581 = vmatpush2.msra.mxu0 0.0
      %4582 = vmatprep.mubr.f32.mxu0 0.0
      %4583 = vmatmul.mubr.f32.gmra.mxu0 %v4495
      %v4584 = vpop.f32.mrf.mxu0
      %v4585 = vadd.f32 0.0, %v4584
      %v4586 = vpop.f32.mrf.mxu0
      %4587 = vmatprep.mubr.f32.mxu0 0.0
      %4588 = vmatmul.mubr.f32.gmra.mxu0 %v4498
      %v4589 = vpop.f32.mrf.mxu0
      %v4590 = vadd.f32 0.0, %v4589
      %v4591 = vpop.f32.mrf.mxu0
      %4592 = vmatprep.mubr.f32.mxu0 0.0
      %4593 = vmatmul.mubr.f32.gmra.mxu0 %v4501
      %v4594 = vpop.f32.mrf.mxu0
      %v4595 = vadd.f32 0.0, %v4594
      %v4596 = vpop.f32.mrf.mxu0
      %4597 = vmatprep.mubr.f32.mxu0 0.0
      %4598 = vmatmul.mubr.f32.gmra.mxu0 %v4504
      %v4599 = vpop.f32.mrf.mxu0
      %v4600 = vadd.f32 0.0, %v4599
      %v4601 = vpop.f32.mrf.mxu0
      %4602 = vmatprep.mubr.f32.mxu0 0.0
      %4603 = vmatmul.mubr.f32.gmra.mxu0 %v4507
      %v4604 = vpop.f32.mrf.mxu0
      %v4605 = vadd.f32 0.0, %v4604
      %v4606 = vpop.f32.mrf.mxu0
      %4607 = vmatprep.mubr.f32.mxu0 0.0
      %4608 = vmatmul.mubr.f32.gmra.mxu0 %v4510
      %v4609 = vpop.f32.mrf.mxu0
      %v4610 = vadd.f32 0.0, %v4609
      %v4611 = vpop.f32.mrf.mxu0
      %4612 = vmatprep.mubr.f32.mxu0 0.0
      %4613 = vmatmul.mubr.f32.gmra.mxu0 %v4513
      %v4614 = vpop.f32.mrf.mxu0
      %v4615 = vadd.f32 0.0, %v4614
      %v4616 = vpop.f32.mrf.mxu0
      %4617 = vmatprep.mubr.f32.mxu0 0.0
      %4618 = vmatmul.mubr.f32.gmra.mxu0 %v4516
      %v4619 = vpop.f32.mrf.mxu0
      %v4620 = vadd.f32 0.0, %v4619
      %v4621 = vpop.f32.mrf.mxu0
      %4622 = vdwg.mxu0
      %v4623 = vadd.f32 %v4467, %v4585
      %v4624 = vadd.f32 %v4468, %v4590
      %v4625 = vadd.f32 %v4469, %v4595
      %v4626 = vadd.f32 %v4470, %v4600
      %v4627 = vadd.f32 %v4471, %v4605
      %v4628 = vadd.f32 %v4472, %v4610
      %v4629 = vadd.f32 %v4473, %v4615
      %v4630 = vadd.f32 %v4474, %v4620
      %s4631 = scalar_lea.vmem [#allocation3], 11
      %v4632 = vld [vmem:[%s4631] ss:$4 sm:$0xff]
      %s4633 = scalar_lea.vmem [#allocation3], 43
      %v4634 = vld [vmem:[%s4633] ss:$4 sm:$0xff]
      %s4635 = scalar_lea.vmem [#allocation3], 75
      %v4636 = vld [vmem:[%s4635] ss:$4 sm:$0xff]
      %s4637 = scalar_lea.vmem [#allocation3], 107
      %v4638 = vld [vmem:[%s4637] ss:$4 sm:$0xff]
      %s4639 = scalar_lea.vmem [#allocation3], 139
      %v4640 = vld [vmem:[%s4639] ss:$4 sm:$0xff]
      %s4641 = scalar_lea.vmem [#allocation3], 171
      %v4642 = vld [vmem:[%s4641] ss:$4 sm:$0xff]
      %s4643 = scalar_lea.vmem [#allocation3], 203
      %v4644 = vld [vmem:[%s4643] ss:$4 sm:$0xff]
      %s4645 = scalar_lea.vmem [#allocation3], 235
      %v4646 = vld [vmem:[%s4645] ss:$4 sm:$0xff]
      %s4647 = scalar_lea.vmem %s3, 96
      %v4648 = vld [vmem:[%s4647] sm:$0xff]
      %v4649 = vld [vmem:[%s4647 + $0x8] sm:$0xff]
      %v4651 = vsel %vm3667, %v4632, 0
      %v4654 = vsel %vm3667, %v4634, 0
      %v4657 = vsel %vm3667, %v4636, 0
      %v4660 = vsel %vm3667, %v4638, 0
      %v4663 = vsel %vm3667, %v4640, 0
      %v4666 = vsel %vm3667, %v4642, 0
      %v4669 = vsel %vm3667, %v4644, 0
      %v4672 = vsel %vm3667, %v4646, 0
      %4674 = vmatprep.subr.mxu0 0.0
      %4675 = vmatpush1.msra.mxu0 0.0
      %4676 = vmatprep.subr.mxu0 0.0
      %4677 = vmatpush1.msra.mxu0 0.0
      %4678 = vmatprep.subr.mxu0 0.0
      %4679 = vmatpush1.msra.mxu0 0.0
      %4680 = vmatprep.subr.mxu0 0.0
      %4681 = vmatpush1.msra.mxu0 0.0
      %4682 = vmatprep.subr.mxu0 0.0
      %4683 = vmatpush1.msra.mxu0 0.0
      %4684 = vmatprep.subr.mxu0 0.0
      %4685 = vmatpush1.msra.mxu0 0.0
      %4686 = vmatprep.subr.mxu0 0.0
      %4687 = vmatpush1.msra.mxu0 0.0
      %4688 = vmatprep.subr.mxu0 0.0
      %4689 = vmatpush1.msra.mxu0 0.0
      %4690 = vmatprep.subr.mxu0 0.0
      %4691 = vmatpush1.msra.mxu0 0.0
      %4692 = vmatprep.subr.mxu0 0.0
      %4693 = vmatpush1.msra.mxu0 0.0
      %4694 = vmatprep.subr.mxu0 0.0
      %4695 = vmatpush1.msra.mxu0 0.0
      %4696 = vmatprep.subr.mxu0 0.0
      %4697 = vmatpush1.msra.mxu0 0.0
      %4698 = vmatprep.subr.mxu0 0.0
      %4699 = vmatpush1.msra.mxu0 0.0
      %4700 = vmatprep.subr.mxu0 0.0
      %4701 = vmatpush1.msra.mxu0 0.0
      %4702 = vmatprep.subr.mxu0 0.0
      %4703 = vmatpush1.msra.mxu0 %v4649
      %4704 = vmatprep.subr.mxu0 0.0
      %4705 = vmatpush1.msra.mxu0 %v4648
      %4706 = vmatprep.subr.mxu0 0.0
      %4707 = vmatpush2.msra.mxu0 0.0
      %4708 = vmatprep.subr.mxu0 0.0
      %4709 = vmatpush2.msra.mxu0 0.0
      %4710 = vmatprep.subr.mxu0 0.0
      %4711 = vmatpush2.msra.mxu0 0.0
      %4712 = vmatprep.subr.mxu0 0.0
      %4713 = vmatpush2.msra.mxu0 0.0
      %4714 = vmatprep.subr.mxu0 0.0
      %4715 = vmatpush2.msra.mxu0 0.0
      %4716 = vmatprep.subr.mxu0 0.0
      %4717 = vmatpush2.msra.mxu0 0.0
      %4718 = vmatprep.subr.mxu0 0.0
      %4719 = vmatpush2.msra.mxu0 0.0
      %4720 = vmatprep.subr.mxu0 0.0
      %4721 = vmatpush2.msra.mxu0 0.0
      %4722 = vmatprep.subr.mxu0 0.0
      %4723 = vmatpush2.msra.mxu0 0.0
      %4724 = vmatprep.subr.mxu0 0.0
      %4725 = vmatpush2.msra.mxu0 0.0
      %4726 = vmatprep.subr.mxu0 0.0
      %4727 = vmatpush2.msra.mxu0 0.0
      %4728 = vmatprep.subr.mxu0 0.0
      %4729 = vmatpush2.msra.mxu0 0.0
      %4730 = vmatprep.subr.mxu0 0.0
      %4731 = vmatpush2.msra.mxu0 0.0
      %4732 = vmatprep.subr.mxu0 0.0
      %4733 = vmatpush2.msra.mxu0 0.0
      %4734 = vmatprep.subr.mxu0 0.0
      %4735 = vmatpush2.msra.mxu0 0.0
      %4736 = vmatprep.subr.mxu0 0.0
      %4737 = vmatpush2.msra.mxu0 0.0
      %4738 = vmatprep.mubr.f32.mxu0 0.0
      %4739 = vmatmul.mubr.f32.gmra.mxu0 %v4651
      %v4740 = vpop.f32.mrf.mxu0
      %v4741 = vadd.f32 0.0, %v4740
      %v4742 = vpop.f32.mrf.mxu0
      %4743 = vmatprep.mubr.f32.mxu0 0.0
      %4744 = vmatmul.mubr.f32.gmra.mxu0 %v4654
      %v4745 = vpop.f32.mrf.mxu0
      %v4746 = vadd.f32 0.0, %v4745
      %v4747 = vpop.f32.mrf.mxu0
      %4748 = vmatprep.mubr.f32.mxu0 0.0
      %4749 = vmatmul.mubr.f32.gmra.mxu0 %v4657
      %v4750 = vpop.f32.mrf.mxu0
      %v4751 = vadd.f32 0.0, %v4750
      %v4752 = vpop.f32.mrf.mxu0
      %4753 = vmatprep.mubr.f32.mxu0 0.0
      %4754 = vmatmul.mubr.f32.gmra.mxu0 %v4660
      %v4755 = vpop.f32.mrf.mxu0
      %v4756 = vadd.f32 0.0, %v4755
      %v4757 = vpop.f32.mrf.mxu0
      %4758 = vmatprep.mubr.f32.mxu0 0.0
      %4759 = vmatmul.mubr.f32.gmra.mxu0 %v4663
      %v4760 = vpop.f32.mrf.mxu0
      %v4761 = vadd.f32 0.0, %v4760
      %v4762 = vpop.f32.mrf.mxu0
      %4763 = vmatprep.mubr.f32.mxu0 0.0
      %4764 = vmatmul.mubr.f32.gmra.mxu0 %v4666
      %v4765 = vpop.f32.mrf.mxu0
      %v4766 = vadd.f32 0.0, %v4765
      %v4767 = vpop.f32.mrf.mxu0
      %4768 = vmatprep.mubr.f32.mxu0 0.0
      %4769 = vmatmul.mubr.f32.gmra.mxu0 %v4669
      %v4770 = vpop.f32.mrf.mxu0
      %v4771 = vadd.f32 0.0, %v4770
      %v4772 = vpop.f32.mrf.mxu0
      %4773 = vmatprep.mubr.f32.mxu0 0.0
      %4774 = vmatmul.mubr.f32.gmra.mxu0 %v4672
      %v4775 = vpop.f32.mrf.mxu0
      %v4776 = vadd.f32 0.0, %v4775
      %v4777 = vpop.f32.mrf.mxu0
      %4778 = vdwg.mxu0
      %v4779 = vadd.f32 %v4623, %v4741
      %v4780 = vadd.f32 %v4624, %v4746
      %v4781 = vadd.f32 %v4625, %v4751
      %v4782 = vadd.f32 %v4626, %v4756
      %v4783 = vadd.f32 %v4627, %v4761
      %v4784 = vadd.f32 %v4628, %v4766
      %v4785 = vadd.f32 %v4629, %v4771
      %v4786 = vadd.f32 %v4630, %v4776
      %v4787 = vld [vmem:[%s4] sm:$0x1]
      %v4789 = vlaneseq
      %v4790 = vshrl.u32 %v4789, 7
      %v4791 = vsub.s32 0, %v4790
      %v4792 = vrot.slane %v4787, %v4791
      %v4794 = vadd.f32 %v4779, %v4792
      %v4795 = vadd.f32 %v4780, %v4792
      %v4796 = vadd.f32 %v4781, %v4792
      %v4797 = vadd.f32 %v4782, %v4792
      %v4798 = vadd.f32 %v4783, %v4792
      %v4799 = vadd.f32 %v4784, %v4792
      %v4800 = vadd.f32 %v4785, %v4792
      %v4801 = vadd.f32 %v4786, %v4792
      %v4802 = vmax.f32 %v4794, 0.0
      %v4803 = vmax.f32 %v4795, 0.0
      %v4804 = vmax.f32 %v4796, 0.0
      %v4805 = vmax.f32 %v4797, 0.0
      %v4806 = vmax.f32 %v4798, 0.0
      %v4807 = vmax.f32 %v4799, 0.0
      %v4808 = vmax.f32 %v4800, 0.0
      %v4809 = vmax.f32 %v4801, 0.0
      %4810 = vst.msk [vmem:[#allocation4 + $0x8] sm:$0xff] %vm3667, %v4802
      %4811 = vst.msk [vmem:[#allocation4 + $0x10] sm:$0xff] %vm3667, %v4803
      %4812 = vst.msk [vmem:[#allocation4 + $0x18] sm:$0xff] %vm3667, %v4804
      %4813 = vst.msk [vmem:[#allocation4 + $0x20] sm:$0xff] %vm3667, %v4805
      %4814 = vst.msk [vmem:[#allocation4 + $0x28] sm:$0xff] %vm3667, %v4806
      %4815 = vst.msk [vmem:[#allocation4 + $0x30] sm:$0xff] %vm3667, %v4807
      %4816 = vst.msk [vmem:[#allocation4 + $0x38] sm:$0xff] %vm3667, %v4808
      %4817 = vst.msk [vmem:[#allocation4 + $0x40] sm:$0xff] %vm3667, %v4809
      %4818 = vst.msk [vmem:[#allocation4 + $0x6] sm:$0x2] %vm3700, %v4802
      %4819 = vst.msk [vmem:[#allocation4 + $0x4] sm:$0x4] %vm3702, %v4802
      %4820 = vst.msk [vmem:[#allocation4 + $0x2] sm:$0x8] %vm3704, %v4802
      %4821 = vst.msk [vmem:[#allocation4 + $0x42] sm:$0x40] %vm3706, %v4809
      %4822 = vst.msk [vmem:[#allocation4 + $0x44] sm:$0x20] %vm3708, %v4809
      %4823 = vst.msk [vmem:[#allocation4 + $0x46] sm:$0x10] %vm3710, %v4809
      %v4824 = vld [vmem:[#allocation4 + $0x5] sm:$0xff]
      %v4825 = vld [vmem:[#allocation4 + $0xd] sm:$0xff]
      %v4826 = vld [vmem:[#allocation4 + $0x15] sm:$0xff]
      %v4827 = vld [vmem:[#allocation4 + $0x1d] sm:$0xff]
      %v4828 = vld [vmem:[#allocation4 + $0x25] sm:$0xff]
      %v4829 = vld [vmem:[#allocation4 + $0x2d] sm:$0xff]
      %v4830 = vld [vmem:[#allocation4 + $0x35] sm:$0xff]
      %v4831 = vld [vmem:[#allocation4 + $0x3d] sm:$0xff]
      %v4832 = vld [vmem:[%s5] sm:$0xff]
      %v4833 = vld [vmem:[%s5 + $0x8] sm:$0xff]
      %v4834 = vld [vmem:[#allocation4 + $0x6] sm:$0xff]
      %v4835 = vld [vmem:[#allocation4 + $0xe] sm:$0xff]
      %v4836 = vld [vmem:[#allocation4 + $0x16] sm:$0xff]
      %v4837 = vld [vmem:[#allocation4 + $0x1e] sm:$0xff]
      %v4838 = vld [vmem:[#allocation4 + $0x26] sm:$0xff]
      %v4839 = vld [vmem:[#allocation4 + $0x2e] sm:$0xff]
      %v4840 = vld [vmem:[#allocation4 + $0x36] sm:$0xff]
      %v4841 = vld [vmem:[#allocation4 + $0x3e] sm:$0xff]
      %s4842 = scalar_lea.vmem %s5, 16
      %v4843 = vld [vmem:[%s4842] sm:$0xff]
      %v4844 = vld [vmem:[%s4842 + $0x8] sm:$0xff]
      %v4846 = vsel %vm3667, %v4834, 0
      %v4849 = vsel %vm3667, %v4835, 0
      %v4852 = vsel %vm3667, %v4836, 0
      %v4855 = vsel %vm3667, %v4837, 0
      %v4858 = vsel %vm3667, %v4838, 0
      %v4861 = vsel %vm3667, %v4839, 0
      %v4864 = vsel %vm3667, %v4840, 0
      %v4867 = vsel %vm3667, %v4841, 0
      %4869 = vmatprep.subr.mxu0 0.0
      %4870 = vmatpush1.msra.mxu0 0.0
      %4871 = vmatprep.subr.mxu0 0.0
      %4872 = vmatpush1.msra.mxu0 0.0
      %4873 = vmatprep.subr.mxu0 0.0
      %4874 = vmatpush1.msra.mxu0 0.0
      %4875 = vmatprep.subr.mxu0 0.0
      %4876 = vmatpush1.msra.mxu0 0.0
      %4877 = vmatprep.subr.mxu0 0.0
      %4878 = vmatpush1.msra.mxu0 0.0
      %4879 = vmatprep.subr.mxu0 0.0
      %4880 = vmatpush1.msra.mxu0 0.0
      %4881 = vmatprep.subr.mxu0 0.0
      %4882 = vmatpush1.msra.mxu0 0.0
      %4883 = vmatprep.subr.mxu0 0.0
      %4884 = vmatpush1.msra.mxu0 0.0
      %4885 = vmatprep.subr.mxu0 0.0
      %4886 = vmatpush1.msra.mxu0 0.0
      %4887 = vmatprep.subr.mxu0 0.0
      %4888 = vmatpush1.msra.mxu0 0.0
      %4889 = vmatprep.subr.mxu0 0.0
      %4890 = vmatpush1.msra.mxu0 0.0
      %4891 = vmatprep.subr.mxu0 0.0
      %4892 = vmatpush1.msra.mxu0 0.0
      %4893 = vmatprep.subr.mxu0 0.0
      %4894 = vmatpush1.msra.mxu0 0.0
      %4895 = vmatprep.subr.mxu0 0.0
      %4896 = vmatpush1.msra.mxu0 0.0
      %4897 = vmatprep.subr.mxu0 0.0
      %4898 = vmatpush1.msra.mxu0 %v4844
      %4899 = vmatprep.subr.mxu0 0.0
      %4900 = vmatpush1.msra.mxu0 %v4843
      %4901 = vmatprep.subr.mxu0 0.0
      %4902 = vmatpush2.msra.mxu0 0.0
      %4903 = vmatprep.subr.mxu0 0.0
      %4904 = vmatpush2.msra.mxu0 0.0
      %4905 = vmatprep.subr.mxu0 0.0
      %4906 = vmatpush2.msra.mxu0 0.0
      %4907 = vmatprep.subr.mxu0 0.0
      %4908 = vmatpush2.msra.mxu0 0.0
      %4909 = vmatprep.subr.mxu0 0.0
      %4910 = vmatpush2.msra.mxu0 0.0
      %4911 = vmatprep.subr.mxu0 0.0
      %4912 = vmatpush2.msra.mxu0 0.0
      %4913 = vmatprep.subr.mxu0 0.0
      %4914 = vmatpush2.msra.mxu0 0.0
      %4915 = vmatprep.subr.mxu0 0.0
      %4916 = vmatpush2.msra.mxu0 0.0
      %4917 = vmatprep.subr.mxu0 0.0
      %4918 = vmatpush2.msra.mxu0 0.0
      %4919 = vmatprep.subr.mxu0 0.0
      %4920 = vmatpush2.msra.mxu0 0.0
      %4921 = vmatprep.subr.mxu0 0.0
      %4922 = vmatpush2.msra.mxu0 0.0
      %4923 = vmatprep.subr.mxu0 0.0
      %4924 = vmatpush2.msra.mxu0 0.0
      %4925 = vmatprep.subr.mxu0 0.0
      %4926 = vmatpush2.msra.mxu0 0.0
      %4927 = vmatprep.subr.mxu0 0.0
      %4928 = vmatpush2.msra.mxu0 0.0
      %4929 = vmatprep.subr.mxu0 0.0
      %4930 = vmatpush2.msra.mxu0 0.0
      %4931 = vmatprep.subr.mxu0 0.0
      %4932 = vmatpush2.msra.mxu0 0.0
      %4933 = vmatprep.mubr.f32.mxu0 0.0
      %4934 = vmatmul.mubr.f32.gmra.mxu0 %v4846
      %v4935 = vpop.f32.mrf.mxu0
      %v4936 = vadd.f32 0.0, %v4935
      %v4937 = vpop.f32.mrf.mxu0
      %4938 = vmatprep.mubr.f32.mxu0 0.0
      %4939 = vmatmul.mubr.f32.gmra.mxu0 %v4849
      %v4940 = vpop.f32.mrf.mxu0
      %v4941 = vadd.f32 0.0, %v4940
      %v4942 = vpop.f32.mrf.mxu0
      %4943 = vmatprep.mubr.f32.mxu0 0.0
      %4944 = vmatmul.mubr.f32.gmra.mxu0 %v4852
      %v4945 = vpop.f32.mrf.mxu0
      %v4946 = vadd.f32 0.0, %v4945
      %v4947 = vpop.f32.mrf.mxu0
      %4948 = vmatprep.mubr.f32.mxu0 0.0
      %4949 = vmatmul.mubr.f32.gmra.mxu0 %v4855
      %v4950 = vpop.f32.mrf.mxu0
      %v4951 = vadd.f32 0.0, %v4950
      %v4952 = vpop.f32.mrf.mxu0
      %4953 = vmatprep.mubr.f32.mxu0 0.0
      %4954 = vmatmul.mubr.f32.gmra.mxu0 %v4858
      %v4955 = vpop.f32.mrf.mxu0
      %v4956 = vadd.f32 0.0, %v4955
      %v4957 = vpop.f32.mrf.mxu0
      %4958 = vmatprep.mubr.f32.mxu0 0.0
      %4959 = vmatmul.mubr.f32.gmra.mxu0 %v4861
      %v4960 = vpop.f32.mrf.mxu0
      %v4961 = vadd.f32 0.0, %v4960
      %v4962 = vpop.f32.mrf.mxu0
      %4963 = vmatprep.mubr.f32.mxu0 0.0
      %4964 = vmatmul.mubr.f32.gmra.mxu0 %v4864
      %v4965 = vpop.f32.mrf.mxu0
      %v4966 = vadd.f32 0.0, %v4965
      %v4967 = vpop.f32.mrf.mxu0
      %4968 = vmatprep.mubr.f32.mxu0 0.0
      %4969 = vmatmul.mubr.f32.gmra.mxu0 %v4867
      %v4970 = vpop.f32.mrf.mxu0
      %v4971 = vadd.f32 0.0, %v4970
      %v4972 = vpop.f32.mrf.mxu0
      %4973 = vdwg.mxu0
      %v4975 = vsel %vm3667, %v4824, 0
      %v4978 = vsel %vm3667, %v4825, 0
      %v4981 = vsel %vm3667, %v4826, 0
      %v4984 = vsel %vm3667, %v4827, 0
      %v4987 = vsel %vm3667, %v4828, 0
      %v4990 = vsel %vm3667, %v4829, 0
      %v4993 = vsel %vm3667, %v4830, 0
      %v4996 = vsel %vm3667, %v4831, 0
      %4998 = vmatprep.subr.mxu0 0.0
      %4999 = vmatpush1.msra.mxu0 0.0
      %5000 = vmatprep.subr.mxu0 0.0
      %5001 = vmatpush1.msra.mxu0 0.0
      %5002 = vmatprep.subr.mxu0 0.0
      %5003 = vmatpush1.msra.mxu0 0.0
      %5004 = vmatprep.subr.mxu0 0.0
      %5005 = vmatpush1.msra.mxu0 0.0
      %5006 = vmatprep.subr.mxu0 0.0
      %5007 = vmatpush1.msra.mxu0 0.0
      %5008 = vmatprep.subr.mxu0 0.0
      %5009 = vmatpush1.msra.mxu0 0.0
      %5010 = vmatprep.subr.mxu0 0.0
      %5011 = vmatpush1.msra.mxu0 0.0
      %5012 = vmatprep.subr.mxu0 0.0
      %5013 = vmatpush1.msra.mxu0 0.0
      %5014 = vmatprep.subr.mxu0 0.0
      %5015 = vmatpush1.msra.mxu0 0.0
      %5016 = vmatprep.subr.mxu0 0.0
      %5017 = vmatpush1.msra.mxu0 0.0
      %5018 = vmatprep.subr.mxu0 0.0
      %5019 = vmatpush1.msra.mxu0 0.0
      %5020 = vmatprep.subr.mxu0 0.0
      %5021 = vmatpush1.msra.mxu0 0.0
      %5022 = vmatprep.subr.mxu0 0.0
      %5023 = vmatpush1.msra.mxu0 0.0
      %5024 = vmatprep.subr.mxu0 0.0
      %5025 = vmatpush1.msra.mxu0 0.0
      %5026 = vmatprep.subr.mxu0 0.0
      %5027 = vmatpush1.msra.mxu0 %v4833
      %5028 = vmatprep.subr.mxu0 0.0
      %5029 = vmatpush1.msra.mxu0 %v4832
      %5030 = vmatprep.subr.mxu0 0.0
      %5031 = vmatpush2.msra.mxu0 0.0
      %5032 = vmatprep.subr.mxu0 0.0
      %5033 = vmatpush2.msra.mxu0 0.0
      %5034 = vmatprep.subr.mxu0 0.0
      %5035 = vmatpush2.msra.mxu0 0.0
      %5036 = vmatprep.subr.mxu0 0.0
      %5037 = vmatpush2.msra.mxu0 0.0
      %5038 = vmatprep.subr.mxu0 0.0
      %5039 = vmatpush2.msra.mxu0 0.0
      %5040 = vmatprep.subr.mxu0 0.0
      %5041 = vmatpush2.msra.mxu0 0.0
      %5042 = vmatprep.subr.mxu0 0.0
      %5043 = vmatpush2.msra.mxu0 0.0
      %5044 = vmatprep.subr.mxu0 0.0
      %5045 = vmatpush2.msra.mxu0 0.0
      %5046 = vmatprep.subr.mxu0 0.0
      %5047 = vmatpush2.msra.mxu0 0.0
      %5048 = vmatprep.subr.mxu0 0.0
      %5049 = vmatpush2.msra.mxu0 0.0
      %5050 = vmatprep.subr.mxu0 0.0
      %5051 = vmatpush2.msra.mxu0 0.0
      %5052 = vmatprep.subr.mxu0 0.0
      %5053 = vmatpush2.msra.mxu0 0.0
      %5054 = vmatprep.subr.mxu0 0.0
      %5055 = vmatpush2.msra.mxu0 0.0
      %5056 = vmatprep.subr.mxu0 0.0
      %5057 = vmatpush2.msra.mxu0 0.0
      %5058 = vmatprep.subr.mxu0 0.0
      %5059 = vmatpush2.msra.mxu0 0.0
      %5060 = vmatprep.subr.mxu0 0.0
      %5061 = vmatpush2.msra.mxu0 0.0
      %5062 = vmatprep.mubr.f32.mxu0 0.0
      %5063 = vmatmul.mubr.f32.gmra.mxu0 %v4975
      %v5064 = vpop.f32.mrf.mxu0
      %v5065 = vadd.f32 %v4936, %v5064
      %v5066 = vpop.f32.mrf.mxu0
      %5067 = vmatprep.mubr.f32.mxu0 0.0
      %5068 = vmatmul.mubr.f32.gmra.mxu0 %v4978
      %v5069 = vpop.f32.mrf.mxu0
      %v5070 = vadd.f32 %v4941, %v5069
      %v5071 = vpop.f32.mrf.mxu0
      %5072 = vmatprep.mubr.f32.mxu0 0.0
      %5073 = vmatmul.mubr.f32.gmra.mxu0 %v4981
      %v5074 = vpop.f32.mrf.mxu0
      %v5075 = vadd.f32 %v4946, %v5074
      %v5076 = vpop.f32.mrf.mxu0
      %5077 = vmatprep.mubr.f32.mxu0 0.0
      %5078 = vmatmul.mubr.f32.gmra.mxu0 %v4984
      %v5079 = vpop.f32.mrf.mxu0
      %v5080 = vadd.f32 %v4951, %v5079
      %v5081 = vpop.f32.mrf.mxu0
      %5082 = vmatprep.mubr.f32.mxu0 0.0
      %5083 = vmatmul.mubr.f32.gmra.mxu0 %v4987
      %v5084 = vpop.f32.mrf.mxu0
      %v5085 = vadd.f32 %v4956, %v5084
      %v5086 = vpop.f32.mrf.mxu0
      %5087 = vmatprep.mubr.f32.mxu0 0.0
      %5088 = vmatmul.mubr.f32.gmra.mxu0 %v4990
      %v5089 = vpop.f32.mrf.mxu0
      %v5090 = vadd.f32 %v4961, %v5089
      %v5091 = vpop.f32.mrf.mxu0
      %5092 = vmatprep.mubr.f32.mxu0 0.0
      %5093 = vmatmul.mubr.f32.gmra.mxu0 %v4993
      %v5094 = vpop.f32.mrf.mxu0
      %v5095 = vadd.f32 %v4966, %v5094
      %v5096 = vpop.f32.mrf.mxu0
      %5097 = vmatprep.mubr.f32.mxu0 0.0
      %5098 = vmatmul.mubr.f32.gmra.mxu0 %v4996
      %v5099 = vpop.f32.mrf.mxu0
      %v5100 = vadd.f32 %v4971, %v5099
      %v5101 = vpop.f32.mrf.mxu0
      %5102 = vdwg.mxu0
      %v5103 = vld [vmem:[#allocation4 + $0x7] sm:$0xff]
      %v5104 = vld [vmem:[#allocation4 + $0xf] sm:$0xff]
      %v5105 = vld [vmem:[#allocation4 + $0x17] sm:$0xff]
      %v5106 = vld [vmem:[#allocation4 + $0x1f] sm:$0xff]
      %v5107 = vld [vmem:[#allocation4 + $0x27] sm:$0xff]
      %v5108 = vld [vmem:[#allocation4 + $0x2f] sm:$0xff]
      %v5109 = vld [vmem:[#allocation4 + $0x37] sm:$0xff]
      %v5110 = vld [vmem:[#allocation4 + $0x3f] sm:$0xff]
      %s5111 = scalar_lea.vmem %s5, 32
      %v5112 = vld [vmem:[%s5111] sm:$0xff]
      %v5113 = vld [vmem:[%s5111 + $0x8] sm:$0xff]
      %v5115 = vsel %vm3667, %v5103, 0
      %v5118 = vsel %vm3667, %v5104, 0
      %v5121 = vsel %vm3667, %v5105, 0
      %v5124 = vsel %vm3667, %v5106, 0
      %v5127 = vsel %vm3667, %v5107, 0
      %v5130 = vsel %vm3667, %v5108, 0
      %v5133 = vsel %vm3667, %v5109, 0
      %v5136 = vsel %vm3667, %v5110, 0
      %5138 = vmatprep.subr.mxu0 0.0
      %5139 = vmatpush1.msra.mxu0 0.0
      %5140 = vmatprep.subr.mxu0 0.0
      %5141 = vmatpush1.msra.mxu0 0.0
      %5142 = vmatprep.subr.mxu0 0.0
      %5143 = vmatpush1.msra.mxu0 0.0
      %5144 = vmatprep.subr.mxu0 0.0
      %5145 = vmatpush1.msra.mxu0 0.0
      %5146 = vmatprep.subr.mxu0 0.0
      %5147 = vmatpush1.msra.mxu0 0.0
      %5148 = vmatprep.subr.mxu0 0.0
      %5149 = vmatpush1.msra.mxu0 0.0
      %5150 = vmatprep.subr.mxu0 0.0
      %5151 = vmatpush1.msra.mxu0 0.0
      %5152 = vmatprep.subr.mxu0 0.0
      %5153 = vmatpush1.msra.mxu0 0.0
      %5154 = vmatprep.subr.mxu0 0.0
      %5155 = vmatpush1.msra.mxu0 0.0
      %5156 = vmatprep.subr.mxu0 0.0
      %5157 = vmatpush1.msra.mxu0 0.0
      %5158 = vmatprep.subr.mxu0 0.0
      %5159 = vmatpush1.msra.mxu0 0.0
      %5160 = vmatprep.subr.mxu0 0.0
      %5161 = vmatpush1.msra.mxu0 0.0
      %5162 = vmatprep.subr.mxu0 0.0
      %5163 = vmatpush1.msra.mxu0 0.0
      %5164 = vmatprep.subr.mxu0 0.0
      %5165 = vmatpush1.msra.mxu0 0.0
      %5166 = vmatprep.subr.mxu0 0.0
      %5167 = vmatpush1.msra.mxu0 %v5113
      %5168 = vmatprep.subr.mxu0 0.0
      %5169 = vmatpush1.msra.mxu0 %v5112
      %5170 = vmatprep.subr.mxu0 0.0
      %5171 = vmatpush2.msra.mxu0 0.0
      %5172 = vmatprep.subr.mxu0 0.0
      %5173 = vmatpush2.msra.mxu0 0.0
      %5174 = vmatprep.subr.mxu0 0.0
      %5175 = vmatpush2.msra.mxu0 0.0
      %5176 = vmatprep.subr.mxu0 0.0
      %5177 = vmatpush2.msra.mxu0 0.0
      %5178 = vmatprep.subr.mxu0 0.0
      %5179 = vmatpush2.msra.mxu0 0.0
      %5180 = vmatprep.subr.mxu0 0.0
      %5181 = vmatpush2.msra.mxu0 0.0
      %5182 = vmatprep.subr.mxu0 0.0
      %5183 = vmatpush2.msra.mxu0 0.0
      %5184 = vmatprep.subr.mxu0 0.0
      %5185 = vmatpush2.msra.mxu0 0.0
      %5186 = vmatprep.subr.mxu0 0.0
      %5187 = vmatpush2.msra.mxu0 0.0
      %5188 = vmatprep.subr.mxu0 0.0
      %5189 = vmatpush2.msra.mxu0 0.0
      %5190 = vmatprep.subr.mxu0 0.0
      %5191 = vmatpush2.msra.mxu0 0.0
      %5192 = vmatprep.subr.mxu0 0.0
      %5193 = vmatpush2.msra.mxu0 0.0
      %5194 = vmatprep.subr.mxu0 0.0
      %5195 = vmatpush2.msra.mxu0 0.0
      %5196 = vmatprep.subr.mxu0 0.0
      %5197 = vmatpush2.msra.mxu0 0.0
      %5198 = vmatprep.subr.mxu0 0.0
      %5199 = vmatpush2.msra.mxu0 0.0
      %5200 = vmatprep.subr.mxu0 0.0
      %5201 = vmatpush2.msra.mxu0 0.0
      %5202 = vmatprep.mubr.f32.mxu0 0.0
      %5203 = vmatmul.mubr.f32.gmra.mxu0 %v5115
      %v5204 = vpop.f32.mrf.mxu0
      %v5205 = vadd.f32 0.0, %v5204
      %v5206 = vpop.f32.mrf.mxu0
      %5207 = vmatprep.mubr.f32.mxu0 0.0
      %5208 = vmatmul.mubr.f32.gmra.mxu0 %v5118
      %v5209 = vpop.f32.mrf.mxu0
      %v5210 = vadd.f32 0.0, %v5209
      %v5211 = vpop.f32.mrf.mxu0
      %5212 = vmatprep.mubr.f32.mxu0 0.0
      %5213 = vmatmul.mubr.f32.gmra.mxu0 %v5121
      %v5214 = vpop.f32.mrf.mxu0
      %v5215 = vadd.f32 0.0, %v5214
      %v5216 = vpop.f32.mrf.mxu0
      %5217 = vmatprep.mubr.f32.mxu0 0.0
      %5218 = vmatmul.mubr.f32.gmra.mxu0 %v5124
      %v5219 = vpop.f32.mrf.mxu0
      %v5220 = vadd.f32 0.0, %v5219
      %v5221 = vpop.f32.mrf.mxu0
      %5222 = vmatprep.mubr.f32.mxu0 0.0
      %5223 = vmatmul.mubr.f32.gmra.mxu0 %v5127
      %v5224 = vpop.f32.mrf.mxu0
      %v5225 = vadd.f32 0.0, %v5224
      %v5226 = vpop.f32.mrf.mxu0
      %5227 = vmatprep.mubr.f32.mxu0 0.0
      %5228 = vmatmul.mubr.f32.gmra.mxu0 %v5130
      %v5229 = vpop.f32.mrf.mxu0
      %v5230 = vadd.f32 0.0, %v5229
      %v5231 = vpop.f32.mrf.mxu0
      %5232 = vmatprep.mubr.f32.mxu0 0.0
      %5233 = vmatmul.mubr.f32.gmra.mxu0 %v5133
      %v5234 = vpop.f32.mrf.mxu0
      %v5235 = vadd.f32 0.0, %v5234
      %v5236 = vpop.f32.mrf.mxu0
      %5237 = vmatprep.mubr.f32.mxu0 0.0
      %5238 = vmatmul.mubr.f32.gmra.mxu0 %v5136
      %v5239 = vpop.f32.mrf.mxu0
      %v5240 = vadd.f32 0.0, %v5239
      %v5241 = vpop.f32.mrf.mxu0
      %5242 = vdwg.mxu0
      %v5243 = vadd.f32 %v5065, %v5205
      %v5244 = vadd.f32 %v5070, %v5210
      %v5245 = vadd.f32 %v5075, %v5215
      %v5246 = vadd.f32 %v5080, %v5220
      %v5247 = vadd.f32 %v5085, %v5225
      %v5248 = vadd.f32 %v5090, %v5230
      %v5249 = vadd.f32 %v5095, %v5235
      %v5250 = vadd.f32 %v5100, %v5240
      %v5251 = vld [vmem:[#allocation4 + $0x8] sm:$0xff]
      %v5252 = vld [vmem:[#allocation4 + $0x10] sm:$0xff]
      %v5253 = vld [vmem:[#allocation4 + $0x18] sm:$0xff]
      %v5254 = vld [vmem:[#allocation4 + $0x20] sm:$0xff]
      %v5255 = vld [vmem:[#allocation4 + $0x28] sm:$0xff]
      %v5256 = vld [vmem:[#allocation4 + $0x30] sm:$0xff]
      %v5257 = vld [vmem:[#allocation4 + $0x38] sm:$0xff]
      %v5258 = vld [vmem:[#allocation4 + $0x40] sm:$0xff]
      %s5259 = scalar_lea.vmem %s5, 48
      %v5260 = vld [vmem:[%s5259] sm:$0xff]
      %v5261 = vld [vmem:[%s5259 + $0x8] sm:$0xff]
      %v5263 = vsel %vm3667, %v5251, 0
      %v5266 = vsel %vm3667, %v5252, 0
      %v5269 = vsel %vm3667, %v5253, 0
      %v5272 = vsel %vm3667, %v5254, 0
      %v5275 = vsel %vm3667, %v5255, 0
      %v5278 = vsel %vm3667, %v5256, 0
      %v5281 = vsel %vm3667, %v5257, 0
      %v5284 = vsel %vm3667, %v5258, 0
      %5286 = vmatprep.subr.mxu0 0.0
      %5287 = vmatpush1.msra.mxu0 0.0
      %5288 = vmatprep.subr.mxu0 0.0
      %5289 = vmatpush1.msra.mxu0 0.0
      %5290 = vmatprep.subr.mxu0 0.0
      %5291 = vmatpush1.msra.mxu0 0.0
      %5292 = vmatprep.subr.mxu0 0.0
      %5293 = vmatpush1.msra.mxu0 0.0
      %5294 = vmatprep.subr.mxu0 0.0
      %5295 = vmatpush1.msra.mxu0 0.0
      %5296 = vmatprep.subr.mxu0 0.0
      %5297 = vmatpush1.msra.mxu0 0.0
      %5298 = vmatprep.subr.mxu0 0.0
      %5299 = vmatpush1.msra.mxu0 0.0
      %5300 = vmatprep.subr.mxu0 0.0
      %5301 = vmatpush1.msra.mxu0 0.0
      %5302 = vmatprep.subr.mxu0 0.0
      %5303 = vmatpush1.msra.mxu0 0.0
      %5304 = vmatprep.subr.mxu0 0.0
      %5305 = vmatpush1.msra.mxu0 0.0
      %5306 = vmatprep.subr.mxu0 0.0
      %5307 = vmatpush1.msra.mxu0 0.0
      %5308 = vmatprep.subr.mxu0 0.0
      %5309 = vmatpush1.msra.mxu0 0.0
      %5310 = vmatprep.subr.mxu0 0.0
      %5311 = vmatpush1.msra.mxu0 0.0
      %5312 = vmatprep.subr.mxu0 0.0
      %5313 = vmatpush1.msra.mxu0 0.0
      %5314 = vmatprep.subr.mxu0 0.0
      %5315 = vmatpush1.msra.mxu0 %v5261
      %5316 = vmatprep.subr.mxu0 0.0
      %5317 = vmatpush1.msra.mxu0 %v5260
      %5318 = vmatprep.subr.mxu0 0.0
      %5319 = vmatpush2.msra.mxu0 0.0
      %5320 = vmatprep.subr.mxu0 0.0
      %5321 = vmatpush2.msra.mxu0 0.0
      %5322 = vmatprep.subr.mxu0 0.0
      %5323 = vmatpush2.msra.mxu0 0.0
      %5324 = vmatprep.subr.mxu0 0.0
      %5325 = vmatpush2.msra.mxu0 0.0
      %5326 = vmatprep.subr.mxu0 0.0
      %5327 = vmatpush2.msra.mxu0 0.0
      %5328 = vmatprep.subr.mxu0 0.0
      %5329 = vmatpush2.msra.mxu0 0.0
      %5330 = vmatprep.subr.mxu0 0.0
      %5331 = vmatpush2.msra.mxu0 0.0
      %5332 = vmatprep.subr.mxu0 0.0
      %5333 = vmatpush2.msra.mxu0 0.0
      %5334 = vmatprep.subr.mxu0 0.0
      %5335 = vmatpush2.msra.mxu0 0.0
      %5336 = vmatprep.subr.mxu0 0.0
      %5337 = vmatpush2.msra.mxu0 0.0
      %5338 = vmatprep.subr.mxu0 0.0
      %5339 = vmatpush2.msra.mxu0 0.0
      %5340 = vmatprep.subr.mxu0 0.0
      %5341 = vmatpush2.msra.mxu0 0.0
      %5342 = vmatprep.subr.mxu0 0.0
      %5343 = vmatpush2.msra.mxu0 0.0
      %5344 = vmatprep.subr.mxu0 0.0
      %5345 = vmatpush2.msra.mxu0 0.0
      %5346 = vmatprep.subr.mxu0 0.0
      %5347 = vmatpush2.msra.mxu0 0.0
      %5348 = vmatprep.subr.mxu0 0.0
      %5349 = vmatpush2.msra.mxu0 0.0
      %5350 = vmatprep.mubr.f32.mxu0 0.0
      %5351 = vmatmul.mubr.f32.gmra.mxu0 %v5263
      %v5352 = vpop.f32.mrf.mxu0
      %v5353 = vadd.f32 0.0, %v5352
      %v5354 = vpop.f32.mrf.mxu0
      %5355 = vmatprep.mubr.f32.mxu0 0.0
      %5356 = vmatmul.mubr.f32.gmra.mxu0 %v5266
      %v5357 = vpop.f32.mrf.mxu0
      %v5358 = vadd.f32 0.0, %v5357
      %v5359 = vpop.f32.mrf.mxu0
      %5360 = vmatprep.mubr.f32.mxu0 0.0
      %5361 = vmatmul.mubr.f32.gmra.mxu0 %v5269
      %v5362 = vpop.f32.mrf.mxu0
      %v5363 = vadd.f32 0.0, %v5362
      %v5364 = vpop.f32.mrf.mxu0
      %5365 = vmatprep.mubr.f32.mxu0 0.0
      %5366 = vmatmul.mubr.f32.gmra.mxu0 %v5272
      %v5367 = vpop.f32.mrf.mxu0
      %v5368 = vadd.f32 0.0, %v5367
      %v5369 = vpop.f32.mrf.mxu0
      %5370 = vmatprep.mubr.f32.mxu0 0.0
      %5371 = vmatmul.mubr.f32.gmra.mxu0 %v5275
      %v5372 = vpop.f32.mrf.mxu0
      %v5373 = vadd.f32 0.0, %v5372
      %v5374 = vpop.f32.mrf.mxu0
      %5375 = vmatprep.mubr.f32.mxu0 0.0
      %5376 = vmatmul.mubr.f32.gmra.mxu0 %v5278
      %v5377 = vpop.f32.mrf.mxu0
      %v5378 = vadd.f32 0.0, %v5377
      %v5379 = vpop.f32.mrf.mxu0
      %5380 = vmatprep.mubr.f32.mxu0 0.0
      %5381 = vmatmul.mubr.f32.gmra.mxu0 %v5281
      %v5382 = vpop.f32.mrf.mxu0
      %v5383 = vadd.f32 0.0, %v5382
      %v5384 = vpop.f32.mrf.mxu0
      %5385 = vmatprep.mubr.f32.mxu0 0.0
      %5386 = vmatmul.mubr.f32.gmra.mxu0 %v5284
      %v5387 = vpop.f32.mrf.mxu0
      %v5388 = vadd.f32 0.0, %v5387
      %v5389 = vpop.f32.mrf.mxu0
      %5390 = vdwg.mxu0
      %v5391 = vadd.f32 %v5243, %v5353
      %v5392 = vadd.f32 %v5244, %v5358
      %v5393 = vadd.f32 %v5245, %v5363
      %v5394 = vadd.f32 %v5246, %v5368
      %v5395 = vadd.f32 %v5247, %v5373
      %v5396 = vadd.f32 %v5248, %v5378
      %v5397 = vadd.f32 %v5249, %v5383
      %v5398 = vadd.f32 %v5250, %v5388
      %v5399 = vld [vmem:[#allocation4 + $0x9] sm:$0xff]
      %v5400 = vld [vmem:[#allocation4 + $0x11] sm:$0xff]
      %v5401 = vld [vmem:[#allocation4 + $0x19] sm:$0xff]
      %v5402 = vld [vmem:[#allocation4 + $0x21] sm:$0xff]
      %v5403 = vld [vmem:[#allocation4 + $0x29] sm:$0xff]
      %v5404 = vld [vmem:[#allocation4 + $0x31] sm:$0xff]
      %v5405 = vld [vmem:[#allocation4 + $0x39] sm:$0xff]
      %v5406 = vld [vmem:[#allocation4 + $0x41] sm:$0xff]
      %s5407 = scalar_lea.vmem %s5, 64
      %v5408 = vld [vmem:[%s5407] sm:$0xff]
      %v5409 = vld [vmem:[%s5407 + $0x8] sm:$0xff]
      %v5411 = vsel %vm3667, %v5399, 0
      %v5414 = vsel %vm3667, %v5400, 0
      %v5417 = vsel %vm3667, %v5401, 0
      %v5420 = vsel %vm3667, %v5402, 0
      %v5423 = vsel %vm3667, %v5403, 0
      %v5426 = vsel %vm3667, %v5404, 0
      %v5429 = vsel %vm3667, %v5405, 0
      %v5432 = vsel %vm3667, %v5406, 0
      %5434 = vmatprep.subr.mxu0 0.0
      %5435 = vmatpush1.msra.mxu0 0.0
      %5436 = vmatprep.subr.mxu0 0.0
      %5437 = vmatpush1.msra.mxu0 0.0
      %5438 = vmatprep.subr.mxu0 0.0
      %5439 = vmatpush1.msra.mxu0 0.0
      %5440 = vmatprep.subr.mxu0 0.0
      %5441 = vmatpush1.msra.mxu0 0.0
      %5442 = vmatprep.subr.mxu0 0.0
      %5443 = vmatpush1.msra.mxu0 0.0
      %5444 = vmatprep.subr.mxu0 0.0
      %5445 = vmatpush1.msra.mxu0 0.0
      %5446 = vmatprep.subr.mxu0 0.0
      %5447 = vmatpush1.msra.mxu0 0.0
      %5448 = vmatprep.subr.mxu0 0.0
      %5449 = vmatpush1.msra.mxu0 0.0
      %5450 = vmatprep.subr.mxu0 0.0
      %5451 = vmatpush1.msra.mxu0 0.0
      %5452 = vmatprep.subr.mxu0 0.0
      %5453 = vmatpush1.msra.mxu0 0.0
      %5454 = vmatprep.subr.mxu0 0.0
      %5455 = vmatpush1.msra.mxu0 0.0
      %5456 = vmatprep.subr.mxu0 0.0
      %5457 = vmatpush1.msra.mxu0 0.0
      %5458 = vmatprep.subr.mxu0 0.0
      %5459 = vmatpush1.msra.mxu0 0.0
      %5460 = vmatprep.subr.mxu0 0.0
      %5461 = vmatpush1.msra.mxu0 0.0
      %5462 = vmatprep.subr.mxu0 0.0
      %5463 = vmatpush1.msra.mxu0 %v5409
      %5464 = vmatprep.subr.mxu0 0.0
      %5465 = vmatpush1.msra.mxu0 %v5408
      %5466 = vmatprep.subr.mxu0 0.0
      %5467 = vmatpush2.msra.mxu0 0.0
      %5468 = vmatprep.subr.mxu0 0.0
      %5469 = vmatpush2.msra.mxu0 0.0
      %5470 = vmatprep.subr.mxu0 0.0
      %5471 = vmatpush2.msra.mxu0 0.0
      %5472 = vmatprep.subr.mxu0 0.0
      %5473 = vmatpush2.msra.mxu0 0.0
      %5474 = vmatprep.subr.mxu0 0.0
      %5475 = vmatpush2.msra.mxu0 0.0
      %5476 = vmatprep.subr.mxu0 0.0
      %5477 = vmatpush2.msra.mxu0 0.0
      %5478 = vmatprep.subr.mxu0 0.0
      %5479 = vmatpush2.msra.mxu0 0.0
      %5480 = vmatprep.subr.mxu0 0.0
      %5481 = vmatpush2.msra.mxu0 0.0
      %5482 = vmatprep.subr.mxu0 0.0
      %5483 = vmatpush2.msra.mxu0 0.0
      %5484 = vmatprep.subr.mxu0 0.0
      %5485 = vmatpush2.msra.mxu0 0.0
      %5486 = vmatprep.subr.mxu0 0.0
      %5487 = vmatpush2.msra.mxu0 0.0
      %5488 = vmatprep.subr.mxu0 0.0
      %5489 = vmatpush2.msra.mxu0 0.0
      %5490 = vmatprep.subr.mxu0 0.0
      %5491 = vmatpush2.msra.mxu0 0.0
      %5492 = vmatprep.subr.mxu0 0.0
      %5493 = vmatpush2.msra.mxu0 0.0
      %5494 = vmatprep.subr.mxu0 0.0
      %5495 = vmatpush2.msra.mxu0 0.0
      %5496 = vmatprep.subr.mxu0 0.0
      %5497 = vmatpush2.msra.mxu0 0.0
      %5498 = vmatprep.mubr.f32.mxu0 0.0
      %5499 = vmatmul.mubr.f32.gmra.mxu0 %v5411
      %v5500 = vpop.f32.mrf.mxu0
      %v5501 = vadd.f32 0.0, %v5500
      %v5502 = vpop.f32.mrf.mxu0
      %5503 = vmatprep.mubr.f32.mxu0 0.0
      %5504 = vmatmul.mubr.f32.gmra.mxu0 %v5414
      %v5505 = vpop.f32.mrf.mxu0
      %v5506 = vadd.f32 0.0, %v5505
      %v5507 = vpop.f32.mrf.mxu0
      %5508 = vmatprep.mubr.f32.mxu0 0.0
      %5509 = vmatmul.mubr.f32.gmra.mxu0 %v5417
      %v5510 = vpop.f32.mrf.mxu0
      %v5511 = vadd.f32 0.0, %v5510
      %v5512 = vpop.f32.mrf.mxu0
      %5513 = vmatprep.mubr.f32.mxu0 0.0
      %5514 = vmatmul.mubr.f32.gmra.mxu0 %v5420
      %v5515 = vpop.f32.mrf.mxu0
      %v5516 = vadd.f32 0.0, %v5515
      %v5517 = vpop.f32.mrf.mxu0
      %5518 = vmatprep.mubr.f32.mxu0 0.0
      %5519 = vmatmul.mubr.f32.gmra.mxu0 %v5423
      %v5520 = vpop.f32.mrf.mxu0
      %v5521 = vadd.f32 0.0, %v5520
      %v5522 = vpop.f32.mrf.mxu0
      %5523 = vmatprep.mubr.f32.mxu0 0.0
      %5524 = vmatmul.mubr.f32.gmra.mxu0 %v5426
      %v5525 = vpop.f32.mrf.mxu0
      %v5526 = vadd.f32 0.0, %v5525
      %v5527 = vpop.f32.mrf.mxu0
      %5528 = vmatprep.mubr.f32.mxu0 0.0
      %5529 = vmatmul.mubr.f32.gmra.mxu0 %v5429
      %v5530 = vpop.f32.mrf.mxu0
      %v5531 = vadd.f32 0.0, %v5530
      %v5532 = vpop.f32.mrf.mxu0
      %5533 = vmatprep.mubr.f32.mxu0 0.0
      %5534 = vmatmul.mubr.f32.gmra.mxu0 %v5432
      %v5535 = vpop.f32.mrf.mxu0
      %v5536 = vadd.f32 0.0, %v5535
      %v5537 = vpop.f32.mrf.mxu0
      %5538 = vdwg.mxu0
      %v5539 = vadd.f32 %v5391, %v5501
      %v5540 = vadd.f32 %v5392, %v5506
      %v5541 = vadd.f32 %v5393, %v5511
      %v5542 = vadd.f32 %v5394, %v5516
      %v5543 = vadd.f32 %v5395, %v5521
      %v5544 = vadd.f32 %v5396, %v5526
      %v5545 = vadd.f32 %v5397, %v5531
      %v5546 = vadd.f32 %v5398, %v5536
      %v5547 = vld [vmem:[#allocation4 + $0xa] sm:$0xff]
      %v5548 = vld [vmem:[#allocation4 + $0x12] sm:$0xff]
      %v5549 = vld [vmem:[#allocation4 + $0x1a] sm:$0xff]
      %v5550 = vld [vmem:[#allocation4 + $0x22] sm:$0xff]
      %v5551 = vld [vmem:[#allocation4 + $0x2a] sm:$0xff]
      %v5552 = vld [vmem:[#allocation4 + $0x32] sm:$0xff]
      %v5553 = vld [vmem:[#allocation4 + $0x3a] sm:$0xff]
      %v5554 = vld [vmem:[#allocation4 + $0x42] sm:$0xff]
      %s5555 = scalar_lea.vmem %s5, 80
      %v5556 = vld [vmem:[%s5555] sm:$0xff]
      %v5557 = vld [vmem:[%s5555 + $0x8] sm:$0xff]
      %v5559 = vsel %vm3667, %v5547, 0
      %v5562 = vsel %vm3667, %v5548, 0
      %v5565 = vsel %vm3667, %v5549, 0
      %v5568 = vsel %vm3667, %v5550, 0
      %v5571 = vsel %vm3667, %v5551, 0
      %v5574 = vsel %vm3667, %v5552, 0
      %v5577 = vsel %vm3667, %v5553, 0
      %v5580 = vsel %vm3667, %v5554, 0
      %5582 = vmatprep.subr.mxu0 0.0
      %5583 = vmatpush1.msra.mxu0 0.0
      %5584 = vmatprep.subr.mxu0 0.0
      %5585 = vmatpush1.msra.mxu0 0.0
      %5586 = vmatprep.subr.mxu0 0.0
      %5587 = vmatpush1.msra.mxu0 0.0
      %5588 = vmatprep.subr.mxu0 0.0
      %5589 = vmatpush1.msra.mxu0 0.0
      %5590 = vmatprep.subr.mxu0 0.0
      %5591 = vmatpush1.msra.mxu0 0.0
      %5592 = vmatprep.subr.mxu0 0.0
      %5593 = vmatpush1.msra.mxu0 0.0
      %5594 = vmatprep.subr.mxu0 0.0
      %5595 = vmatpush1.msra.mxu0 0.0
      %5596 = vmatprep.subr.mxu0 0.0
      %5597 = vmatpush1.msra.mxu0 0.0
      %5598 = vmatprep.subr.mxu0 0.0
      %5599 = vmatpush1.msra.mxu0 0.0
      %5600 = vmatprep.subr.mxu0 0.0
      %5601 = vmatpush1.msra.mxu0 0.0
      %5602 = vmatprep.subr.mxu0 0.0
      %5603 = vmatpush1.msra.mxu0 0.0
      %5604 = vmatprep.subr.mxu0 0.0
      %5605 = vmatpush1.msra.mxu0 0.0
      %5606 = vmatprep.subr.mxu0 0.0
      %5607 = vmatpush1.msra.mxu0 0.0
      %5608 = vmatprep.subr.mxu0 0.0
      %5609 = vmatpush1.msra.mxu0 0.0
      %5610 = vmatprep.subr.mxu0 0.0
      %5611 = vmatpush1.msra.mxu0 %v5557
      %5612 = vmatprep.subr.mxu0 0.0
      %5613 = vmatpush1.msra.mxu0 %v5556
      %5614 = vmatprep.subr.mxu0 0.0
      %5615 = vmatpush2.msra.mxu0 0.0
      %5616 = vmatprep.subr.mxu0 0.0
      %5617 = vmatpush2.msra.mxu0 0.0
      %5618 = vmatprep.subr.mxu0 0.0
      %5619 = vmatpush2.msra.mxu0 0.0
      %5620 = vmatprep.subr.mxu0 0.0
      %5621 = vmatpush2.msra.mxu0 0.0
      %5622 = vmatprep.subr.mxu0 0.0
      %5623 = vmatpush2.msra.mxu0 0.0
      %5624 = vmatprep.subr.mxu0 0.0
      %5625 = vmatpush2.msra.mxu0 0.0
      %5626 = vmatprep.subr.mxu0 0.0
      %5627 = vmatpush2.msra.mxu0 0.0
      %5628 = vmatprep.subr.mxu0 0.0
      %5629 = vmatpush2.msra.mxu0 0.0
      %5630 = vmatprep.subr.mxu0 0.0
      %5631 = vmatpush2.msra.mxu0 0.0
      %5632 = vmatprep.subr.mxu0 0.0
      %5633 = vmatpush2.msra.mxu0 0.0
      %5634 = vmatprep.subr.mxu0 0.0
      %5635 = vmatpush2.msra.mxu0 0.0
      %5636 = vmatprep.subr.mxu0 0.0
      %5637 = vmatpush2.msra.mxu0 0.0
      %5638 = vmatprep.subr.mxu0 0.0
      %5639 = vmatpush2.msra.mxu0 0.0
      %5640 = vmatprep.subr.mxu0 0.0
      %5641 = vmatpush2.msra.mxu0 0.0
      %5642 = vmatprep.subr.mxu0 0.0
      %5643 = vmatpush2.msra.mxu0 0.0
      %5644 = vmatprep.subr.mxu0 0.0
      %5645 = vmatpush2.msra.mxu0 0.0
      %5646 = vmatprep.mubr.f32.mxu0 0.0
      %5647 = vmatmul.mubr.f32.gmra.mxu0 %v5559
      %v5648 = vpop.f32.mrf.mxu0
      %v5649 = vadd.f32 0.0, %v5648
      %v5650 = vpop.f32.mrf.mxu0
      %5651 = vmatprep.mubr.f32.mxu0 0.0
      %5652 = vmatmul.mubr.f32.gmra.mxu0 %v5562
      %v5653 = vpop.f32.mrf.mxu0
      %v5654 = vadd.f32 0.0, %v5653
      %v5655 = vpop.f32.mrf.mxu0
      %5656 = vmatprep.mubr.f32.mxu0 0.0
      %5657 = vmatmul.mubr.f32.gmra.mxu0 %v5565
      %v5658 = vpop.f32.mrf.mxu0
      %v5659 = vadd.f32 0.0, %v5658
      %v5660 = vpop.f32.mrf.mxu0
      %5661 = vmatprep.mubr.f32.mxu0 0.0
      %5662 = vmatmul.mubr.f32.gmra.mxu0 %v5568
      %v5663 = vpop.f32.mrf.mxu0
      %v5664 = vadd.f32 0.0, %v5663
      %v5665 = vpop.f32.mrf.mxu0
      %5666 = vmatprep.mubr.f32.mxu0 0.0
      %5667 = vmatmul.mubr.f32.gmra.mxu0 %v5571
      %v5668 = vpop.f32.mrf.mxu0
      %v5669 = vadd.f32 0.0, %v5668
      %v5670 = vpop.f32.mrf.mxu0
      %5671 = vmatprep.mubr.f32.mxu0 0.0
      %5672 = vmatmul.mubr.f32.gmra.mxu0 %v5574
      %v5673 = vpop.f32.mrf.mxu0
      %v5674 = vadd.f32 0.0, %v5673
      %v5675 = vpop.f32.mrf.mxu0
      %5676 = vmatprep.mubr.f32.mxu0 0.0
      %5677 = vmatmul.mubr.f32.gmra.mxu0 %v5577
      %v5678 = vpop.f32.mrf.mxu0
      %v5679 = vadd.f32 0.0, %v5678
      %v5680 = vpop.f32.mrf.mxu0
      %5681 = vmatprep.mubr.f32.mxu0 0.0
      %5682 = vmatmul.mubr.f32.gmra.mxu0 %v5580
      %v5683 = vpop.f32.mrf.mxu0
      %v5684 = vadd.f32 0.0, %v5683
      %v5685 = vpop.f32.mrf.mxu0
      %5686 = vdwg.mxu0
      %v5687 = vadd.f32 %v5539, %v5649
      %v5688 = vadd.f32 %v5540, %v5654
      %v5689 = vadd.f32 %v5541, %v5659
      %v5690 = vadd.f32 %v5542, %v5664
      %v5691 = vadd.f32 %v5543, %v5669
      %v5692 = vadd.f32 %v5544, %v5674
      %v5693 = vadd.f32 %v5545, %v5679
      %v5694 = vadd.f32 %v5546, %v5684
      %v5695 = vld [vmem:[#allocation4 + $0xb] sm:$0xff]
      %v5696 = vld [vmem:[#allocation4 + $0x13] sm:$0xff]
      %v5697 = vld [vmem:[#allocation4 + $0x1b] sm:$0xff]
      %v5698 = vld [vmem:[#allocation4 + $0x23] sm:$0xff]
      %v5699 = vld [vmem:[#allocation4 + $0x2b] sm:$0xff]
      %v5700 = vld [vmem:[#allocation4 + $0x33] sm:$0xff]
      %v5701 = vld [vmem:[#allocation4 + $0x3b] sm:$0xff]
      %v5702 = vld [vmem:[#allocation4 + $0x43] sm:$0xff]
      %s5703 = scalar_lea.vmem %s5, 96
      %v5704 = vld [vmem:[%s5703] sm:$0xff]
      %v5705 = vld [vmem:[%s5703 + $0x8] sm:$0xff]
      %v5707 = vsel %vm3667, %v5695, 0
      %v5710 = vsel %vm3667, %v5696, 0
      %v5713 = vsel %vm3667, %v5697, 0
      %v5716 = vsel %vm3667, %v5698, 0
      %v5719 = vsel %vm3667, %v5699, 0
      %v5722 = vsel %vm3667, %v5700, 0
      %v5725 = vsel %vm3667, %v5701, 0
      %v5728 = vsel %vm3667, %v5702, 0
      %5730 = vmatprep.subr.mxu0 0.0
      %5731 = vmatpush1.msra.mxu0 0.0
      %5732 = vmatprep.subr.mxu0 0.0
      %5733 = vmatpush1.msra.mxu0 0.0
      %5734 = vmatprep.subr.mxu0 0.0
      %5735 = vmatpush1.msra.mxu0 0.0
      %5736 = vmatprep.subr.mxu0 0.0
      %5737 = vmatpush1.msra.mxu0 0.0
      %5738 = vmatprep.subr.mxu0 0.0
      %5739 = vmatpush1.msra.mxu0 0.0
      %5740 = vmatprep.subr.mxu0 0.0
      %5741 = vmatpush1.msra.mxu0 0.0
      %5742 = vmatprep.subr.mxu0 0.0
      %5743 = vmatpush1.msra.mxu0 0.0
      %5744 = vmatprep.subr.mxu0 0.0
      %5745 = vmatpush1.msra.mxu0 0.0
      %5746 = vmatprep.subr.mxu0 0.0
      %5747 = vmatpush1.msra.mxu0 0.0
      %5748 = vmatprep.subr.mxu0 0.0
      %5749 = vmatpush1.msra.mxu0 0.0
      %5750 = vmatprep.subr.mxu0 0.0
      %5751 = vmatpush1.msra.mxu0 0.0
      %5752 = vmatprep.subr.mxu0 0.0
      %5753 = vmatpush1.msra.mxu0 0.0
      %5754 = vmatprep.subr.mxu0 0.0
      %5755 = vmatpush1.msra.mxu0 0.0
      %5756 = vmatprep.subr.mxu0 0.0
      %5757 = vmatpush1.msra.mxu0 0.0
      %5758 = vmatprep.subr.mxu0 0.0
      %5759 = vmatpush1.msra.mxu0 %v5705
      %5760 = vmatprep.subr.mxu0 0.0
      %5761 = vmatpush1.msra.mxu0 %v5704
      %5762 = vmatprep.subr.mxu0 0.0
      %5763 = vmatpush2.msra.mxu0 0.0
      %5764 = vmatprep.subr.mxu0 0.0
      %5765 = vmatpush2.msra.mxu0 0.0
      %5766 = vmatprep.subr.mxu0 0.0
      %5767 = vmatpush2.msra.mxu0 0.0
      %5768 = vmatprep.subr.mxu0 0.0
      %5769 = vmatpush2.msra.mxu0 0.0
      %5770 = vmatprep.subr.mxu0 0.0
      %5771 = vmatpush2.msra.mxu0 0.0
      %5772 = vmatprep.subr.mxu0 0.0
      %5773 = vmatpush2.msra.mxu0 0.0
      %5774 = vmatprep.subr.mxu0 0.0
      %5775 = vmatpush2.msra.mxu0 0.0
      %5776 = vmatprep.subr.mxu0 0.0
      %5777 = vmatpush2.msra.mxu0 0.0
      %5778 = vmatprep.subr.mxu0 0.0
      %5779 = vmatpush2.msra.mxu0 0.0
      %5780 = vmatprep.subr.mxu0 0.0
      %5781 = vmatpush2.msra.mxu0 0.0
      %5782 = vmatprep.subr.mxu0 0.0
      %5783 = vmatpush2.msra.mxu0 0.0
      %5784 = vmatprep.subr.mxu0 0.0
      %5785 = vmatpush2.msra.mxu0 0.0
      %5786 = vmatprep.subr.mxu0 0.0
      %5787 = vmatpush2.msra.mxu0 0.0
      %5788 = vmatprep.subr.mxu0 0.0
      %5789 = vmatpush2.msra.mxu0 0.0
      %5790 = vmatprep.subr.mxu0 0.0
      %5791 = vmatpush2.msra.mxu0 0.0
      %5792 = vmatprep.subr.mxu0 0.0
      %5793 = vmatpush2.msra.mxu0 0.0
      %5794 = vmatprep.mubr.f32.mxu0 0.0
      %5795 = vmatmul.mubr.f32.gmra.mxu0 %v5707
      %v5796 = vpop.f32.mrf.mxu0
      %v5797 = vadd.f32 0.0, %v5796
      %v5798 = vpop.f32.mrf.mxu0
      %5799 = vmatprep.mubr.f32.mxu0 0.0
      %5800 = vmatmul.mubr.f32.gmra.mxu0 %v5710
      %v5801 = vpop.f32.mrf.mxu0
      %v5802 = vadd.f32 0.0, %v5801
      %v5803 = vpop.f32.mrf.mxu0
      %5804 = vmatprep.mubr.f32.mxu0 0.0
      %5805 = vmatmul.mubr.f32.gmra.mxu0 %v5713
      %v5806 = vpop.f32.mrf.mxu0
      %v5807 = vadd.f32 0.0, %v5806
      %v5808 = vpop.f32.mrf.mxu0
      %5809 = vmatprep.mubr.f32.mxu0 0.0
      %5810 = vmatmul.mubr.f32.gmra.mxu0 %v5716
      %v5811 = vpop.f32.mrf.mxu0
      %v5812 = vadd.f32 0.0, %v5811
      %v5813 = vpop.f32.mrf.mxu0
      %5814 = vmatprep.mubr.f32.mxu0 0.0
      %5815 = vmatmul.mubr.f32.gmra.mxu0 %v5719
      %v5816 = vpop.f32.mrf.mxu0
      %v5817 = vadd.f32 0.0, %v5816
      %v5818 = vpop.f32.mrf.mxu0
      %5819 = vmatprep.mubr.f32.mxu0 0.0
      %5820 = vmatmul.mubr.f32.gmra.mxu0 %v5722
      %v5821 = vpop.f32.mrf.mxu0
      %v5822 = vadd.f32 0.0, %v5821
      %v5823 = vpop.f32.mrf.mxu0
      %5824 = vmatprep.mubr.f32.mxu0 0.0
      %5825 = vmatmul.mubr.f32.gmra.mxu0 %v5725
      %v5826 = vpop.f32.mrf.mxu0
      %v5827 = vadd.f32 0.0, %v5826
      %v5828 = vpop.f32.mrf.mxu0
      %5829 = vmatprep.mubr.f32.mxu0 0.0
      %5830 = vmatmul.mubr.f32.gmra.mxu0 %v5728
      %v5831 = vpop.f32.mrf.mxu0
      %v5832 = vadd.f32 0.0, %v5831
      %v5833 = vpop.f32.mrf.mxu0
      %5834 = vdwg.mxu0
      %v5835 = vadd.f32 %v5687, %v5797
      %v5836 = vadd.f32 %v5688, %v5802
      %v5837 = vadd.f32 %v5689, %v5807
      %v5838 = vadd.f32 %v5690, %v5812
      %v5839 = vadd.f32 %v5691, %v5817
      %v5840 = vadd.f32 %v5692, %v5822
      %v5841 = vadd.f32 %v5693, %v5827
      %v5842 = vadd.f32 %v5694, %v5832
      %v5843 = vld [vmem:[%s6] sm:$0x1]
      %v5845 = vlaneseq
      %v5846 = vshrl.u32 %v5845, 7
      %v5847 = vsub.s32 0, %v5846
      %v5848 = vrot.slane %v5843, %v5847
      %v5850 = vadd.f32 %v5835, %v5848
      %v5851 = vadd.f32 %v5836, %v5848
      %v5852 = vadd.f32 %v5837, %v5848
      %v5853 = vadd.f32 %v5838, %v5848
      %v5854 = vadd.f32 %v5839, %v5848
      %v5855 = vadd.f32 %v5840, %v5848
      %v5856 = vadd.f32 %v5841, %v5848
      %v5857 = vadd.f32 %v5842, %v5848
      %v5858 = vmax.f32 %v5850, 0.0
      %v5859 = vmax.f32 %v5851, 0.0
      %v5860 = vmax.f32 %v5852, 0.0
      %v5861 = vmax.f32 %v5853, 0.0
      %v5862 = vmax.f32 %v5854, 0.0
      %v5863 = vmax.f32 %v5855, 0.0
      %v5864 = vmax.f32 %v5856, 0.0
      %v5865 = vmax.f32 %v5857, 0.0
      %5866 = vst.msk [vmem:[#allocation5 + $0x8] sm:$0xff] %vm3667, %v5858
      %5867 = vst.msk [vmem:[#allocation5 + $0x10] sm:$0xff] %vm3667, %v5859
      %5868 = vst.msk [vmem:[#allocation5 + $0x18] sm:$0xff] %vm3667, %v5860
      %5869 = vst.msk [vmem:[#allocation5 + $0x20] sm:$0xff] %vm3667, %v5861
      %5870 = vst.msk [vmem:[#allocation5 + $0x28] sm:$0xff] %vm3667, %v5862
      %5871 = vst.msk [vmem:[#allocation5 + $0x30] sm:$0xff] %vm3667, %v5863
      %5872 = vst.msk [vmem:[#allocation5 + $0x38] sm:$0xff] %vm3667, %v5864
      %5873 = vst.msk [vmem:[#allocation5 + $0x40] sm:$0xff] %vm3667, %v5865
      %5874 = vst.msk [vmem:[#allocation5 + $0x6] sm:$0x2] %vm3700, %v5858
      %5875 = vst.msk [vmem:[#allocation5 + $0x4] sm:$0x4] %vm3702, %v5858
      %5876 = vst.msk [vmem:[#allocation5 + $0x2] sm:$0x8] %vm3704, %v5858
      %5877 = vst.msk [vmem:[#allocation5 + $0x42] sm:$0x40] %vm3706, %v5865
      %5878 = vst.msk [vmem:[#allocation5 + $0x44] sm:$0x20] %vm3708, %v5865
      %5879 = vst.msk [vmem:[#allocation5 + $0x46] sm:$0x10] %vm3710, %v5865
      %s5880 = scalar_lea.vmem [#allocation5], 5
      %v5881 = vld [vmem:[%s5880] ss:$4 sm:$0xff]
      %s5882 = scalar_lea.vmem [#allocation5], 37
      %v5883 = vld [vmem:[%s5882] ss:$4 sm:$0xff]
      %v5884 = vld [vmem:[%s7] sm:$0xff]
      %v5885 = vld [vmem:[%s7 + $0x8] sm:$0xff]
      %s5886 = scalar_lea.vmem [#allocation5], 6
      %v5887 = vld [vmem:[%s5886] ss:$4 sm:$0xff]
      %s5888 = scalar_lea.vmem [#allocation5], 38
      %v5889 = vld [vmem:[%s5888] ss:$4 sm:$0xff]
      %s5890 = scalar_lea.vmem %s7, 16
      %v5891 = vld [vmem:[%s5890] sm:$0xff]
      %v5892 = vld [vmem:[%s5890 + $0x8] sm:$0xff]
      %v5894 = vsel %vm3667, %v5887, 0
      %v5897 = vsel %vm3667, %v5889, 0
      %5899 = vmatprep.subr.mxu0 0.0
      %5900 = vmatpush1.msra.mxu0 0.0
      %5901 = vmatprep.subr.mxu0 0.0
      %5902 = vmatpush1.msra.mxu0 0.0
      %5903 = vmatprep.subr.mxu0 0.0
      %5904 = vmatpush1.msra.mxu0 0.0
      %5905 = vmatprep.subr.mxu0 0.0
      %5906 = vmatpush1.msra.mxu0 0.0
      %5907 = vmatprep.subr.mxu0 0.0
      %5908 = vmatpush1.msra.mxu0 0.0
      %5909 = vmatprep.subr.mxu0 0.0
      %5910 = vmatpush1.msra.mxu0 0.0
      %5911 = vmatprep.subr.mxu0 0.0
      %5912 = vmatpush1.msra.mxu0 0.0
      %5913 = vmatprep.subr.mxu0 0.0
      %5914 = vmatpush1.msra.mxu0 0.0
      %5915 = vmatprep.subr.mxu0 0.0
      %5916 = vmatpush1.msra.mxu0 0.0
      %5917 = vmatprep.subr.mxu0 0.0
      %5918 = vmatpush1.msra.mxu0 0.0
      %5919 = vmatprep.subr.mxu0 0.0
      %5920 = vmatpush1.msra.mxu0 0.0
      %5921 = vmatprep.subr.mxu0 0.0
      %5922 = vmatpush1.msra.mxu0 0.0
      %5923 = vmatprep.subr.mxu0 0.0
      %5924 = vmatpush1.msra.mxu0 0.0
      %5925 = vmatprep.subr.mxu0 0.0
      %5926 = vmatpush1.msra.mxu0 0.0
      %5927 = vmatprep.subr.mxu0 0.0
      %5928 = vmatpush1.msra.mxu0 %v5892
      %5929 = vmatprep.subr.mxu0 0.0
      %5930 = vmatpush1.msra.mxu0 %v5891
      %5931 = vmatprep.subr.mxu0 0.0
      %5932 = vmatpush2.msra.mxu0 0.0
      %5933 = vmatprep.subr.mxu0 0.0
      %5934 = vmatpush2.msra.mxu0 0.0
      %5935 = vmatprep.subr.mxu0 0.0
      %5936 = vmatpush2.msra.mxu0 0.0
      %5937 = vmatprep.subr.mxu0 0.0
      %5938 = vmatpush2.msra.mxu0 0.0
      %5939 = vmatprep.subr.mxu0 0.0
      %5940 = vmatpush2.msra.mxu0 0.0
      %5941 = vmatprep.subr.mxu0 0.0
      %5942 = vmatpush2.msra.mxu0 0.0
      %5943 = vmatprep.subr.mxu0 0.0
      %5944 = vmatpush2.msra.mxu0 0.0
      %5945 = vmatprep.subr.mxu0 0.0
      %5946 = vmatpush2.msra.mxu0 0.0
      %5947 = vmatprep.subr.mxu0 0.0
      %5948 = vmatpush2.msra.mxu0 0.0
      %5949 = vmatprep.subr.mxu0 0.0
      %5950 = vmatpush2.msra.mxu0 0.0
      %5951 = vmatprep.subr.mxu0 0.0
      %5952 = vmatpush2.msra.mxu0 0.0
      %5953 = vmatprep.subr.mxu0 0.0
      %5954 = vmatpush2.msra.mxu0 0.0
      %5955 = vmatprep.subr.mxu0 0.0
      %5956 = vmatpush2.msra.mxu0 0.0
      %5957 = vmatprep.subr.mxu0 0.0
      %5958 = vmatpush2.msra.mxu0 0.0
      %5959 = vmatprep.subr.mxu0 0.0
      %5960 = vmatpush2.msra.mxu0 0.0
      %5961 = vmatprep.subr.mxu0 0.0
      %5962 = vmatpush2.msra.mxu0 0.0
      %5963 = vmatprep.mubr.f32.mxu0 0.0
      %5964 = vmatmul.mubr.f32.gmra.mxu0 %v5894
      %v5965 = vpop.f32.mrf.mxu0
      %v5966 = vadd.f32 0.0, %v5965
      %v5967 = vpop.f32.mrf.mxu0
      %5968 = vmatprep.mubr.f32.mxu0 0.0
      %5969 = vmatmul.mubr.f32.gmra.mxu0 %v5897
      %v5970 = vpop.f32.mrf.mxu0
      %v5971 = vadd.f32 0.0, %v5970
      %v5972 = vpop.f32.mrf.mxu0
      %5973 = vdwg.mxu0
      %v5975 = vsel %vm3667, %v5881, 0
      %v5978 = vsel %vm3667, %v5883, 0
      %5980 = vmatprep.subr.mxu0 0.0
      %5981 = vmatpush1.msra.mxu0 0.0
      %5982 = vmatprep.subr.mxu0 0.0
      %5983 = vmatpush1.msra.mxu0 0.0
      %5984 = vmatprep.subr.mxu0 0.0
      %5985 = vmatpush1.msra.mxu0 0.0
      %5986 = vmatprep.subr.mxu0 0.0
      %5987 = vmatpush1.msra.mxu0 0.0
      %5988 = vmatprep.subr.mxu0 0.0
      %5989 = vmatpush1.msra.mxu0 0.0
      %5990 = vmatprep.subr.mxu0 0.0
      %5991 = vmatpush1.msra.mxu0 0.0
      %5992 = vmatprep.subr.mxu0 0.0
      %5993 = vmatpush1.msra.mxu0 0.0
      %5994 = vmatprep.subr.mxu0 0.0
      %5995 = vmatpush1.msra.mxu0 0.0
      %5996 = vmatprep.subr.mxu0 0.0
      %5997 = vmatpush1.msra.mxu0 0.0
      %5998 = vmatprep.subr.mxu0 0.0
      %5999 = vmatpush1.msra.mxu0 0.0
      %6000 = vmatprep.subr.mxu0 0.0
      %6001 = vmatpush1.msra.mxu0 0.0
      %6002 = vmatprep.subr.mxu0 0.0
      %6003 = vmatpush1.msra.mxu0 0.0
      %6004 = vmatprep.subr.mxu0 0.0
      %6005 = vmatpush1.msra.mxu0 0.0
      %6006 = vmatprep.subr.mxu0 0.0
      %6007 = vmatpush1.msra.mxu0 0.0
      %6008 = vmatprep.subr.mxu0 0.0
      %6009 = vmatpush1.msra.mxu0 %v5885
      %6010 = vmatprep.subr.mxu0 0.0
      %6011 = vmatpush1.msra.mxu0 %v5884
      %6012 = vmatprep.subr.mxu0 0.0
      %6013 = vmatpush2.msra.mxu0 0.0
      %6014 = vmatprep.subr.mxu0 0.0
      %6015 = vmatpush2.msra.mxu0 0.0
      %6016 = vmatprep.subr.mxu0 0.0
      %6017 = vmatpush2.msra.mxu0 0.0
      %6018 = vmatprep.subr.mxu0 0.0
      %6019 = vmatpush2.msra.mxu0 0.0
      %6020 = vmatprep.subr.mxu0 0.0
      %6021 = vmatpush2.msra.mxu0 0.0
      %6022 = vmatprep.subr.mxu0 0.0
      %6023 = vmatpush2.msra.mxu0 0.0
      %6024 = vmatprep.subr.mxu0 0.0
      %6025 = vmatpush2.msra.mxu0 0.0
      %6026 = vmatprep.subr.mxu0 0.0
      %6027 = vmatpush2.msra.mxu0 0.0
      %6028 = vmatprep.subr.mxu0 0.0
      %6029 = vmatpush2.msra.mxu0 0.0
      %6030 = vmatprep.subr.mxu0 0.0
      %6031 = vmatpush2.msra.mxu0 0.0
      %6032 = vmatprep.subr.mxu0 0.0
      %6033 = vmatpush2.msra.mxu0 0.0
      %6034 = vmatprep.subr.mxu0 0.0
      %6035 = vmatpush2.msra.mxu0 0.0
      %6036 = vmatprep.subr.mxu0 0.0
      %6037 = vmatpush2.msra.mxu0 0.0
      %6038 = vmatprep.subr.mxu0 0.0
      %6039 = vmatpush2.msra.mxu0 0.0
      %6040 = vmatprep.subr.mxu0 0.0
      %6041 = vmatpush2.msra.mxu0 0.0
      %6042 = vmatprep.subr.mxu0 0.0
      %6043 = vmatpush2.msra.mxu0 0.0
      %6044 = vmatprep.mubr.f32.mxu0 0.0
      %6045 = vmatmul.mubr.f32.gmra.mxu0 %v5975
      %v6046 = vpop.f32.mrf.mxu0
      %v6047 = vadd.f32 %v5966, %v6046
      %v6048 = vpop.f32.mrf.mxu0
      %6049 = vmatprep.mubr.f32.mxu0 0.0
      %6050 = vmatmul.mubr.f32.gmra.mxu0 %v5978
      %v6051 = vpop.f32.mrf.mxu0
      %v6052 = vadd.f32 %v5971, %v6051
      %v6053 = vpop.f32.mrf.mxu0
      %6054 = vdwg.mxu0
      %s6055 = scalar_lea.vmem [#allocation5], 7
      %v6056 = vld [vmem:[%s6055] ss:$4 sm:$0xff]
      %s6057 = scalar_lea.vmem [#allocation5], 39
      %v6058 = vld [vmem:[%s6057] ss:$4 sm:$0xff]
      %s6059 = scalar_lea.vmem %s7, 32
      %v6060 = vld [vmem:[%s6059] sm:$0xff]
      %v6061 = vld [vmem:[%s6059 + $0x8] sm:$0xff]
      %v6063 = vsel %vm3667, %v6056, 0
      %v6066 = vsel %vm3667, %v6058, 0
      %6068 = vmatprep.subr.mxu0 0.0
      %6069 = vmatpush1.msra.mxu0 0.0
      %6070 = vmatprep.subr.mxu0 0.0
      %6071 = vmatpush1.msra.mxu0 0.0
      %6072 = vmatprep.subr.mxu0 0.0
      %6073 = vmatpush1.msra.mxu0 0.0
      %6074 = vmatprep.subr.mxu0 0.0
      %6075 = vmatpush1.msra.mxu0 0.0
      %6076 = vmatprep.subr.mxu0 0.0
      %6077 = vmatpush1.msra.mxu0 0.0
      %6078 = vmatprep.subr.mxu0 0.0
      %6079 = vmatpush1.msra.mxu0 0.0
      %6080 = vmatprep.subr.mxu0 0.0
      %6081 = vmatpush1.msra.mxu0 0.0
      %6082 = vmatprep.subr.mxu0 0.0
      %6083 = vmatpush1.msra.mxu0 0.0
      %6084 = vmatprep.subr.mxu0 0.0
      %6085 = vmatpush1.msra.mxu0 0.0
      %6086 = vmatprep.subr.mxu0 0.0
      %6087 = vmatpush1.msra.mxu0 0.0
      %6088 = vmatprep.subr.mxu0 0.0
      %6089 = vmatpush1.msra.mxu0 0.0
      %6090 = vmatprep.subr.mxu0 0.0
      %6091 = vmatpush1.msra.mxu0 0.0
      %6092 = vmatprep.subr.mxu0 0.0
      %6093 = vmatpush1.msra.mxu0 0.0
      %6094 = vmatprep.subr.mxu0 0.0
      %6095 = vmatpush1.msra.mxu0 0.0
      %6096 = vmatprep.subr.mxu0 0.0
      %6097 = vmatpush1.msra.mxu0 %v6061
      %6098 = vmatprep.subr.mxu0 0.0
      %6099 = vmatpush1.msra.mxu0 %v6060
      %6100 = vmatprep.subr.mxu0 0.0
      %6101 = vmatpush2.msra.mxu0 0.0
      %6102 = vmatprep.subr.mxu0 0.0
      %6103 = vmatpush2.msra.mxu0 0.0
      %6104 = vmatprep.subr.mxu0 0.0
      %6105 = vmatpush2.msra.mxu0 0.0
      %6106 = vmatprep.subr.mxu0 0.0
      %6107 = vmatpush2.msra.mxu0 0.0
      %6108 = vmatprep.subr.mxu0 0.0
      %6109 = vmatpush2.msra.mxu0 0.0
      %6110 = vmatprep.subr.mxu0 0.0
      %6111 = vmatpush2.msra.mxu0 0.0
      %6112 = vmatprep.subr.mxu0 0.0
      %6113 = vmatpush2.msra.mxu0 0.0
      %6114 = vmatprep.subr.mxu0 0.0
      %6115 = vmatpush2.msra.mxu0 0.0
      %6116 = vmatprep.subr.mxu0 0.0
      %6117 = vmatpush2.msra.mxu0 0.0
      %6118 = vmatprep.subr.mxu0 0.0
      %6119 = vmatpush2.msra.mxu0 0.0
      %6120 = vmatprep.subr.mxu0 0.0
      %6121 = vmatpush2.msra.mxu0 0.0
      %6122 = vmatprep.subr.mxu0 0.0
      %6123 = vmatpush2.msra.mxu0 0.0
      %6124 = vmatprep.subr.mxu0 0.0
      %6125 = vmatpush2.msra.mxu0 0.0
      %6126 = vmatprep.subr.mxu0 0.0
      %6127 = vmatpush2.msra.mxu0 0.0
      %6128 = vmatprep.subr.mxu0 0.0
      %6129 = vmatpush2.msra.mxu0 0.0
      %6130 = vmatprep.subr.mxu0 0.0
      %6131 = vmatpush2.msra.mxu0 0.0
      %6132 = vmatprep.mubr.f32.mxu0 0.0
      %6133 = vmatmul.mubr.f32.gmra.mxu0 %v6063
      %v6134 = vpop.f32.mrf.mxu0
      %v6135 = vadd.f32 0.0, %v6134
      %v6136 = vpop.f32.mrf.mxu0
      %6137 = vmatprep.mubr.f32.mxu0 0.0
      %6138 = vmatmul.mubr.f32.gmra.mxu0 %v6066
      %v6139 = vpop.f32.mrf.mxu0
      %v6140 = vadd.f32 0.0, %v6139
      %v6141 = vpop.f32.mrf.mxu0
      %6142 = vdwg.mxu0
      %v6143 = vadd.f32 %v6047, %v6135
      %v6144 = vadd.f32 %v6052, %v6140
      %s6145 = scalar_lea.vmem [#allocation5], 8
      %v6146 = vld [vmem:[%s6145] ss:$4 sm:$0xff]
      %s6147 = scalar_lea.vmem [#allocation5], 40
      %v6148 = vld [vmem:[%s6147] ss:$4 sm:$0xff]
      %s6149 = scalar_lea.vmem %s7, 48
      %v6150 = vld [vmem:[%s6149] sm:$0xff]
      %v6151 = vld [vmem:[%s6149 + $0x8] sm:$0xff]
      %v6153 = vsel %vm3667, %v6146, 0
      %v6156 = vsel %vm3667, %v6148, 0
      %6158 = vmatprep.subr.mxu0 0.0
      %6159 = vmatpush1.msra.mxu0 0.0
      %6160 = vmatprep.subr.mxu0 0.0
      %6161 = vmatpush1.msra.mxu0 0.0
      %6162 = vmatprep.subr.mxu0 0.0
      %6163 = vmatpush1.msra.mxu0 0.0
      %6164 = vmatprep.subr.mxu0 0.0
      %6165 = vmatpush1.msra.mxu0 0.0
      %6166 = vmatprep.subr.mxu0 0.0
      %6167 = vmatpush1.msra.mxu0 0.0
      %6168 = vmatprep.subr.mxu0 0.0
      %6169 = vmatpush1.msra.mxu0 0.0
      %6170 = vmatprep.subr.mxu0 0.0
      %6171 = vmatpush1.msra.mxu0 0.0
      %6172 = vmatprep.subr.mxu0 0.0
      %6173 = vmatpush1.msra.mxu0 0.0
      %6174 = vmatprep.subr.mxu0 0.0
      %6175 = vmatpush1.msra.mxu0 0.0
      %6176 = vmatprep.subr.mxu0 0.0
      %6177 = vmatpush1.msra.mxu0 0.0
      %6178 = vmatprep.subr.mxu0 0.0
      %6179 = vmatpush1.msra.mxu0 0.0
      %6180 = vmatprep.subr.mxu0 0.0
      %6181 = vmatpush1.msra.mxu0 0.0
      %6182 = vmatprep.subr.mxu0 0.0
      %6183 = vmatpush1.msra.mxu0 0.0
      %6184 = vmatprep.subr.mxu0 0.0
      %6185 = vmatpush1.msra.mxu0 0.0
      %6186 = vmatprep.subr.mxu0 0.0
      %6187 = vmatpush1.msra.mxu0 %v6151
      %6188 = vmatprep.subr.mxu0 0.0
      %6189 = vmatpush1.msra.mxu0 %v6150
      %6190 = vmatprep.subr.mxu0 0.0
      %6191 = vmatpush2.msra.mxu0 0.0
      %6192 = vmatprep.subr.mxu0 0.0
      %6193 = vmatpush2.msra.mxu0 0.0
      %6194 = vmatprep.subr.mxu0 0.0
      %6195 = vmatpush2.msra.mxu0 0.0
      %6196 = vmatprep.subr.mxu0 0.0
      %6197 = vmatpush2.msra.mxu0 0.0
      %6198 = vmatprep.subr.mxu0 0.0
      %6199 = vmatpush2.msra.mxu0 0.0
      %6200 = vmatprep.subr.mxu0 0.0
      %6201 = vmatpush2.msra.mxu0 0.0
      %6202 = vmatprep.subr.mxu0 0.0
      %6203 = vmatpush2.msra.mxu0 0.0
      %6204 = vmatprep.subr.mxu0 0.0
      %6205 = vmatpush2.msra.mxu0 0.0
      %6206 = vmatprep.subr.mxu0 0.0
      %6207 = vmatpush2.msra.mxu0 0.0
      %6208 = vmatprep.subr.mxu0 0.0
      %6209 = vmatpush2.msra.mxu0 0.0
      %6210 = vmatprep.subr.mxu0 0.0
      %6211 = vmatpush2.msra.mxu0 0.0
      %6212 = vmatprep.subr.mxu0 0.0
      %6213 = vmatpush2.msra.mxu0 0.0
      %6214 = vmatprep.subr.mxu0 0.0
      %6215 = vmatpush2.msra.mxu0 0.0
      %6216 = vmatprep.subr.mxu0 0.0
      %6217 = vmatpush2.msra.mxu0 0.0
      %6218 = vmatprep.subr.mxu0 0.0
      %6219 = vmatpush2.msra.mxu0 0.0
      %6220 = vmatprep.subr.mxu0 0.0
      %6221 = vmatpush2.msra.mxu0 0.0
      %6222 = vmatprep.mubr.f32.mxu0 0.0
      %6223 = vmatmul.mubr.f32.gmra.mxu0 %v6153
      %v6224 = vpop.f32.mrf.mxu0
      %v6225 = vadd.f32 0.0, %v6224
      %v6226 = vpop.f32.mrf.mxu0
      %6227 = vmatprep.mubr.f32.mxu0 0.0
      %6228 = vmatmul.mubr.f32.gmra.mxu0 %v6156
      %v6229 = vpop.f32.mrf.mxu0
      %v6230 = vadd.f32 0.0, %v6229
      %v6231 = vpop.f32.mrf.mxu0
      %6232 = vdwg.mxu0
      %v6233 = vadd.f32 %v6143, %v6225
      %v6234 = vadd.f32 %v6144, %v6230
      %s6235 = scalar_lea.vmem [#allocation5], 9
      %v6236 = vld [vmem:[%s6235] ss:$4 sm:$0xff]
      %s6237 = scalar_lea.vmem [#allocation5], 41
      %v6238 = vld [vmem:[%s6237] ss:$4 sm:$0xff]
      %s6239 = scalar_lea.vmem %s7, 64
      %v6240 = vld [vmem:[%s6239] sm:$0xff]
      %v6241 = vld [vmem:[%s6239 + $0x8] sm:$0xff]
      %v6243 = vsel %vm3667, %v6236, 0
      %v6246 = vsel %vm3667, %v6238, 0
      %6248 = vmatprep.subr.mxu0 0.0
      %6249 = vmatpush1.msra.mxu0 0.0
      %6250 = vmatprep.subr.mxu0 0.0
      %6251 = vmatpush1.msra.mxu0 0.0
      %6252 = vmatprep.subr.mxu0 0.0
      %6253 = vmatpush1.msra.mxu0 0.0
      %6254 = vmatprep.subr.mxu0 0.0
      %6255 = vmatpush1.msra.mxu0 0.0
      %6256 = vmatprep.subr.mxu0 0.0
      %6257 = vmatpush1.msra.mxu0 0.0
      %6258 = vmatprep.subr.mxu0 0.0
      %6259 = vmatpush1.msra.mxu0 0.0
      %6260 = vmatprep.subr.mxu0 0.0
      %6261 = vmatpush1.msra.mxu0 0.0
      %6262 = vmatprep.subr.mxu0 0.0
      %6263 = vmatpush1.msra.mxu0 0.0
      %6264 = vmatprep.subr.mxu0 0.0
      %6265 = vmatpush1.msra.mxu0 0.0
      %6266 = vmatprep.subr.mxu0 0.0
      %6267 = vmatpush1.msra.mxu0 0.0
      %6268 = vmatprep.subr.mxu0 0.0
      %6269 = vmatpush1.msra.mxu0 0.0
      %6270 = vmatprep.subr.mxu0 0.0
      %6271 = vmatpush1.msra.mxu0 0.0
      %6272 = vmatprep.subr.mxu0 0.0
      %6273 = vmatpush1.msra.mxu0 0.0
      %6274 = vmatprep.subr.mxu0 0.0
      %6275 = vmatpush1.msra.mxu0 0.0
      %6276 = vmatprep.subr.mxu0 0.0
      %6277 = vmatpush1.msra.mxu0 %v6241
      %6278 = vmatprep.subr.mxu0 0.0
      %6279 = vmatpush1.msra.mxu0 %v6240
      %6280 = vmatprep.subr.mxu0 0.0
      %6281 = vmatpush2.msra.mxu0 0.0
      %6282 = vmatprep.subr.mxu0 0.0
      %6283 = vmatpush2.msra.mxu0 0.0
      %6284 = vmatprep.subr.mxu0 0.0
      %6285 = vmatpush2.msra.mxu0 0.0
      %6286 = vmatprep.subr.mxu0 0.0
      %6287 = vmatpush2.msra.mxu0 0.0
      %6288 = vmatprep.subr.mxu0 0.0
      %6289 = vmatpush2.msra.mxu0 0.0
      %6290 = vmatprep.subr.mxu0 0.0
      %6291 = vmatpush2.msra.mxu0 0.0
      %6292 = vmatprep.subr.mxu0 0.0
      %6293 = vmatpush2.msra.mxu0 0.0
      %6294 = vmatprep.subr.mxu0 0.0
      %6295 = vmatpush2.msra.mxu0 0.0
      %6296 = vmatprep.subr.mxu0 0.0
      %6297 = vmatpush2.msra.mxu0 0.0
      %6298 = vmatprep.subr.mxu0 0.0
      %6299 = vmatpush2.msra.mxu0 0.0
      %6300 = vmatprep.subr.mxu0 0.0
      %6301 = vmatpush2.msra.mxu0 0.0
      %6302 = vmatprep.subr.mxu0 0.0
      %6303 = vmatpush2.msra.mxu0 0.0
      %6304 = vmatprep.subr.mxu0 0.0
      %6305 = vmatpush2.msra.mxu0 0.0
      %6306 = vmatprep.subr.mxu0 0.0
      %6307 = vmatpush2.msra.mxu0 0.0
      %6308 = vmatprep.subr.mxu0 0.0
      %6309 = vmatpush2.msra.mxu0 0.0
      %6310 = vmatprep.subr.mxu0 0.0
      %6311 = vmatpush2.msra.mxu0 0.0
      %6312 = vmatprep.mubr.f32.mxu0 0.0
      %6313 = vmatmul.mubr.f32.gmra.mxu0 %v6243
      %v6314 = vpop.f32.mrf.mxu0
      %v6315 = vadd.f32 0.0, %v6314
      %v6316 = vpop.f32.mrf.mxu0
      %6317 = vmatprep.mubr.f32.mxu0 0.0
      %6318 = vmatmul.mubr.f32.gmra.mxu0 %v6246
      %v6319 = vpop.f32.mrf.mxu0
      %v6320 = vadd.f32 0.0, %v6319
      %v6321 = vpop.f32.mrf.mxu0
      %6322 = vdwg.mxu0
      %v6323 = vadd.f32 %v6233, %v6315
      %v6324 = vadd.f32 %v6234, %v6320
      %s6325 = scalar_lea.vmem [#allocation5], 10
      %v6326 = vld [vmem:[%s6325] ss:$4 sm:$0xff]
      %s6327 = scalar_lea.vmem [#allocation5], 42
      %v6328 = vld [vmem:[%s6327] ss:$4 sm:$0xff]
      %s6329 = scalar_lea.vmem %s7, 80
      %v6330 = vld [vmem:[%s6329] sm:$0xff]
      %v6331 = vld [vmem:[%s6329 + $0x8] sm:$0xff]
      %v6333 = vsel %vm3667, %v6326, 0
      %v6336 = vsel %vm3667, %v6328, 0
      %6338 = vmatprep.subr.mxu0 0.0
      %6339 = vmatpush1.msra.mxu0 0.0
      %6340 = vmatprep.subr.mxu0 0.0
      %6341 = vmatpush1.msra.mxu0 0.0
      %6342 = vmatprep.subr.mxu0 0.0
      %6343 = vmatpush1.msra.mxu0 0.0
      %6344 = vmatprep.subr.mxu0 0.0
      %6345 = vmatpush1.msra.mxu0 0.0
      %6346 = vmatprep.subr.mxu0 0.0
      %6347 = vmatpush1.msra.mxu0 0.0
      %6348 = vmatprep.subr.mxu0 0.0
      %6349 = vmatpush1.msra.mxu0 0.0
      %6350 = vmatprep.subr.mxu0 0.0
      %6351 = vmatpush1.msra.mxu0 0.0
      %6352 = vmatprep.subr.mxu0 0.0
      %6353 = vmatpush1.msra.mxu0 0.0
      %6354 = vmatprep.subr.mxu0 0.0
      %6355 = vmatpush1.msra.mxu0 0.0
      %6356 = vmatprep.subr.mxu0 0.0
      %6357 = vmatpush1.msra.mxu0 0.0
      %6358 = vmatprep.subr.mxu0 0.0
      %6359 = vmatpush1.msra.mxu0 0.0
      %6360 = vmatprep.subr.mxu0 0.0
      %6361 = vmatpush1.msra.mxu0 0.0
      %6362 = vmatprep.subr.mxu0 0.0
      %6363 = vmatpush1.msra.mxu0 0.0
      %6364 = vmatprep.subr.mxu0 0.0
      %6365 = vmatpush1.msra.mxu0 0.0
      %6366 = vmatprep.subr.mxu0 0.0
      %6367 = vmatpush1.msra.mxu0 %v6331
      %6368 = vmatprep.subr.mxu0 0.0
      %6369 = vmatpush1.msra.mxu0 %v6330
      %6370 = vmatprep.subr.mxu0 0.0
      %6371 = vmatpush2.msra.mxu0 0.0
      %6372 = vmatprep.subr.mxu0 0.0
      %6373 = vmatpush2.msra.mxu0 0.0
      %6374 = vmatprep.subr.mxu0 0.0
      %6375 = vmatpush2.msra.mxu0 0.0
      %6376 = vmatprep.subr.mxu0 0.0
      %6377 = vmatpush2.msra.mxu0 0.0
      %6378 = vmatprep.subr.mxu0 0.0
      %6379 = vmatpush2.msra.mxu0 0.0
      %6380 = vmatprep.subr.mxu0 0.0
      %6381 = vmatpush2.msra.mxu0 0.0
      %6382 = vmatprep.subr.mxu0 0.0
      %6383 = vmatpush2.msra.mxu0 0.0
      %6384 = vmatprep.subr.mxu0 0.0
      %6385 = vmatpush2.msra.mxu0 0.0
      %6386 = vmatprep.subr.mxu0 0.0
      %6387 = vmatpush2.msra.mxu0 0.0
      %6388 = vmatprep.subr.mxu0 0.0
      %6389 = vmatpush2.msra.mxu0 0.0
      %6390 = vmatprep.subr.mxu0 0.0
      %6391 = vmatpush2.msra.mxu0 0.0
      %6392 = vmatprep.subr.mxu0 0.0
      %6393 = vmatpush2.msra.mxu0 0.0
      %6394 = vmatprep.subr.mxu0 0.0
      %6395 = vmatpush2.msra.mxu0 0.0
      %6396 = vmatprep.subr.mxu0 0.0
      %6397 = vmatpush2.msra.mxu0 0.0
      %6398 = vmatprep.subr.mxu0 0.0
      %6399 = vmatpush2.msra.mxu0 0.0
      %6400 = vmatprep.subr.mxu0 0.0
      %6401 = vmatpush2.msra.mxu0 0.0
      %6402 = vmatprep.mubr.f32.mxu0 0.0
      %6403 = vmatmul.mubr.f32.gmra.mxu0 %v6333
      %v6404 = vpop.f32.mrf.mxu0
      %v6405 = vadd.f32 0.0, %v6404
      %v6406 = vpop.f32.mrf.mxu0
      %6407 = vmatprep.mubr.f32.mxu0 0.0
      %6408 = vmatmul.mubr.f32.gmra.mxu0 %v6336
      %v6409 = vpop.f32.mrf.mxu0
      %v6410 = vadd.f32 0.0, %v6409
      %v6411 = vpop.f32.mrf.mxu0
      %6412 = vdwg.mxu0
      %v6413 = vadd.f32 %v6323, %v6405
      %v6414 = vadd.f32 %v6324, %v6410
      %s6415 = scalar_lea.vmem [#allocation5], 11
      %v6416 = vld [vmem:[%s6415] ss:$4 sm:$0xff]
      %s6417 = scalar_lea.vmem [#allocation5], 43
      %v6418 = vld [vmem:[%s6417] ss:$4 sm:$0xff]
      %s6419 = scalar_lea.vmem %s7, 96
      %v6420 = vld [vmem:[%s6419] sm:$0xff]
      %v6421 = vld [vmem:[%s6419 + $0x8] sm:$0xff]
      %v6423 = vsel %vm3667, %v6416, 0
      %v6426 = vsel %vm3667, %v6418, 0
      %6428 = vmatprep.subr.mxu0 0.0
      %6429 = vmatpush1.msra.mxu0 0.0
      %6430 = vmatprep.subr.mxu0 0.0
      %6431 = vmatpush1.msra.mxu0 0.0
      %6432 = vmatprep.subr.mxu0 0.0
      %6433 = vmatpush1.msra.mxu0 0.0
      %6434 = vmatprep.subr.mxu0 0.0
      %6435 = vmatpush1.msra.mxu0 0.0
      %6436 = vmatprep.subr.mxu0 0.0
      %6437 = vmatpush1.msra.mxu0 0.0
      %6438 = vmatprep.subr.mxu0 0.0
      %6439 = vmatpush1.msra.mxu0 0.0
      %6440 = vmatprep.subr.mxu0 0.0
      %6441 = vmatpush1.msra.mxu0 0.0
      %6442 = vmatprep.subr.mxu0 0.0
      %6443 = vmatpush1.msra.mxu0 0.0
      %6444 = vmatprep.subr.mxu0 0.0
      %6445 = vmatpush1.msra.mxu0 0.0
      %6446 = vmatprep.subr.mxu0 0.0
      %6447 = vmatpush1.msra.mxu0 0.0
      %6448 = vmatprep.subr.mxu0 0.0
      %6449 = vmatpush1.msra.mxu0 0.0
      %6450 = vmatprep.subr.mxu0 0.0
      %6451 = vmatpush1.msra.mxu0 0.0
      %6452 = vmatprep.subr.mxu0 0.0
      %6453 = vmatpush1.msra.mxu0 0.0
      %6454 = vmatprep.subr.mxu0 0.0
      %6455 = vmatpush1.msra.mxu0 0.0
      %6456 = vmatprep.subr.mxu0 0.0
      %6457 = vmatpush1.msra.mxu0 %v6421
      %6458 = vmatprep.subr.mxu0 0.0
      %6459 = vmatpush1.msra.mxu0 %v6420
      %6460 = vmatprep.subr.mxu0 0.0
      %6461 = vmatpush2.msra.mxu0 0.0
      %6462 = vmatprep.subr.mxu0 0.0
      %6463 = vmatpush2.msra.mxu0 0.0
      %6464 = vmatprep.subr.mxu0 0.0
      %6465 = vmatpush2.msra.mxu0 0.0
      %6466 = vmatprep.subr.mxu0 0.0
      %6467 = vmatpush2.msra.mxu0 0.0
      %6468 = vmatprep.subr.mxu0 0.0
      %6469 = vmatpush2.msra.mxu0 0.0
      %6470 = vmatprep.subr.mxu0 0.0
      %6471 = vmatpush2.msra.mxu0 0.0
      %6472 = vmatprep.subr.mxu0 0.0
      %6473 = vmatpush2.msra.mxu0 0.0
      %6474 = vmatprep.subr.mxu0 0.0
      %6475 = vmatpush2.msra.mxu0 0.0
      %6476 = vmatprep.subr.mxu0 0.0
      %6477 = vmatpush2.msra.mxu0 0.0
      %6478 = vmatprep.subr.mxu0 0.0
      %6479 = vmatpush2.msra.mxu0 0.0
      %6480 = vmatprep.subr.mxu0 0.0
      %6481 = vmatpush2.msra.mxu0 0.0
      %6482 = vmatprep.subr.mxu0 0.0
      %6483 = vmatpush2.msra.mxu0 0.0
      %6484 = vmatprep.subr.mxu0 0.0
      %6485 = vmatpush2.msra.mxu0 0.0
      %6486 = vmatprep.subr.mxu0 0.0
      %6487 = vmatpush2.msra.mxu0 0.0
      %6488 = vmatprep.subr.mxu0 0.0
      %6489 = vmatpush2.msra.mxu0 0.0
      %6490 = vmatprep.subr.mxu0 0.0
      %6491 = vmatpush2.msra.mxu0 0.0
      %6492 = vmatprep.mubr.f32.mxu0 0.0
      %6493 = vmatmul.mubr.f32.gmra.mxu0 %v6423
      %v6494 = vpop.f32.mrf.mxu0
      %v6495 = vadd.f32 0.0, %v6494
      %v6496 = vpop.f32.mrf.mxu0
      %6497 = vmatprep.mubr.f32.mxu0 0.0
      %6498 = vmatmul.mubr.f32.gmra.mxu0 %v6426
      %v6499 = vpop.f32.mrf.mxu0
      %v6500 = vadd.f32 0.0, %v6499
      %v6501 = vpop.f32.mrf.mxu0
      %6502 = vdwg.mxu0
      %v6503 = vadd.f32 %v6413, %v6495
      %v6504 = vadd.f32 %v6414, %v6500
      %v6505 = vld [vmem:[%s8] sm:$0x1]
      %v6507 = vlaneseq
      %v6508 = vshrl.u32 %v6507, 7
      %v6509 = vsub.s32 0, %v6508
      %v6510 = vrot.slane %v6505, %v6509
      %v6512 = vadd.f32 %v6503, %v6510
      %v6513 = vadd.f32 %v6504, %v6510
      %v6514 = vmax.f32 %v6512, 0.0
      %v6515 = vmax.f32 %v6513, 0.0
      %vm6516 = vcmask 261120
      %6517 = vst.msk [vmem:[#allocation6 + $0x8] sm:$0xff] %vm6516, %v6514
      %6518 = vst.msk [vmem:[#allocation6 + $0x10] sm:$0xff] %vm6516, %v6515
      %vm6519 = vcmask 254977
      %6520 = vst.msk [vmem:[#allocation6 + $0x6] sm:$0x2] %vm6519, %v6514
      %vm6521 = vcmask 256002
      %6522 = vst.msk [vmem:[#allocation6 + $0x4] sm:$0x4] %vm6521, %v6514
      %vm6523 = vcmask 257027
      %6524 = vst.msk [vmem:[#allocation6 + $0x2] sm:$0x8] %vm6523, %v6514
      %vm6525 = vcmask 260102
      %6526 = vst.msk [vmem:[#allocation6 + $0x12] sm:$0x40] %vm6525, %v6515
      %vm6527 = vcmask 259077
      %6528 = vst.msk [vmem:[#allocation6 + $0x14] sm:$0x20] %vm6527, %v6515
      %vm6529 = vcmask 258052
      %6530 = vst.msk [vmem:[#allocation6 + $0x16] sm:$0x10] %vm6529, %v6515
      %s6531 = scalar_lea.vmem [#allocation6], 5
      %v6532 = vld [vmem:[%s6531] ss:$4 sm:$0xf]
      %v6533 = vld [vmem:[%s9] sm:$0xff]
      %v6534 = vld [vmem:[%s9 + $0x8] sm:$0xff]
      %v6535 = vld [vmem:[%s9 + $0x10] sm:$0xff]
      %v6536 = vld [vmem:[%s9 + $0x18] sm:$0xff]
      %s6537 = scalar_lea.vmem [#allocation6], 6
      %v6538 = vld [vmem:[%s6537] ss:$4 sm:$0xf]
      %s6539 = scalar_lea.vmem %s9, 32
      %v6540 = vld [vmem:[%s6539] sm:$0xff]
      %v6541 = vld [vmem:[%s6539 + $0x8] sm:$0xff]
      %v6542 = vld [vmem:[%s6539 + $0x10] sm:$0xff]
      %v6543 = vld [vmem:[%s6539 + $0x18] sm:$0xff]
      %v6545 = vsel %vm6516, %v6538, 0
      %6547 = vmatprep.subr.mxu0 0.0
      %6548 = vmatpush1.msra.mxu0 0.0
      %6549 = vmatprep.subr.mxu0 0.0
      %6550 = vmatpush1.msra.mxu0 0.0
      %6551 = vmatprep.subr.mxu0 0.0
      %6552 = vmatpush1.msra.mxu0 0.0
      %6553 = vmatprep.subr.mxu0 0.0
      %6554 = vmatpush1.msra.mxu0 0.0
      %6555 = vmatprep.subr.mxu0 0.0
      %6556 = vmatpush1.msra.mxu0 0.0
      %6557 = vmatprep.subr.mxu0 0.0
      %6558 = vmatpush1.msra.mxu0 0.0
      %6559 = vmatprep.subr.mxu0 0.0
      %6560 = vmatpush1.msra.mxu0 0.0
      %6561 = vmatprep.subr.mxu0 0.0
      %6562 = vmatpush1.msra.mxu0 0.0
      %6563 = vmatprep.subr.mxu0 0.0
      %6564 = vmatpush1.msra.mxu0 0.0
      %6565 = vmatprep.subr.mxu0 0.0
      %6566 = vmatpush1.msra.mxu0 0.0
      %6567 = vmatprep.subr.mxu0 0.0
      %6568 = vmatpush1.msra.mxu0 0.0
      %6569 = vmatprep.subr.mxu0 0.0
      %6570 = vmatpush1.msra.mxu0 0.0
      %6571 = vmatprep.subr.mxu0 0.0
      %6572 = vmatpush1.msra.mxu0 %v6543
      %6573 = vmatprep.subr.mxu0 0.0
      %6574 = vmatpush1.msra.mxu0 %v6542
      %6575 = vmatprep.subr.mxu0 0.0
      %6576 = vmatpush1.msra.mxu0 %v6541
      %6577 = vmatprep.subr.mxu0 0.0
      %6578 = vmatpush1.msra.mxu0 %v6540
      %6579 = vmatprep.subr.mxu0 0.0
      %6580 = vmatpush2.msra.mxu0 0.0
      %6581 = vmatprep.subr.mxu0 0.0
      %6582 = vmatpush2.msra.mxu0 0.0
      %6583 = vmatprep.subr.mxu0 0.0
      %6584 = vmatpush2.msra.mxu0 0.0
      %6585 = vmatprep.subr.mxu0 0.0
      %6586 = vmatpush2.msra.mxu0 0.0
      %6587 = vmatprep.subr.mxu0 0.0
      %6588 = vmatpush2.msra.mxu0 0.0
      %6589 = vmatprep.subr.mxu0 0.0
      %6590 = vmatpush2.msra.mxu0 0.0
      %6591 = vmatprep.subr.mxu0 0.0
      %6592 = vmatpush2.msra.mxu0 0.0
      %6593 = vmatprep.subr.mxu0 0.0
      %6594 = vmatpush2.msra.mxu0 0.0
      %6595 = vmatprep.subr.mxu0 0.0
      %6596 = vmatpush2.msra.mxu0 0.0
      %6597 = vmatprep.subr.mxu0 0.0
      %6598 = vmatpush2.msra.mxu0 0.0
      %6599 = vmatprep.subr.mxu0 0.0
      %6600 = vmatpush2.msra.mxu0 0.0
      %6601 = vmatprep.subr.mxu0 0.0
      %6602 = vmatpush2.msra.mxu0 0.0
      %6603 = vmatprep.subr.mxu0 0.0
      %6604 = vmatpush2.msra.mxu0 0.0
      %6605 = vmatprep.subr.mxu0 0.0
      %6606 = vmatpush2.msra.mxu0 0.0
      %6607 = vmatprep.subr.mxu0 0.0
      %6608 = vmatpush2.msra.mxu0 0.0
      %6609 = vmatprep.subr.mxu0 0.0
      %6610 = vmatpush2.msra.mxu0 0.0
      %6611 = vmatprep.mubr.f32.mxu0 0.0
      %6612 = vmatmul.mubr.f32.gmra.mxu0 %v6545
      %v6613 = vpop.f32.mrf.mxu0
      %v6614 = vadd.f32 0.0, %v6613
      %v6615 = vpop.f32.mrf.mxu0
      %6616 = vdwg.mxu0
      %v6618 = vsel %vm6516, %v6532, 0
      %6620 = vmatprep.subr.mxu0 0.0
      %6621 = vmatpush1.msra.mxu0 0.0
      %6622 = vmatprep.subr.mxu0 0.0
      %6623 = vmatpush1.msra.mxu0 0.0
      %6624 = vmatprep.subr.mxu0 0.0
      %6625 = vmatpush1.msra.mxu0 0.0
      %6626 = vmatprep.subr.mxu0 0.0
      %6627 = vmatpush1.msra.mxu0 0.0
      %6628 = vmatprep.subr.mxu0 0.0
      %6629 = vmatpush1.msra.mxu0 0.0
      %6630 = vmatprep.subr.mxu0 0.0
      %6631 = vmatpush1.msra.mxu0 0.0
      %6632 = vmatprep.subr.mxu0 0.0
      %6633 = vmatpush1.msra.mxu0 0.0
      %6634 = vmatprep.subr.mxu0 0.0
      %6635 = vmatpush1.msra.mxu0 0.0
      %6636 = vmatprep.subr.mxu0 0.0
      %6637 = vmatpush1.msra.mxu0 0.0
      %6638 = vmatprep.subr.mxu0 0.0
      %6639 = vmatpush1.msra.mxu0 0.0
      %6640 = vmatprep.subr.mxu0 0.0
      %6641 = vmatpush1.msra.mxu0 0.0
      %6642 = vmatprep.subr.mxu0 0.0
      %6643 = vmatpush1.msra.mxu0 0.0
      %6644 = vmatprep.subr.mxu0 0.0
      %6645 = vmatpush1.msra.mxu0 %v6536
      %6646 = vmatprep.subr.mxu0 0.0
      %6647 = vmatpush1.msra.mxu0 %v6535
      %6648 = vmatprep.subr.mxu0 0.0
      %6649 = vmatpush1.msra.mxu0 %v6534
      %6650 = vmatprep.subr.mxu0 0.0
      %6651 = vmatpush1.msra.mxu0 %v6533
      %6652 = vmatprep.subr.mxu0 0.0
      %6653 = vmatpush2.msra.mxu0 0.0
      %6654 = vmatprep.subr.mxu0 0.0
      %6655 = vmatpush2.msra.mxu0 0.0
      %6656 = vmatprep.subr.mxu0 0.0
      %6657 = vmatpush2.msra.mxu0 0.0
      %6658 = vmatprep.subr.mxu0 0.0
      %6659 = vmatpush2.msra.mxu0 0.0
      %6660 = vmatprep.subr.mxu0 0.0
      %6661 = vmatpush2.msra.mxu0 0.0
      %6662 = vmatprep.subr.mxu0 0.0
      %6663 = vmatpush2.msra.mxu0 0.0
      %6664 = vmatprep.subr.mxu0 0.0
      %6665 = vmatpush2.msra.mxu0 0.0
      %6666 = vmatprep.subr.mxu0 0.0
      %6667 = vmatpush2.msra.mxu0 0.0
      %6668 = vmatprep.subr.mxu0 0.0
      %6669 = vmatpush2.msra.mxu0 0.0
      %6670 = vmatprep.subr.mxu0 0.0
      %6671 = vmatpush2.msra.mxu0 0.0
      %6672 = vmatprep.subr.mxu0 0.0
      %6673 = vmatpush2.msra.mxu0 0.0
      %6674 = vmatprep.subr.mxu0 0.0
      %6675 = vmatpush2.msra.mxu0 0.0
      %6676 = vmatprep.subr.mxu0 0.0
      %6677 = vmatpush2.msra.mxu0 0.0
      %6678 = vmatprep.subr.mxu0 0.0
      %6679 = vmatpush2.msra.mxu0 0.0
      %6680 = vmatprep.subr.mxu0 0.0
      %6681 = vmatpush2.msra.mxu0 0.0
      %6682 = vmatprep.subr.mxu0 0.0
      %6683 = vmatpush2.msra.mxu0 0.0
      %6684 = vmatprep.mubr.f32.mxu0 0.0
      %6685 = vmatmul.mubr.f32.gmra.mxu0 %v6618
      %v6686 = vpop.f32.mrf.mxu0
      %v6687 = vadd.f32 %v6614, %v6686
      %v6688 = vpop.f32.mrf.mxu0
      %6689 = vdwg.mxu0
      %s6690 = scalar_lea.vmem [#allocation6], 7
      %v6691 = vld [vmem:[%s6690] ss:$4 sm:$0xf]
      %s6692 = scalar_lea.vmem %s9, 64
      %v6693 = vld [vmem:[%s6692] sm:$0xff]
      %v6694 = vld [vmem:[%s6692 + $0x8] sm:$0xff]
      %v6695 = vld [vmem:[%s6692 + $0x10] sm:$0xff]
      %v6696 = vld [vmem:[%s6692 + $0x18] sm:$0xff]
      %v6698 = vsel %vm6516, %v6691, 0
      %6700 = vmatprep.subr.mxu0 0.0
      %6701 = vmatpush1.msra.mxu0 0.0
      %6702 = vmatprep.subr.mxu0 0.0
      %6703 = vmatpush1.msra.mxu0 0.0
      %6704 = vmatprep.subr.mxu0 0.0
      %6705 = vmatpush1.msra.mxu0 0.0
      %6706 = vmatprep.subr.mxu0 0.0
      %6707 = vmatpush1.msra.mxu0 0.0
      %6708 = vmatprep.subr.mxu0 0.0
      %6709 = vmatpush1.msra.mxu0 0.0
      %6710 = vmatprep.subr.mxu0 0.0
      %6711 = vmatpush1.msra.mxu0 0.0
      %6712 = vmatprep.subr.mxu0 0.0
      %6713 = vmatpush1.msra.mxu0 0.0
      %6714 = vmatprep.subr.mxu0 0.0
      %6715 = vmatpush1.msra.mxu0 0.0
      %6716 = vmatprep.subr.mxu0 0.0
      %6717 = vmatpush1.msra.mxu0 0.0
      %6718 = vmatprep.subr.mxu0 0.0
      %6719 = vmatpush1.msra.mxu0 0.0
      %6720 = vmatprep.subr.mxu0 0.0
      %6721 = vmatpush1.msra.mxu0 0.0
      %6722 = vmatprep.subr.mxu0 0.0
      %6723 = vmatpush1.msra.mxu0 0.0
      %6724 = vmatprep.subr.mxu0 0.0
      %6725 = vmatpush1.msra.mxu0 %v6696
      %6726 = vmatprep.subr.mxu0 0.0
      %6727 = vmatpush1.msra.mxu0 %v6695
      %6728 = vmatprep.subr.mxu0 0.0
      %6729 = vmatpush1.msra.mxu0 %v6694
      %6730 = vmatprep.subr.mxu0 0.0
      %6731 = vmatpush1.msra.mxu0 %v6693
      %6732 = vmatprep.subr.mxu0 0.0
      %6733 = vmatpush2.msra.mxu0 0.0
      %6734 = vmatprep.subr.mxu0 0.0
      %6735 = vmatpush2.msra.mxu0 0.0
      %6736 = vmatprep.subr.mxu0 0.0
      %6737 = vmatpush2.msra.mxu0 0.0
      %6738 = vmatprep.subr.mxu0 0.0
      %6739 = vmatpush2.msra.mxu0 0.0
      %6740 = vmatprep.subr.mxu0 0.0
      %6741 = vmatpush2.msra.mxu0 0.0
      %6742 = vmatprep.subr.mxu0 0.0
      %6743 = vmatpush2.msra.mxu0 0.0
      %6744 = vmatprep.subr.mxu0 0.0
      %6745 = vmatpush2.msra.mxu0 0.0
      %6746 = vmatprep.subr.mxu0 0.0
      %6747 = vmatpush2.msra.mxu0 0.0
      %6748 = vmatprep.subr.mxu0 0.0
      %6749 = vmatpush2.msra.mxu0 0.0
      %6750 = vmatprep.subr.mxu0 0.0
      %6751 = vmatpush2.msra.mxu0 0.0
      %6752 = vmatprep.subr.mxu0 0.0
      %6753 = vmatpush2.msra.mxu0 0.0
      %6754 = vmatprep.subr.mxu0 0.0
      %6755 = vmatpush2.msra.mxu0 0.0
      %6756 = vmatprep.subr.mxu0 0.0
      %6757 = vmatpush2.msra.mxu0 0.0
      %6758 = vmatprep.subr.mxu0 0.0
      %6759 = vmatpush2.msra.mxu0 0.0
      %6760 = vmatprep.subr.mxu0 0.0
      %6761 = vmatpush2.msra.mxu0 0.0
      %6762 = vmatprep.subr.mxu0 0.0
      %6763 = vmatpush2.msra.mxu0 0.0
      %6764 = vmatprep.mubr.f32.mxu0 0.0
      %6765 = vmatmul.mubr.f32.gmra.mxu0 %v6698
      %v6766 = vpop.f32.mrf.mxu0
      %v6767 = vadd.f32 0.0, %v6766
      %v6768 = vpop.f32.mrf.mxu0
      %6769 = vdwg.mxu0
      %v6770 = vadd.f32 %v6687, %v6767
      %s6771 = scalar_lea.vmem [#allocation6], 8
      %v6772 = vld [vmem:[%s6771] ss:$4 sm:$0xf]
      %s6773 = scalar_lea.vmem %s9, 96
      %v6774 = vld [vmem:[%s6773] sm:$0xff]
      %v6775 = vld [vmem:[%s6773 + $0x8] sm:$0xff]
      %v6776 = vld [vmem:[%s6773 + $0x10] sm:$0xff]
      %v6777 = vld [vmem:[%s6773 + $0x18] sm:$0xff]
      %v6779 = vsel %vm6516, %v6772, 0
      %6781 = vmatprep.subr.mxu0 0.0
      %6782 = vmatpush1.msra.mxu0 0.0
      %6783 = vmatprep.subr.mxu0 0.0
      %6784 = vmatpush1.msra.mxu0 0.0
      %6785 = vmatprep.subr.mxu0 0.0
      %6786 = vmatpush1.msra.mxu0 0.0
      %6787 = vmatprep.subr.mxu0 0.0
      %6788 = vmatpush1.msra.mxu0 0.0
      %6789 = vmatprep.subr.mxu0 0.0
      %6790 = vmatpush1.msra.mxu0 0.0
      %6791 = vmatprep.subr.mxu0 0.0
      %6792 = vmatpush1.msra.mxu0 0.0
      %6793 = vmatprep.subr.mxu0 0.0
      %6794 = vmatpush1.msra.mxu0 0.0
      %6795 = vmatprep.subr.mxu0 0.0
      %6796 = vmatpush1.msra.mxu0 0.0
      %6797 = vmatprep.subr.mxu0 0.0
      %6798 = vmatpush1.msra.mxu0 0.0
      %6799 = vmatprep.subr.mxu0 0.0
      %6800 = vmatpush1.msra.mxu0 0.0
      %6801 = vmatprep.subr.mxu0 0.0
      %6802 = vmatpush1.msra.mxu0 0.0
      %6803 = vmatprep.subr.mxu0 0.0
      %6804 = vmatpush1.msra.mxu0 0.0
      %6805 = vmatprep.subr.mxu0 0.0
      %6806 = vmatpush1.msra.mxu0 %v6777
      %6807 = vmatprep.subr.mxu0 0.0
      %6808 = vmatpush1.msra.mxu0 %v6776
      %6809 = vmatprep.subr.mxu0 0.0
      %6810 = vmatpush1.msra.mxu0 %v6775
      %6811 = vmatprep.subr.mxu0 0.0
      %6812 = vmatpush1.msra.mxu0 %v6774
      %6813 = vmatprep.subr.mxu0 0.0
      %6814 = vmatpush2.msra.mxu0 0.0
      %6815 = vmatprep.subr.mxu0 0.0
      %6816 = vmatpush2.msra.mxu0 0.0
      %6817 = vmatprep.subr.mxu0 0.0
      %6818 = vmatpush2.msra.mxu0 0.0
      %6819 = vmatprep.subr.mxu0 0.0
      %6820 = vmatpush2.msra.mxu0 0.0
      %6821 = vmatprep.subr.mxu0 0.0
      %6822 = vmatpush2.msra.mxu0 0.0
      %6823 = vmatprep.subr.mxu0 0.0
      %6824 = vmatpush2.msra.mxu0 0.0
      %6825 = vmatprep.subr.mxu0 0.0
      %6826 = vmatpush2.msra.mxu0 0.0
      %6827 = vmatprep.subr.mxu0 0.0
      %6828 = vmatpush2.msra.mxu0 0.0
      %6829 = vmatprep.subr.mxu0 0.0
      %6830 = vmatpush2.msra.mxu0 0.0
      %6831 = vmatprep.subr.mxu0 0.0
      %6832 = vmatpush2.msra.mxu0 0.0
      %6833 = vmatprep.subr.mxu0 0.0
      %6834 = vmatpush2.msra.mxu0 0.0
      %6835 = vmatprep.subr.mxu0 0.0
      %6836 = vmatpush2.msra.mxu0 0.0
      %6837 = vmatprep.subr.mxu0 0.0
      %6838 = vmatpush2.msra.mxu0 0.0
      %6839 = vmatprep.subr.mxu0 0.0
      %6840 = vmatpush2.msra.mxu0 0.0
      %6841 = vmatprep.subr.mxu0 0.0
      %6842 = vmatpush2.msra.mxu0 0.0
      %6843 = vmatprep.subr.mxu0 0.0
      %6844 = vmatpush2.msra.mxu0 0.0
      %6845 = vmatprep.mubr.f32.mxu0 0.0
      %6846 = vmatmul.mubr.f32.gmra.mxu0 %v6779
      %v6847 = vpop.f32.mrf.mxu0
      %v6848 = vadd.f32 0.0, %v6847
      %v6849 = vpop.f32.mrf.mxu0
      %6850 = vdwg.mxu0
      %v6851 = vadd.f32 %v6770, %v6848
      %s6852 = scalar_lea.vmem [#allocation6], 9
      %v6853 = vld [vmem:[%s6852] ss:$4 sm:$0xf]
      %s6854 = scalar_lea.vmem %s9, 128
      %v6855 = vld [vmem:[%s6854] sm:$0xff]
      %v6856 = vld [vmem:[%s6854 + $0x8] sm:$0xff]
      %v6857 = vld [vmem:[%s6854 + $0x10] sm:$0xff]
      %v6858 = vld [vmem:[%s6854 + $0x18] sm:$0xff]
      %v6860 = vsel %vm6516, %v6853, 0
      %6862 = vmatprep.subr.mxu0 0.0
      %6863 = vmatpush1.msra.mxu0 0.0
      %6864 = vmatprep.subr.mxu0 0.0
      %6865 = vmatpush1.msra.mxu0 0.0
      %6866 = vmatprep.subr.mxu0 0.0
      %6867 = vmatpush1.msra.mxu0 0.0
      %6868 = vmatprep.subr.mxu0 0.0
      %6869 = vmatpush1.msra.mxu0 0.0
      %6870 = vmatprep.subr.mxu0 0.0
      %6871 = vmatpush1.msra.mxu0 0.0
      %6872 = vmatprep.subr.mxu0 0.0
      %6873 = vmatpush1.msra.mxu0 0.0
      %6874 = vmatprep.subr.mxu0 0.0
      %6875 = vmatpush1.msra.mxu0 0.0
      %6876 = vmatprep.subr.mxu0 0.0
      %6877 = vmatpush1.msra.mxu0 0.0
      %6878 = vmatprep.subr.mxu0 0.0
      %6879 = vmatpush1.msra.mxu0 0.0
      %6880 = vmatprep.subr.mxu0 0.0
      %6881 = vmatpush1.msra.mxu0 0.0
      %6882 = vmatprep.subr.mxu0 0.0
      %6883 = vmatpush1.msra.mxu0 0.0
      %6884 = vmatprep.subr.mxu0 0.0
      %6885 = vmatpush1.msra.mxu0 0.0
      %6886 = vmatprep.subr.mxu0 0.0
      %6887 = vmatpush1.msra.mxu0 %v6858
      %6888 = vmatprep.subr.mxu0 0.0
      %6889 = vmatpush1.msra.mxu0 %v6857
      %6890 = vmatprep.subr.mxu0 0.0
      %6891 = vmatpush1.msra.mxu0 %v6856
      %6892 = vmatprep.subr.mxu0 0.0
      %6893 = vmatpush1.msra.mxu0 %v6855
      %6894 = vmatprep.subr.mxu0 0.0
      %6895 = vmatpush2.msra.mxu0 0.0
      %6896 = vmatprep.subr.mxu0 0.0
      %6897 = vmatpush2.msra.mxu0 0.0
      %6898 = vmatprep.subr.mxu0 0.0
      %6899 = vmatpush2.msra.mxu0 0.0
      %6900 = vmatprep.subr.mxu0 0.0
      %6901 = vmatpush2.msra.mxu0 0.0
      %6902 = vmatprep.subr.mxu0 0.0
      %6903 = vmatpush2.msra.mxu0 0.0
      %6904 = vmatprep.subr.mxu0 0.0
      %6905 = vmatpush2.msra.mxu0 0.0
      %6906 = vmatprep.subr.mxu0 0.0
      %6907 = vmatpush2.msra.mxu0 0.0
      %6908 = vmatprep.subr.mxu0 0.0
      %6909 = vmatpush2.msra.mxu0 0.0
      %6910 = vmatprep.subr.mxu0 0.0
      %6911 = vmatpush2.msra.mxu0 0.0
      %6912 = vmatprep.subr.mxu0 0.0
      %6913 = vmatpush2.msra.mxu0 0.0
      %6914 = vmatprep.subr.mxu0 0.0
      %6915 = vmatpush2.msra.mxu0 0.0
      %6916 = vmatprep.subr.mxu0 0.0
      %6917 = vmatpush2.msra.mxu0 0.0
      %6918 = vmatprep.subr.mxu0 0.0
      %6919 = vmatpush2.msra.mxu0 0.0
      %6920 = vmatprep.subr.mxu0 0.0
      %6921 = vmatpush2.msra.mxu0 0.0
      %6922 = vmatprep.subr.mxu0 0.0
      %6923 = vmatpush2.msra.mxu0 0.0
      %6924 = vmatprep.subr.mxu0 0.0
      %6925 = vmatpush2.msra.mxu0 0.0
      %6926 = vmatprep.mubr.f32.mxu0 0.0
      %6927 = vmatmul.mubr.f32.gmra.mxu0 %v6860
      %v6928 = vpop.f32.mrf.mxu0
      %v6929 = vadd.f32 0.0, %v6928
      %v6930 = vpop.f32.mrf.mxu0
      %6931 = vdwg.mxu0
      %v6932 = vadd.f32 %v6851, %v6929
      %s6933 = scalar_lea.vmem [#allocation6], 10
      %v6934 = vld [vmem:[%s6933] ss:$4 sm:$0xf]
      %s6935 = scalar_lea.vmem %s9, 160
      %v6936 = vld [vmem:[%s6935] sm:$0xff]
      %v6937 = vld [vmem:[%s6935 + $0x8] sm:$0xff]
      %v6938 = vld [vmem:[%s6935 + $0x10] sm:$0xff]
      %v6939 = vld [vmem:[%s6935 + $0x18] sm:$0xff]
      %v6941 = vsel %vm6516, %v6934, 0
      %6943 = vmatprep.subr.mxu0 0.0
      %6944 = vmatpush1.msra.mxu0 0.0
      %6945 = vmatprep.subr.mxu0 0.0
      %6946 = vmatpush1.msra.mxu0 0.0
      %6947 = vmatprep.subr.mxu0 0.0
      %6948 = vmatpush1.msra.mxu0 0.0
      %6949 = vmatprep.subr.mxu0 0.0
      %6950 = vmatpush1.msra.mxu0 0.0
      %6951 = vmatprep.subr.mxu0 0.0
      %6952 = vmatpush1.msra.mxu0 0.0
      %6953 = vmatprep.subr.mxu0 0.0
      %6954 = vmatpush1.msra.mxu0 0.0
      %6955 = vmatprep.subr.mxu0 0.0
      %6956 = vmatpush1.msra.mxu0 0.0
      %6957 = vmatprep.subr.mxu0 0.0
      %6958 = vmatpush1.msra.mxu0 0.0
      %6959 = vmatprep.subr.mxu0 0.0
      %6960 = vmatpush1.msra.mxu0 0.0
      %6961 = vmatprep.subr.mxu0 0.0
      %6962 = vmatpush1.msra.mxu0 0.0
      %6963 = vmatprep.subr.mxu0 0.0
      %6964 = vmatpush1.msra.mxu0 0.0
      %6965 = vmatprep.subr.mxu0 0.0
      %6966 = vmatpush1.msra.mxu0 0.0
      %6967 = vmatprep.subr.mxu0 0.0
      %6968 = vmatpush1.msra.mxu0 %v6939
      %6969 = vmatprep.subr.mxu0 0.0
      %6970 = vmatpush1.msra.mxu0 %v6938
      %6971 = vmatprep.subr.mxu0 0.0
      %6972 = vmatpush1.msra.mxu0 %v6937
      %6973 = vmatprep.subr.mxu0 0.0
      %6974 = vmatpush1.msra.mxu0 %v6936
      %6975 = vmatprep.subr.mxu0 0.0
      %6976 = vmatpush2.msra.mxu0 0.0
      %6977 = vmatprep.subr.mxu0 0.0
      %6978 = vmatpush2.msra.mxu0 0.0
      %6979 = vmatprep.subr.mxu0 0.0
      %6980 = vmatpush2.msra.mxu0 0.0
      %6981 = vmatprep.subr.mxu0 0.0
      %6982 = vmatpush2.msra.mxu0 0.0
      %6983 = vmatprep.subr.mxu0 0.0
      %6984 = vmatpush2.msra.mxu0 0.0
      %6985 = vmatprep.subr.mxu0 0.0
      %6986 = vmatpush2.msra.mxu0 0.0
      %6987 = vmatprep.subr.mxu0 0.0
      %6988 = vmatpush2.msra.mxu0 0.0
      %6989 = vmatprep.subr.mxu0 0.0
      %6990 = vmatpush2.msra.mxu0 0.0
      %6991 = vmatprep.subr.mxu0 0.0
      %6992 = vmatpush2.msra.mxu0 0.0
      %6993 = vmatprep.subr.mxu0 0.0
      %6994 = vmatpush2.msra.mxu0 0.0
      %6995 = vmatprep.subr.mxu0 0.0
      %6996 = vmatpush2.msra.mxu0 0.0
      %6997 = vmatprep.subr.mxu0 0.0
      %6998 = vmatpush2.msra.mxu0 0.0
      %6999 = vmatprep.subr.mxu0 0.0
      %7000 = vmatpush2.msra.mxu0 0.0
      %7001 = vmatprep.subr.mxu0 0.0
      %7002 = vmatpush2.msra.mxu0 0.0
      %7003 = vmatprep.subr.mxu0 0.0
      %7004 = vmatpush2.msra.mxu0 0.0
      %7005 = vmatprep.subr.mxu0 0.0
      %7006 = vmatpush2.msra.mxu0 0.0
      %7007 = vmatprep.mubr.f32.mxu0 0.0
      %7008 = vmatmul.mubr.f32.gmra.mxu0 %v6941
      %v7009 = vpop.f32.mrf.mxu0
      %v7010 = vadd.f32 0.0, %v7009
      %v7011 = vpop.f32.mrf.mxu0
      %7012 = vdwg.mxu0
      %v7013 = vadd.f32 %v6932, %v7010
      %s7014 = scalar_lea.vmem [#allocation6], 11
      %v7015 = vld [vmem:[%s7014] ss:$4 sm:$0xf]
      %s7016 = scalar_lea.vmem %s9, 192
      %v7017 = vld [vmem:[%s7016] sm:$0xff]
      %v7018 = vld [vmem:[%s7016 + $0x8] sm:$0xff]
      %v7019 = vld [vmem:[%s7016 + $0x10] sm:$0xff]
      %v7020 = vld [vmem:[%s7016 + $0x18] sm:$0xff]
      %v7022 = vsel %vm6516, %v7015, 0
      %7024 = vmatprep.subr.mxu0 0.0
      %7025 = vmatpush1.msra.mxu0 0.0
      %7026 = vmatprep.subr.mxu0 0.0
      %7027 = vmatpush1.msra.mxu0 0.0
      %7028 = vmatprep.subr.mxu0 0.0
      %7029 = vmatpush1.msra.mxu0 0.0
      %7030 = vmatprep.subr.mxu0 0.0
      %7031 = vmatpush1.msra.mxu0 0.0
      %7032 = vmatprep.subr.mxu0 0.0
      %7033 = vmatpush1.msra.mxu0 0.0
      %7034 = vmatprep.subr.mxu0 0.0
      %7035 = vmatpush1.msra.mxu0 0.0
      %7036 = vmatprep.subr.mxu0 0.0
      %7037 = vmatpush1.msra.mxu0 0.0
      %7038 = vmatprep.subr.mxu0 0.0
      %7039 = vmatpush1.msra.mxu0 0.0
      %7040 = vmatprep.subr.mxu0 0.0
      %7041 = vmatpush1.msra.mxu0 0.0
      %7042 = vmatprep.subr.mxu0 0.0
      %7043 = vmatpush1.msra.mxu0 0.0
      %7044 = vmatprep.subr.mxu0 0.0
      %7045 = vmatpush1.msra.mxu0 0.0
      %7046 = vmatprep.subr.mxu0 0.0
      %7047 = vmatpush1.msra.mxu0 0.0
      %7048 = vmatprep.subr.mxu0 0.0
      %7049 = vmatpush1.msra.mxu0 %v7020
      %7050 = vmatprep.subr.mxu0 0.0
      %7051 = vmatpush1.msra.mxu0 %v7019
      %7052 = vmatprep.subr.mxu0 0.0
      %7053 = vmatpush1.msra.mxu0 %v7018
      %7054 = vmatprep.subr.mxu0 0.0
      %7055 = vmatpush1.msra.mxu0 %v7017
      %7056 = vmatprep.subr.mxu0 0.0
      %7057 = vmatpush2.msra.mxu0 0.0
      %7058 = vmatprep.subr.mxu0 0.0
      %7059 = vmatpush2.msra.mxu0 0.0
      %7060 = vmatprep.subr.mxu0 0.0
      %7061 = vmatpush2.msra.mxu0 0.0
      %7062 = vmatprep.subr.mxu0 0.0
      %7063 = vmatpush2.msra.mxu0 0.0
      %7064 = vmatprep.subr.mxu0 0.0
      %7065 = vmatpush2.msra.mxu0 0.0
      %7066 = vmatprep.subr.mxu0 0.0
      %7067 = vmatpush2.msra.mxu0 0.0
      %7068 = vmatprep.subr.mxu0 0.0
      %7069 = vmatpush2.msra.mxu0 0.0
      %7070 = vmatprep.subr.mxu0 0.0
      %7071 = vmatpush2.msra.mxu0 0.0
      %7072 = vmatprep.subr.mxu0 0.0
      %7073 = vmatpush2.msra.mxu0 0.0
      %7074 = vmatprep.subr.mxu0 0.0
      %7075 = vmatpush2.msra.mxu0 0.0
      %7076 = vmatprep.subr.mxu0 0.0
      %7077 = vmatpush2.msra.mxu0 0.0
      %7078 = vmatprep.subr.mxu0 0.0
      %7079 = vmatpush2.msra.mxu0 0.0
      %7080 = vmatprep.subr.mxu0 0.0
      %7081 = vmatpush2.msra.mxu0 0.0
      %7082 = vmatprep.subr.mxu0 0.0
      %7083 = vmatpush2.msra.mxu0 0.0
      %7084 = vmatprep.subr.mxu0 0.0
      %7085 = vmatpush2.msra.mxu0 0.0
      %7086 = vmatprep.subr.mxu0 0.0
      %7087 = vmatpush2.msra.mxu0 0.0
      %7088 = vmatprep.mubr.f32.mxu0 0.0
      %7089 = vmatmul.mubr.f32.gmra.mxu0 %v7022
      %v7090 = vpop.f32.mrf.mxu0
      %v7091 = vadd.f32 0.0, %v7090
      %v7092 = vpop.f32.mrf.mxu0
      %7093 = vdwg.mxu0
      %v7094 = vadd.f32 %v7013, %v7091
      %v7095 = vld [vmem:[%s10] sm:$0x1]
      %v7097 = vlaneseq
      %v7098 = vshrl.u32 %v7097, 7
      %v7099 = vsub.s32 0, %v7098
      %v7100 = vrot.slane %v7095, %v7099
      %v7102 = vadd.f32 %v7094, %v7100
      %v7103 = vmax.f32 %v7102, 0.0
      %vm7104 = vcmask 519168
      %7105 = vst.msk [vmem:[#allocation7 + $0x8] sm:$0xf] %vm7104, %v7103
      %vm7106 = vcmask 517121
      %7107 = vst.msk [vmem:[#allocation7 + $0x6] sm:$0x2] %vm7106, %v7103
      %vm7108 = vcmask 518146
      %7109 = vst.msk [vmem:[#allocation7 + $0x4] sm:$0x4] %vm7108, %v7103
      %vm7110 = vcmask 519171
      %7111 = vst.msk [vmem:[#allocation7 + $0x2] sm:$0x8] %vm7110, %v7103
      %7112 = vst.msk [vmem:[#allocation7 + $0xa] sm:$0x4] %vm7108, %v7103
      %7113 = vst.msk [vmem:[#allocation7 + $0xc] sm:$0x2] %vm7106, %v7103
      %vm7114 = vcmask 516096
      %7115 = vst.msk [vmem:[#allocation7 + $0xe] sm:$0x1] %vm7114, %v7103
      %v7116 = vld [vmem:[#allocation7 + $0x5] sm:$0x1]
      %v7117 = vld [vmem:[%s11] sm:$0xff]
      %v7118 = vld [vmem:[%s11 + $0x8] sm:$0xff]
      %v7119 = vld [vmem:[%s11 + $0x10] sm:$0xff]
      %v7120 = vld [vmem:[%s11 + $0x18] sm:$0xff]
      %v7121 = vld [vmem:[%s11 + $0x20] sm:$0xff]
      %v7122 = vld [vmem:[%s11 + $0x28] sm:$0xff]
      %v7123 = vld [vmem:[%s11 + $0x30] sm:$0xff]
      %v7124 = vld [vmem:[%s11 + $0x38] sm:$0xff]
      %v7125 = vld [vmem:[#allocation7 + $0x6] sm:$0x1]
      %s7126 = scalar_lea.vmem %s11, 64
      %v7127 = vld [vmem:[%s7126] sm:$0xff]
      %v7128 = vld [vmem:[%s7126 + $0x8] sm:$0xff]
      %v7129 = vld [vmem:[%s7126 + $0x10] sm:$0xff]
      %v7130 = vld [vmem:[%s7126 + $0x18] sm:$0xff]
      %v7131 = vld [vmem:[%s7126 + $0x20] sm:$0xff]
      %v7132 = vld [vmem:[%s7126 + $0x28] sm:$0xff]
      %v7133 = vld [vmem:[%s7126 + $0x30] sm:$0xff]
      %v7134 = vld [vmem:[%s7126 + $0x38] sm:$0xff]
      %vm7135 = vcmask 523264
      %v7137 = vsel %vm7135, %v7125, 0
      %7139 = vmatprep.subr.mxu0 0.0
      %7140 = vmatpush1.msra.mxu0 0.0
      %7141 = vmatprep.subr.mxu0 0.0
      %7142 = vmatpush1.msra.mxu0 0.0
      %7143 = vmatprep.subr.mxu0 0.0
      %7144 = vmatpush1.msra.mxu0 0.0
      %7145 = vmatprep.subr.mxu0 0.0
      %7146 = vmatpush1.msra.mxu0 0.0
      %7147 = vmatprep.subr.mxu0 0.0
      %7148 = vmatpush1.msra.mxu0 0.0
      %7149 = vmatprep.subr.mxu0 0.0
      %7150 = vmatpush1.msra.mxu0 0.0
      %7151 = vmatprep.subr.mxu0 0.0
      %7152 = vmatpush1.msra.mxu0 0.0
      %7153 = vmatprep.subr.mxu0 0.0
      %7154 = vmatpush1.msra.mxu0 0.0
      %7155 = vmatprep.subr.mxu0 0.0
      %7156 = vmatpush1.msra.mxu0 %v7134
      %7157 = vmatprep.subr.mxu0 0.0
      %7158 = vmatpush1.msra.mxu0 %v7133
      %7159 = vmatprep.subr.mxu0 0.0
      %7160 = vmatpush1.msra.mxu0 %v7132
      %7161 = vmatprep.subr.mxu0 0.0
      %7162 = vmatpush1.msra.mxu0 %v7131
      %7163 = vmatprep.subr.mxu0 0.0
      %7164 = vmatpush1.msra.mxu0 %v7130
      %7165 = vmatprep.subr.mxu0 0.0
      %7166 = vmatpush1.msra.mxu0 %v7129
      %7167 = vmatprep.subr.mxu0 0.0
      %7168 = vmatpush1.msra.mxu0 %v7128
      %7169 = vmatprep.subr.mxu0 0.0
      %7170 = vmatpush1.msra.mxu0 %v7127
      %7171 = vmatprep.subr.mxu0 0.0
      %7172 = vmatpush2.msra.mxu0 0.0
      %7173 = vmatprep.subr.mxu0 0.0
      %7174 = vmatpush2.msra.mxu0 0.0
      %7175 = vmatprep.subr.mxu0 0.0
      %7176 = vmatpush2.msra.mxu0 0.0
      %7177 = vmatprep.subr.mxu0 0.0
      %7178 = vmatpush2.msra.mxu0 0.0
      %7179 = vmatprep.subr.mxu0 0.0
      %7180 = vmatpush2.msra.mxu0 0.0
      %7181 = vmatprep.subr.mxu0 0.0
      %7182 = vmatpush2.msra.mxu0 0.0
      %7183 = vmatprep.subr.mxu0 0.0
      %7184 = vmatpush2.msra.mxu0 0.0
      %7185 = vmatprep.subr.mxu0 0.0
      %7186 = vmatpush2.msra.mxu0 0.0
      %7187 = vmatprep.subr.mxu0 0.0
      %7188 = vmatpush2.msra.mxu0 0.0
      %7189 = vmatprep.subr.mxu0 0.0
      %7190 = vmatpush2.msra.mxu0 0.0
      %7191 = vmatprep.subr.mxu0 0.0
      %7192 = vmatpush2.msra.mxu0 0.0
      %7193 = vmatprep.subr.mxu0 0.0
      %7194 = vmatpush2.msra.mxu0 0.0
      %7195 = vmatprep.subr.mxu0 0.0
      %7196 = vmatpush2.msra.mxu0 0.0
      %7197 = vmatprep.subr.mxu0 0.0
      %7198 = vmatpush2.msra.mxu0 0.0
      %7199 = vmatprep.subr.mxu0 0.0
      %7200 = vmatpush2.msra.mxu0 0.0
      %7201 = vmatprep.subr.mxu0 0.0
      %7202 = vmatpush2.msra.mxu0 0.0
      %7203 = vmatprep.mubr.f32.mxu0 0.0
      %7204 = vmatmul.mubr.f32.gmra.mxu0 %v7137
      %v7205 = vpop.f32.mrf.mxu0
      %v7206 = vadd.f32 0.0, %v7205
      %v7207 = vpop.f32.mrf.mxu0
      %7208 = vdwg.mxu0
      %v7210 = vsel %vm7135, %v7116, 0
      %7212 = vmatprep.subr.mxu0 0.0
      %7213 = vmatpush1.msra.mxu0 0.0
      %7214 = vmatprep.subr.mxu0 0.0
      %7215 = vmatpush1.msra.mxu0 0.0
      %7216 = vmatprep.subr.mxu0 0.0
      %7217 = vmatpush1.msra.mxu0 0.0
      %7218 = vmatprep.subr.mxu0 0.0
      %7219 = vmatpush1.msra.mxu0 0.0
      %7220 = vmatprep.subr.mxu0 0.0
      %7221 = vmatpush1.msra.mxu0 0.0
      %7222 = vmatprep.subr.mxu0 0.0
      %7223 = vmatpush1.msra.mxu0 0.0
      %7224 = vmatprep.subr.mxu0 0.0
      %7225 = vmatpush1.msra.mxu0 0.0
      %7226 = vmatprep.subr.mxu0 0.0
      %7227 = vmatpush1.msra.mxu0 0.0
      %7228 = vmatprep.subr.mxu0 0.0
      %7229 = vmatpush1.msra.mxu0 %v7124
      %7230 = vmatprep.subr.mxu0 0.0
      %7231 = vmatpush1.msra.mxu0 %v7123
      %7232 = vmatprep.subr.mxu0 0.0
      %7233 = vmatpush1.msra.mxu0 %v7122
      %7234 = vmatprep.subr.mxu0 0.0
      %7235 = vmatpush1.msra.mxu0 %v7121
      %7236 = vmatprep.subr.mxu0 0.0
      %7237 = vmatpush1.msra.mxu0 %v7120
      %7238 = vmatprep.subr.mxu0 0.0
      %7239 = vmatpush1.msra.mxu0 %v7119
      %7240 = vmatprep.subr.mxu0 0.0
      %7241 = vmatpush1.msra.mxu0 %v7118
      %7242 = vmatprep.subr.mxu0 0.0
      %7243 = vmatpush1.msra.mxu0 %v7117
      %7244 = vmatprep.subr.mxu0 0.0
      %7245 = vmatpush2.msra.mxu0 0.0
      %7246 = vmatprep.subr.mxu0 0.0
      %7247 = vmatpush2.msra.mxu0 0.0
      %7248 = vmatprep.subr.mxu0 0.0
      %7249 = vmatpush2.msra.mxu0 0.0
      %7250 = vmatprep.subr.mxu0 0.0
      %7251 = vmatpush2.msra.mxu0 0.0
      %7252 = vmatprep.subr.mxu0 0.0
      %7253 = vmatpush2.msra.mxu0 0.0
      %7254 = vmatprep.subr.mxu0 0.0
      %7255 = vmatpush2.msra.mxu0 0.0
      %7256 = vmatprep.subr.mxu0 0.0
      %7257 = vmatpush2.msra.mxu0 0.0
      %7258 = vmatprep.subr.mxu0 0.0
      %7259 = vmatpush2.msra.mxu0 0.0
      %7260 = vmatprep.subr.mxu0 0.0
      %7261 = vmatpush2.msra.mxu0 0.0
      %7262 = vmatprep.subr.mxu0 0.0
      %7263 = vmatpush2.msra.mxu0 0.0
      %7264 = vmatprep.subr.mxu0 0.0
      %7265 = vmatpush2.msra.mxu0 0.0
      %7266 = vmatprep.subr.mxu0 0.0
      %7267 = vmatpush2.msra.mxu0 0.0
      %7268 = vmatprep.subr.mxu0 0.0
      %7269 = vmatpush2.msra.mxu0 0.0
      %7270 = vmatprep.subr.mxu0 0.0
      %7271 = vmatpush2.msra.mxu0 0.0
      %7272 = vmatprep.subr.mxu0 0.0
      %7273 = vmatpush2.msra.mxu0 0.0
      %7274 = vmatprep.subr.mxu0 0.0
      %7275 = vmatpush2.msra.mxu0 0.0
      %7276 = vmatprep.mubr.f32.mxu0 0.0
      %7277 = vmatmul.mubr.f32.gmra.mxu0 %v7210
      %v7278 = vpop.f32.mrf.mxu0
      %v7279 = vadd.f32 %v7206, %v7278
      %v7280 = vpop.f32.mrf.mxu0
      %7281 = vdwg.mxu0
      %v7282 = vld [vmem:[#allocation7 + $0x7] sm:$0x1]
      %s7283 = scalar_lea.vmem %s11, 128
      %v7284 = vld [vmem:[%s7283] sm:$0xff]
      %v7285 = vld [vmem:[%s7283 + $0x8] sm:$0xff]
      %v7286 = vld [vmem:[%s7283 + $0x10] sm:$0xff]
      %v7287 = vld [vmem:[%s7283 + $0x18] sm:$0xff]
      %v7288 = vld [vmem:[%s7283 + $0x20] sm:$0xff]
      %v7289 = vld [vmem:[%s7283 + $0x28] sm:$0xff]
      %v7290 = vld [vmem:[%s7283 + $0x30] sm:$0xff]
      %v7291 = vld [vmem:[%s7283 + $0x38] sm:$0xff]
      %v7293 = vsel %vm7135, %v7282, 0
      %7295 = vmatprep.subr.mxu0 0.0
      %7296 = vmatpush1.msra.mxu0 0.0
      %7297 = vmatprep.subr.mxu0 0.0
      %7298 = vmatpush1.msra.mxu0 0.0
      %7299 = vmatprep.subr.mxu0 0.0
      %7300 = vmatpush1.msra.mxu0 0.0
      %7301 = vmatprep.subr.mxu0 0.0
      %7302 = vmatpush1.msra.mxu0 0.0
      %7303 = vmatprep.subr.mxu0 0.0
      %7304 = vmatpush1.msra.mxu0 0.0
      %7305 = vmatprep.subr.mxu0 0.0
      %7306 = vmatpush1.msra.mxu0 0.0
      %7307 = vmatprep.subr.mxu0 0.0
      %7308 = vmatpush1.msra.mxu0 0.0
      %7309 = vmatprep.subr.mxu0 0.0
      %7310 = vmatpush1.msra.mxu0 0.0
      %7311 = vmatprep.subr.mxu0 0.0
      %7312 = vmatpush1.msra.mxu0 %v7291
      %7313 = vmatprep.subr.mxu0 0.0
      %7314 = vmatpush1.msra.mxu0 %v7290
      %7315 = vmatprep.subr.mxu0 0.0
      %7316 = vmatpush1.msra.mxu0 %v7289
      %7317 = vmatprep.subr.mxu0 0.0
      %7318 = vmatpush1.msra.mxu0 %v7288
      %7319 = vmatprep.subr.mxu0 0.0
      %7320 = vmatpush1.msra.mxu0 %v7287
      %7321 = vmatprep.subr.mxu0 0.0
      %7322 = vmatpush1.msra.mxu0 %v7286
      %7323 = vmatprep.subr.mxu0 0.0
      %7324 = vmatpush1.msra.mxu0 %v7285
      %7325 = vmatprep.subr.mxu0 0.0
      %7326 = vmatpush1.msra.mxu0 %v7284
      %7327 = vmatprep.subr.mxu0 0.0
      %7328 = vmatpush2.msra.mxu0 0.0
      %7329 = vmatprep.subr.mxu0 0.0
      %7330 = vmatpush2.msra.mxu0 0.0
      %7331 = vmatprep.subr.mxu0 0.0
      %7332 = vmatpush2.msra.mxu0 0.0
      %7333 = vmatprep.subr.mxu0 0.0
      %7334 = vmatpush2.msra.mxu0 0.0
      %7335 = vmatprep.subr.mxu0 0.0
      %7336 = vmatpush2.msra.mxu0 0.0
      %7337 = vmatprep.subr.mxu0 0.0
      %7338 = vmatpush2.msra.mxu0 0.0
      %7339 = vmatprep.subr.mxu0 0.0
      %7340 = vmatpush2.msra.mxu0 0.0
      %7341 = vmatprep.subr.mxu0 0.0
      %7342 = vmatpush2.msra.mxu0 0.0
      %7343 = vmatprep.subr.mxu0 0.0
      %7344 = vmatpush2.msra.mxu0 0.0
      %7345 = vmatprep.subr.mxu0 0.0
      %7346 = vmatpush2.msra.mxu0 0.0
      %7347 = vmatprep.subr.mxu0 0.0
      %7348 = vmatpush2.msra.mxu0 0.0
      %7349 = vmatprep.subr.mxu0 0.0
      %7350 = vmatpush2.msra.mxu0 0.0
      %7351 = vmatprep.subr.mxu0 0.0
      %7352 = vmatpush2.msra.mxu0 0.0
      %7353 = vmatprep.subr.mxu0 0.0
      %7354 = vmatpush2.msra.mxu0 0.0
      %7355 = vmatprep.subr.mxu0 0.0
      %7356 = vmatpush2.msra.mxu0 0.0
      %7357 = vmatprep.subr.mxu0 0.0
      %7358 = vmatpush2.msra.mxu0 0.0
      %7359 = vmatprep.mubr.f32.mxu0 0.0
      %7360 = vmatmul.mubr.f32.gmra.mxu0 %v7293
      %v7361 = vpop.f32.mrf.mxu0
      %v7362 = vadd.f32 0.0, %v7361
      %v7363 = vpop.f32.mrf.mxu0
      %7364 = vdwg.mxu0
      %v7365 = vadd.f32 %v7279, %v7362
      %v7366 = vld [vmem:[#allocation7 + $0x8] sm:$0x1]
      %s7367 = scalar_lea.vmem %s11, 192
      %v7368 = vld [vmem:[%s7367] sm:$0xff]
      %v7369 = vld [vmem:[%s7367 + $0x8] sm:$0xff]
      %v7370 = vld [vmem:[%s7367 + $0x10] sm:$0xff]
      %v7371 = vld [vmem:[%s7367 + $0x18] sm:$0xff]
      %v7372 = vld [vmem:[%s7367 + $0x20] sm:$0xff]
      %v7373 = vld [vmem:[%s7367 + $0x28] sm:$0xff]
      %v7374 = vld [vmem:[%s7367 + $0x30] sm:$0xff]
      %v7375 = vld [vmem:[%s7367 + $0x38] sm:$0xff]
      %v7377 = vsel %vm7135, %v7366, 0
      %7379 = vmatprep.subr.mxu0 0.0
      %7380 = vmatpush1.msra.mxu0 0.0
      %7381 = vmatprep.subr.mxu0 0.0
      %7382 = vmatpush1.msra.mxu0 0.0
      %7383 = vmatprep.subr.mxu0 0.0
      %7384 = vmatpush1.msra.mxu0 0.0
      %7385 = vmatprep.subr.mxu0 0.0
      %7386 = vmatpush1.msra.mxu0 0.0
      %7387 = vmatprep.subr.mxu0 0.0
      %7388 = vmatpush1.msra.mxu0 0.0
      %7389 = vmatprep.subr.mxu0 0.0
      %7390 = vmatpush1.msra.mxu0 0.0
      %7391 = vmatprep.subr.mxu0 0.0
      %7392 = vmatpush1.msra.mxu0 0.0
      %7393 = vmatprep.subr.mxu0 0.0
      %7394 = vmatpush1.msra.mxu0 0.0
      %7395 = vmatprep.subr.mxu0 0.0
      %7396 = vmatpush1.msra.mxu0 %v7375
      %7397 = vmatprep.subr.mxu0 0.0
      %7398 = vmatpush1.msra.mxu0 %v7374
      %7399 = vmatprep.subr.mxu0 0.0
      %7400 = vmatpush1.msra.mxu0 %v7373
      %7401 = vmatprep.subr.mxu0 0.0
      %7402 = vmatpush1.msra.mxu0 %v7372
      %7403 = vmatprep.subr.mxu0 0.0
      %7404 = vmatpush1.msra.mxu0 %v7371
      %7405 = vmatprep.subr.mxu0 0.0
      %7406 = vmatpush1.msra.mxu0 %v7370
      %7407 = vmatprep.subr.mxu0 0.0
      %7408 = vmatpush1.msra.mxu0 %v7369
      %7409 = vmatprep.subr.mxu0 0.0
      %7410 = vmatpush1.msra.mxu0 %v7368
      %7411 = vmatprep.subr.mxu0 0.0
      %7412 = vmatpush2.msra.mxu0 0.0
      %7413 = vmatprep.subr.mxu0 0.0
      %7414 = vmatpush2.msra.mxu0 0.0
      %7415 = vmatprep.subr.mxu0 0.0
      %7416 = vmatpush2.msra.mxu0 0.0
      %7417 = vmatprep.subr.mxu0 0.0
      %7418 = vmatpush2.msra.mxu0 0.0
      %7419 = vmatprep.subr.mxu0 0.0
      %7420 = vmatpush2.msra.mxu0 0.0
      %7421 = vmatprep.subr.mxu0 0.0
      %7422 = vmatpush2.msra.mxu0 0.0
      %7423 = vmatprep.subr.mxu0 0.0
      %7424 = vmatpush2.msra.mxu0 0.0
      %7425 = vmatprep.subr.mxu0 0.0
      %7426 = vmatpush2.msra.mxu0 0.0
      %7427 = vmatprep.subr.mxu0 0.0
      %7428 = vmatpush2.msra.mxu0 0.0
      %7429 = vmatprep.subr.mxu0 0.0
      %7430 = vmatpush2.msra.mxu0 0.0
      %7431 = vmatprep.subr.mxu0 0.0
      %7432 = vmatpush2.msra.mxu0 0.0
      %7433 = vmatprep.subr.mxu0 0.0
      %7434 = vmatpush2.msra.mxu0 0.0
      %7435 = vmatprep.subr.mxu0 0.0
      %7436 = vmatpush2.msra.mxu0 0.0
      %7437 = vmatprep.subr.mxu0 0.0
      %7438 = vmatpush2.msra.mxu0 0.0
      %7439 = vmatprep.subr.mxu0 0.0
      %7440 = vmatpush2.msra.mxu0 0.0
      %7441 = vmatprep.subr.mxu0 0.0
      %7442 = vmatpush2.msra.mxu0 0.0
      %7443 = vmatprep.mubr.f32.mxu0 0.0
      %7444 = vmatmul.mubr.f32.gmra.mxu0 %v7377
      %v7445 = vpop.f32.mrf.mxu0
      %v7446 = vadd.f32 0.0, %v7445
      %v7447 = vpop.f32.mrf.mxu0
      %7448 = vdwg.mxu0
      %v7449 = vadd.f32 %v7365, %v7446
      %v7450 = vld [vmem:[#allocation7 + $0x9] sm:$0x1]
      %s7451 = scalar_lea.vmem %s11, 256
      %v7452 = vld [vmem:[%s7451] sm:$0xff]
      %v7453 = vld [vmem:[%s7451 + $0x8] sm:$0xff]
      %v7454 = vld [vmem:[%s7451 + $0x10] sm:$0xff]
      %v7455 = vld [vmem:[%s7451 + $0x18] sm:$0xff]
      %v7456 = vld [vmem:[%s7451 + $0x20] sm:$0xff]
      %v7457 = vld [vmem:[%s7451 + $0x28] sm:$0xff]
      %v7458 = vld [vmem:[%s7451 + $0x30] sm:$0xff]
      %v7459 = vld [vmem:[%s7451 + $0x38] sm:$0xff]
      %v7461 = vsel %vm7135, %v7450, 0
      %7463 = vmatprep.subr.mxu0 0.0
      %7464 = vmatpush1.msra.mxu0 0.0
      %7465 = vmatprep.subr.mxu0 0.0
      %7466 = vmatpush1.msra.mxu0 0.0
      %7467 = vmatprep.subr.mxu0 0.0
      %7468 = vmatpush1.msra.mxu0 0.0
      %7469 = vmatprep.subr.mxu0 0.0
      %7470 = vmatpush1.msra.mxu0 0.0
      %7471 = vmatprep.subr.mxu0 0.0
      %7472 = vmatpush1.msra.mxu0 0.0
      %7473 = vmatprep.subr.mxu0 0.0
      %7474 = vmatpush1.msra.mxu0 0.0
      %7475 = vmatprep.subr.mxu0 0.0
      %7476 = vmatpush1.msra.mxu0 0.0
      %7477 = vmatprep.subr.mxu0 0.0
      %7478 = vmatpush1.msra.mxu0 0.0
      %7479 = vmatprep.subr.mxu0 0.0
      %7480 = vmatpush1.msra.mxu0 %v7459
      %7481 = vmatprep.subr.mxu0 0.0
      %7482 = vmatpush1.msra.mxu0 %v7458
      %7483 = vmatprep.subr.mxu0 0.0
      %7484 = vmatpush1.msra.mxu0 %v7457
      %7485 = vmatprep.subr.mxu0 0.0
      %7486 = vmatpush1.msra.mxu0 %v7456
      %7487 = vmatprep.subr.mxu0 0.0
      %7488 = vmatpush1.msra.mxu0 %v7455
      %7489 = vmatprep.subr.mxu0 0.0
      %7490 = vmatpush1.msra.mxu0 %v7454
      %7491 = vmatprep.subr.mxu0 0.0
      %7492 = vmatpush1.msra.mxu0 %v7453
      %7493 = vmatprep.subr.mxu0 0.0
      %7494 = vmatpush1.msra.mxu0 %v7452
      %7495 = vmatprep.subr.mxu0 0.0
      %7496 = vmatpush2.msra.mxu0 0.0
      %7497 = vmatprep.subr.mxu0 0.0
      %7498 = vmatpush2.msra.mxu0 0.0
      %7499 = vmatprep.subr.mxu0 0.0
      %7500 = vmatpush2.msra.mxu0 0.0
      %7501 = vmatprep.subr.mxu0 0.0
      %7502 = vmatpush2.msra.mxu0 0.0
      %7503 = vmatprep.subr.mxu0 0.0
      %7504 = vmatpush2.msra.mxu0 0.0
      %7505 = vmatprep.subr.mxu0 0.0
      %7506 = vmatpush2.msra.mxu0 0.0
      %7507 = vmatprep.subr.mxu0 0.0
      %7508 = vmatpush2.msra.mxu0 0.0
      %7509 = vmatprep.subr.mxu0 0.0
      %7510 = vmatpush2.msra.mxu0 0.0
      %7511 = vmatprep.subr.mxu0 0.0
      %7512 = vmatpush2.msra.mxu0 0.0
      %7513 = vmatprep.subr.mxu0 0.0
      %7514 = vmatpush2.msra.mxu0 0.0
      %7515 = vmatprep.subr.mxu0 0.0
      %7516 = vmatpush2.msra.mxu0 0.0
      %7517 = vmatprep.subr.mxu0 0.0
      %7518 = vmatpush2.msra.mxu0 0.0
      %7519 = vmatprep.subr.mxu0 0.0
      %7520 = vmatpush2.msra.mxu0 0.0
      %7521 = vmatprep.subr.mxu0 0.0
      %7522 = vmatpush2.msra.mxu0 0.0
      %7523 = vmatprep.subr.mxu0 0.0
      %7524 = vmatpush2.msra.mxu0 0.0
      %7525 = vmatprep.subr.mxu0 0.0
      %7526 = vmatpush2.msra.mxu0 0.0
      %7527 = vmatprep.mubr.f32.mxu0 0.0
      %7528 = vmatmul.mubr.f32.gmra.mxu0 %v7461
      %v7529 = vpop.f32.mrf.mxu0
      %v7530 = vadd.f32 0.0, %v7529
      %v7531 = vpop.f32.mrf.mxu0
      %7532 = vdwg.mxu0
      %v7533 = vadd.f32 %v7449, %v7530
      %v7534 = vld [vmem:[#allocation7 + $0xa] sm:$0x1]
      %s7535 = scalar_lea.vmem %s11, 320
      %v7536 = vld [vmem:[%s7535] sm:$0xff]
      %v7537 = vld [vmem:[%s7535 + $0x8] sm:$0xff]
      %v7538 = vld [vmem:[%s7535 + $0x10] sm:$0xff]
      %v7539 = vld [vmem:[%s7535 + $0x18] sm:$0xff]
      %v7540 = vld [vmem:[%s7535 + $0x20] sm:$0xff]
      %v7541 = vld [vmem:[%s7535 + $0x28] sm:$0xff]
      %v7542 = vld [vmem:[%s7535 + $0x30] sm:$0xff]
      %v7543 = vld [vmem:[%s7535 + $0x38] sm:$0xff]
      %v7545 = vsel %vm7135, %v7534, 0
      %7547 = vmatprep.subr.mxu0 0.0
      %7548 = vmatpush1.msra.mxu0 0.0
      %7549 = vmatprep.subr.mxu0 0.0
      %7550 = vmatpush1.msra.mxu0 0.0
      %7551 = vmatprep.subr.mxu0 0.0
      %7552 = vmatpush1.msra.mxu0 0.0
      %7553 = vmatprep.subr.mxu0 0.0
      %7554 = vmatpush1.msra.mxu0 0.0
      %7555 = vmatprep.subr.mxu0 0.0
      %7556 = vmatpush1.msra.mxu0 0.0
      %7557 = vmatprep.subr.mxu0 0.0
      %7558 = vmatpush1.msra.mxu0 0.0
      %7559 = vmatprep.subr.mxu0 0.0
      %7560 = vmatpush1.msra.mxu0 0.0
      %7561 = vmatprep.subr.mxu0 0.0
      %7562 = vmatpush1.msra.mxu0 0.0
      %7563 = vmatprep.subr.mxu0 0.0
      %7564 = vmatpush1.msra.mxu0 %v7543
      %7565 = vmatprep.subr.mxu0 0.0
      %7566 = vmatpush1.msra.mxu0 %v7542
      %7567 = vmatprep.subr.mxu0 0.0
      %7568 = vmatpush1.msra.mxu0 %v7541
      %7569 = vmatprep.subr.mxu0 0.0
      %7570 = vmatpush1.msra.mxu0 %v7540
      %7571 = vmatprep.subr.mxu0 0.0
      %7572 = vmatpush1.msra.mxu0 %v7539
      %7573 = vmatprep.subr.mxu0 0.0
      %7574 = vmatpush1.msra.mxu0 %v7538
      %7575 = vmatprep.subr.mxu0 0.0
      %7576 = vmatpush1.msra.mxu0 %v7537
      %7577 = vmatprep.subr.mxu0 0.0
      %7578 = vmatpush1.msra.mxu0 %v7536
      %7579 = vmatprep.subr.mxu0 0.0
      %7580 = vmatpush2.msra.mxu0 0.0
      %7581 = vmatprep.subr.mxu0 0.0
      %7582 = vmatpush2.msra.mxu0 0.0
      %7583 = vmatprep.subr.mxu0 0.0
      %7584 = vmatpush2.msra.mxu0 0.0
      %7585 = vmatprep.subr.mxu0 0.0
      %7586 = vmatpush2.msra.mxu0 0.0
      %7587 = vmatprep.subr.mxu0 0.0
      %7588 = vmatpush2.msra.mxu0 0.0
      %7589 = vmatprep.subr.mxu0 0.0
      %7590 = vmatpush2.msra.mxu0 0.0
      %7591 = vmatprep.subr.mxu0 0.0
      %7592 = vmatpush2.msra.mxu0 0.0
      %7593 = vmatprep.subr.mxu0 0.0
      %7594 = vmatpush2.msra.mxu0 0.0
      %7595 = vmatprep.subr.mxu0 0.0
      %7596 = vmatpush2.msra.mxu0 0.0
      %7597 = vmatprep.subr.mxu0 0.0
      %7598 = vmatpush2.msra.mxu0 0.0
      %7599 = vmatprep.subr.mxu0 0.0
      %7600 = vmatpush2.msra.mxu0 0.0
      %7601 = vmatprep.subr.mxu0 0.0
      %7602 = vmatpush2.msra.mxu0 0.0
      %7603 = vmatprep.subr.mxu0 0.0
      %7604 = vmatpush2.msra.mxu0 0.0
      %7605 = vmatprep.subr.mxu0 0.0
      %7606 = vmatpush2.msra.mxu0 0.0
      %7607 = vmatprep.subr.mxu0 0.0
      %7608 = vmatpush2.msra.mxu0 0.0
      %7609 = vmatprep.subr.mxu0 0.0
      %7610 = vmatpush2.msra.mxu0 0.0
      %7611 = vmatprep.mubr.f32.mxu0 0.0
      %7612 = vmatmul.mubr.f32.gmra.mxu0 %v7545
      %v7613 = vpop.f32.mrf.mxu0
      %v7614 = vadd.f32 0.0, %v7613
      %v7615 = vpop.f32.mrf.mxu0
      %7616 = vdwg.mxu0
      %v7617 = vadd.f32 %v7533, %v7614
      %v7618 = vld [vmem:[#allocation7 + $0xb] sm:$0x1]
      %s7619 = scalar_lea.vmem %s11, 384
      %v7620 = vld [vmem:[%s7619] sm:$0xff]
      %v7621 = vld [vmem:[%s7619 + $0x8] sm:$0xff]
      %v7622 = vld [vmem:[%s7619 + $0x10] sm:$0xff]
      %v7623 = vld [vmem:[%s7619 + $0x18] sm:$0xff]
      %v7624 = vld [vmem:[%s7619 + $0x20] sm:$0xff]
      %v7625 = vld [vmem:[%s7619 + $0x28] sm:$0xff]
      %v7626 = vld [vmem:[%s7619 + $0x30] sm:$0xff]
      %v7627 = vld [vmem:[%s7619 + $0x38] sm:$0xff]
      %v7629 = vsel %vm7135, %v7618, 0
      %7631 = vmatprep.subr.mxu0 0.0
      %7632 = vmatpush1.msra.mxu0 0.0
      %7633 = vmatprep.subr.mxu0 0.0
      %7634 = vmatpush1.msra.mxu0 0.0
      %7635 = vmatprep.subr.mxu0 0.0
      %7636 = vmatpush1.msra.mxu0 0.0
      %7637 = vmatprep.subr.mxu0 0.0
      %7638 = vmatpush1.msra.mxu0 0.0
      %7639 = vmatprep.subr.mxu0 0.0
      %7640 = vmatpush1.msra.mxu0 0.0
      %7641 = vmatprep.subr.mxu0 0.0
      %7642 = vmatpush1.msra.mxu0 0.0
      %7643 = vmatprep.subr.mxu0 0.0
      %7644 = vmatpush1.msra.mxu0 0.0
      %7645 = vmatprep.subr.mxu0 0.0
      %7646 = vmatpush1.msra.mxu0 0.0
      %7647 = vmatprep.subr.mxu0 0.0
      %7648 = vmatpush1.msra.mxu0 %v7627
      %7649 = vmatprep.subr.mxu0 0.0
      %7650 = vmatpush1.msra.mxu0 %v7626
      %7651 = vmatprep.subr.mxu0 0.0
      %7652 = vmatpush1.msra.mxu0 %v7625
      %7653 = vmatprep.subr.mxu0 0.0
      %7654 = vmatpush1.msra.mxu0 %v7624
      %7655 = vmatprep.subr.mxu0 0.0
      %7656 = vmatpush1.msra.mxu0 %v7623
      %7657 = vmatprep.subr.mxu0 0.0
      %7658 = vmatpush1.msra.mxu0 %v7622
      %7659 = vmatprep.subr.mxu0 0.0
      %7660 = vmatpush1.msra.mxu0 %v7621
      %7661 = vmatprep.subr.mxu0 0.0
      %7662 = vmatpush1.msra.mxu0 %v7620
      %7663 = vmatprep.subr.mxu0 0.0
      %7664 = vmatpush2.msra.mxu0 0.0
      %7665 = vmatprep.subr.mxu0 0.0
      %7666 = vmatpush2.msra.mxu0 0.0
      %7667 = vmatprep.subr.mxu0 0.0
      %7668 = vmatpush2.msra.mxu0 0.0
      %7669 = vmatprep.subr.mxu0 0.0
      %7670 = vmatpush2.msra.mxu0 0.0
      %7671 = vmatprep.subr.mxu0 0.0
      %7672 = vmatpush2.msra.mxu0 0.0
      %7673 = vmatprep.subr.mxu0 0.0
      %7674 = vmatpush2.msra.mxu0 0.0
      %7675 = vmatprep.subr.mxu0 0.0
      %7676 = vmatpush2.msra.mxu0 0.0
      %7677 = vmatprep.subr.mxu0 0.0
      %7678 = vmatpush2.msra.mxu0 0.0
      %7679 = vmatprep.subr.mxu0 0.0
      %7680 = vmatpush2.msra.mxu0 0.0
      %7681 = vmatprep.subr.mxu0 0.0
      %7682 = vmatpush2.msra.mxu0 0.0
      %7683 = vmatprep.subr.mxu0 0.0
      %7684 = vmatpush2.msra.mxu0 0.0
      %7685 = vmatprep.subr.mxu0 0.0
      %7686 = vmatpush2.msra.mxu0 0.0
      %7687 = vmatprep.subr.mxu0 0.0
      %7688 = vmatpush2.msra.mxu0 0.0
      %7689 = vmatprep.subr.mxu0 0.0
      %7690 = vmatpush2.msra.mxu0 0.0
      %7691 = vmatprep.subr.mxu0 0.0
      %7692 = vmatpush2.msra.mxu0 0.0
      %7693 = vmatprep.subr.mxu0 0.0
      %7694 = vmatpush2.msra.mxu0 0.0
      %7695 = vmatprep.mubr.f32.mxu0 0.0
      %7696 = vmatmul.mubr.f32.gmra.mxu0 %v7629
      %v7697 = vpop.f32.mrf.mxu0
      %v7698 = vadd.f32 0.0, %v7697
      %v7699 = vpop.f32.mrf.mxu0
      %7700 = vdwg.mxu0
      %v7701 = vadd.f32 %v7617, %v7698
      %v7702 = vld [vmem:[%s12] sm:$0x1]
      %v7703 = vadd.f32 %v7701, %v7702
      %v7704 = vmax.f32 %v7703, 0.0
      %v7705 = vadd.f32 %v7704, 0.0
      %7706 = vst [vmem:[%s436] sm:$0x1] %v7705
      %p7707 = scmp.lt.s32.totalorder %s24, 1
      %s7708 = scalar_select %p7707, %s24, 1
      %s7709 = scalar_lea.vmem %s13, %s7708
      // Predicated region
      $region73: #{_lambda_.1} parent=71 // pred_check
        %p7710 = pneg %p320
      $region74: #{_lambda_.1} parent=71 // pred_check_branch
        %7712 = sbr.rel (%p7710) target = $region76
      $region75: #{_lambda_.1} parent=71 // pred_region
        _
      $region76: #{_lambda_.1} parent=71 // pred_fallthru
        _
    $region72: #{_lambda_.1} parent=5 // pred_fallthru
      _
    %p7713 = scmp.le.s32.totalorder 2, %s19
    // Predicated region
    $region77: #{_lambda_.1} parent=5 // pred_check
      %p7714 = pneg %p7713
    $region78: #{_lambda_.1} parent=5 // pred_check_branch
      %7716 = sbr.rel (%p7714) target = $region80
    $region79: #{_lambda_.1} parent=5 // pred_region
      %s7717 = ssub.s32 %s19, 2
      // Predicated region
      $region81: #{_lambda_.1} parent=79 // pred_check
        %p7718 = pneg %p326
      $region82: #{_lambda_.1} parent=79 // pred_check_branch
        %7720 = sbr.rel (%p7718) target = $region84
      $region83: #{_lambda_.1} parent=79 // pred_region
        %p7721 = scmp.lt.s32.totalorder %s25, 1
        %s7722 = scalar_select %p7721, %s25, 1
        %s7723 = scalar_lea.vmem %s13, %s7722
      $region84: #{_lambda_.1} parent=79 // pred_fallthru
        _
    $region80: #{_lambda_.1} parent=5 // pred_fallthru
      _
  $region6: #{_lambda_.1} parent=0 // loop_footer
    %s23 = sadd.s32 1, %s19
  $region7: #{_lambda_.1} parent=0 // loop_footer_branch
    %18 = sbr.rel target = $region3
  $region8: #{_lambda_.1} parent=0 // loop_exit
    _

</llo_original>
